<compile_context>
chip_gen: v7x
topology: tpu7x:2x2x1
jax: 0.10.0
libtpu: 0.0.40
codegen_flags: <defaults>
</compile_context>

<pallas_src>
import jax
import jax.numpy as jnp
from jax.experimental import pallas as pl
from jax.experimental.pallas import tpu as pltpu

HIDDEN = 256
NUM_GRID = 5                      # pykan KANLayer default: num=5 grid intervals
K_SPLINE = 3                      # pykan KANLayer default: k=3 (cubic B-splines)
NB = NUM_GRID + K_SPLINE          # 8 spline basis functions per input
NG = NUM_GRID + 2 * K_SPLINE + 1  # 12 extended-grid knots per input
OUT_PAD = 128                     # lane-dense padded output width

LAYER_NUMS_LARGE_NOBI = [256, 128, 32, 1]


# -------------------- reciprocal knot-span tables (wrapper-side) --------------------
def _rcp_table(g):
    """rcp[(p-1)*(NG-1)+k, :] = 1 / (g[k+p,:] - g[k,:]); p = 1..K_SPLINE.

    TODO(synk): assumes no repeated knots inside a span (true for the default uniform
    pykan grid); a grid with repeated knots would need pykan's 0-guard here.
    """
    rows = []
    d_in = g.shape[1]
    for p in range(1, K_SPLINE + 1):
        r = 1.0 / (g[p:, :] - g[:-p, :])                      # (NG-p, d_in)
        pad = jnp.zeros((p - 1, d_in), g.dtype)
        rows.append(jnp.concatenate([r, pad], axis=0))        # (NG-1, d_in)
    return jnp.concatenate(rows, axis=0)                      # (K*(NG-1), d_in)


# --------------------------- fused RNN + KAN kernel ---------------------------
def make_fused_kernel(t_blk, b_blk, feat, layer_dims):
    n_kan = len(layer_dims) - 1
    H = layer_dims[0]

    def kernel(*refs):
        (x_ref, w0i_ref, b0_ref, w0h_ref, w1i_ref, w1h_ref, b1_ref) = refs[:7]
        kan_refs = refs[7:7 + 4 * n_kan]
        o_ref = refs[7 + 4 * n_kan]
        h0_ref, h1_ref = refs[7 + 4 * n_kan + 1:]

        t_idx = pl.program_id(1)
        nt = pl.num_programs(1)

        # ---------------- init carried hidden state on the first time-block ----------------
        @pl.when(t_idx == 0)
        def _():
            h0_ref[...] = jnp.zeros_like(h0_ref)
            h1_ref[...] = jnp.zeros_like(h1_ref)

        # ---------------- hoisted input projection: one MXU matmul per time-block ----------
        xf = x_ref[...].reshape(t_blk * b_blk, feat).astype(jnp.bfloat16)
        xproj = (jnp.dot(xf, w0i_ref[...], preferred_element_type=jnp.float32)
                 + b0_ref[...])                               # (t_blk*b_blk, H) f32

        # hoisted weight loads / bias broadcast (NOT inside the unrolled recurrence)
        w0h = w0h_ref[...]                                    # (H, H)  bf16 = W_hh^0.T
        w1i = w1i_ref[...]                                    # (H, H)  bf16 = W_ih^1.T
        w1h = w1h_ref[...]                                    # (H, H)  bf16 = W_hh^1.T
        b1b = jnp.broadcast_to(b1_ref[...], (b_blk, H))       # (B, H)  f32, once per block

        # ---------------- 2-layer tanh RNN, unrolled over the (small) time-block -----------
        # TODO(synk): for t_blk > ~32 switch to lax.fori_loop(..., unroll=2-4).
        h0 = h0_ref[...]
        h1 = h1_ref[...]
        for tt in range(t_blk):
            x_t = xproj[tt * b_blk:(tt + 1) * b_blk, :]       # sublane-aligned static slice
            # h1_prev @ W_hh^1 is independent of this step's h0 -> overlaps layer-0 work
            p1 = jnp.dot(h1.astype(jnp.bfloat16), w1h,
                         preferred_element_type=jnp.float32)
            h0 = jnp.tanh(x_t + jnp.dot(h0.astype(jnp.bfloat16), w0h,
                                        preferred_element_type=jnp.float32))
            h1 = jnp.tanh(jnp.dot(h0.astype(jnp.bfloat16), w1i,
                                  preferred_element_type=jnp.float32) + p1 + b1b)
        h0_ref[...] = h0
        h1_ref[...] = h1

        # ---------------- fused KAN stack + sigmoid, only after the last time-block --------
        @pl.when(t_idx == nt - 1)
        def _():
            act = h1                                          # output[:, -1, :]
            for li in range(n_kan):
                d_in, d_out = layer_dims[li], layer_dims[li + 1]
                g_ref, rcp_ref, coef_ref, bw_ref = kan_refs[4 * li:4 * li + 4]
                x = act                                       # (B, d_in) f32
                g = g_ref[...]                                # (NG, d_in): d_in on lanes
                rcp = rcp_ref[...]                            # precomputed reciprocals

                # degree-0 B-spline bases: lane-major (B, d_in) slabs
                bas = [((x >= g[k:k + 1, :]) & (x < g[k + 1:k + 2, :])).astype(jnp.float32)
                       for k in range(NG - 1)]
                dxs = [x - g[k:k + 1, :] for k in range(NG)]  # shared (x - knot) terms
                # Cox-de Boor recursion, divide-free (reciprocal table)
                for p in range(1, K_SPLINE + 1):
                    base_row = (p - 1) * (NG - 1)
                    nxt = []
                    for k in range(NG - 1 - p):
                        r1 = rcp[base_row + k:base_row + k + 1, :]
                        r2 = rcp[base_row + k + 1:base_row + k + 2, :]
                        nxt.append(dxs[k] * r1 * bas[k]
                                   - dxs[k + p + 1] * r2 * bas[k + 1])
                    bas = nxt                                 # NB slabs after p=K_SPLINE

                silu = x * jax.nn.sigmoid(x)                  # residual "base" branch (f32)

                if d_in % 128 == 0:
                    # wide layer: vreg-aligned lane concat -> single MXU contraction
                    spl = jnp.concatenate(bas, axis=1).astype(jnp.bfloat16)  # (B, NB*d_in)
                    act = (jnp.dot(silu.astype(jnp.bfloat16), bw_ref[...],
                                   preferred_element_type=jnp.float32)
                           + jnp.dot(spl, coef_ref[...],
                                     preferred_element_type=jnp.float32))
                else:
                    # narrow head (d_in=32, d_out=1): no cross-lane concat, no tiny MXU
                    # matmul — pure VPU multiply-accumulate + one lane reduce.
                    # TODO(synk): only d_out == 1 narrow layers are supported here.
                    coef = coef_ref[...]                      # (NB, d_in) f32
                    bw = bw_ref[...]                          # (1, d_in)  f32
                    acc = silu * bw
                    for k in range(NB):
                        acc = acc + bas[k] * coef[k:k + 1, :]
                    act = jnp.sum(acc, axis=1, keepdims=True)  # (B, 1)

            y = jax.nn.sigmoid(act)                           # final torch.sigmoid, (B, 1)
            # lane-dense store: broadcast the single output column across 128 lanes
            o_ref[...] = jnp.broadcast_to(y[:, :1], o_ref.shape)

    return kernel


# ------------------------------- full forward ---------------------------------
def forward(x, params):
    B, T, F = x.shape
    rnn, kan = params["rnn"], params["kan"]
    H = rnn["w0h"].shape[0]
    assert H == LAYER_NUMS_LARGE_NOBI[0]
    assert LAYER_NUMS_LARGE_NOBI[-1] == 1

    # pad batch to the f32 sublane tile (>=8) so per-step slices / stores are aligned
    Bp = max(8, ((B + 7) // 8) * 8)
    b_blk = Bp if Bp <= 128 else 128
    if Bp % b_blk:
        Bp = ((Bp + b_blk - 1) // b_blk) * b_blk

    # time-block: largest candidate dividing T that still leaves a real T grid (>=2 steps
    # when possible) so the x DMA pipelines under the recurrence.
    cap = max(1, T // 2)
    t_blk = 1
    for d in (32, 16, 8, 4, 2, 1):
        if d <= cap and T % d == 0:
            t_blk = d
            break

    # time-major so each time-block's hoisted projection is one (t_blk*Bp, F) matmul
    xt = jnp.transpose(x, (1, 0, 2))                         # (T, B, F)
    if Bp != B:
        xt = jnp.pad(xt, ((0, 0), (0, Bp - B), (0, 0)))

    nb, nt = Bp // b_blk, T // t_blk

    fixed_inputs = [rnn["w0i"], rnn["b0"], rnn["w0h"], rnn["w1i"], rnn["w1h"], rnn["b1"]]
    kan_inputs = []
    for lp in kan:
        kan_inputs += [lp["grid"], _rcp_table(lp["grid"]), lp["coef"], lp["base_w"]]

    def full_spec(a):
        zeros = (0,) * a.ndim
        return pl.BlockSpec(a.shape, lambda b, t: zeros)     # resident, never re-fetched

    in_specs = ([pl.BlockSpec((t_blk, b_blk, F), lambda b, t: (t, b, 0))]
                + [full_spec(a) for a in fixed_inputs + kan_inputs])

    out_pad = pl.pallas_call(
        make_fused_kernel(t_blk, b_blk, F, LAYER_NUMS_LARGE_NOBI),
        out_shape=jax.ShapeDtypeStruct((Bp, OUT_PAD), jnp.float32),
        grid=(nb, nt),
        in_specs=in_specs,
        out_specs=pl.BlockSpec((b_blk, OUT_PAD), lambda b, t: (b, 0)),
        scratch_shapes=[pltpu.VMEM((b_blk, H), jnp.float32),   # carried h0
                        pltpu.VMEM((b_blk, H), jnp.float32)],  # carried h1
        compiler_params=pltpu.CompilerParams(
            dimension_semantics=("parallel", "arbitrary"),     # batch across TCs, time serial
            vmem_limit_bytes=64 * 1024 * 1024),
    )(xt, *fixed_inputs, *kan_inputs)

    return out_pad[:B, 0]   # output_sigmoid.squeeze(1) -> (B,)


# --------------------------- deterministic init --------------------------------
def init_params(key, feature_number):
    n_kan = len(LAYER_NUMS_LARGE_NOBI) - 1
    keys = jax.random.split(key, 8 + 2 * n_kan)
    ki = iter(keys)
    s = 1.0 / jnp.sqrt(jnp.float32(HIDDEN))

    def unif(k, shape):
        return jax.random.uniform(k, shape, jnp.float32, -s, s)

    w0i = unif(next(ki), (feature_number, HIDDEN))                   # weight_ih_l0.T
    w0h = unif(next(ki), (HIDDEN, HIDDEN))                           # weight_hh_l0.T
    b0 = unif(next(ki), (1, HIDDEN)) + unif(next(ki), (1, HIDDEN))   # b_ih_l0 + b_hh_l0
    w1i = unif(next(ki), (HIDDEN, HIDDEN))                           # weight_ih_l1.T
    w1h = unif(next(ki), (HIDDEN, HIDDEN))                           # weight_hh_l1.T
    b1 = unif(next(ki), (1, HIDDEN)) + unif(next(ki), (1, HIDDEN))   # b_ih_l1 + b_hh_l1
    rnn = {"w0i": w0i.astype(jnp.bfloat16),      # MXU operands stored bf16
           "w0h": w0h.astype(jnp.bfloat16),
           "w1i": w1i.astype(jnp.bfloat16),
           "w1h": w1h.astype(jnp.bfloat16),
           "b0": b0, "b1": b1}                   # biases stay f32

    # pykan default extended uniform grid on [-1, 1] with num=5, k=3
    h_step = 2.0 / NUM_GRID
    knots = -1.0 - K_SPLINE * h_step + h_step * jnp.arange(NG, dtype=jnp.float32)

    kan = []
    for li in range(n_kan):
        d_in, d_out = LAYER_NUMS_LARGE_NOBI[li], LAYER_NUMS_LARGE_NOBI[li + 1]
        k_coef, k_base = next(ki), next(ki)
        grid = jnp.tile(knots[:, None], (1, d_in)).astype(jnp.float32)
        if d_in % 128 == 0:
            # wide layer: coef pre-flattened (NB*d_in, d_out), basis-major; base_w (d_in, d_out)
            coef = (0.1 * jax.random.normal(k_coef, (NB * d_in, d_out), jnp.float32)
                    ).astype(jnp.bfloat16)
            base_w = ((1.0 / jnp.sqrt(jnp.float32(d_in)))
                      + 0.05 * jax.random.normal(k_base, (d_in, d_out), jnp.float32)
                      ).astype(jnp.bfloat16)
        else:
            assert d_out == 1, "narrow KAN layers only supported with out_dim == 1"
            coef = 0.1 * jax.random.normal(k_coef, (NB, d_in), jnp.float32)
            base_w = ((1.0 / jnp.sqrt(jnp.float32(d_in)))
                      + 0.05 * jax.random.normal(k_base, (1, d_in), jnp.float32))
        kan.append({"grid": grid, "coef": coef, "base_w": base_w})
    return {"rnn": rnn, "kan": kan}


if __name__ == "__main__":
    B, T, F = 2, 8, 16
    key = jax.random.PRNGKey(0)
    kx, kp = jax.random.split(key)
    x = jax.random.normal(kx, (B, T, F), dtype=jnp.float32)
    params = init_params(kp, F)

    out = jax.jit(forward)(x, params)
    out = jax.block_until_ready(out)
    assert out.shape == (B,), out.shape
    assert bool(jnp.all(jnp.isfinite(out)))
    assert bool(jnp.all((out >= 0.0) & (out <= 1.0)))
    print("KERNEL_OK")
</pallas_src>

<mosaic_0001>
module attributes {stable_mosaic.version = 11 : i64} {
  func.func @kernel(%arg0: i32, %arg1: i32, %arg2: memref<4x8x16xf32, #tpu.memory_space<vmem>>, %arg3: memref<16x256xbf16, #tpu.memory_space<vmem>>, %arg4: memref<1x256xf32, #tpu.memory_space<vmem>>, %arg5: memref<256x256xbf16, #tpu.memory_space<vmem>>, %arg6: memref<256x256xbf16, #tpu.memory_space<vmem>>, %arg7: memref<256x256xbf16, #tpu.memory_space<vmem>>, %arg8: memref<1x256xf32, #tpu.memory_space<vmem>>, %arg9: memref<12x256xf32, #tpu.memory_space<vmem>>, %arg10: memref<33x256xf32, #tpu.memory_space<vmem>>, %arg11: memref<2048x128xbf16, #tpu.memory_space<vmem>>, %arg12: memref<256x128xbf16, #tpu.memory_space<vmem>>, %arg13: memref<12x128xf32, #tpu.memory_space<vmem>>, %arg14: memref<33x128xf32, #tpu.memory_space<vmem>>, %arg15: memref<1024x32xbf16, #tpu.memory_space<vmem>>, %arg16: memref<128x32xbf16, #tpu.memory_space<vmem>>, %arg17: memref<12x32xf32, #tpu.memory_space<vmem>>, %arg18: memref<33x32xf32, #tpu.memory_space<vmem>>, %arg19: memref<8x32xf32, #tpu.memory_space<vmem>>, %arg20: memref<1x32xf32, #tpu.memory_space<vmem>>, %arg21: memref<8x128xf32, #tpu.memory_space<vmem>>, %arg22: memref<8x256xf32, #tpu.memory_space<vmem>>, %arg23: memref<8x256xf32, #tpu.memory_space<vmem>>) attributes {dimension_semantics = [#tpu.dimension_semantics<parallel>, #tpu.dimension_semantics<arbitrary>], iteration_bounds = array<i64: 1, 2>, scalar_prefetch = 0 : i64, scratch_operands = 2 : i64, tpu.core_type = #tpu.core_type<tc>, window_params = [{transform_indices = @transform_0, window_bounds = array<i64: 4, 8, 16>}, {pipeline_mode = #tpu.pipeline_mode<synchronous>, transform_indices = @transform_1, window_bounds = array<i64: 16, 256>}, {pipeline_mode = #tpu.pipeline_mode<synchronous>, transform_indices = @transform_2, window_bounds = array<i64: 1, 256>}, {pipeline_mode = #tpu.pipeline_mode<synchronous>, transform_indices = @transform_3, window_bounds = array<i64: 256, 256>}, {pipeline_mode = #tpu.pipeline_mode<synchronous>, transform_indices = @transform_4, window_bounds = array<i64: 256, 256>}, {pipeline_mode = #tpu.pipeline_mode<synchronous>, transform_indices = @transform_5, window_bounds = array<i64: 256, 256>}, {pipeline_mode = #tpu.pipeline_mode<synchronous>, transform_indices = @transform_6, window_bounds = array<i64: 1, 256>}, {pipeline_mode = #tpu.pipeline_mode<synchronous>, transform_indices = @transform_7, window_bounds = array<i64: 12, 256>}, {pipeline_mode = #tpu.pipeline_mode<synchronous>, transform_indices = @transform_8, window_bounds = array<i64: 33, 256>}, {pipeline_mode = #tpu.pipeline_mode<synchronous>, transform_indices = @transform_9, window_bounds = array<i64: 2048, 128>}, {pipeline_mode = #tpu.pipeline_mode<synchronous>, transform_indices = @transform_10, window_bounds = array<i64: 256, 128>}, {pipeline_mode = #tpu.pipeline_mode<synchronous>, transform_indices = @transform_11, window_bounds = array<i64: 12, 128>}, {pipeline_mode = #tpu.pipeline_mode<synchronous>, transform_indices = @transform_12, window_bounds = array<i64: 33, 128>}, {pipeline_mode = #tpu.pipeline_mode<synchronous>, transform_indices = @transform_13, window_bounds = array<i64: 1024, 32>}, {pipeline_mode = #tpu.pipeline_mode<synchronous>, transform_indices = @transform_14, window_bounds = array<i64: 128, 32>}, {pipeline_mode = #tpu.pipeline_mode<synchronous>, transform_indices = @transform_15, window_bounds = array<i64: 12, 32>}, {pipeline_mode = #tpu.pipeline_mode<synchronous>, transform_indices = @transform_16, window_bounds = array<i64: 33, 32>}, {pipeline_mode = #tpu.pipeline_mode<synchronous>, transform_indices = @transform_17, window_bounds = array<i64: 8, 32>}, {pipeline_mode = #tpu.pipeline_mode<synchronous>, transform_indices = @transform_18, window_bounds = array<i64: 1, 32>}, {transform_indices = @transform_19, window_bounds = array<i64: 8, 128>}]} {
    %c0_i32 = arith.constant 0 : i32
    %0 = arith.cmpi eq, %arg1, %c0_i32 : i32
    %1 = arith.extui %0 : i1 to i32
    %c0_i32_0 = arith.constant 0 : i32
    %2 = arith.cmpi ne, %1, %c0_i32_0 : i32
    scf.if %2 {
      %cst_36 = arith.constant 0.000000e+00 : f32
      %72 = vector.broadcast %cst_36 : f32 to vector<8x256xf32>
      %c0_37 = arith.constant 0 : index
      %c0_38 = arith.constant 0 : index
      %73 = vector.load %arg22[%c0_37, %c0_38] : memref<8x256xf32, #tpu.memory_space<vmem>>, vector<8x256xf32>
      tpu.vector_store %arg22[%c0_37, %c0_38], %72 {strides = array<i32>} : memref<8x256xf32, #tpu.memory_space<vmem>>, vector<8x256xf32>,
      %cst_39 = arith.constant 0.000000e+00 : f32
      %74 = vector.broadcast %cst_39 : f32 to vector<8x256xf32>
      %c0_40 = arith.constant 0 : index
      %c0_41 = arith.constant 0 : index
      %75 = vector.load %arg23[%c0_40, %c0_41] : memref<8x256xf32, #tpu.memory_space<vmem>>, vector<8x256xf32>
      tpu.vector_store %arg23[%c0_40, %c0_41], %74 {strides = array<i32>} : memref<8x256xf32, #tpu.memory_space<vmem>>, vector<8x256xf32>,
    } else {
    }
    %c0 = arith.constant 0 : index
    %c0_1 = arith.constant 0 : index
    %c0_2 = arith.constant 0 : index
    %3 = vector.load %arg2[%c0, %c0_1, %c0_2] : memref<4x8x16xf32, #tpu.memory_space<vmem>>, vector<4x8x16xf32>
    %4 = vector.shape_cast %3 : vector<4x8x16xf32> to vector<32x16xf32>
    %5 = arith.truncf %4 : vector<32x16xf32> to vector<32x16xbf16>
    %c0_3 = arith.constant 0 : index
    %c0_4 = arith.constant 0 : index
    %6 = vector.load %arg3[%c0_3, %c0_4] : memref<16x256xbf16, #tpu.memory_space<vmem>>, vector<16x256xbf16>
    %cst = arith.constant dense<0.000000e+00> : vector<32x256xf32>
    %7 = tpu.matmul %5, %6, %cst {dimension_numbers = #tpu.dot_dimension_numbers<[1], [0], [0], [1], [0, 0, 1, 1], [], []>} : vector<32x16xbf16>, vector<16x256xbf16>, vector<32x256xf32> -> vector<32x256xf32>
    %c0_5 = arith.constant 0 : index
    %c0_6 = arith.constant 0 : index
    %8 = vector.load %arg4[%c0_5, %c0_6] : memref<1x256xf32, #tpu.memory_space<vmem>>, vector<1x256xf32>
    %9 = vector.broadcast %8 : vector<1x256xf32> to vector<32x256xf32>
    %10 = arith.addf %7, %9 : vector<32x256xf32>
    %c0_7 = arith.constant 0 : index
    %c0_8 = arith.constant 0 : index
    %11 = vector.load %arg5[%c0_7, %c0_8] : memref<256x256xbf16, #tpu.memory_space<vmem>>, vector<256x256xbf16>
    %c0_9 = arith.constant 0 : index
    %c0_10 = arith.constant 0 : index
    %12 = vector.load %arg6[%c0_9, %c0_10] : memref<256x256xbf16, #tpu.memory_space<vmem>>, vector<256x256xbf16>
    %c0_11 = arith.constant 0 : index
    %c0_12 = arith.constant 0 : index
    %13 = vector.load %arg7[%c0_11, %c0_12] : memref<256x256xbf16, #tpu.memory_space<vmem>>, vector<256x256xbf16>
    %c0_13 = arith.constant 0 : index
    %c0_14 = arith.constant 0 : index
    %14 = vector.load %arg8[%c0_13, %c0_14] : memref<1x256xf32, #tpu.memory_space<vmem>>, vector<1x256xf32>
    %15 = vector.shape_cast %14 : vector<1x256xf32> to vector<1x256xf32>
    %16 = vector.broadcast %15 : vector<1x256xf32> to vector<8x256xf32>
    %c0_15 = arith.constant 0 : index
    %c0_16 = arith.constant 0 : index
    %17 = vector.load %arg22[%c0_15, %c0_16] : memref<8x256xf32, #tpu.memory_space<vmem>>, vector<8x256xf32>
    %c0_17 = arith.constant 0 : index
    %c0_18 = arith.constant 0 : index
    %18 = vector.load %arg23[%c0_17, %c0_18] : memref<8x256xf32, #tpu.memory_space<vmem>>, vector<8x256xf32>
    %19 = vector.extract_strided_slice %10 {offsets = [0, 0], sizes = [8, 256], strides = [1, 1]} : vector<32x256xf32> to vector<8x256xf32>
    %20 = arith.truncf %18 : vector<8x256xf32> to vector<8x256xbf16>
    %cst_19 = arith.constant dense<0.000000e+00> : vector<8x256xf32>
    %21 = tpu.matmul %20, %13, %cst_19 {dimension_numbers = #tpu.dot_dimension_numbers<[1], [0], [0], [1], [0, 0, 1, 1], [], []>} : vector<8x256xbf16>, vector<256x256xbf16>, vector<8x256xf32> -> vector<8x256xf32>
    %22 = arith.truncf %17 : vector<8x256xf32> to vector<8x256xbf16>
    %cst_20 = arith.constant dense<0.000000e+00> : vector<8x256xf32>
    %23 = tpu.matmul %22, %11, %cst_20 {dimension_numbers = #tpu.dot_dimension_numbers<[1], [0], [0], [1], [0, 0, 1, 1], [], []>} : vector<8x256xbf16>, vector<256x256xbf16>, vector<8x256xf32> -> vector<8x256xf32>
    %24 = arith.addf %19, %23 : vector<8x256xf32>
    %25 = math.tanh %24 : vector<8x256xf32>
    %26 = arith.truncf %25 : vector<8x256xf32> to vector<8x256xbf16>
    %cst_21 = arith.constant dense<0.000000e+00> : vector<8x256xf32>
    %27 = tpu.matmul %26, %12, %cst_21 {dimension_numbers = #tpu.dot_dimension_numbers<[1], [0], [0], [1], [0, 0, 1, 1], [], []>} : vector<8x256xbf16>, vector<256x256xbf16>, vector<8x256xf32> -> vector<8x256xf32>
    %28 = arith.addf %27, %21 : vector<8x256xf32>
    %29 = arith.addf %28, %16 : vector<8x256xf32>
    %30 = math.tanh %29 : vector<8x256xf32>
    %31 = vector.extract_strided_slice %10 {offsets = [8, 0], sizes = [8, 256], strides = [1, 1]} : vector<32x256xf32> to vector<8x256xf32>
    %32 = arith.truncf %30 : vector<8x256xf32> to vector<8x256xbf16>
    %cst_22 = arith.constant dense<0.000000e+00> : vector<8x256xf32>
    %33 = tpu.matmul %32, %13, %cst_22 {dimension_numbers = #tpu.dot_dimension_numbers<[1], [0], [0], [1], [0, 0, 1, 1], [], []>} : vector<8x256xbf16>, vector<256x256xbf16>, vector<8x256xf32> -> vector<8x256xf32>
    %34 = arith.truncf %25 : vector<8x256xf32> to vector<8x256xbf16>
    %cst_23 = arith.constant dense<0.000000e+00> : vector<8x256xf32>
    %35 = tpu.matmul %34, %11, %cst_23 {dimension_numbers = #tpu.dot_dimension_numbers<[1], [0], [0], [1], [0, 0, 1, 1], [], []>} : vector<8x256xbf16>, vector<256x256xbf16>, vector<8x256xf32> -> vector<8x256xf32>
    %36 = arith.addf %31, %35 : vector<8x256xf32>
    %37 = math.tanh %36 : vector<8x256xf32>
    %38 = arith.truncf %37 : vector<8x256xf32> to vector<8x256xbf16>
    %cst_24 = arith.constant dense<0.000000e+00> : vector<8x256xf32>
    %39 = tpu.matmul %38, %12, %cst_24 {dimension_numbers = #tpu.dot_dimension_numbers<[1], [0], [0], [1], [0, 0, 1, 1], [], []>} : vector<8x256xbf16>, vector<256x256xbf16>, vector<8x256xf32> -> vector<8x256xf32>
    %40 = arith.addf %39, %33 : vector<8x256xf32>
    %41 = arith.addf %40, %16 : vector<8x256xf32>
    %42 = math.tanh %41 : vector<8x256xf32>
    %43 = vector.extract_strided_slice %10 {offsets = [16, 0], sizes = [8, 256], strides = [1, 1]} : vector<32x256xf32> to vector<8x256xf32>
    %44 = arith.truncf %42 : vector<8x256xf32> to vector<8x256xbf16>
    %cst_25 = arith.constant dense<0.000000e+00> : vector<8x256xf32>
    %45 = tpu.matmul %44, %13, %cst_25 {dimension_numbers = #tpu.dot_dimension_numbers<[1], [0], [0], [1], [0, 0, 1, 1], [], []>} : vector<8x256xbf16>, vector<256x256xbf16>, vector<8x256xf32> -> vector<8x256xf32>
    %46 = arith.truncf %37 : vector<8x256xf32> to vector<8x256xbf16>
    %cst_26 = arith.constant dense<0.000000e+00> : vector<8x256xf32>
    %47 = tpu.matmul %46, %11, %cst_26 {dimension_numbers = #tpu.dot_dimension_numbers<[1], [0], [0], [1], [0, 0, 1, 1], [], []>} : vector<8x256xbf16>, vector<256x256xbf16>, vector<8x256xf32> -> vector<8x256xf32>
    %48 = arith.addf %43, %47 : vector<8x256xf32>
    %49 = math.tanh %48 : vector<8x256xf32>
    %50 = arith.truncf %49 : vector<8x256xf32> to vector<8x256xbf16>
    %cst_27 = arith.constant dense<0.000000e+00> : vector<8x256xf32>
    %51 = tpu.matmul %50, %12, %cst_27 {dimension_numbers = #tpu.dot_dimension_numbers<[1], [0], [0], [1], [0, 0, 1, 1], [], []>} : vector<8x256xbf16>, vector<256x256xbf16>, vector<8x256xf32> -> vector<8x256xf32>
    %52 = arith.addf %51, %45 : vector<8x256xf32>
    %53 = arith.addf %52, %16 : vector<8x256xf32>
    %54 = math.tanh %53 : vector<8x256xf32>
    %55 = vector.extract_strided_slice %10 {offsets = [24, 0], sizes = [8, 256], strides = [1, 1]} : vector<32x256xf32> to vector<8x256xf32>
    %56 = arith.truncf %54 : vector<8x256xf32> to vector<8x256xbf16>
    %cst_28 = arith.constant dense<0.000000e+00> : vector<8x256xf32>
    %57 = tpu.matmul %56, %13, %cst_28 {dimension_numbers = #tpu.dot_dimension_numbers<[1], [0], [0], [1], [0, 0, 1, 1], [], []>} : vector<8x256xbf16>, vector<256x256xbf16>, vector<8x256xf32> -> vector<8x256xf32>
    %58 = arith.truncf %49 : vector<8x256xf32> to vector<8x256xbf16>
    %cst_29 = arith.constant dense<0.000000e+00> : vector<8x256xf32>
    %59 = tpu.matmul %58, %11, %cst_29 {dimension_numbers = #tpu.dot_dimension_numbers<[1], [0], [0], [1], [0, 0, 1, 1], [], []>} : vector<8x256xbf16>, vector<256x256xbf16>, vector<8x256xf32> -> vector<8x256xf32>
    %60 = arith.addf %55, %59 : vector<8x256xf32>
    %61 = math.tanh %60 : vector<8x256xf32>
    %62 = arith.truncf %61 : vector<8x256xf32> to vector<8x256xbf16>
    %cst_30 = arith.constant dense<0.000000e+00> : vector<8x256xf32>
    %63 = tpu.matmul %62, %12, %cst_30 {dimension_numbers = #tpu.dot_dimension_numbers<[1], [0], [0], [1], [0, 0, 1, 1], [], []>} : vector<8x256xbf16>, vector<256x256xbf16>, vector<8x256xf32> -> vector<8x256xf32>
    %64 = arith.addf %63, %57 : vector<8x256xf32>
    %65 = arith.addf %64, %16 : vector<8x256xf32>
    %66 = math.tanh %65 : vector<8x256xf32>
    %c0_31 = arith.constant 0 : index
    %c0_32 = arith.constant 0 : index
    %67 = vector.load %arg22[%c0_31, %c0_32] : memref<8x256xf32, #tpu.memory_space<vmem>>, vector<8x256xf32>
    tpu.vector_store %arg22[%c0_31, %c0_32], %61 {strides = array<i32>} : memref<8x256xf32, #tpu.memory_space<vmem>>, vector<8x256xf32>,
    %c0_33 = arith.constant 0 : index
    %c0_34 = arith.constant 0 : index
    %68 = vector.load %arg23[%c0_33, %c0_34] : memref<8x256xf32, #tpu.memory_space<vmem>>, vector<8x256xf32>
    tpu.vector_store %arg23[%c0_33, %c0_34], %66 {strides = array<i32>} : memref<8x256xf32, #tpu.memory_space<vmem>>, vector<8x256xf32>,
    %c1_i32 = arith.constant 1 : i32
    %69 = arith.cmpi eq, %arg1, %c1_i32 : i32
    %70 = arith.extui %69 : i1 to i32
    %c0_i32_35 = arith.constant 0 : i32
    %71 = arith.cmpi ne, %70, %c0_i32_35 : i32
    scf.if %71 {
      %c0_36 = arith.constant 0 : index
      %c0_37 = arith.constant 0 : index
      %72 = vector.load %arg9[%c0_36, %c0_37] : memref<12x256xf32, #tpu.memory_space<vmem>>, vector<12x256xf32>
      %c0_38 = arith.constant 0 : index
      %c0_39 = arith.constant 0 : index
      %73 = vector.load %arg10[%c0_38, %c0_39] : memref<33x256xf32, #tpu.memory_space<vmem>>, vector<33x256xf32>
      %74 = vector.extract_strided_slice %72 {offsets = [0, 0], sizes = [1, 256], strides = [1, 1]} : vector<12x256xf32> to vector<1x256xf32>
      %75 = vector.broadcast %74 : vector<1x256xf32> to vector<8x256xf32>
      %76 = arith.cmpf oge, %66, %75 : vector<8x256xf32>
      %77 = vector.extract_strided_slice %72 {offsets = [1, 0], sizes = [1, 256], strides = [1, 1]} : vector<12x256xf32> to vector<1x256xf32>
      %78 = vector.broadcast %77 : vector<1x256xf32> to vector<8x256xf32>
      %79 = arith.cmpf olt, %66, %78 : vector<8x256xf32>
      %80 = arith.andi %76, %79 : vector<8x256xi1>
      %81 = arith.extui %80 : vector<8x256xi1> to vector<8x256xi32>
      %82 = arith.sitofp %81 : vector<8x256xi32> to vector<8x256xf32>
      %83 = vector.extract_strided_slice %72 {offsets = [1, 0], sizes = [1, 256], strides = [1, 1]} : vector<12x256xf32> to vector<1x256xf32>
      %84 = vector.broadcast %83 : vector<1x256xf32> to vector<8x256xf32>
      %85 = arith.cmpf oge, %66, %84 : vector<8x256xf32>
      %86 = vector.extract_strided_slice %72 {offsets = [2, 0], sizes = [1, 256], strides = [1, 1]} : vector<12x256xf32> to vector<1x256xf32>
      %87 = vector.broadcast %86 : vector<1x256xf32> to vector<8x256xf32>
      %88 = arith.cmpf olt, %66, %87 : vector<8x256xf32>
      %89 = arith.andi %85, %88 : vector<8x256xi1>
      %90 = arith.extui %89 : vector<8x256xi1> to vector<8x256xi32>
      %91 = arith.sitofp %90 : vector<8x256xi32> to vector<8x256xf32>
      %92 = vector.extract_strided_slice %72 {offsets = [2, 0], sizes = [1, 256], strides = [1, 1]} : vector<12x256xf32> to vector<1x256xf32>
      %93 = vector.broadcast %92 : vector<1x256xf32> to vector<8x256xf32>
      %94 = arith.cmpf oge, %66, %93 : vector<8x256xf32>
      %95 = vector.extract_strided_slice %72 {offsets = [3, 0], sizes = [1, 256], strides = [1, 1]} : vector<12x256xf32> to vector<1x256xf32>
      %96 = vector.broadcast %95 : vector<1x256xf32> to vector<8x256xf32>
      %97 = arith.cmpf olt, %66, %96 : vector<8x256xf32>
      %98 = arith.andi %94, %97 : vector<8x256xi1>
      %99 = arith.extui %98 : vector<8x256xi1> to vector<8x256xi32>
      %100 = arith.sitofp %99 : vector<8x256xi32> to vector<8x256xf32>
      %101 = vector.extract_strided_slice %72 {offsets = [3, 0], sizes = [1, 256], strides = [1, 1]} : vector<12x256xf32> to vector<1x256xf32>
      %102 = vector.broadcast %101 : vector<1x256xf32> to vector<8x256xf32>
      %103 = arith.cmpf oge, %66, %102 : vector<8x256xf32>
      %104 = vector.extract_strided_slice %72 {offsets = [4, 0], sizes = [1, 256], strides = [1, 1]} : vector<12x256xf32> to vector<1x256xf32>
      %105 = vector.broadcast %104 : vector<1x256xf32> to vector<8x256xf32>
      %106 = arith.cmpf olt, %66, %105 : vector<8x256xf32>
      %107 = arith.andi %103, %106 : vector<8x256xi1>
      %108 = arith.extui %107 : vector<8x256xi1> to vector<8x256xi32>
      %109 = arith.sitofp %108 : vector<8x256xi32> to vector<8x256xf32>
      %110 = vector.extract_strided_slice %72 {offsets = [4, 0], sizes = [1, 256], strides = [1, 1]} : vector<12x256xf32> to vector<1x256xf32>
      %111 = vector.broadcast %110 : vector<1x256xf32> to vector<8x256xf32>
      %112 = arith.cmpf oge, %66, %111 : vector<8x256xf32>
      %113 = vector.extract_strided_slice %72 {offsets = [5, 0], sizes = [1, 256], strides = [1, 1]} : vector<12x256xf32> to vector<1x256xf32>
      %114 = vector.broadcast %113 : vector<1x256xf32> to vector<8x256xf32>
      %115 = arith.cmpf olt, %66, %114 : vector<8x256xf32>
      %116 = arith.andi %112, %115 : vector<8x256xi1>
      %117 = arith.extui %116 : vector<8x256xi1> to vector<8x256xi32>
      %118 = arith.sitofp %117 : vector<8x256xi32> to vector<8x256xf32>
      %119 = vector.extract_strided_slice %72 {offsets = [5, 0], sizes = [1, 256], strides = [1, 1]} : vector<12x256xf32> to vector<1x256xf32>
      %120 = vector.broadcast %119 : vector<1x256xf32> to vector<8x256xf32>
      %121 = arith.cmpf oge, %66, %120 : vector<8x256xf32>
      %122 = vector.extract_strided_slice %72 {offsets = [6, 0], sizes = [1, 256], strides = [1, 1]} : vector<12x256xf32> to vector<1x256xf32>
      %123 = vector.broadcast %122 : vector<1x256xf32> to vector<8x256xf32>
      %124 = arith.cmpf olt, %66, %123 : vector<8x256xf32>
      %125 = arith.andi %121, %124 : vector<8x256xi1>
      %126 = arith.extui %125 : vector<8x256xi1> to vector<8x256xi32>
      %127 = arith.sitofp %126 : vector<8x256xi32> to vector<8x256xf32>
      %128 = vector.extract_strided_slice %72 {offsets = [6, 0], sizes = [1, 256], strides = [1, 1]} : vector<12x256xf32> to vector<1x256xf32>
      %129 = vector.broadcast %128 : vector<1x256xf32> to vector<8x256xf32>
      %130 = arith.cmpf oge, %66, %129 : vector<8x256xf32>
      %131 = vector.extract_strided_slice %72 {offsets = [7, 0], sizes = [1, 256], strides = [1, 1]} : vector<12x256xf32> to vector<1x256xf32>
      %132 = vector.broadcast %131 : vector<1x256xf32> to vector<8x256xf32>
      %133 = arith.cmpf olt, %66, %132 : vector<8x256xf32>
      %134 = arith.andi %130, %133 : vector<8x256xi1>
      %135 = arith.extui %134 : vector<8x256xi1> to vector<8x256xi32>
      %136 = arith.sitofp %135 : vector<8x256xi32> to vector<8x256xf32>
      %137 = vector.extract_strided_slice %72 {offsets = [7, 0], sizes = [1, 256], strides = [1, 1]} : vector<12x256xf32> to vector<1x256xf32>
      %138 = vector.broadcast %137 : vector<1x256xf32> to vector<8x256xf32>
      %139 = arith.cmpf oge, %66, %138 : vector<8x256xf32>
      %140 = vector.extract_strided_slice %72 {offsets = [8, 0], sizes = [1, 256], strides = [1, 1]} : vector<12x256xf32> to vector<1x256xf32>
      %141 = vector.broadcast %140 : vector<1x256xf32> to vector<8x256xf32>
      %142 = arith.cmpf olt, %66, %141 : vector<8x256xf32>
      %143 = arith.andi %139, %142 : vector<8x256xi1>
      %144 = arith.extui %143 : vector<8x256xi1> to vector<8x256xi32>
      %145 = arith.sitofp %144 : vector<8x256xi32> to vector<8x256xf32>
      %146 = vector.extract_strided_slice %72 {offsets = [8, 0], sizes = [1, 256], strides = [1, 1]} : vector<12x256xf32> to vector<1x256xf32>
      %147 = vector.broadcast %146 : vector<1x256xf32> to vector<8x256xf32>
      %148 = arith.cmpf oge, %66, %147 : vector<8x256xf32>
      %149 = vector.extract_strided_slice %72 {offsets = [9, 0], sizes = [1, 256], strides = [1, 1]} : vector<12x256xf32> to vector<1x256xf32>
      %150 = vector.broadcast %149 : vector<1x256xf32> to vector<8x256xf32>
      %151 = arith.cmpf olt, %66, %150 : vector<8x256xf32>
      %152 = arith.andi %148, %151 : vector<8x256xi1>
      %153 = arith.extui %152 : vector<8x256xi1> to vector<8x256xi32>
      %154 = arith.sitofp %153 : vector<8x256xi32> to vector<8x256xf32>
      %155 = vector.extract_strided_slice %72 {offsets = [9, 0], sizes = [1, 256], strides = [1, 1]} : vector<12x256xf32> to vector<1x256xf32>
      %156 = vector.broadcast %155 : vector<1x256xf32> to vector<8x256xf32>
      %157 = arith.cmpf oge, %66, %156 : vector<8x256xf32>
      %158 = vector.extract_strided_slice %72 {offsets = [10, 0], sizes = [1, 256], strides = [1, 1]} : vector<12x256xf32> to vector<1x256xf32>
      %159 = vector.broadcast %158 : vector<1x256xf32> to vector<8x256xf32>
      %160 = arith.cmpf olt, %66, %159 : vector<8x256xf32>
      %161 = arith.andi %157, %160 : vector<8x256xi1>
      %162 = arith.extui %161 : vector<8x256xi1> to vector<8x256xi32>
      %163 = arith.sitofp %162 : vector<8x256xi32> to vector<8x256xf32>
      %164 = vector.extract_strided_slice %72 {offsets = [10, 0], sizes = [1, 256], strides = [1, 1]} : vector<12x256xf32> to vector<1x256xf32>
      %165 = vector.broadcast %164 : vector<1x256xf32> to vector<8x256xf32>
      %166 = arith.cmpf oge, %66, %165 : vector<8x256xf32>
      %167 = vector.extract_strided_slice %72 {offsets = [11, 0], sizes = [1, 256], strides = [1, 1]} : vector<12x256xf32> to vector<1x256xf32>
      %168 = vector.broadcast %167 : vector<1x256xf32> to vector<8x256xf32>
      %169 = arith.cmpf olt, %66, %168 : vector<8x256xf32>
      %170 = arith.andi %166, %169 : vector<8x256xi1>
      %171 = arith.extui %170 : vector<8x256xi1> to vector<8x256xi32>
      %172 = arith.sitofp %171 : vector<8x256xi32> to vector<8x256xf32>
      %173 = vector.extract_strided_slice %72 {offsets = [0, 0], sizes = [1, 256], strides = [1, 1]} : vector<12x256xf32> to vector<1x256xf32>
      %174 = vector.broadcast %173 : vector<1x256xf32> to vector<8x256xf32>
      %175 = arith.subf %66, %174 : vector<8x256xf32>
      %176 = vector.extract_strided_slice %72 {offsets = [1, 0], sizes = [1, 256], strides = [1, 1]} : vector<12x256xf32> to vector<1x256xf32>
      %177 = vector.broadcast %176 : vector<1x256xf32> to vector<8x256xf32>
      %178 = arith.subf %66, %177 : vector<8x256xf32>
      %179 = vector.extract_strided_slice %72 {offsets = [2, 0], sizes = [1, 256], strides = [1, 1]} : vector<12x256xf32> to vector<1x256xf32>
      %180 = vector.broadcast %179 : vector<1x256xf32> to vector<8x256xf32>
      %181 = arith.subf %66, %180 : vector<8x256xf32>
      %182 = vector.extract_strided_slice %72 {offsets = [3, 0], sizes = [1, 256], strides = [1, 1]} : vector<12x256xf32> to vector<1x256xf32>
      %183 = vector.broadcast %182 : vector<1x256xf32> to vector<8x256xf32>
      %184 = arith.subf %66, %183 : vector<8x256xf32>
      %185 = vector.extract_strided_slice %72 {offsets = [4, 0], sizes = [1, 256], strides = [1, 1]} : vector<12x256xf32> to vector<1x256xf32>
      %186 = vector.broadcast %185 : vector<1x256xf32> to vector<8x256xf32>
      %187 = arith.subf %66, %186 : vector<8x256xf32>
      %188 = vector.extract_strided_slice %72 {offsets = [5, 0], sizes = [1, 256], strides = [1, 1]} : vector<12x256xf32> to vector<1x256xf32>
      %189 = vector.broadcast %188 : vector<1x256xf32> to vector<8x256xf32>
      %190 = arith.subf %66, %189 : vector<8x256xf32>
      %191 = vector.extract_strided_slice %72 {offsets = [6, 0], sizes = [1, 256], strides = [1, 1]} : vector<12x256xf32> to vector<1x256xf32>
      %192 = vector.broadcast %191 : vector<1x256xf32> to vector<8x256xf32>
      %193 = arith.subf %66, %192 : vector<8x256xf32>
      %194 = vector.extract_strided_slice %72 {offsets = [7, 0], sizes = [1, 256], strides = [1, 1]} : vector<12x256xf32> to vector<1x256xf32>
      %195 = vector.broadcast %194 : vector<1x256xf32> to vector<8x256xf32>
      %196 = arith.subf %66, %195 : vector<8x256xf32>
      %197 = vector.extract_strided_slice %72 {offsets = [8, 0], sizes = [1, 256], strides = [1, 1]} : vector<12x256xf32> to vector<1x256xf32>
      %198 = vector.broadcast %197 : vector<1x256xf32> to vector<8x256xf32>
      %199 = arith.subf %66, %198 : vector<8x256xf32>
      %200 = vector.extract_strided_slice %72 {offsets = [9, 0], sizes = [1, 256], strides = [1, 1]} : vector<12x256xf32> to vector<1x256xf32>
      %201 = vector.broadcast %200 : vector<1x256xf32> to vector<8x256xf32>
      %202 = arith.subf %66, %201 : vector<8x256xf32>
      %203 = vector.extract_strided_slice %72 {offsets = [10, 0], sizes = [1, 256], strides = [1, 1]} : vector<12x256xf32> to vector<1x256xf32>
      %204 = vector.broadcast %203 : vector<1x256xf32> to vector<8x256xf32>
      %205 = arith.subf %66, %204 : vector<8x256xf32>
      %206 = vector.extract_strided_slice %72 {offsets = [11, 0], sizes = [1, 256], strides = [1, 1]} : vector<12x256xf32> to vector<1x256xf32>
      %207 = vector.broadcast %206 : vector<1x256xf32> to vector<8x256xf32>
      %208 = arith.subf %66, %207 : vector<8x256xf32>
      %209 = vector.extract_strided_slice %73 {offsets = [0, 0], sizes = [1, 256], strides = [1, 1]} : vector<33x256xf32> to vector<1x256xf32>
      %210 = vector.extract_strided_slice %73 {offsets = [1, 0], sizes = [1, 256], strides = [1, 1]} : vector<33x256xf32> to vector<1x256xf32>
      %211 = vector.broadcast %209 : vector<1x256xf32> to vector<8x256xf32>
      %212 = arith.mulf %175, %211 : vector<8x256xf32>
      %213 = arith.mulf %212, %82 : vector<8x256xf32>
      %214 = vector.broadcast %210 : vector<1x256xf32> to vector<8x256xf32>
      %215 = arith.mulf %181, %214 : vector<8x256xf32>
      %216 = arith.mulf %215, %91 : vector<8x256xf32>
      %217 = arith.subf %213, %216 : vector<8x256xf32>
      %218 = vector.extract_strided_slice %73 {offsets = [1, 0], sizes = [1, 256], strides = [1, 1]} : vector<33x256xf32> to vector<1x256xf32>
      %219 = vector.extract_strided_slice %73 {offsets = [2, 0], sizes = [1, 256], strides = [1, 1]} : vector<33x256xf32> to vector<1x256xf32>
      %220 = vector.broadcast %218 : vector<1x256xf32> to vector<8x256xf32>
      %221 = arith.mulf %178, %220 : vector<8x256xf32>
      %222 = arith.mulf %221, %91 : vector<8x256xf32>
      %223 = vector.broadcast %219 : vector<1x256xf32> to vector<8x256xf32>
      %224 = arith.mulf %184, %223 : vector<8x256xf32>
      %225 = arith.mulf %224, %100 : vector<8x256xf32>
      %226 = arith.subf %222, %225 : vector<8x256xf32>
      %227 = vector.extract_strided_slice %73 {offsets = [2, 0], sizes = [1, 256], strides = [1, 1]} : vector<33x256xf32> to vector<1x256xf32>
      %228 = vector.extract_strided_slice %73 {offsets = [3, 0], sizes = [1, 256], strides = [1, 1]} : vector<33x256xf32> to vector<1x256xf32>
      %229 = vector.broadcast %227 : vector<1x256xf32> to vector<8x256xf32>
      %230 = arith.mulf %181, %229 : vector<8x256xf32>
      %231 = arith.mulf %230, %100 : vector<8x256xf32>
      %232 = vector.broadcast %228 : vector<1x256xf32> to vector<8x256xf32>
      %233 = arith.mulf %187, %232 : vector<8x256xf32>
      %234 = arith.mulf %233, %109 : vector<8x256xf32>
      %235 = arith.subf %231, %234 : vector<8x256xf32>
      %236 = vector.extract_strided_slice %73 {offsets = [3, 0], sizes = [1, 256], strides = [1, 1]} : vector<33x256xf32> to vector<1x256xf32>
      %237 = vector.extract_strided_slice %73 {offsets = [4, 0], sizes = [1, 256], strides = [1, 1]} : vector<33x256xf32> to vector<1x256xf32>
      %238 = vector.broadcast %236 : vector<1x256xf32> to vector<8x256xf32>
      %239 = arith.mulf %184, %238 : vector<8x256xf32>
      %240 = arith.mulf %239, %109 : vector<8x256xf32>
      %241 = vector.broadcast %237 : vector<1x256xf32> to vector<8x256xf32>
      %242 = arith.mulf %190, %241 : vector<8x256xf32>
      %243 = arith.mulf %242, %118 : vector<8x256xf32>
      %244 = arith.subf %240, %243 : vector<8x256xf32>
      %245 = vector.extract_strided_slice %73 {offsets = [4, 0], sizes = [1, 256], strides = [1, 1]} : vector<33x256xf32> to vector<1x256xf32>
      %246 = vector.extract_strided_slice %73 {offsets = [5, 0], sizes = [1, 256], strides = [1, 1]} : vector<33x256xf32> to vector<1x256xf32>
      %247 = vector.broadcast %245 : vector<1x256xf32> to vector<8x256xf32>
      %248 = arith.mulf %187, %247 : vector<8x256xf32>
      %249 = arith.mulf %248, %118 : vector<8x256xf32>
      %250 = vector.broadcast %246 : vector<1x256xf32> to vector<8x256xf32>
      %251 = arith.mulf %193, %250 : vector<8x256xf32>
      %252 = arith.mulf %251, %127 : vector<8x256xf32>
      %253 = arith.subf %249, %252 : vector<8x256xf32>
      %254 = vector.extract_strided_slice %73 {offsets = [5, 0], sizes = [1, 256], strides = [1, 1]} : vector<33x256xf32> to vector<1x256xf32>
      %255 = vector.extract_strided_slice %73 {offsets = [6, 0], sizes = [1, 256], strides = [1, 1]} : vector<33x256xf32> to vector<1x256xf32>
      %256 = vector.broadcast %254 : vector<1x256xf32> to vector<8x256xf32>
      %257 = arith.mulf %190, %256 : vector<8x256xf32>
      %258 = arith.mulf %257, %127 : vector<8x256xf32>
      %259 = vector.broadcast %255 : vector<1x256xf32> to vector<8x256xf32>
      %260 = arith.mulf %196, %259 : vector<8x256xf32>
      %261 = arith.mulf %260, %136 : vector<8x256xf32>
      %262 = arith.subf %258, %261 : vector<8x256xf32>
      %263 = vector.extract_strided_slice %73 {offsets = [6, 0], sizes = [1, 256], strides = [1, 1]} : vector<33x256xf32> to vector<1x256xf32>
      %264 = vector.extract_strided_slice %73 {offsets = [7, 0], sizes = [1, 256], strides = [1, 1]} : vector<33x256xf32> to vector<1x256xf32>
      %265 = vector.broadcast %263 : vector<1x256xf32> to vector<8x256xf32>
      %266 = arith.mulf %193, %265 : vector<8x256xf32>
      %267 = arith.mulf %266, %136 : vector<8x256xf32>
      %268 = vector.broadcast %264 : vector<1x256xf32> to vector<8x256xf32>
      %269 = arith.mulf %199, %268 : vector<8x256xf32>
      %270 = arith.mulf %269, %145 : vector<8x256xf32>
      %271 = arith.subf %267, %270 : vector<8x256xf32>
      %272 = vector.extract_strided_slice %73 {offsets = [7, 0], sizes = [1, 256], strides = [1, 1]} : vector<33x256xf32> to vector<1x256xf32>
      %273 = vector.extract_strided_slice %73 {offsets = [8, 0], sizes = [1, 256], strides = [1, 1]} : vector<33x256xf32> to vector<1x256xf32>
      %274 = vector.broadcast %272 : vector<1x256xf32> to vector<8x256xf32>
      %275 = arith.mulf %196, %274 : vector<8x256xf32>
      %276 = arith.mulf %275, %145 : vector<8x256xf32>
      %277 = vector.broadcast %273 : vector<1x256xf32> to vector<8x256xf32>
      %278 = arith.mulf %202, %277 : vector<8x256xf32>
      %279 = arith.mulf %278, %154 : vector<8x256xf32>
      %280 = arith.subf %276, %279 : vector<8x256xf32>
      %281 = vector.extract_strided_slice %73 {offsets = [8, 0], sizes = [1, 256], strides = [1, 1]} : vector<33x256xf32> to vector<1x256xf32>
      %282 = vector.extract_strided_slice %73 {offsets = [9, 0], sizes = [1, 256], strides = [1, 1]} : vector<33x256xf32> to vector<1x256xf32>
      %283 = vector.broadcast %281 : vector<1x256xf32> to vector<8x256xf32>
      %284 = arith.mulf %199, %283 : vector<8x256xf32>
      %285 = arith.mulf %284, %154 : vector<8x256xf32>
      %286 = vector.broadcast %282 : vector<1x256xf32> to vector<8x256xf32>
      %287 = arith.mulf %205, %286 : vector<8x256xf32>
      %288 = arith.mulf %287, %163 : vector<8x256xf32>
      %289 = arith.subf %285, %288 : vector<8x256xf32>
      %290 = vector.extract_strided_slice %73 {offsets = [9, 0], sizes = [1, 256], strides = [1, 1]} : vector<33x256xf32> to vector<1x256xf32>
      %291 = vector.extract_strided_slice %73 {offsets = [10, 0], sizes = [1, 256], strides = [1, 1]} : vector<33x256xf32> to vector<1x256xf32>
      %292 = vector.broadcast %290 : vector<1x256xf32> to vector<8x256xf32>
      %293 = arith.mulf %202, %292 : vector<8x256xf32>
      %294 = arith.mulf %293, %163 : vector<8x256xf32>
      %295 = vector.broadcast %291 : vector<1x256xf32> to vector<8x256xf32>
      %296 = arith.mulf %208, %295 : vector<8x256xf32>
      %297 = arith.mulf %296, %172 : vector<8x256xf32>
      %298 = arith.subf %294, %297 : vector<8x256xf32>
      %299 = vector.extract_strided_slice %73 {offsets = [11, 0], sizes = [1, 256], strides = [1, 1]} : vector<33x256xf32> to vector<1x256xf32>
      %300 = vector.extract_strided_slice %73 {offsets = [12, 0], sizes = [1, 256], strides = [1, 1]} : vector<33x256xf32> to vector<1x256xf32>
      %301 = vector.broadcast %299 : vector<1x256xf32> to vector<8x256xf32>
      %302 = arith.mulf %175, %301 : vector<8x256xf32>
      %303 = arith.mulf %302, %217 : vector<8x256xf32>
      %304 = vector.broadcast %300 : vector<1x256xf32> to vector<8x256xf32>
      %305 = arith.mulf %184, %304 : vector<8x256xf32>
      %306 = arith.mulf %305, %226 : vector<8x256xf32>
      %307 = arith.subf %303, %306 : vector<8x256xf32>
      %308 = vector.extract_strided_slice %73 {offsets = [12, 0], sizes = [1, 256], strides = [1, 1]} : vector<33x256xf32> to vector<1x256xf32>
      %309 = vector.extract_strided_slice %73 {offsets = [13, 0], sizes = [1, 256], strides = [1, 1]} : vector<33x256xf32> to vector<1x256xf32>
      %310 = vector.broadcast %308 : vector<1x256xf32> to vector<8x256xf32>
      %311 = arith.mulf %178, %310 : vector<8x256xf32>
      %312 = arith.mulf %311, %226 : vector<8x256xf32>
      %313 = vector.broadcast %309 : vector<1x256xf32> to vector<8x256xf32>
      %314 = arith.mulf %187, %313 : vector<8x256xf32>
      %315 = arith.mulf %314, %235 : vector<8x256xf32>
      %316 = arith.subf %312, %315 : vector<8x256xf32>
      %317 = vector.extract_strided_slice %73 {offsets = [13, 0], sizes = [1, 256], strides = [1, 1]} : vector<33x256xf32> to vector<1x256xf32>
      %318 = vector.extract_strided_slice %73 {offsets = [14, 0], sizes = [1, 256], strides = [1, 1]} : vector<33x256xf32> to vector<1x256xf32>
      %319 = vector.broadcast %317 : vector<1x256xf32> to vector<8x256xf32>
      %320 = arith.mulf %181, %319 : vector<8x256xf32>
      %321 = arith.mulf %320, %235 : vector<8x256xf32>
      %322 = vector.broadcast %318 : vector<1x256xf32> to vector<8x256xf32>
      %323 = arith.mulf %190, %322 : vector<8x256xf32>
      %324 = arith.mulf %323, %244 : vector<8x256xf32>
      %325 = arith.subf %321, %324 : vector<8x256xf32>
      %326 = vector.extract_strided_slice %73 {offsets = [14, 0], sizes = [1, 256], strides = [1, 1]} : vector<33x256xf32> to vector<1x256xf32>
      %327 = vector.extract_strided_slice %73 {offsets = [15, 0], sizes = [1, 256], strides = [1, 1]} : vector<33x256xf32> to vector<1x256xf32>
      %328 = vector.broadcast %326 : vector<1x256xf32> to vector<8x256xf32>
      %329 = arith.mulf %184, %328 : vector<8x256xf32>
      %330 = arith.mulf %329, %244 : vector<8x256xf32>
      %331 = vector.broadcast %327 : vector<1x256xf32> to vector<8x256xf32>
      %332 = arith.mulf %193, %331 : vector<8x256xf32>
      %333 = arith.mulf %332, %253 : vector<8x256xf32>
      %334 = arith.subf %330, %333 : vector<8x256xf32>
      %335 = vector.extract_strided_slice %73 {offsets = [15, 0], sizes = [1, 256], strides = [1, 1]} : vector<33x256xf32> to vector<1x256xf32>
      %336 = vector.extract_strided_slice %73 {offsets = [16, 0], sizes = [1, 256], strides = [1, 1]} : vector<33x256xf32> to vector<1x256xf32>
      %337 = vector.broadcast %335 : vector<1x256xf32> to vector<8x256xf32>
      %338 = arith.mulf %187, %337 : vector<8x256xf32>
      %339 = arith.mulf %338, %253 : vector<8x256xf32>
      %340 = vector.broadcast %336 : vector<1x256xf32> to vector<8x256xf32>
      %341 = arith.mulf %196, %340 : vector<8x256xf32>
      %342 = arith.mulf %341, %262 : vector<8x256xf32>
      %343 = arith.subf %339, %342 : vector<8x256xf32>
      %344 = vector.extract_strided_slice %73 {offsets = [16, 0], sizes = [1, 256], strides = [1, 1]} : vector<33x256xf32> to vector<1x256xf32>
      %345 = vector.extract_strided_slice %73 {offsets = [17, 0], sizes = [1, 256], strides = [1, 1]} : vector<33x256xf32> to vector<1x256xf32>
      %346 = vector.broadcast %344 : vector<1x256xf32> to vector<8x256xf32>
      %347 = arith.mulf %190, %346 : vector<8x256xf32>
      %348 = arith.mulf %347, %262 : vector<8x256xf32>
      %349 = vector.broadcast %345 : vector<1x256xf32> to vector<8x256xf32>
      %350 = arith.mulf %199, %349 : vector<8x256xf32>
      %351 = arith.mulf %350, %271 : vector<8x256xf32>
      %352 = arith.subf %348, %351 : vector<8x256xf32>
      %353 = vector.extract_strided_slice %73 {offsets = [17, 0], sizes = [1, 256], strides = [1, 1]} : vector<33x256xf32> to vector<1x256xf32>
      %354 = vector.extract_strided_slice %73 {offsets = [18, 0], sizes = [1, 256], strides = [1, 1]} : vector<33x256xf32> to vector<1x256xf32>
      %355 = vector.broadcast %353 : vector<1x256xf32> to vector<8x256xf32>
      %356 = arith.mulf %193, %355 : vector<8x256xf32>
      %357 = arith.mulf %356, %271 : vector<8x256xf32>
      %358 = vector.broadcast %354 : vector<1x256xf32> to vector<8x256xf32>
      %359 = arith.mulf %202, %358 : vector<8x256xf32>
      %360 = arith.mulf %359, %280 : vector<8x256xf32>
      %361 = arith.subf %357, %360 : vector<8x256xf32>
      %362 = vector.extract_strided_slice %73 {offsets = [18, 0], sizes = [1, 256], strides = [1, 1]} : vector<33x256xf32> to vector<1x256xf32>
      %363 = vector.extract_strided_slice %73 {offsets = [19, 0], sizes = [1, 256], strides = [1, 1]} : vector<33x256xf32> to vector<1x256xf32>
      %364 = vector.broadcast %362 : vector<1x256xf32> to vector<8x256xf32>
      %365 = arith.mulf %196, %364 : vector<8x256xf32>
      %366 = arith.mulf %365, %280 : vector<8x256xf32>
      %367 = vector.broadcast %363 : vector<1x256xf32> to vector<8x256xf32>
      %368 = arith.mulf %205, %367 : vector<8x256xf32>
      %369 = arith.mulf %368, %289 : vector<8x256xf32>
      %370 = arith.subf %366, %369 : vector<8x256xf32>
      %371 = vector.extract_strided_slice %73 {offsets = [19, 0], sizes = [1, 256], strides = [1, 1]} : vector<33x256xf32> to vector<1x256xf32>
      %372 = vector.extract_strided_slice %73 {offsets = [20, 0], sizes = [1, 256], strides = [1, 1]} : vector<33x256xf32> to vector<1x256xf32>
      %373 = vector.broadcast %371 : vector<1x256xf32> to vector<8x256xf32>
      %374 = arith.mulf %199, %373 : vector<8x256xf32>
      %375 = arith.mulf %374, %289 : vector<8x256xf32>
      %376 = vector.broadcast %372 : vector<1x256xf32> to vector<8x256xf32>
      %377 = arith.mulf %208, %376 : vector<8x256xf32>
      %378 = arith.mulf %377, %298 : vector<8x256xf32>
      %379 = arith.subf %375, %378 : vector<8x256xf32>
      %380 = vector.extract_strided_slice %73 {offsets = [22, 0], sizes = [1, 256], strides = [1, 1]} : vector<33x256xf32> to vector<1x256xf32>
      %381 = vector.extract_strided_slice %73 {offsets = [23, 0], sizes = [1, 256], strides = [1, 1]} : vector<33x256xf32> to vector<1x256xf32>
      %382 = vector.broadcast %380 : vector<1x256xf32> to vector<8x256xf32>
      %383 = arith.mulf %175, %382 : vector<8x256xf32>
      %384 = arith.mulf %383, %307 : vector<8x256xf32>
      %385 = vector.broadcast %381 : vector<1x256xf32> to vector<8x256xf32>
      %386 = arith.mulf %187, %385 : vector<8x256xf32>
      %387 = arith.mulf %386, %316 : vector<8x256xf32>
      %388 = arith.subf %384, %387 : vector<8x256xf32>
      %389 = vector.extract_strided_slice %73 {offsets = [23, 0], sizes = [1, 256], strides = [1, 1]} : vector<33x256xf32> to vector<1x256xf32>
      %390 = vector.extract_strided_slice %73 {offsets = [24, 0], sizes = [1, 256], strides = [1, 1]} : vector<33x256xf32> to vector<1x256xf32>
      %391 = vector.broadcast %389 : vector<1x256xf32> to vector<8x256xf32>
      %392 = arith.mulf %178, %391 : vector<8x256xf32>
      %393 = arith.mulf %392, %316 : vector<8x256xf32>
      %394 = vector.broadcast %390 : vector<1x256xf32> to vector<8x256xf32>
      %395 = arith.mulf %190, %394 : vector<8x256xf32>
      %396 = arith.mulf %395, %325 : vector<8x256xf32>
      %397 = arith.subf %393, %396 : vector<8x256xf32>
      %398 = vector.extract_strided_slice %73 {offsets = [24, 0], sizes = [1, 256], strides = [1, 1]} : vector<33x256xf32> to vector<1x256xf32>
      %399 = vector.extract_strided_slice %73 {offsets = [25, 0], sizes = [1, 256], strides = [1, 1]} : vector<33x256xf32> to vector<1x256xf32>
      %400 = vector.broadcast %398 : vector<1x256xf32> to vector<8x256xf32>
      %401 = arith.mulf %181, %400 : vector<8x256xf32>
      %402 = arith.mulf %401, %325 : vector<8x256xf32>
      %403 = vector.broadcast %399 : vector<1x256xf32> to vector<8x256xf32>
      %404 = arith.mulf %193, %403 : vector<8x256xf32>
      %405 = arith.mulf %404, %334 : vector<8x256xf32>
      %406 = arith.subf %402, %405 : vector<8x256xf32>
      %407 = vector.extract_strided_slice %73 {offsets = [25, 0], sizes = [1, 256], strides = [1, 1]} : vector<33x256xf32> to vector<1x256xf32>
      %408 = vector.extract_strided_slice %73 {offsets = [26, 0], sizes = [1, 256], strides = [1, 1]} : vector<33x256xf32> to vector<1x256xf32>
      %409 = vector.broadcast %407 : vector<1x256xf32> to vector<8x256xf32>
      %410 = arith.mulf %184, %409 : vector<8x256xf32>
      %411 = arith.mulf %410, %334 : vector<8x256xf32>
      %412 = vector.broadcast %408 : vector<1x256xf32> to vector<8x256xf32>
      %413 = arith.mulf %196, %412 : vector<8x256xf32>
      %414 = arith.mulf %413, %343 : vector<8x256xf32>
      %415 = arith.subf %411, %414 : vector<8x256xf32>
      %416 = vector.extract_strided_slice %73 {offsets = [26, 0], sizes = [1, 256], strides = [1, 1]} : vector<33x256xf32> to vector<1x256xf32>
      %417 = vector.extract_strided_slice %73 {offsets = [27, 0], sizes = [1, 256], strides = [1, 1]} : vector<33x256xf32> to vector<1x256xf32>
      %418 = vector.broadcast %416 : vector<1x256xf32> to vector<8x256xf32>
      %419 = arith.mulf %187, %418 : vector<8x256xf32>
      %420 = arith.mulf %419, %343 : vector<8x256xf32>
      %421 = vector.broadcast %417 : vector<1x256xf32> to vector<8x256xf32>
      %422 = arith.mulf %199, %421 : vector<8x256xf32>
      %423 = arith.mulf %422, %352 : vector<8x256xf32>
      %424 = arith.subf %420, %423 : vector<8x256xf32>
      %425 = vector.extract_strided_slice %73 {offsets = [27, 0], sizes = [1, 256], strides = [1, 1]} : vector<33x256xf32> to vector<1x256xf32>
      %426 = vector.extract_strided_slice %73 {offsets = [28, 0], sizes = [1, 256], strides = [1, 1]} : vector<33x256xf32> to vector<1x256xf32>
      %427 = vector.broadcast %425 : vector<1x256xf32> to vector<8x256xf32>
      %428 = arith.mulf %190, %427 : vector<8x256xf32>
      %429 = arith.mulf %428, %352 : vector<8x256xf32>
      %430 = vector.broadcast %426 : vector<1x256xf32> to vector<8x256xf32>
      %431 = arith.mulf %202, %430 : vector<8x256xf32>
      %432 = arith.mulf %431, %361 : vector<8x256xf32>
      %433 = arith.subf %429, %432 : vector<8x256xf32>
      %434 = vector.extract_strided_slice %73 {offsets = [28, 0], sizes = [1, 256], strides = [1, 1]} : vector<33x256xf32> to vector<1x256xf32>
      %435 = vector.extract_strided_slice %73 {offsets = [29, 0], sizes = [1, 256], strides = [1, 1]} : vector<33x256xf32> to vector<1x256xf32>
      %436 = vector.broadcast %434 : vector<1x256xf32> to vector<8x256xf32>
      %437 = arith.mulf %193, %436 : vector<8x256xf32>
      %438 = arith.mulf %437, %361 : vector<8x256xf32>
      %439 = vector.broadcast %435 : vector<1x256xf32> to vector<8x256xf32>
      %440 = arith.mulf %205, %439 : vector<8x256xf32>
      %441 = arith.mulf %440, %370 : vector<8x256xf32>
      %442 = arith.subf %438, %441 : vector<8x256xf32>
      %443 = vector.extract_strided_slice %73 {offsets = [29, 0], sizes = [1, 256], strides = [1, 1]} : vector<33x256xf32> to vector<1x256xf32>
      %444 = vector.extract_strided_slice %73 {offsets = [30, 0], sizes = [1, 256], strides = [1, 1]} : vector<33x256xf32> to vector<1x256xf32>
      %445 = vector.broadcast %443 : vector<1x256xf32> to vector<8x256xf32>
      %446 = arith.mulf %196, %445 : vector<8x256xf32>
      %447 = arith.mulf %446, %370 : vector<8x256xf32>
      %448 = vector.broadcast %444 : vector<1x256xf32> to vector<8x256xf32>
      %449 = arith.mulf %208, %448 : vector<8x256xf32>
      %450 = arith.mulf %449, %379 : vector<8x256xf32>
      %451 = arith.subf %447, %450 : vector<8x256xf32>
      %452 = arith.negf %66 : vector<8x256xf32>
      %453 = math.exp %452 : vector<8x256xf32>
      %cst_40 = arith.constant 1.000000e+00 : f32
      %454 = vector.broadcast %cst_40 : f32 to vector<8x256xf32>
      %455 = arith.addf %454, %453 : vector<8x256xf32>
      %456 = arith.divf %454, %455 : vector<8x256xf32>
      %457 = arith.mulf %66, %456 : vector<8x256xf32>
      %458 = tpu.concatenate %388, %397, %406, %415, %424, %433, %442, %451 in 1 : vector<8x256xf32>, vector<8x256xf32>, vector<8x256xf32>, vector<8x256xf32>, vector<8x256xf32>, vector<8x256xf32>, vector<8x256xf32>, vector<8x256xf32> -> vector<8x2048xf32>
      %459 = arith.truncf %458 : vector<8x2048xf32> to vector<8x2048xbf16>
      %460 = arith.truncf %457 : vector<8x256xf32> to vector<8x256xbf16>
      %c0_41 = arith.constant 0 : index
      %c0_42 = arith.constant 0 : index
      %461 = vector.load %arg12[%c0_41, %c0_42] : memref<256x128xbf16, #tpu.memory_space<vmem>>, vector<256x128xbf16>
      %cst_43 = arith.constant dense<0.000000e+00> : vector<8x128xf32>
      %462 = tpu.matmul %460, %461, %cst_43 {dimension_numbers = #tpu.dot_dimension_numbers<[1], [0], [0], [1], [0, 0, 1, 1], [], []>} : vector<8x256xbf16>, vector<256x128xbf16>, vector<8x128xf32> -> vector<8x128xf32>
      %c0_44 = arith.constant 0 : index
      %c0_45 = arith.constant 0 : index
      %463 = vector.load %arg11[%c0_44, %c0_45] : memref<2048x128xbf16, #tpu.memory_space<vmem>>, vector<2048x128xbf16>
      %cst_46 = arith.constant dense<0.000000e+00> : vector<8x128xf32>
      %464 = tpu.matmul %459, %463, %cst_46 {dimension_numbers = #tpu.dot_dimension_numbers<[1], [0], [0], [1], [0, 0, 1, 1], [], []>} : vector<8x2048xbf16>, vector<2048x128xbf16>, vector<8x128xf32> -> vector<8x128xf32>
      %465 = arith.addf %462, %464 : vector<8x128xf32>
      %c0_47 = arith.constant 0 : index
      %c0_48 = arith.constant 0 : index
      %466 = vector.load %arg13[%c0_47, %c0_48] : memref<12x128xf32, #tpu.memory_space<vmem>>, vector<12x128xf32>
      %c0_49 = arith.constant 0 : index
      %c0_50 = arith.constant 0 : index
      %467 = vector.load %arg14[%c0_49, %c0_50] : memref<33x128xf32, #tpu.memory_space<vmem>>, vector<33x128xf32>
      %468 = vector.extract_strided_slice %466 {offsets = [0, 0], sizes = [1, 128], strides = [1, 1]} : vector<12x128xf32> to vector<1x128xf32>
      %469 = vector.broadcast %468 : vector<1x128xf32> to vector<8x128xf32>
      %470 = arith.cmpf oge, %465, %469 : vector<8x128xf32>
      %471 = vector.extract_strided_slice %466 {offsets = [1, 0], sizes = [1, 128], strides = [1, 1]} : vector<12x128xf32> to vector<1x128xf32>
      %472 = vector.broadcast %471 : vector<1x128xf32> to vector<8x128xf32>
      %473 = arith.cmpf olt, %465, %472 : vector<8x128xf32>
      %474 = arith.andi %470, %473 : vector<8x128xi1>
      %475 = arith.extui %474 : vector<8x128xi1> to vector<8x128xi32>
      %476 = arith.sitofp %475 : vector<8x128xi32> to vector<8x128xf32>
      %477 = vector.extract_strided_slice %466 {offsets = [1, 0], sizes = [1, 128], strides = [1, 1]} : vector<12x128xf32> to vector<1x128xf32>
      %478 = vector.broadcast %477 : vector<1x128xf32> to vector<8x128xf32>
      %479 = arith.cmpf oge, %465, %478 : vector<8x128xf32>
      %480 = vector.extract_strided_slice %466 {offsets = [2, 0], sizes = [1, 128], strides = [1, 1]} : vector<12x128xf32> to vector<1x128xf32>
      %481 = vector.broadcast %480 : vector<1x128xf32> to vector<8x128xf32>
      %482 = arith.cmpf olt, %465, %481 : vector<8x128xf32>
      %483 = arith.andi %479, %482 : vector<8x128xi1>
      %484 = arith.extui %483 : vector<8x128xi1> to vector<8x128xi32>
      %485 = arith.sitofp %484 : vector<8x128xi32> to vector<8x128xf32>
      %486 = vector.extract_strided_slice %466 {offsets = [2, 0], sizes = [1, 128], strides = [1, 1]} : vector<12x128xf32> to vector<1x128xf32>
      %487 = vector.broadcast %486 : vector<1x128xf32> to vector<8x128xf32>
      %488 = arith.cmpf oge, %465, %487 : vector<8x128xf32>
      %489 = vector.extract_strided_slice %466 {offsets = [3, 0], sizes = [1, 128], strides = [1, 1]} : vector<12x128xf32> to vector<1x128xf32>
      %490 = vector.broadcast %489 : vector<1x128xf32> to vector<8x128xf32>
      %491 = arith.cmpf olt, %465, %490 : vector<8x128xf32>
      %492 = arith.andi %488, %491 : vector<8x128xi1>
      %493 = arith.extui %492 : vector<8x128xi1> to vector<8x128xi32>
      %494 = arith.sitofp %493 : vector<8x128xi32> to vector<8x128xf32>
      %495 = vector.extract_strided_slice %466 {offsets = [3, 0], sizes = [1, 128], strides = [1, 1]} : vector<12x128xf32> to vector<1x128xf32>
      %496 = vector.broadcast %495 : vector<1x128xf32> to vector<8x128xf32>
      %497 = arith.cmpf oge, %465, %496 : vector<8x128xf32>
      %498 = vector.extract_strided_slice %466 {offsets = [4, 0], sizes = [1, 128], strides = [1, 1]} : vector<12x128xf32> to vector<1x128xf32>
      %499 = vector.broadcast %498 : vector<1x128xf32> to vector<8x128xf32>
      %500 = arith.cmpf olt, %465, %499 : vector<8x128xf32>
      %501 = arith.andi %497, %500 : vector<8x128xi1>
      %502 = arith.extui %501 : vector<8x128xi1> to vector<8x128xi32>
      %503 = arith.sitofp %502 : vector<8x128xi32> to vector<8x128xf32>
      %504 = vector.extract_strided_slice %466 {offsets = [4, 0], sizes = [1, 128], strides = [1, 1]} : vector<12x128xf32> to vector<1x128xf32>
      %505 = vector.broadcast %504 : vector<1x128xf32> to vector<8x128xf32>
      %506 = arith.cmpf oge, %465, %505 : vector<8x128xf32>
      %507 = vector.extract_strided_slice %466 {offsets = [5, 0], sizes = [1, 128], strides = [1, 1]} : vector<12x128xf32> to vector<1x128xf32>
      %508 = vector.broadcast %507 : vector<1x128xf32> to vector<8x128xf32>
      %509 = arith.cmpf olt, %465, %508 : vector<8x128xf32>
      %510 = arith.andi %506, %509 : vector<8x128xi1>
      %511 = arith.extui %510 : vector<8x128xi1> to vector<8x128xi32>
      %512 = arith.sitofp %511 : vector<8x128xi32> to vector<8x128xf32>
      %513 = vector.extract_strided_slice %466 {offsets = [5, 0], sizes = [1, 128], strides = [1, 1]} : vector<12x128xf32> to vector<1x128xf32>
      %514 = vector.broadcast %513 : vector<1x128xf32> to vector<8x128xf32>
      %515 = arith.cmpf oge, %465, %514 : vector<8x128xf32>
      %516 = vector.extract_strided_slice %466 {offsets = [6, 0], sizes = [1, 128], strides = [1, 1]} : vector<12x128xf32> to vector<1x128xf32>
      %517 = vector.broadcast %516 : vector<1x128xf32> to vector<8x128xf32>
      %518 = arith.cmpf olt, %465, %517 : vector<8x128xf32>
      %519 = arith.andi %515, %518 : vector<8x128xi1>
      %520 = arith.extui %519 : vector<8x128xi1> to vector<8x128xi32>
      %521 = arith.sitofp %520 : vector<8x128xi32> to vector<8x128xf32>
      %522 = vector.extract_strided_slice %466 {offsets = [6, 0], sizes = [1, 128], strides = [1, 1]} : vector<12x128xf32> to vector<1x128xf32>
      %523 = vector.broadcast %522 : vector<1x128xf32> to vector<8x128xf32>
      %524 = arith.cmpf oge, %465, %523 : vector<8x128xf32>
      %525 = vector.extract_strided_slice %466 {offsets = [7, 0], sizes = [1, 128], strides = [1, 1]} : vector<12x128xf32> to vector<1x128xf32>
      %526 = vector.broadcast %525 : vector<1x128xf32> to vector<8x128xf32>
      %527 = arith.cmpf olt, %465, %526 : vector<8x128xf32>
      %528 = arith.andi %524, %527 : vector<8x128xi1>
      %529 = arith.extui %528 : vector<8x128xi1> to vector<8x128xi32>
      %530 = arith.sitofp %529 : vector<8x128xi32> to vector<8x128xf32>
      %531 = vector.extract_strided_slice %466 {offsets = [7, 0], sizes = [1, 128], strides = [1, 1]} : vector<12x128xf32> to vector<1x128xf32>
      %532 = vector.broadcast %531 : vector<1x128xf32> to vector<8x128xf32>
      %533 = arith.cmpf oge, %465, %532 : vector<8x128xf32>
      %534 = vector.extract_strided_slice %466 {offsets = [8, 0], sizes = [1, 128], strides = [1, 1]} : vector<12x128xf32> to vector<1x128xf32>
      %535 = vector.broadcast %534 : vector<1x128xf32> to vector<8x128xf32>
      %536 = arith.cmpf olt, %465, %535 : vector<8x128xf32>
      %537 = arith.andi %533, %536 : vector<8x128xi1>
      %538 = arith.extui %537 : vector<8x128xi1> to vector<8x128xi32>
      %539 = arith.sitofp %538 : vector<8x128xi32> to vector<8x128xf32>
      %540 = vector.extract_strided_slice %466 {offsets = [8, 0], sizes = [1, 128], strides = [1, 1]} : vector<12x128xf32> to vector<1x128xf32>
      %541 = vector.broadcast %540 : vector<1x128xf32> to vector<8x128xf32>
      %542 = arith.cmpf oge, %465, %541 : vector<8x128xf32>
      %543 = vector.extract_strided_slice %466 {offsets = [9, 0], sizes = [1, 128], strides = [1, 1]} : vector<12x128xf32> to vector<1x128xf32>
      %544 = vector.broadcast %543 : vector<1x128xf32> to vector<8x128xf32>
      %545 = arith.cmpf olt, %465, %544 : vector<8x128xf32>
      %546 = arith.andi %542, %545 : vector<8x128xi1>
      %547 = arith.extui %546 : vector<8x128xi1> to vector<8x128xi32>
      %548 = arith.sitofp %547 : vector<8x128xi32> to vector<8x128xf32>
      %549 = vector.extract_strided_slice %466 {offsets = [9, 0], sizes = [1, 128], strides = [1, 1]} : vector<12x128xf32> to vector<1x128xf32>
      %550 = vector.broadcast %549 : vector<1x128xf32> to vector<8x128xf32>
      %551 = arith.cmpf oge, %465, %550 : vector<8x128xf32>
      %552 = vector.extract_strided_slice %466 {offsets = [10, 0], sizes = [1, 128], strides = [1, 1]} : vector<12x128xf32> to vector<1x128xf32>
      %553 = vector.broadcast %552 : vector<1x128xf32> to vector<8x128xf32>
      %554 = arith.cmpf olt, %465, %553 : vector<8x128xf32>
      %555 = arith.andi %551, %554 : vector<8x128xi1>
      %556 = arith.extui %555 : vector<8x128xi1> to vector<8x128xi32>
      %557 = arith.sitofp %556 : vector<8x128xi32> to vector<8x128xf32>
      %558 = vector.extract_strided_slice %466 {offsets = [10, 0], sizes = [1, 128], strides = [1, 1]} : vector<12x128xf32> to vector<1x128xf32>
      %559 = vector.broadcast %558 : vector<1x128xf32> to vector<8x128xf32>
      %560 = arith.cmpf oge, %465, %559 : vector<8x128xf32>
      %561 = vector.extract_strided_slice %466 {offsets = [11, 0], sizes = [1, 128], strides = [1, 1]} : vector<12x128xf32> to vector<1x128xf32>
      %562 = vector.broadcast %561 : vector<1x128xf32> to vector<8x128xf32>
      %563 = arith.cmpf olt, %465, %562 : vector<8x128xf32>
      %564 = arith.andi %560, %563 : vector<8x128xi1>
      %565 = arith.extui %564 : vector<8x128xi1> to vector<8x128xi32>
      %566 = arith.sitofp %565 : vector<8x128xi32> to vector<8x128xf32>
      %567 = vector.extract_strided_slice %466 {offsets = [0, 0], sizes = [1, 128], strides = [1, 1]} : vector<12x128xf32> to vector<1x128xf32>
      %568 = vector.broadcast %567 : vector<1x128xf32> to vector<8x128xf32>
      %569 = arith.subf %465, %568 : vector<8x128xf32>
      %570 = vector.extract_strided_slice %466 {offsets = [1, 0], sizes = [1, 128], strides = [1, 1]} : vector<12x128xf32> to vector<1x128xf32>
      %571 = vector.broadcast %570 : vector<1x128xf32> to vector<8x128xf32>
      %572 = arith.subf %465, %571 : vector<8x128xf32>
      %573 = vector.extract_strided_slice %466 {offsets = [2, 0], sizes = [1, 128], strides = [1, 1]} : vector<12x128xf32> to vector<1x128xf32>
      %574 = vector.broadcast %573 : vector<1x128xf32> to vector<8x128xf32>
      %575 = arith.subf %465, %574 : vector<8x128xf32>
      %576 = vector.extract_strided_slice %466 {offsets = [3, 0], sizes = [1, 128], strides = [1, 1]} : vector<12x128xf32> to vector<1x128xf32>
      %577 = vector.broadcast %576 : vector<1x128xf32> to vector<8x128xf32>
      %578 = arith.subf %465, %577 : vector<8x128xf32>
      %579 = vector.extract_strided_slice %466 {offsets = [4, 0], sizes = [1, 128], strides = [1, 1]} : vector<12x128xf32> to vector<1x128xf32>
      %580 = vector.broadcast %579 : vector<1x128xf32> to vector<8x128xf32>
      %581 = arith.subf %465, %580 : vector<8x128xf32>
      %582 = vector.extract_strided_slice %466 {offsets = [5, 0], sizes = [1, 128], strides = [1, 1]} : vector<12x128xf32> to vector<1x128xf32>
      %583 = vector.broadcast %582 : vector<1x128xf32> to vector<8x128xf32>
      %584 = arith.subf %465, %583 : vector<8x128xf32>
      %585 = vector.extract_strided_slice %466 {offsets = [6, 0], sizes = [1, 128], strides = [1, 1]} : vector<12x128xf32> to vector<1x128xf32>
      %586 = vector.broadcast %585 : vector<1x128xf32> to vector<8x128xf32>
      %587 = arith.subf %465, %586 : vector<8x128xf32>
      %588 = vector.extract_strided_slice %466 {offsets = [7, 0], sizes = [1, 128], strides = [1, 1]} : vector<12x128xf32> to vector<1x128xf32>
      %589 = vector.broadcast %588 : vector<1x128xf32> to vector<8x128xf32>
      %590 = arith.subf %465, %589 : vector<8x128xf32>
      %591 = vector.extract_strided_slice %466 {offsets = [8, 0], sizes = [1, 128], strides = [1, 1]} : vector<12x128xf32> to vector<1x128xf32>
      %592 = vector.broadcast %591 : vector<1x128xf32> to vector<8x128xf32>
      %593 = arith.subf %465, %592 : vector<8x128xf32>
      %594 = vector.extract_strided_slice %466 {offsets = [9, 0], sizes = [1, 128], strides = [1, 1]} : vector<12x128xf32> to vector<1x128xf32>
      %595 = vector.broadcast %594 : vector<1x128xf32> to vector<8x128xf32>
      %596 = arith.subf %465, %595 : vector<8x128xf32>
      %597 = vector.extract_strided_slice %466 {offsets = [10, 0], sizes = [1, 128], strides = [1, 1]} : vector<12x128xf32> to vector<1x128xf32>
      %598 = vector.broadcast %597 : vector<1x128xf32> to vector<8x128xf32>
      %599 = arith.subf %465, %598 : vector<8x128xf32>
      %600 = vector.extract_strided_slice %466 {offsets = [11, 0], sizes = [1, 128], strides = [1, 1]} : vector<12x128xf32> to vector<1x128xf32>
      %601 = vector.broadcast %600 : vector<1x128xf32> to vector<8x128xf32>
      %602 = arith.subf %465, %601 : vector<8x128xf32>
      %603 = vector.extract_strided_slice %467 {offsets = [0, 0], sizes = [1, 128], strides = [1, 1]} : vector<33x128xf32> to vector<1x128xf32>
      %604 = vector.extract_strided_slice %467 {offsets = [1, 0], sizes = [1, 128], strides = [1, 1]} : vector<33x128xf32> to vector<1x128xf32>
      %605 = vector.broadcast %603 : vector<1x128xf32> to vector<8x128xf32>
      %606 = arith.mulf %569, %605 : vector<8x128xf32>
      %607 = arith.mulf %606, %476 : vector<8x128xf32>
      %608 = vector.broadcast %604 : vector<1x128xf32> to vector<8x128xf32>
      %609 = arith.mulf %575, %608 : vector<8x128xf32>
      %610 = arith.mulf %609, %485 : vector<8x128xf32>
      %611 = arith.subf %607, %610 : vector<8x128xf32>
      %612 = vector.extract_strided_slice %467 {offsets = [1, 0], sizes = [1, 128], strides = [1, 1]} : vector<33x128xf32> to vector<1x128xf32>
      %613 = vector.extract_strided_slice %467 {offsets = [2, 0], sizes = [1, 128], strides = [1, 1]} : vector<33x128xf32> to vector<1x128xf32>
      %614 = vector.broadcast %612 : vector<1x128xf32> to vector<8x128xf32>
      %615 = arith.mulf %572, %614 : vector<8x128xf32>
      %616 = arith.mulf %615, %485 : vector<8x128xf32>
      %617 = vector.broadcast %613 : vector<1x128xf32> to vector<8x128xf32>
      %618 = arith.mulf %578, %617 : vector<8x128xf32>
      %619 = arith.mulf %618, %494 : vector<8x128xf32>
      %620 = arith.subf %616, %619 : vector<8x128xf32>
      %621 = vector.extract_strided_slice %467 {offsets = [2, 0], sizes = [1, 128], strides = [1, 1]} : vector<33x128xf32> to vector<1x128xf32>
      %622 = vector.extract_strided_slice %467 {offsets = [3, 0], sizes = [1, 128], strides = [1, 1]} : vector<33x128xf32> to vector<1x128xf32>
      %623 = vector.broadcast %621 : vector<1x128xf32> to vector<8x128xf32>
      %624 = arith.mulf %575, %623 : vector<8x128xf32>
      %625 = arith.mulf %624, %494 : vector<8x128xf32>
      %626 = vector.broadcast %622 : vector<1x128xf32> to vector<8x128xf32>
      %627 = arith.mulf %581, %626 : vector<8x128xf32>
      %628 = arith.mulf %627, %503 : vector<8x128xf32>
      %629 = arith.subf %625, %628 : vector<8x128xf32>
      %630 = vector.extract_strided_slice %467 {offsets = [3, 0], sizes = [1, 128], strides = [1, 1]} : vector<33x128xf32> to vector<1x128xf32>
      %631 = vector.extract_strided_slice %467 {offsets = [4, 0], sizes = [1, 128], strides = [1, 1]} : vector<33x128xf32> to vector<1x128xf32>
      %632 = vector.broadcast %630 : vector<1x128xf32> to vector<8x128xf32>
      %633 = arith.mulf %578, %632 : vector<8x128xf32>
      %634 = arith.mulf %633, %503 : vector<8x128xf32>
      %635 = vector.broadcast %631 : vector<1x128xf32> to vector<8x128xf32>
      %636 = arith.mulf %584, %635 : vector<8x128xf32>
      %637 = arith.mulf %636, %512 : vector<8x128xf32>
      %638 = arith.subf %634, %637 : vector<8x128xf32>
      %639 = vector.extract_strided_slice %467 {offsets = [4, 0], sizes = [1, 128], strides = [1, 1]} : vector<33x128xf32> to vector<1x128xf32>
      %640 = vector.extract_strided_slice %467 {offsets = [5, 0], sizes = [1, 128], strides = [1, 1]} : vector<33x128xf32> to vector<1x128xf32>
      %641 = vector.broadcast %639 : vector<1x128xf32> to vector<8x128xf32>
      %642 = arith.mulf %581, %641 : vector<8x128xf32>
      %643 = arith.mulf %642, %512 : vector<8x128xf32>
      %644 = vector.broadcast %640 : vector<1x128xf32> to vector<8x128xf32>
      %645 = arith.mulf %587, %644 : vector<8x128xf32>
      %646 = arith.mulf %645, %521 : vector<8x128xf32>
      %647 = arith.subf %643, %646 : vector<8x128xf32>
      %648 = vector.extract_strided_slice %467 {offsets = [5, 0], sizes = [1, 128], strides = [1, 1]} : vector<33x128xf32> to vector<1x128xf32>
      %649 = vector.extract_strided_slice %467 {offsets = [6, 0], sizes = [1, 128], strides = [1, 1]} : vector<33x128xf32> to vector<1x128xf32>
      %650 = vector.broadcast %648 : vector<1x128xf32> to vector<8x128xf32>
      %651 = arith.mulf %584, %650 : vector<8x128xf32>
      %652 = arith.mulf %651, %521 : vector<8x128xf32>
      %653 = vector.broadcast %649 : vector<1x128xf32> to vector<8x128xf32>
      %654 = arith.mulf %590, %653 : vector<8x128xf32>
      %655 = arith.mulf %654, %530 : vector<8x128xf32>
      %656 = arith.subf %652, %655 : vector<8x128xf32>
      %657 = vector.extract_strided_slice %467 {offsets = [6, 0], sizes = [1, 128], strides = [1, 1]} : vector<33x128xf32> to vector<1x128xf32>
      %658 = vector.extract_strided_slice %467 {offsets = [7, 0], sizes = [1, 128], strides = [1, 1]} : vector<33x128xf32> to vector<1x128xf32>
      %659 = vector.broadcast %657 : vector<1x128xf32> to vector<8x128xf32>
      %660 = arith.mulf %587, %659 : vector<8x128xf32>
      %661 = arith.mulf %660, %530 : vector<8x128xf32>
      %662 = vector.broadcast %658 : vector<1x128xf32> to vector<8x128xf32>
      %663 = arith.mulf %593, %662 : vector<8x128xf32>
      %664 = arith.mulf %663, %539 : vector<8x128xf32>
      %665 = arith.subf %661, %664 : vector<8x128xf32>
      %666 = vector.extract_strided_slice %467 {offsets = [7, 0], sizes = [1, 128], strides = [1, 1]} : vector<33x128xf32> to vector<1x128xf32>
      %667 = vector.extract_strided_slice %467 {offsets = [8, 0], sizes = [1, 128], strides = [1, 1]} : vector<33x128xf32> to vector<1x128xf32>
      %668 = vector.broadcast %666 : vector<1x128xf32> to vector<8x128xf32>
      %669 = arith.mulf %590, %668 : vector<8x128xf32>
      %670 = arith.mulf %669, %539 : vector<8x128xf32>
      %671 = vector.broadcast %667 : vector<1x128xf32> to vector<8x128xf32>
      %672 = arith.mulf %596, %671 : vector<8x128xf32>
      %673 = arith.mulf %672, %548 : vector<8x128xf32>
      %674 = arith.subf %670, %673 : vector<8x128xf32>
      %675 = vector.extract_strided_slice %467 {offsets = [8, 0], sizes = [1, 128], strides = [1, 1]} : vector<33x128xf32> to vector<1x128xf32>
      %676 = vector.extract_strided_slice %467 {offsets = [9, 0], sizes = [1, 128], strides = [1, 1]} : vector<33x128xf32> to vector<1x128xf32>
      %677 = vector.broadcast %675 : vector<1x128xf32> to vector<8x128xf32>
      %678 = arith.mulf %593, %677 : vector<8x128xf32>
      %679 = arith.mulf %678, %548 : vector<8x128xf32>
      %680 = vector.broadcast %676 : vector<1x128xf32> to vector<8x128xf32>
      %681 = arith.mulf %599, %680 : vector<8x128xf32>
      %682 = arith.mulf %681, %557 : vector<8x128xf32>
      %683 = arith.subf %679, %682 : vector<8x128xf32>
      %684 = vector.extract_strided_slice %467 {offsets = [9, 0], sizes = [1, 128], strides = [1, 1]} : vector<33x128xf32> to vector<1x128xf32>
      %685 = vector.extract_strided_slice %467 {offsets = [10, 0], sizes = [1, 128], strides = [1, 1]} : vector<33x128xf32> to vector<1x128xf32>
      %686 = vector.broadcast %684 : vector<1x128xf32> to vector<8x128xf32>
      %687 = arith.mulf %596, %686 : vector<8x128xf32>
      %688 = arith.mulf %687, %557 : vector<8x128xf32>
      %689 = vector.broadcast %685 : vector<1x128xf32> to vector<8x128xf32>
      %690 = arith.mulf %602, %689 : vector<8x128xf32>
      %691 = arith.mulf %690, %566 : vector<8x128xf32>
      %692 = arith.subf %688, %691 : vector<8x128xf32>
      %693 = vector.extract_strided_slice %467 {offsets = [11, 0], sizes = [1, 128], strides = [1, 1]} : vector<33x128xf32> to vector<1x128xf32>
      %694 = vector.extract_strided_slice %467 {offsets = [12, 0], sizes = [1, 128], strides = [1, 1]} : vector<33x128xf32> to vector<1x128xf32>
      %695 = vector.broadcast %693 : vector<1x128xf32> to vector<8x128xf32>
      %696 = arith.mulf %569, %695 : vector<8x128xf32>
      %697 = arith.mulf %696, %611 : vector<8x128xf32>
      %698 = vector.broadcast %694 : vector<1x128xf32> to vector<8x128xf32>
      %699 = arith.mulf %578, %698 : vector<8x128xf32>
      %700 = arith.mulf %699, %620 : vector<8x128xf32>
      %701 = arith.subf %697, %700 : vector<8x128xf32>
      %702 = vector.extract_strided_slice %467 {offsets = [12, 0], sizes = [1, 128], strides = [1, 1]} : vector<33x128xf32> to vector<1x128xf32>
      %703 = vector.extract_strided_slice %467 {offsets = [13, 0], sizes = [1, 128], strides = [1, 1]} : vector<33x128xf32> to vector<1x128xf32>
      %704 = vector.broadcast %702 : vector<1x128xf32> to vector<8x128xf32>
      %705 = arith.mulf %572, %704 : vector<8x128xf32>
      %706 = arith.mulf %705, %620 : vector<8x128xf32>
      %707 = vector.broadcast %703 : vector<1x128xf32> to vector<8x128xf32>
      %708 = arith.mulf %581, %707 : vector<8x128xf32>
      %709 = arith.mulf %708, %629 : vector<8x128xf32>
      %710 = arith.subf %706, %709 : vector<8x128xf32>
      %711 = vector.extract_strided_slice %467 {offsets = [13, 0], sizes = [1, 128], strides = [1, 1]} : vector<33x128xf32> to vector<1x128xf32>
      %712 = vector.extract_strided_slice %467 {offsets = [14, 0], sizes = [1, 128], strides = [1, 1]} : vector<33x128xf32> to vector<1x128xf32>
      %713 = vector.broadcast %711 : vector<1x128xf32> to vector<8x128xf32>
      %714 = arith.mulf %575, %713 : vector<8x128xf32>
      %715 = arith.mulf %714, %629 : vector<8x128xf32>
      %716 = vector.broadcast %712 : vector<1x128xf32> to vector<8x128xf32>
      %717 = arith.mulf %584, %716 : vector<8x128xf32>
      %718 = arith.mulf %717, %638 : vector<8x128xf32>
      %719 = arith.subf %715, %718 : vector<8x128xf32>
      %720 = vector.extract_strided_slice %467 {offsets = [14, 0], sizes = [1, 128], strides = [1, 1]} : vector<33x128xf32> to vector<1x128xf32>
      %721 = vector.extract_strided_slice %467 {offsets = [15, 0], sizes = [1, 128], strides = [1, 1]} : vector<33x128xf32> to vector<1x128xf32>
      %722 = vector.broadcast %720 : vector<1x128xf32> to vector<8x128xf32>
      %723 = arith.mulf %578, %722 : vector<8x128xf32>
      %724 = arith.mulf %723, %638 : vector<8x128xf32>
      %725 = vector.broadcast %721 : vector<1x128xf32> to vector<8x128xf32>
      %726 = arith.mulf %587, %725 : vector<8x128xf32>
      %727 = arith.mulf %726, %647 : vector<8x128xf32>
      %728 = arith.subf %724, %727 : vector<8x128xf32>
      %729 = vector.extract_strided_slice %467 {offsets = [15, 0], sizes = [1, 128], strides = [1, 1]} : vector<33x128xf32> to vector<1x128xf32>
      %730 = vector.extract_strided_slice %467 {offsets = [16, 0], sizes = [1, 128], strides = [1, 1]} : vector<33x128xf32> to vector<1x128xf32>
      %731 = vector.broadcast %729 : vector<1x128xf32> to vector<8x128xf32>
      %732 = arith.mulf %581, %731 : vector<8x128xf32>
      %733 = arith.mulf %732, %647 : vector<8x128xf32>
      %734 = vector.broadcast %730 : vector<1x128xf32> to vector<8x128xf32>
      %735 = arith.mulf %590, %734 : vector<8x128xf32>
      %736 = arith.mulf %735, %656 : vector<8x128xf32>
      %737 = arith.subf %733, %736 : vector<8x128xf32>
      %738 = vector.extract_strided_slice %467 {offsets = [16, 0], sizes = [1, 128], strides = [1, 1]} : vector<33x128xf32> to vector<1x128xf32>
      %739 = vector.extract_strided_slice %467 {offsets = [17, 0], sizes = [1, 128], strides = [1, 1]} : vector<33x128xf32> to vector<1x128xf32>
      %740 = vector.broadcast %738 : vector<1x128xf32> to vector<8x128xf32>
      %741 = arith.mulf %584, %740 : vector<8x128xf32>
      %742 = arith.mulf %741, %656 : vector<8x128xf32>
      %743 = vector.broadcast %739 : vector<1x128xf32> to vector<8x128xf32>
      %744 = arith.mulf %593, %743 : vector<8x128xf32>
      %745 = arith.mulf %744, %665 : vector<8x128xf32>
      %746 = arith.subf %742, %745 : vector<8x128xf32>
      %747 = vector.extract_strided_slice %467 {offsets = [17, 0], sizes = [1, 128], strides = [1, 1]} : vector<33x128xf32> to vector<1x128xf32>
      %748 = vector.extract_strided_slice %467 {offsets = [18, 0], sizes = [1, 128], strides = [1, 1]} : vector<33x128xf32> to vector<1x128xf32>
      %749 = vector.broadcast %747 : vector<1x128xf32> to vector<8x128xf32>
      %750 = arith.mulf %587, %749 : vector<8x128xf32>
      %751 = arith.mulf %750, %665 : vector<8x128xf32>
      %752 = vector.broadcast %748 : vector<1x128xf32> to vector<8x128xf32>
      %753 = arith.mulf %596, %752 : vector<8x128xf32>
      %754 = arith.mulf %753, %674 : vector<8x128xf32>
      %755 = arith.subf %751, %754 : vector<8x128xf32>
      %756 = vector.extract_strided_slice %467 {offsets = [18, 0], sizes = [1, 128], strides = [1, 1]} : vector<33x128xf32> to vector<1x128xf32>
      %757 = vector.extract_strided_slice %467 {offsets = [19, 0], sizes = [1, 128], strides = [1, 1]} : vector<33x128xf32> to vector<1x128xf32>
      %758 = vector.broadcast %756 : vector<1x128xf32> to vector<8x128xf32>
      %759 = arith.mulf %590, %758 : vector<8x128xf32>
      %760 = arith.mulf %759, %674 : vector<8x128xf32>
      %761 = vector.broadcast %757 : vector<1x128xf32> to vector<8x128xf32>
      %762 = arith.mulf %599, %761 : vector<8x128xf32>
      %763 = arith.mulf %762, %683 : vector<8x128xf32>
      %764 = arith.subf %760, %763 : vector<8x128xf32>
      %765 = vector.extract_strided_slice %467 {offsets = [19, 0], sizes = [1, 128], strides = [1, 1]} : vector<33x128xf32> to vector<1x128xf32>
      %766 = vector.extract_strided_slice %467 {offsets = [20, 0], sizes = [1, 128], strides = [1, 1]} : vector<33x128xf32> to vector<1x128xf32>
      %767 = vector.broadcast %765 : vector<1x128xf32> to vector<8x128xf32>
      %768 = arith.mulf %593, %767 : vector<8x128xf32>
      %769 = arith.mulf %768, %683 : vector<8x128xf32>
      %770 = vector.broadcast %766 : vector<1x128xf32> to vector<8x128xf32>
      %771 = arith.mulf %602, %770 : vector<8x128xf32>
      %772 = arith.mulf %771, %692 : vector<8x128xf32>
      %773 = arith.subf %769, %772 : vector<8x128xf32>
      %774 = vector.extract_strided_slice %467 {offsets = [22, 0], sizes = [1, 128], strides = [1, 1]} : vector<33x128xf32> to vector<1x128xf32>
      %775 = vector.extract_strided_slice %467 {offsets = [23, 0], sizes = [1, 128], strides = [1, 1]} : vector<33x128xf32> to vector<1x128xf32>
      %776 = vector.broadcast %774 : vector<1x128xf32> to vector<8x128xf32>
      %777 = arith.mulf %569, %776 : vector<8x128xf32>
      %778 = arith.mulf %777, %701 : vector<8x128xf32>
      %779 = vector.broadcast %775 : vector<1x128xf32> to vector<8x128xf32>
      %780 = arith.mulf %581, %779 : vector<8x128xf32>
      %781 = arith.mulf %780, %710 : vector<8x128xf32>
      %782 = arith.subf %778, %781 : vector<8x128xf32>
      %783 = vector.extract_strided_slice %467 {offsets = [23, 0], sizes = [1, 128], strides = [1, 1]} : vector<33x128xf32> to vector<1x128xf32>
      %784 = vector.extract_strided_slice %467 {offsets = [24, 0], sizes = [1, 128], strides = [1, 1]} : vector<33x128xf32> to vector<1x128xf32>
      %785 = vector.broadcast %783 : vector<1x128xf32> to vector<8x128xf32>
      %786 = arith.mulf %572, %785 : vector<8x128xf32>
      %787 = arith.mulf %786, %710 : vector<8x128xf32>
      %788 = vector.broadcast %784 : vector<1x128xf32> to vector<8x128xf32>
      %789 = arith.mulf %584, %788 : vector<8x128xf32>
      %790 = arith.mulf %789, %719 : vector<8x128xf32>
      %791 = arith.subf %787, %790 : vector<8x128xf32>
      %792 = vector.extract_strided_slice %467 {offsets = [24, 0], sizes = [1, 128], strides = [1, 1]} : vector<33x128xf32> to vector<1x128xf32>
      %793 = vector.extract_strided_slice %467 {offsets = [25, 0], sizes = [1, 128], strides = [1, 1]} : vector<33x128xf32> to vector<1x128xf32>
      %794 = vector.broadcast %792 : vector<1x128xf32> to vector<8x128xf32>
      %795 = arith.mulf %575, %794 : vector<8x128xf32>
      %796 = arith.mulf %795, %719 : vector<8x128xf32>
      %797 = vector.broadcast %793 : vector<1x128xf32> to vector<8x128xf32>
      %798 = arith.mulf %587, %797 : vector<8x128xf32>
      %799 = arith.mulf %798, %728 : vector<8x128xf32>
      %800 = arith.subf %796, %799 : vector<8x128xf32>
      %801 = vector.extract_strided_slice %467 {offsets = [25, 0], sizes = [1, 128], strides = [1, 1]} : vector<33x128xf32> to vector<1x128xf32>
      %802 = vector.extract_strided_slice %467 {offsets = [26, 0], sizes = [1, 128], strides = [1, 1]} : vector<33x128xf32> to vector<1x128xf32>
      %803 = vector.broadcast %801 : vector<1x128xf32> to vector<8x128xf32>
      %804 = arith.mulf %578, %803 : vector<8x128xf32>
      %805 = arith.mulf %804, %728 : vector<8x128xf32>
      %806 = vector.broadcast %802 : vector<1x128xf32> to vector<8x128xf32>
      %807 = arith.mulf %590, %806 : vector<8x128xf32>
      %808 = arith.mulf %807, %737 : vector<8x128xf32>
      %809 = arith.subf %805, %808 : vector<8x128xf32>
      %810 = vector.extract_strided_slice %467 {offsets = [26, 0], sizes = [1, 128], strides = [1, 1]} : vector<33x128xf32> to vector<1x128xf32>
      %811 = vector.extract_strided_slice %467 {offsets = [27, 0], sizes = [1, 128], strides = [1, 1]} : vector<33x128xf32> to vector<1x128xf32>
      %812 = vector.broadcast %810 : vector<1x128xf32> to vector<8x128xf32>
      %813 = arith.mulf %581, %812 : vector<8x128xf32>
      %814 = arith.mulf %813, %737 : vector<8x128xf32>
      %815 = vector.broadcast %811 : vector<1x128xf32> to vector<8x128xf32>
      %816 = arith.mulf %593, %815 : vector<8x128xf32>
      %817 = arith.mulf %816, %746 : vector<8x128xf32>
      %818 = arith.subf %814, %817 : vector<8x128xf32>
      %819 = vector.extract_strided_slice %467 {offsets = [27, 0], sizes = [1, 128], strides = [1, 1]} : vector<33x128xf32> to vector<1x128xf32>
      %820 = vector.extract_strided_slice %467 {offsets = [28, 0], sizes = [1, 128], strides = [1, 1]} : vector<33x128xf32> to vector<1x128xf32>
      %821 = vector.broadcast %819 : vector<1x128xf32> to vector<8x128xf32>
      %822 = arith.mulf %584, %821 : vector<8x128xf32>
      %823 = arith.mulf %822, %746 : vector<8x128xf32>
      %824 = vector.broadcast %820 : vector<1x128xf32> to vector<8x128xf32>
      %825 = arith.mulf %596, %824 : vector<8x128xf32>
      %826 = arith.mulf %825, %755 : vector<8x128xf32>
      %827 = arith.subf %823, %826 : vector<8x128xf32>
      %828 = vector.extract_strided_slice %467 {offsets = [28, 0], sizes = [1, 128], strides = [1, 1]} : vector<33x128xf32> to vector<1x128xf32>
      %829 = vector.extract_strided_slice %467 {offsets = [29, 0], sizes = [1, 128], strides = [1, 1]} : vector<33x128xf32> to vector<1x128xf32>
      %830 = vector.broadcast %828 : vector<1x128xf32> to vector<8x128xf32>
      %831 = arith.mulf %587, %830 : vector<8x128xf32>
      %832 = arith.mulf %831, %755 : vector<8x128xf32>
      %833 = vector.broadcast %829 : vector<1x128xf32> to vector<8x128xf32>
      %834 = arith.mulf %599, %833 : vector<8x128xf32>
      %835 = arith.mulf %834, %764 : vector<8x128xf32>
      %836 = arith.subf %832, %835 : vector<8x128xf32>
      %837 = vector.extract_strided_slice %467 {offsets = [29, 0], sizes = [1, 128], strides = [1, 1]} : vector<33x128xf32> to vector<1x128xf32>
      %838 = vector.extract_strided_slice %467 {offsets = [30, 0], sizes = [1, 128], strides = [1, 1]} : vector<33x128xf32> to vector<1x128xf32>
      %839 = vector.broadcast %837 : vector<1x128xf32> to vector<8x128xf32>
      %840 = arith.mulf %590, %839 : vector<8x128xf32>
      %841 = arith.mulf %840, %764 : vector<8x128xf32>
      %842 = vector.broadcast %838 : vector<1x128xf32> to vector<8x128xf32>
      %843 = arith.mulf %602, %842 : vector<8x128xf32>
      %844 = arith.mulf %843, %773 : vector<8x128xf32>
      %845 = arith.subf %841, %844 : vector<8x128xf32>
      %846 = arith.negf %465 : vector<8x128xf32>
      %847 = math.exp %846 : vector<8x128xf32>
      %cst_51 = arith.constant 1.000000e+00 : f32
      %848 = vector.broadcast %cst_51 : f32 to vector<8x128xf32>
      %849 = arith.addf %848, %847 : vector<8x128xf32>
      %850 = arith.divf %848, %849 : vector<8x128xf32>
      %851 = arith.mulf %465, %850 : vector<8x128xf32>
      %852 = tpu.concatenate %782, %791, %800, %809, %818, %827, %836, %845 in 1 : vector<8x128xf32>, vector<8x128xf32>, vector<8x128xf32>, vector<8x128xf32>, vector<8x128xf32>, vector<8x128xf32>, vector<8x128xf32>, vector<8x128xf32> -> vector<8x1024xf32>
      %853 = arith.truncf %852 : vector<8x1024xf32> to vector<8x1024xbf16>
      %854 = arith.truncf %851 : vector<8x128xf32> to vector<8x128xbf16>
      %c0_52 = arith.constant 0 : index
      %c0_53 = arith.constant 0 : index
      %855 = vector.load %arg16[%c0_52, %c0_53] : memref<128x32xbf16, #tpu.memory_space<vmem>>, vector<128x32xbf16>
      %cst_54 = arith.constant dense<0.000000e+00> : vector<8x32xf32>
      %856 = tpu.matmul %854, %855, %cst_54 {dimension_numbers = #tpu.dot_dimension_numbers<[1], [0], [0], [1], [0, 0, 1, 1], [], []>} : vector<8x128xbf16>, vector<128x32xbf16>, vector<8x32xf32> -> vector<8x32xf32>
      %c0_55 = arith.constant 0 : index
      %c0_56 = arith.constant 0 : index
      %857 = vector.load %arg15[%c0_55, %c0_56] : memref<1024x32xbf16, #tpu.memory_space<vmem>>, vector<1024x32xbf16>
      %cst_57 = arith.constant dense<0.000000e+00> : vector<8x32xf32>
      %858 = tpu.matmul %853, %857, %cst_57 {dimension_numbers = #tpu.dot_dimension_numbers<[1], [0], [0], [1], [0, 0, 1, 1], [], []>} : vector<8x1024xbf16>, vector<1024x32xbf16>, vector<8x32xf32> -> vector<8x32xf32>
      %859 = arith.addf %856, %858 : vector<8x32xf32>
      %c0_58 = arith.constant 0 : index
      %c0_59 = arith.constant 0 : index
      %860 = vector.load %arg17[%c0_58, %c0_59] : memref<12x32xf32, #tpu.memory_space<vmem>>, vector<12x32xf32>
      %c0_60 = arith.constant 0 : index
      %c0_61 = arith.constant 0 : index
      %861 = vector.load %arg18[%c0_60, %c0_61] : memref<33x32xf32, #tpu.memory_space<vmem>>, vector<33x32xf32>
      %862 = vector.extract_strided_slice %860 {offsets = [0, 0], sizes = [1, 32], strides = [1, 1]} : vector<12x32xf32> to vector<1x32xf32>
      %863 = vector.broadcast %862 : vector<1x32xf32> to vector<8x32xf32>
      %864 = arith.cmpf oge, %859, %863 : vector<8x32xf32>
      %865 = vector.extract_strided_slice %860 {offsets = [1, 0], sizes = [1, 32], strides = [1, 1]} : vector<12x32xf32> to vector<1x32xf32>
      %866 = vector.broadcast %865 : vector<1x32xf32> to vector<8x32xf32>
      %867 = arith.cmpf olt, %859, %866 : vector<8x32xf32>
      %868 = arith.andi %864, %867 : vector<8x32xi1>
      %869 = arith.extui %868 : vector<8x32xi1> to vector<8x32xi32>
      %870 = arith.sitofp %869 : vector<8x32xi32> to vector<8x32xf32>
      %871 = vector.extract_strided_slice %860 {offsets = [1, 0], sizes = [1, 32], strides = [1, 1]} : vector<12x32xf32> to vector<1x32xf32>
      %872 = vector.broadcast %871 : vector<1x32xf32> to vector<8x32xf32>
      %873 = arith.cmpf oge, %859, %872 : vector<8x32xf32>
      %874 = vector.extract_strided_slice %860 {offsets = [2, 0], sizes = [1, 32], strides = [1, 1]} : vector<12x32xf32> to vector<1x32xf32>
      %875 = vector.broadcast %874 : vector<1x32xf32> to vector<8x32xf32>
      %876 = arith.cmpf olt, %859, %875 : vector<8x32xf32>
      %877 = arith.andi %873, %876 : vector<8x32xi1>
      %878 = arith.extui %877 : vector<8x32xi1> to vector<8x32xi32>
      %879 = arith.sitofp %878 : vector<8x32xi32> to vector<8x32xf32>
      %880 = vector.extract_strided_slice %860 {offsets = [2, 0], sizes = [1, 32], strides = [1, 1]} : vector<12x32xf32> to vector<1x32xf32>
      %881 = vector.broadcast %880 : vector<1x32xf32> to vector<8x32xf32>
      %882 = arith.cmpf oge, %859, %881 : vector<8x32xf32>
      %883 = vector.extract_strided_slice %860 {offsets = [3, 0], sizes = [1, 32], strides = [1, 1]} : vector<12x32xf32> to vector<1x32xf32>
      %884 = vector.broadcast %883 : vector<1x32xf32> to vector<8x32xf32>
      %885 = arith.cmpf olt, %859, %884 : vector<8x32xf32>
      %886 = arith.andi %882, %885 : vector<8x32xi1>
      %887 = arith.extui %886 : vector<8x32xi1> to vector<8x32xi32>
      %888 = arith.sitofp %887 : vector<8x32xi32> to vector<8x32xf32>
      %889 = vector.extract_strided_slice %860 {offsets = [3, 0], sizes = [1, 32], strides = [1, 1]} : vector<12x32xf32> to vector<1x32xf32>
      %890 = vector.broadcast %889 : vector<1x32xf32> to vector<8x32xf32>
      %891 = arith.cmpf oge, %859, %890 : vector<8x32xf32>
      %892 = vector.extract_strided_slice %860 {offsets = [4, 0], sizes = [1, 32], strides = [1, 1]} : vector<12x32xf32> to vector<1x32xf32>
      %893 = vector.broadcast %892 : vector<1x32xf32> to vector<8x32xf32>
      %894 = arith.cmpf olt, %859, %893 : vector<8x32xf32>
      %895 = arith.andi %891, %894 : vector<8x32xi1>
      %896 = arith.extui %895 : vector<8x32xi1> to vector<8x32xi32>
      %897 = arith.sitofp %896 : vector<8x32xi32> to vector<8x32xf32>
      %898 = vector.extract_strided_slice %860 {offsets = [4, 0], sizes = [1, 32], strides = [1, 1]} : vector<12x32xf32> to vector<1x32xf32>
      %899 = vector.broadcast %898 : vector<1x32xf32> to vector<8x32xf32>
      %900 = arith.cmpf oge, %859, %899 : vector<8x32xf32>
      %901 = vector.extract_strided_slice %860 {offsets = [5, 0], sizes = [1, 32], strides = [1, 1]} : vector<12x32xf32> to vector<1x32xf32>
      %902 = vector.broadcast %901 : vector<1x32xf32> to vector<8x32xf32>
      %903 = arith.cmpf olt, %859, %902 : vector<8x32xf32>
      %904 = arith.andi %900, %903 : vector<8x32xi1>
      %905 = arith.extui %904 : vector<8x32xi1> to vector<8x32xi32>
      %906 = arith.sitofp %905 : vector<8x32xi32> to vector<8x32xf32>
      %907 = vector.extract_strided_slice %860 {offsets = [5, 0], sizes = [1, 32], strides = [1, 1]} : vector<12x32xf32> to vector<1x32xf32>
      %908 = vector.broadcast %907 : vector<1x32xf32> to vector<8x32xf32>
      %909 = arith.cmpf oge, %859, %908 : vector<8x32xf32>
      %910 = vector.extract_strided_slice %860 {offsets = [6, 0], sizes = [1, 32], strides = [1, 1]} : vector<12x32xf32> to vector<1x32xf32>
      %911 = vector.broadcast %910 : vector<1x32xf32> to vector<8x32xf32>
      %912 = arith.cmpf olt, %859, %911 : vector<8x32xf32>
      %913 = arith.andi %909, %912 : vector<8x32xi1>
      %914 = arith.extui %913 : vector<8x32xi1> to vector<8x32xi32>
      %915 = arith.sitofp %914 : vector<8x32xi32> to vector<8x32xf32>
      %916 = vector.extract_strided_slice %860 {offsets = [6, 0], sizes = [1, 32], strides = [1, 1]} : vector<12x32xf32> to vector<1x32xf32>
      %917 = vector.broadcast %916 : vector<1x32xf32> to vector<8x32xf32>
      %918 = arith.cmpf oge, %859, %917 : vector<8x32xf32>
      %919 = vector.extract_strided_slice %860 {offsets = [7, 0], sizes = [1, 32], strides = [1, 1]} : vector<12x32xf32> to vector<1x32xf32>
      %920 = vector.broadcast %919 : vector<1x32xf32> to vector<8x32xf32>
      %921 = arith.cmpf olt, %859, %920 : vector<8x32xf32>
      %922 = arith.andi %918, %921 : vector<8x32xi1>
      %923 = arith.extui %922 : vector<8x32xi1> to vector<8x32xi32>
      %924 = arith.sitofp %923 : vector<8x32xi32> to vector<8x32xf32>
      %925 = vector.extract_strided_slice %860 {offsets = [7, 0], sizes = [1, 32], strides = [1, 1]} : vector<12x32xf32> to vector<1x32xf32>
      %926 = vector.broadcast %925 : vector<1x32xf32> to vector<8x32xf32>
      %927 = arith.cmpf oge, %859, %926 : vector<8x32xf32>
      %928 = vector.extract_strided_slice %860 {offsets = [8, 0], sizes = [1, 32], strides = [1, 1]} : vector<12x32xf32> to vector<1x32xf32>
      %929 = vector.broadcast %928 : vector<1x32xf32> to vector<8x32xf32>
      %930 = arith.cmpf olt, %859, %929 : vector<8x32xf32>
      %931 = arith.andi %927, %930 : vector<8x32xi1>
      %932 = arith.extui %931 : vector<8x32xi1> to vector<8x32xi32>
      %933 = arith.sitofp %932 : vector<8x32xi32> to vector<8x32xf32>
      %934 = vector.extract_strided_slice %860 {offsets = [8, 0], sizes = [1, 32], strides = [1, 1]} : vector<12x32xf32> to vector<1x32xf32>
      %935 = vector.broadcast %934 : vector<1x32xf32> to vector<8x32xf32>
      %936 = arith.cmpf oge, %859, %935 : vector<8x32xf32>
      %937 = vector.extract_strided_slice %860 {offsets = [9, 0], sizes = [1, 32], strides = [1, 1]} : vector<12x32xf32> to vector<1x32xf32>
      %938 = vector.broadcast %937 : vector<1x32xf32> to vector<8x32xf32>
      %939 = arith.cmpf olt, %859, %938 : vector<8x32xf32>
      %940 = arith.andi %936, %939 : vector<8x32xi1>
      %941 = arith.extui %940 : vector<8x32xi1> to vector<8x32xi32>
      %942 = arith.sitofp %941 : vector<8x32xi32> to vector<8x32xf32>
      %943 = vector.extract_strided_slice %860 {offsets = [9, 0], sizes = [1, 32], strides = [1, 1]} : vector<12x32xf32> to vector<1x32xf32>
      %944 = vector.broadcast %943 : vector<1x32xf32> to vector<8x32xf32>
      %945 = arith.cmpf oge, %859, %944 : vector<8x32xf32>
      %946 = vector.extract_strided_slice %860 {offsets = [10, 0], sizes = [1, 32], strides = [1, 1]} : vector<12x32xf32> to vector<1x32xf32>
      %947 = vector.broadcast %946 : vector<1x32xf32> to vector<8x32xf32>
      %948 = arith.cmpf olt, %859, %947 : vector<8x32xf32>
      %949 = arith.andi %945, %948 : vector<8x32xi1>
      %950 = arith.extui %949 : vector<8x32xi1> to vector<8x32xi32>
      %951 = arith.sitofp %950 : vector<8x32xi32> to vector<8x32xf32>
      %952 = vector.extract_strided_slice %860 {offsets = [10, 0], sizes = [1, 32], strides = [1, 1]} : vector<12x32xf32> to vector<1x32xf32>
      %953 = vector.broadcast %952 : vector<1x32xf32> to vector<8x32xf32>
      %954 = arith.cmpf oge, %859, %953 : vector<8x32xf32>
      %955 = vector.extract_strided_slice %860 {offsets = [11, 0], sizes = [1, 32], strides = [1, 1]} : vector<12x32xf32> to vector<1x32xf32>
      %956 = vector.broadcast %955 : vector<1x32xf32> to vector<8x32xf32>
      %957 = arith.cmpf olt, %859, %956 : vector<8x32xf32>
      %958 = arith.andi %954, %957 : vector<8x32xi1>
      %959 = arith.extui %958 : vector<8x32xi1> to vector<8x32xi32>
      %960 = arith.sitofp %959 : vector<8x32xi32> to vector<8x32xf32>
      %961 = vector.extract_strided_slice %860 {offsets = [0, 0], sizes = [1, 32], strides = [1, 1]} : vector<12x32xf32> to vector<1x32xf32>
      %962 = vector.broadcast %961 : vector<1x32xf32> to vector<8x32xf32>
      %963 = arith.subf %859, %962 : vector<8x32xf32>
      %964 = vector.extract_strided_slice %860 {offsets = [1, 0], sizes = [1, 32], strides = [1, 1]} : vector<12x32xf32> to vector<1x32xf32>
      %965 = vector.broadcast %964 : vector<1x32xf32> to vector<8x32xf32>
      %966 = arith.subf %859, %965 : vector<8x32xf32>
      %967 = vector.extract_strided_slice %860 {offsets = [2, 0], sizes = [1, 32], strides = [1, 1]} : vector<12x32xf32> to vector<1x32xf32>
      %968 = vector.broadcast %967 : vector<1x32xf32> to vector<8x32xf32>
      %969 = arith.subf %859, %968 : vector<8x32xf32>
      %970 = vector.extract_strided_slice %860 {offsets = [3, 0], sizes = [1, 32], strides = [1, 1]} : vector<12x32xf32> to vector<1x32xf32>
      %971 = vector.broadcast %970 : vector<1x32xf32> to vector<8x32xf32>
      %972 = arith.subf %859, %971 : vector<8x32xf32>
      %973 = vector.extract_strided_slice %860 {offsets = [4, 0], sizes = [1, 32], strides = [1, 1]} : vector<12x32xf32> to vector<1x32xf32>
      %974 = vector.broadcast %973 : vector<1x32xf32> to vector<8x32xf32>
      %975 = arith.subf %859, %974 : vector<8x32xf32>
      %976 = vector.extract_strided_slice %860 {offsets = [5, 0], sizes = [1, 32], strides = [1, 1]} : vector<12x32xf32> to vector<1x32xf32>
      %977 = vector.broadcast %976 : vector<1x32xf32> to vector<8x32xf32>
      %978 = arith.subf %859, %977 : vector<8x32xf32>
      %979 = vector.extract_strided_slice %860 {offsets = [6, 0], sizes = [1, 32], strides = [1, 1]} : vector<12x32xf32> to vector<1x32xf32>
      %980 = vector.broadcast %979 : vector<1x32xf32> to vector<8x32xf32>
      %981 = arith.subf %859, %980 : vector<8x32xf32>
      %982 = vector.extract_strided_slice %860 {offsets = [7, 0], sizes = [1, 32], strides = [1, 1]} : vector<12x32xf32> to vector<1x32xf32>
      %983 = vector.broadcast %982 : vector<1x32xf32> to vector<8x32xf32>
      %984 = arith.subf %859, %983 : vector<8x32xf32>
      %985 = vector.extract_strided_slice %860 {offsets = [8, 0], sizes = [1, 32], strides = [1, 1]} : vector<12x32xf32> to vector<1x32xf32>
      %986 = vector.broadcast %985 : vector<1x32xf32> to vector<8x32xf32>
      %987 = arith.subf %859, %986 : vector<8x32xf32>
      %988 = vector.extract_strided_slice %860 {offsets = [9, 0], sizes = [1, 32], strides = [1, 1]} : vector<12x32xf32> to vector<1x32xf32>
      %989 = vector.broadcast %988 : vector<1x32xf32> to vector<8x32xf32>
      %990 = arith.subf %859, %989 : vector<8x32xf32>
      %991 = vector.extract_strided_slice %860 {offsets = [10, 0], sizes = [1, 32], strides = [1, 1]} : vector<12x32xf32> to vector<1x32xf32>
      %992 = vector.broadcast %991 : vector<1x32xf32> to vector<8x32xf32>
      %993 = arith.subf %859, %992 : vector<8x32xf32>
      %994 = vector.extract_strided_slice %860 {offsets = [11, 0], sizes = [1, 32], strides = [1, 1]} : vector<12x32xf32> to vector<1x32xf32>
      %995 = vector.broadcast %994 : vector<1x32xf32> to vector<8x32xf32>
      %996 = arith.subf %859, %995 : vector<8x32xf32>
      %997 = vector.extract_strided_slice %861 {offsets = [0, 0], sizes = [1, 32], strides = [1, 1]} : vector<33x32xf32> to vector<1x32xf32>
      %998 = vector.extract_strided_slice %861 {offsets = [1, 0], sizes = [1, 32], strides = [1, 1]} : vector<33x32xf32> to vector<1x32xf32>
      %999 = vector.broadcast %997 : vector<1x32xf32> to vector<8x32xf32>
      %1000 = arith.mulf %963, %999 : vector<8x32xf32>
      %1001 = arith.mulf %1000, %870 : vector<8x32xf32>
      %1002 = vector.broadcast %998 : vector<1x32xf32> to vector<8x32xf32>
      %1003 = arith.mulf %969, %1002 : vector<8x32xf32>
      %1004 = arith.mulf %1003, %879 : vector<8x32xf32>
      %1005 = arith.subf %1001, %1004 : vector<8x32xf32>
      %1006 = vector.extract_strided_slice %861 {offsets = [1, 0], sizes = [1, 32], strides = [1, 1]} : vector<33x32xf32> to vector<1x32xf32>
      %1007 = vector.extract_strided_slice %861 {offsets = [2, 0], sizes = [1, 32], strides = [1, 1]} : vector<33x32xf32> to vector<1x32xf32>
      %1008 = vector.broadcast %1006 : vector<1x32xf32> to vector<8x32xf32>
      %1009 = arith.mulf %966, %1008 : vector<8x32xf32>
      %1010 = arith.mulf %1009, %879 : vector<8x32xf32>
      %1011 = vector.broadcast %1007 : vector<1x32xf32> to vector<8x32xf32>
      %1012 = arith.mulf %972, %1011 : vector<8x32xf32>
      %1013 = arith.mulf %1012, %888 : vector<8x32xf32>
      %1014 = arith.subf %1010, %1013 : vector<8x32xf32>
      %1015 = vector.extract_strided_slice %861 {offsets = [2, 0], sizes = [1, 32], strides = [1, 1]} : vector<33x32xf32> to vector<1x32xf32>
      %1016 = vector.extract_strided_slice %861 {offsets = [3, 0], sizes = [1, 32], strides = [1, 1]} : vector<33x32xf32> to vector<1x32xf32>
      %1017 = vector.broadcast %1015 : vector<1x32xf32> to vector<8x32xf32>
      %1018 = arith.mulf %969, %1017 : vector<8x32xf32>
      %1019 = arith.mulf %1018, %888 : vector<8x32xf32>
      %1020 = vector.broadcast %1016 : vector<1x32xf32> to vector<8x32xf32>
      %1021 = arith.mulf %975, %1020 : vector<8x32xf32>
      %1022 = arith.mulf %1021, %897 : vector<8x32xf32>
      %1023 = arith.subf %1019, %1022 : vector<8x32xf32>
      %1024 = vector.extract_strided_slice %861 {offsets = [3, 0], sizes = [1, 32], strides = [1, 1]} : vector<33x32xf32> to vector<1x32xf32>
      %1025 = vector.extract_strided_slice %861 {offsets = [4, 0], sizes = [1, 32], strides = [1, 1]} : vector<33x32xf32> to vector<1x32xf32>
      %1026 = vector.broadcast %1024 : vector<1x32xf32> to vector<8x32xf32>
      %1027 = arith.mulf %972, %1026 : vector<8x32xf32>
      %1028 = arith.mulf %1027, %897 : vector<8x32xf32>
      %1029 = vector.broadcast %1025 : vector<1x32xf32> to vector<8x32xf32>
      %1030 = arith.mulf %978, %1029 : vector<8x32xf32>
      %1031 = arith.mulf %1030, %906 : vector<8x32xf32>
      %1032 = arith.subf %1028, %1031 : vector<8x32xf32>
      %1033 = vector.extract_strided_slice %861 {offsets = [4, 0], sizes = [1, 32], strides = [1, 1]} : vector<33x32xf32> to vector<1x32xf32>
      %1034 = vector.extract_strided_slice %861 {offsets = [5, 0], sizes = [1, 32], strides = [1, 1]} : vector<33x32xf32> to vector<1x32xf32>
      %1035 = vector.broadcast %1033 : vector<1x32xf32> to vector<8x32xf32>
      %1036 = arith.mulf %975, %1035 : vector<8x32xf32>
      %1037 = arith.mulf %1036, %906 : vector<8x32xf32>
      %1038 = vector.broadcast %1034 : vector<1x32xf32> to vector<8x32xf32>
      %1039 = arith.mulf %981, %1038 : vector<8x32xf32>
      %1040 = arith.mulf %1039, %915 : vector<8x32xf32>
      %1041 = arith.subf %1037, %1040 : vector<8x32xf32>
      %1042 = vector.extract_strided_slice %861 {offsets = [5, 0], sizes = [1, 32], strides = [1, 1]} : vector<33x32xf32> to vector<1x32xf32>
      %1043 = vector.extract_strided_slice %861 {offsets = [6, 0], sizes = [1, 32], strides = [1, 1]} : vector<33x32xf32> to vector<1x32xf32>
      %1044 = vector.broadcast %1042 : vector<1x32xf32> to vector<8x32xf32>
      %1045 = arith.mulf %978, %1044 : vector<8x32xf32>
      %1046 = arith.mulf %1045, %915 : vector<8x32xf32>
      %1047 = vector.broadcast %1043 : vector<1x32xf32> to vector<8x32xf32>
      %1048 = arith.mulf %984, %1047 : vector<8x32xf32>
      %1049 = arith.mulf %1048, %924 : vector<8x32xf32>
      %1050 = arith.subf %1046, %1049 : vector<8x32xf32>
      %1051 = vector.extract_strided_slice %861 {offsets = [6, 0], sizes = [1, 32], strides = [1, 1]} : vector<33x32xf32> to vector<1x32xf32>
      %1052 = vector.extract_strided_slice %861 {offsets = [7, 0], sizes = [1, 32], strides = [1, 1]} : vector<33x32xf32> to vector<1x32xf32>
      %1053 = vector.broadcast %1051 : vector<1x32xf32> to vector<8x32xf32>
      %1054 = arith.mulf %981, %1053 : vector<8x32xf32>
      %1055 = arith.mulf %1054, %924 : vector<8x32xf32>
      %1056 = vector.broadcast %1052 : vector<1x32xf32> to vector<8x32xf32>
      %1057 = arith.mulf %987, %1056 : vector<8x32xf32>
      %1058 = arith.mulf %1057, %933 : vector<8x32xf32>
      %1059 = arith.subf %1055, %1058 : vector<8x32xf32>
      %1060 = vector.extract_strided_slice %861 {offsets = [7, 0], sizes = [1, 32], strides = [1, 1]} : vector<33x32xf32> to vector<1x32xf32>
      %1061 = vector.extract_strided_slice %861 {offsets = [8, 0], sizes = [1, 32], strides = [1, 1]} : vector<33x32xf32> to vector<1x32xf32>
      %1062 = vector.broadcast %1060 : vector<1x32xf32> to vector<8x32xf32>
      %1063 = arith.mulf %984, %1062 : vector<8x32xf32>
      %1064 = arith.mulf %1063, %933 : vector<8x32xf32>
      %1065 = vector.broadcast %1061 : vector<1x32xf32> to vector<8x32xf32>
      %1066 = arith.mulf %990, %1065 : vector<8x32xf32>
      %1067 = arith.mulf %1066, %942 : vector<8x32xf32>
      %1068 = arith.subf %1064, %1067 : vector<8x32xf32>
      %1069 = vector.extract_strided_slice %861 {offsets = [8, 0], sizes = [1, 32], strides = [1, 1]} : vector<33x32xf32> to vector<1x32xf32>
      %1070 = vector.extract_strided_slice %861 {offsets = [9, 0], sizes = [1, 32], strides = [1, 1]} : vector<33x32xf32> to vector<1x32xf32>
      %1071 = vector.broadcast %1069 : vector<1x32xf32> to vector<8x32xf32>
      %1072 = arith.mulf %987, %1071 : vector<8x32xf32>
      %1073 = arith.mulf %1072, %942 : vector<8x32xf32>
      %1074 = vector.broadcast %1070 : vector<1x32xf32> to vector<8x32xf32>
      %1075 = arith.mulf %993, %1074 : vector<8x32xf32>
      %1076 = arith.mulf %1075, %951 : vector<8x32xf32>
      %1077 = arith.subf %1073, %1076 : vector<8x32xf32>
      %1078 = vector.extract_strided_slice %861 {offsets = [9, 0], sizes = [1, 32], strides = [1, 1]} : vector<33x32xf32> to vector<1x32xf32>
      %1079 = vector.extract_strided_slice %861 {offsets = [10, 0], sizes = [1, 32], strides = [1, 1]} : vector<33x32xf32> to vector<1x32xf32>
      %1080 = vector.broadcast %1078 : vector<1x32xf32> to vector<8x32xf32>
      %1081 = arith.mulf %990, %1080 : vector<8x32xf32>
      %1082 = arith.mulf %1081, %951 : vector<8x32xf32>
      %1083 = vector.broadcast %1079 : vector<1x32xf32> to vector<8x32xf32>
      %1084 = arith.mulf %996, %1083 : vector<8x32xf32>
      %1085 = arith.mulf %1084, %960 : vector<8x32xf32>
      %1086 = arith.subf %1082, %1085 : vector<8x32xf32>
      %1087 = vector.extract_strided_slice %861 {offsets = [11, 0], sizes = [1, 32], strides = [1, 1]} : vector<33x32xf32> to vector<1x32xf32>
      %1088 = vector.extract_strided_slice %861 {offsets = [12, 0], sizes = [1, 32], strides = [1, 1]} : vector<33x32xf32> to vector<1x32xf32>
      %1089 = vector.broadcast %1087 : vector<1x32xf32> to vector<8x32xf32>
      %1090 = arith.mulf %963, %1089 : vector<8x32xf32>
      %1091 = arith.mulf %1090, %1005 : vector<8x32xf32>
      %1092 = vector.broadcast %1088 : vector<1x32xf32> to vector<8x32xf32>
      %1093 = arith.mulf %972, %1092 : vector<8x32xf32>
      %1094 = arith.mulf %1093, %1014 : vector<8x32xf32>
      %1095 = arith.subf %1091, %1094 : vector<8x32xf32>
      %1096 = vector.extract_strided_slice %861 {offsets = [12, 0], sizes = [1, 32], strides = [1, 1]} : vector<33x32xf32> to vector<1x32xf32>
      %1097 = vector.extract_strided_slice %861 {offsets = [13, 0], sizes = [1, 32], strides = [1, 1]} : vector<33x32xf32> to vector<1x32xf32>
      %1098 = vector.broadcast %1096 : vector<1x32xf32> to vector<8x32xf32>
      %1099 = arith.mulf %966, %1098 : vector<8x32xf32>
      %1100 = arith.mulf %1099, %1014 : vector<8x32xf32>
      %1101 = vector.broadcast %1097 : vector<1x32xf32> to vector<8x32xf32>
      %1102 = arith.mulf %975, %1101 : vector<8x32xf32>
      %1103 = arith.mulf %1102, %1023 : vector<8x32xf32>
      %1104 = arith.subf %1100, %1103 : vector<8x32xf32>
      %1105 = vector.extract_strided_slice %861 {offsets = [13, 0], sizes = [1, 32], strides = [1, 1]} : vector<33x32xf32> to vector<1x32xf32>
      %1106 = vector.extract_strided_slice %861 {offsets = [14, 0], sizes = [1, 32], strides = [1, 1]} : vector<33x32xf32> to vector<1x32xf32>
      %1107 = vector.broadcast %1105 : vector<1x32xf32> to vector<8x32xf32>
      %1108 = arith.mulf %969, %1107 : vector<8x32xf32>
      %1109 = arith.mulf %1108, %1023 : vector<8x32xf32>
      %1110 = vector.broadcast %1106 : vector<1x32xf32> to vector<8x32xf32>
      %1111 = arith.mulf %978, %1110 : vector<8x32xf32>
      %1112 = arith.mulf %1111, %1032 : vector<8x32xf32>
      %1113 = arith.subf %1109, %1112 : vector<8x32xf32>
      %1114 = vector.extract_strided_slice %861 {offsets = [14, 0], sizes = [1, 32], strides = [1, 1]} : vector<33x32xf32> to vector<1x32xf32>
      %1115 = vector.extract_strided_slice %861 {offsets = [15, 0], sizes = [1, 32], strides = [1, 1]} : vector<33x32xf32> to vector<1x32xf32>
      %1116 = vector.broadcast %1114 : vector<1x32xf32> to vector<8x32xf32>
      %1117 = arith.mulf %972, %1116 : vector<8x32xf32>
      %1118 = arith.mulf %1117, %1032 : vector<8x32xf32>
      %1119 = vector.broadcast %1115 : vector<1x32xf32> to vector<8x32xf32>
      %1120 = arith.mulf %981, %1119 : vector<8x32xf32>
      %1121 = arith.mulf %1120, %1041 : vector<8x32xf32>
      %1122 = arith.subf %1118, %1121 : vector<8x32xf32>
      %1123 = vector.extract_strided_slice %861 {offsets = [15, 0], sizes = [1, 32], strides = [1, 1]} : vector<33x32xf32> to vector<1x32xf32>
      %1124 = vector.extract_strided_slice %861 {offsets = [16, 0], sizes = [1, 32], strides = [1, 1]} : vector<33x32xf32> to vector<1x32xf32>
      %1125 = vector.broadcast %1123 : vector<1x32xf32> to vector<8x32xf32>
      %1126 = arith.mulf %975, %1125 : vector<8x32xf32>
      %1127 = arith.mulf %1126, %1041 : vector<8x32xf32>
      %1128 = vector.broadcast %1124 : vector<1x32xf32> to vector<8x32xf32>
      %1129 = arith.mulf %984, %1128 : vector<8x32xf32>
      %1130 = arith.mulf %1129, %1050 : vector<8x32xf32>
      %1131 = arith.subf %1127, %1130 : vector<8x32xf32>
      %1132 = vector.extract_strided_slice %861 {offsets = [16, 0], sizes = [1, 32], strides = [1, 1]} : vector<33x32xf32> to vector<1x32xf32>
      %1133 = vector.extract_strided_slice %861 {offsets = [17, 0], sizes = [1, 32], strides = [1, 1]} : vector<33x32xf32> to vector<1x32xf32>
      %1134 = vector.broadcast %1132 : vector<1x32xf32> to vector<8x32xf32>
      %1135 = arith.mulf %978, %1134 : vector<8x32xf32>
      %1136 = arith.mulf %1135, %1050 : vector<8x32xf32>
      %1137 = vector.broadcast %1133 : vector<1x32xf32> to vector<8x32xf32>
      %1138 = arith.mulf %987, %1137 : vector<8x32xf32>
      %1139 = arith.mulf %1138, %1059 : vector<8x32xf32>
      %1140 = arith.subf %1136, %1139 : vector<8x32xf32>
      %1141 = vector.extract_strided_slice %861 {offsets = [17, 0], sizes = [1, 32], strides = [1, 1]} : vector<33x32xf32> to vector<1x32xf32>
      %1142 = vector.extract_strided_slice %861 {offsets = [18, 0], sizes = [1, 32], strides = [1, 1]} : vector<33x32xf32> to vector<1x32xf32>
      %1143 = vector.broadcast %1141 : vector<1x32xf32> to vector<8x32xf32>
      %1144 = arith.mulf %981, %1143 : vector<8x32xf32>
      %1145 = arith.mulf %1144, %1059 : vector<8x32xf32>
      %1146 = vector.broadcast %1142 : vector<1x32xf32> to vector<8x32xf32>
      %1147 = arith.mulf %990, %1146 : vector<8x32xf32>
      %1148 = arith.mulf %1147, %1068 : vector<8x32xf32>
      %1149 = arith.subf %1145, %1148 : vector<8x32xf32>
      %1150 = vector.extract_strided_slice %861 {offsets = [18, 0], sizes = [1, 32], strides = [1, 1]} : vector<33x32xf32> to vector<1x32xf32>
      %1151 = vector.extract_strided_slice %861 {offsets = [19, 0], sizes = [1, 32], strides = [1, 1]} : vector<33x32xf32> to vector<1x32xf32>
      %1152 = vector.broadcast %1150 : vector<1x32xf32> to vector<8x32xf32>
      %1153 = arith.mulf %984, %1152 : vector<8x32xf32>
      %1154 = arith.mulf %1153, %1068 : vector<8x32xf32>
      %1155 = vector.broadcast %1151 : vector<1x32xf32> to vector<8x32xf32>
      %1156 = arith.mulf %993, %1155 : vector<8x32xf32>
      %1157 = arith.mulf %1156, %1077 : vector<8x32xf32>
      %1158 = arith.subf %1154, %1157 : vector<8x32xf32>
      %1159 = vector.extract_strided_slice %861 {offsets = [19, 0], sizes = [1, 32], strides = [1, 1]} : vector<33x32xf32> to vector<1x32xf32>
      %1160 = vector.extract_strided_slice %861 {offsets = [20, 0], sizes = [1, 32], strides = [1, 1]} : vector<33x32xf32> to vector<1x32xf32>
      %1161 = vector.broadcast %1159 : vector<1x32xf32> to vector<8x32xf32>
      %1162 = arith.mulf %987, %1161 : vector<8x32xf32>
      %1163 = arith.mulf %1162, %1077 : vector<8x32xf32>
      %1164 = vector.broadcast %1160 : vector<1x32xf32> to vector<8x32xf32>
      %1165 = arith.mulf %996, %1164 : vector<8x32xf32>
      %1166 = arith.mulf %1165, %1086 : vector<8x32xf32>
      %1167 = arith.subf %1163, %1166 : vector<8x32xf32>
      %1168 = vector.extract_strided_slice %861 {offsets = [22, 0], sizes = [1, 32], strides = [1, 1]} : vector<33x32xf32> to vector<1x32xf32>
      %1169 = vector.extract_strided_slice %861 {offsets = [23, 0], sizes = [1, 32], strides = [1, 1]} : vector<33x32xf32> to vector<1x32xf32>
      %1170 = vector.broadcast %1168 : vector<1x32xf32> to vector<8x32xf32>
      %1171 = arith.mulf %963, %1170 : vector<8x32xf32>
      %1172 = arith.mulf %1171, %1095 : vector<8x32xf32>
      %1173 = vector.broadcast %1169 : vector<1x32xf32> to vector<8x32xf32>
      %1174 = arith.mulf %975, %1173 : vector<8x32xf32>
      %1175 = arith.mulf %1174, %1104 : vector<8x32xf32>
      %1176 = arith.subf %1172, %1175 : vector<8x32xf32>
      %1177 = vector.extract_strided_slice %861 {offsets = [23, 0], sizes = [1, 32], strides = [1, 1]} : vector<33x32xf32> to vector<1x32xf32>
      %1178 = vector.extract_strided_slice %861 {offsets = [24, 0], sizes = [1, 32], strides = [1, 1]} : vector<33x32xf32> to vector<1x32xf32>
      %1179 = vector.broadcast %1177 : vector<1x32xf32> to vector<8x32xf32>
      %1180 = arith.mulf %966, %1179 : vector<8x32xf32>
      %1181 = arith.mulf %1180, %1104 : vector<8x32xf32>
      %1182 = vector.broadcast %1178 : vector<1x32xf32> to vector<8x32xf32>
      %1183 = arith.mulf %978, %1182 : vector<8x32xf32>
      %1184 = arith.mulf %1183, %1113 : vector<8x32xf32>
      %1185 = arith.subf %1181, %1184 : vector<8x32xf32>
      %1186 = vector.extract_strided_slice %861 {offsets = [24, 0], sizes = [1, 32], strides = [1, 1]} : vector<33x32xf32> to vector<1x32xf32>
      %1187 = vector.extract_strided_slice %861 {offsets = [25, 0], sizes = [1, 32], strides = [1, 1]} : vector<33x32xf32> to vector<1x32xf32>
      %1188 = vector.broadcast %1186 : vector<1x32xf32> to vector<8x32xf32>
      %1189 = arith.mulf %969, %1188 : vector<8x32xf32>
      %1190 = arith.mulf %1189, %1113 : vector<8x32xf32>
      %1191 = vector.broadcast %1187 : vector<1x32xf32> to vector<8x32xf32>
      %1192 = arith.mulf %981, %1191 : vector<8x32xf32>
      %1193 = arith.mulf %1192, %1122 : vector<8x32xf32>
      %1194 = arith.subf %1190, %1193 : vector<8x32xf32>
      %1195 = vector.extract_strided_slice %861 {offsets = [25, 0], sizes = [1, 32], strides = [1, 1]} : vector<33x32xf32> to vector<1x32xf32>
      %1196 = vector.extract_strided_slice %861 {offsets = [26, 0], sizes = [1, 32], strides = [1, 1]} : vector<33x32xf32> to vector<1x32xf32>
      %1197 = vector.broadcast %1195 : vector<1x32xf32> to vector<8x32xf32>
      %1198 = arith.mulf %972, %1197 : vector<8x32xf32>
      %1199 = arith.mulf %1198, %1122 : vector<8x32xf32>
      %1200 = vector.broadcast %1196 : vector<1x32xf32> to vector<8x32xf32>
      %1201 = arith.mulf %984, %1200 : vector<8x32xf32>
      %1202 = arith.mulf %1201, %1131 : vector<8x32xf32>
      %1203 = arith.subf %1199, %1202 : vector<8x32xf32>
      %1204 = vector.extract_strided_slice %861 {offsets = [26, 0], sizes = [1, 32], strides = [1, 1]} : vector<33x32xf32> to vector<1x32xf32>
      %1205 = vector.extract_strided_slice %861 {offsets = [27, 0], sizes = [1, 32], strides = [1, 1]} : vector<33x32xf32> to vector<1x32xf32>
      %1206 = vector.broadcast %1204 : vector<1x32xf32> to vector<8x32xf32>
      %1207 = arith.mulf %975, %1206 : vector<8x32xf32>
      %1208 = arith.mulf %1207, %1131 : vector<8x32xf32>
      %1209 = vector.broadcast %1205 : vector<1x32xf32> to vector<8x32xf32>
      %1210 = arith.mulf %987, %1209 : vector<8x32xf32>
      %1211 = arith.mulf %1210, %1140 : vector<8x32xf32>
      %1212 = arith.subf %1208, %1211 : vector<8x32xf32>
      %1213 = vector.extract_strided_slice %861 {offsets = [27, 0], sizes = [1, 32], strides = [1, 1]} : vector<33x32xf32> to vector<1x32xf32>
      %1214 = vector.extract_strided_slice %861 {offsets = [28, 0], sizes = [1, 32], strides = [1, 1]} : vector<33x32xf32> to vector<1x32xf32>
      %1215 = vector.broadcast %1213 : vector<1x32xf32> to vector<8x32xf32>
      %1216 = arith.mulf %978, %1215 : vector<8x32xf32>
      %1217 = arith.mulf %1216, %1140 : vector<8x32xf32>
      %1218 = vector.broadcast %1214 : vector<1x32xf32> to vector<8x32xf32>
      %1219 = arith.mulf %990, %1218 : vector<8x32xf32>
      %1220 = arith.mulf %1219, %1149 : vector<8x32xf32>
      %1221 = arith.subf %1217, %1220 : vector<8x32xf32>
      %1222 = vector.extract_strided_slice %861 {offsets = [28, 0], sizes = [1, 32], strides = [1, 1]} : vector<33x32xf32> to vector<1x32xf32>
      %1223 = vector.extract_strided_slice %861 {offsets = [29, 0], sizes = [1, 32], strides = [1, 1]} : vector<33x32xf32> to vector<1x32xf32>
      %1224 = vector.broadcast %1222 : vector<1x32xf32> to vector<8x32xf32>
      %1225 = arith.mulf %981, %1224 : vector<8x32xf32>
      %1226 = arith.mulf %1225, %1149 : vector<8x32xf32>
      %1227 = vector.broadcast %1223 : vector<1x32xf32> to vector<8x32xf32>
      %1228 = arith.mulf %993, %1227 : vector<8x32xf32>
      %1229 = arith.mulf %1228, %1158 : vector<8x32xf32>
      %1230 = arith.subf %1226, %1229 : vector<8x32xf32>
      %1231 = vector.extract_strided_slice %861 {offsets = [29, 0], sizes = [1, 32], strides = [1, 1]} : vector<33x32xf32> to vector<1x32xf32>
      %1232 = vector.extract_strided_slice %861 {offsets = [30, 0], sizes = [1, 32], strides = [1, 1]} : vector<33x32xf32> to vector<1x32xf32>
      %1233 = vector.broadcast %1231 : vector<1x32xf32> to vector<8x32xf32>
      %1234 = arith.mulf %984, %1233 : vector<8x32xf32>
      %1235 = arith.mulf %1234, %1158 : vector<8x32xf32>
      %1236 = vector.broadcast %1232 : vector<1x32xf32> to vector<8x32xf32>
      %1237 = arith.mulf %996, %1236 : vector<8x32xf32>
      %1238 = arith.mulf %1237, %1167 : vector<8x32xf32>
      %1239 = arith.subf %1235, %1238 : vector<8x32xf32>
      %1240 = arith.negf %859 : vector<8x32xf32>
      %1241 = math.exp %1240 : vector<8x32xf32>
      %cst_62 = arith.constant 1.000000e+00 : f32
      %1242 = vector.broadcast %cst_62 : f32 to vector<8x32xf32>
      %1243 = arith.addf %1242, %1241 : vector<8x32xf32>
      %1244 = arith.divf %1242, %1243 : vector<8x32xf32>
      %1245 = arith.mulf %859, %1244 : vector<8x32xf32>
      %c0_63 = arith.constant 0 : index
      %c0_64 = arith.constant 0 : index
      %1246 = vector.load %arg19[%c0_63, %c0_64] : memref<8x32xf32, #tpu.memory_space<vmem>>, vector<8x32xf32>
      %c0_65 = arith.constant 0 : index
      %c0_66 = arith.constant 0 : index
      %1247 = vector.load %arg20[%c0_65, %c0_66] : memref<1x32xf32, #tpu.memory_space<vmem>>, vector<1x32xf32>
      %1248 = vector.broadcast %1247 : vector<1x32xf32> to vector<8x32xf32>
      %1249 = arith.mulf %1245, %1248 : vector<8x32xf32>
      %1250 = vector.extract_strided_slice %1246 {offsets = [0, 0], sizes = [1, 32], strides = [1, 1]} : vector<8x32xf32> to vector<1x32xf32>
      %1251 = vector.broadcast %1250 : vector<1x32xf32> to vector<8x32xf32>
      %1252 = arith.mulf %1176, %1251 : vector<8x32xf32>
      %1253 = arith.addf %1249, %1252 : vector<8x32xf32>
      %1254 = vector.extract_strided_slice %1246 {offsets = [1, 0], sizes = [1, 32], strides = [1, 1]} : vector<8x32xf32> to vector<1x32xf32>
      %1255 = vector.broadcast %1254 : vector<1x32xf32> to vector<8x32xf32>
      %1256 = arith.mulf %1185, %1255 : vector<8x32xf32>
      %1257 = arith.addf %1253, %1256 : vector<8x32xf32>
      %1258 = vector.extract_strided_slice %1246 {offsets = [2, 0], sizes = [1, 32], strides = [1, 1]} : vector<8x32xf32> to vector<1x32xf32>
      %1259 = vector.broadcast %1258 : vector<1x32xf32> to vector<8x32xf32>
      %1260 = arith.mulf %1194, %1259 : vector<8x32xf32>
      %1261 = arith.addf %1257, %1260 : vector<8x32xf32>
      %1262 = vector.extract_strided_slice %1246 {offsets = [3, 0], sizes = [1, 32], strides = [1, 1]} : vector<8x32xf32> to vector<1x32xf32>
      %1263 = vector.broadcast %1262 : vector<1x32xf32> to vector<8x32xf32>
      %1264 = arith.mulf %1203, %1263 : vector<8x32xf32>
      %1265 = arith.addf %1261, %1264 : vector<8x32xf32>
      %1266 = vector.extract_strided_slice %1246 {offsets = [4, 0], sizes = [1, 32], strides = [1, 1]} : vector<8x32xf32> to vector<1x32xf32>
      %1267 = vector.broadcast %1266 : vector<1x32xf32> to vector<8x32xf32>
      %1268 = arith.mulf %1212, %1267 : vector<8x32xf32>
      %1269 = arith.addf %1265, %1268 : vector<8x32xf32>
      %1270 = vector.extract_strided_slice %1246 {offsets = [5, 0], sizes = [1, 32], strides = [1, 1]} : vector<8x32xf32> to vector<1x32xf32>
      %1271 = vector.broadcast %1270 : vector<1x32xf32> to vector<8x32xf32>
      %1272 = arith.mulf %1221, %1271 : vector<8x32xf32>
      %1273 = arith.addf %1269, %1272 : vector<8x32xf32>
      %1274 = vector.extract_strided_slice %1246 {offsets = [6, 0], sizes = [1, 32], strides = [1, 1]} : vector<8x32xf32> to vector<1x32xf32>
      %1275 = vector.broadcast %1274 : vector<1x32xf32> to vector<8x32xf32>
      %1276 = arith.mulf %1230, %1275 : vector<8x32xf32>
      %1277 = arith.addf %1273, %1276 : vector<8x32xf32>
      %1278 = vector.extract_strided_slice %1246 {offsets = [7, 0], sizes = [1, 32], strides = [1, 1]} : vector<8x32xf32> to vector<1x32xf32>
      %1279 = vector.broadcast %1278 : vector<1x32xf32> to vector<8x32xf32>
      %1280 = arith.mulf %1239, %1279 : vector<8x32xf32>
      %1281 = arith.addf %1277, %1280 : vector<8x32xf32>
      %cst_67 = arith.constant dense<0.000000e+00> : vector<8xf32>
      %1282 = vector.multi_reduction <add>, %1281, %cst_67 [1] : vector<8x32xf32> to vector<8xf32>
      %1283 = vector.shape_cast %1282 : vector<8xf32> to vector<8x1xf32>
      %1284 = arith.negf %1283 : vector<8x1xf32>
      %1285 = math.exp %1284 : vector<8x1xf32>
      %cst_68 = arith.constant 1.000000e+00 : f32
      %1286 = vector.broadcast %cst_68 : f32 to vector<8x1xf32>
      %1287 = arith.addf %1286, %1285 : vector<8x1xf32>
      %1288 = arith.divf %1286, %1287 : vector<8x1xf32>
      %1289 = vector.shape_cast %1288 : vector<8x1xf32> to vector<8x1xf32>
      %1290 = vector.broadcast %1289 : vector<8x1xf32> to vector<8x128xf32>
      %c0_69 = arith.constant 0 : index
      %c0_70 = arith.constant 0 : index
      %1291 = vector.load %arg21[%c0_69, %c0_70] : memref<8x128xf32, #tpu.memory_space<vmem>>, vector<8x128xf32>
      tpu.vector_store %arg21[%c0_69, %c0_70], %1290 {strides = array<i32>} : memref<8x128xf32, #tpu.memory_space<vmem>>, vector<8x128xf32>,
    } else {
    }
    return
  }
  func.func @transform_0(%arg0: i32, %arg1: i32) -> (i32, i32, i32) {
    %c0_i32 = arith.constant 0 : i32
    %c0_i32_0 = arith.constant 0 : i32
    return %arg1, %arg0, %c0_i32 : i32, i32, i32
  }
  func.func @transform_1(%arg0: i32, %arg1: i32) -> (i32, i32) {
    %c0_i32 = arith.constant 0 : i32
    %c0_i32_0 = arith.constant 0 : i32
    %c0_i32_1 = arith.constant 0 : i32
    return %c0_i32, %c0_i32_0 : i32, i32
  }
  func.func @transform_2(%arg0: i32, %arg1: i32) -> (i32, i32) {
    %c0_i32 = arith.constant 0 : i32
    %c0_i32_0 = arith.constant 0 : i32
    %c0_i32_1 = arith.constant 0 : i32
    return %c0_i32, %c0_i32_0 : i32, i32
  }
  func.func @transform_3(%arg0: i32, %arg1: i32) -> (i32, i32) {
    %c0_i32 = arith.constant 0 : i32
    %c0_i32_0 = arith.constant 0 : i32
    %c0_i32_1 = arith.constant 0 : i32
    return %c0_i32, %c0_i32_0 : i32, i32
  }
  func.func @transform_4(%arg0: i32, %arg1: i32) -> (i32, i32) {
    %c0_i32 = arith.constant 0 : i32
    %c0_i32_0 = arith.constant 0 : i32
    %c0_i32_1 = arith.constant 0 : i32
    return %c0_i32, %c0_i32_0 : i32, i32
  }
  func.func @transform_5(%arg0: i32, %arg1: i32) -> (i32, i32) {
    %c0_i32 = arith.constant 0 : i32
    %c0_i32_0 = arith.constant 0 : i32
    %c0_i32_1 = arith.constant 0 : i32
    return %c0_i32, %c0_i32_0 : i32, i32
  }
  func.func @transform_6(%arg0: i32, %arg1: i32) -> (i32, i32) {
    %c0_i32 = arith.constant 0 : i32
    %c0_i32_0 = arith.constant 0 : i32
    %c0_i32_1 = arith.constant 0 : i32
    return %c0_i32, %c0_i32_0 : i32, i32
  }
  func.func @transform_7(%arg0: i32, %arg1: i32) -> (i32, i32) {
    %c0_i32 = arith.constant 0 : i32
    %c0_i32_0 = arith.constant 0 : i32
    %c0_i32_1 = arith.constant 0 : i32
    return %c0_i32, %c0_i32_0 : i32, i32
  }
  func.func @transform_8(%arg0: i32, %arg1: i32) -> (i32, i32) {
    %c0_i32 = arith.constant 0 : i32
    %c0_i32_0 = arith.constant 0 : i32
    %c0_i32_1 = arith.constant 0 : i32
    return %c0_i32, %c0_i32_0 : i32, i32
  }
  func.func @transform_9(%arg0: i32, %arg1: i32) -> (i32, i32) {
    %c0_i32 = arith.constant 0 : i32
    %c0_i32_0 = arith.constant 0 : i32
    %c0_i32_1 = arith.constant 0 : i32
    return %c0_i32, %c0_i32_0 : i32, i32
  }
  func.func @transform_10(%arg0: i32, %arg1: i32) -> (i32, i32) {
    %c0_i32 = arith.constant 0 : i32
    %c0_i32_0 = arith.constant 0 : i32
    %c0_i32_1 = arith.constant 0 : i32
    return %c0_i32, %c0_i32_0 : i32, i32
  }
  func.func @transform_11(%arg0: i32, %arg1: i32) -> (i32, i32) {
    %c0_i32 = arith.constant 0 : i32
    %c0_i32_0 = arith.constant 0 : i32
    %c0_i32_1 = arith.constant 0 : i32
    return %c0_i32, %c0_i32_0 : i32, i32
  }
  func.func @transform_12(%arg0: i32, %arg1: i32) -> (i32, i32) {
    %c0_i32 = arith.constant 0 : i32
    %c0_i32_0 = arith.constant 0 : i32
    %c0_i32_1 = arith.constant 0 : i32
    return %c0_i32, %c0_i32_0 : i32, i32
  }
  func.func @transform_13(%arg0: i32, %arg1: i32) -> (i32, i32) {
    %c0_i32 = arith.constant 0 : i32
    %c0_i32_0 = arith.constant 0 : i32
    %c0_i32_1 = arith.constant 0 : i32
    return %c0_i32, %c0_i32_0 : i32, i32
  }
  func.func @transform_14(%arg0: i32, %arg1: i32) -> (i32, i32) {
    %c0_i32 = arith.constant 0 : i32
    %c0_i32_0 = arith.constant 0 : i32
    %c0_i32_1 = arith.constant 0 : i32
    return %c0_i32, %c0_i32_0 : i32, i32
  }
  func.func @transform_15(%arg0: i32, %arg1: i32) -> (i32, i32) {
    %c0_i32 = arith.constant 0 : i32
    %c0_i32_0 = arith.constant 0 : i32
    %c0_i32_1 = arith.constant 0 : i32
    return %c0_i32, %c0_i32_0 : i32, i32
  }
  func.func @transform_16(%arg0: i32, %arg1: i32) -> (i32, i32) {
    %c0_i32 = arith.constant 0 : i32
    %c0_i32_0 = arith.constant 0 : i32
    %c0_i32_1 = arith.constant 0 : i32
    return %c0_i32, %c0_i32_0 : i32, i32
  }
  func.func @transform_17(%arg0: i32, %arg1: i32) -> (i32, i32) {
    %c0_i32 = arith.constant 0 : i32
    %c0_i32_0 = arith.constant 0 : i32
    %c0_i32_1 = arith.constant 0 : i32
    return %c0_i32, %c0_i32_0 : i32, i32
  }
  func.func @transform_18(%arg0: i32, %arg1: i32) -> (i32, i32) {
    %c0_i32 = arith.constant 0 : i32
    %c0_i32_0 = arith.constant 0 : i32
    %c0_i32_1 = arith.constant 0 : i32
    return %c0_i32, %c0_i32_0 : i32, i32
  }
  func.func @transform_19(%arg0: i32, %arg1: i32) -> (i32, i32) {
    %c0_i32 = arith.constant 0 : i32
    %c0_i32_0 = arith.constant 0 : i32
    return %arg0, %c0_i32 : i32, i32
  }
}

</mosaic_0001>

<llo_original>
// kernel: forward.1
$region0: #{forward.1}
  #allocation0 [shape = 'u32[]', space=smem, size = 0x4, offset = 0x4, fixed_abs, tag = 'smem constant byte address 0x4 - core index']
  #allocation1 [shape = 'u32[144,128]{1,0:T(1,128)}', space=vmem, size = 0x12000, scoped, tag = 'internal scratch']
  #allocation2 [shape = 'f32[8,256]{1,0:T(8,128)}', space=vmem, size = 0x2000, scoped, tag = 'scratch operand']
  #allocation3 [shape = 'f32[8,256]{1,0:T(8,128)}', space=vmem, size = 0x2000, scoped, tag = 'scratch operand']
  %s0 = inlined_call_operand.hbm [shape: f32[8,8,16], index: 0, kind: input, shape index: {}]
  %s1 = inlined_call_operand.hbm [shape: bf16[16,256], index: 1, kind: input, shape index: {}]
  %s2 = inlined_call_operand.hbm [shape: f32[1,256], index: 2, kind: input, shape index: {}]
  %s3 = inlined_call_operand.hbm [shape: bf16[256,256], index: 3, kind: input, shape index: {}]
  %s4 = inlined_call_operand.hbm [shape: bf16[256,256], index: 4, kind: input, shape index: {}]
  %s5 = inlined_call_operand.hbm [shape: bf16[256,256], index: 5, kind: input, shape index: {}]
  %s6 = inlined_call_operand.hbm [shape: f32[1,256], index: 6, kind: input, shape index: {}]
  %s7 = inlined_call_operand.hbm [shape: f32[12,256], index: 7, kind: input, shape index: {}]
  %s8 = inlined_call_operand.hbm [shape: f32[33,256], index: 8, kind: input, shape index: {}]
  %s9 = inlined_call_operand.hbm [shape: bf16[2048,128], index: 9, kind: input, shape index: {}]
  %s10 = inlined_call_operand.hbm [shape: bf16[256,128], index: 10, kind: input, shape index: {}]
  %s11 = inlined_call_operand.hbm [shape: f32[12,128], index: 11, kind: input, shape index: {}]
  %s12 = inlined_call_operand.hbm [shape: f32[33,128], index: 12, kind: input, shape index: {}]
  %s13 = inlined_call_operand.hbm [shape: bf16[1024,32], index: 13, kind: input, shape index: {}]
  %s14 = inlined_call_operand.hbm [shape: bf16[128,32], index: 14, kind: input, shape index: {}]
  %s15 = inlined_call_operand.hbm [shape: f32[12,32], index: 15, kind: input, shape index: {}]
  %s16 = inlined_call_operand.hbm [shape: f32[33,32], index: 16, kind: input, shape index: {}]
  %s17 = inlined_call_operand.hbm [shape: f32[8,32], index: 17, kind: input, shape index: {}]
  %s18 = inlined_call_operand.hbm [shape: f32[1,32], index: 18, kind: input, shape index: {}]
  %s19 = inlined_call_operand.hbm [shape: f32[8,128], index: 19, kind: output, shape index: {}]
  %s20 = sld [smem:[#allocation0]]
  $region193: #{forward.1} parent=0
    _
  %s22 = ssub.s32 1, %s20
  %s23 = scalar_select 0, %s22, %s20
  $region1: #{forward.1} parent=0
    #allocation4 [shape = 'u8[32768]{0}', space=vmem, size = 0x8000, scoped, tag = 'input window, operand 0']
    #allocation5 [shape = 's32[2]{0}', space=sflag, size = 0x8, scoped, tag = 'scoped memory for forward.1']
    #allocation6 [shape = 's32[2]{0}', space=sflag, size = 0x8, scoped, tag = 'scoped memory for forward.1']
    #allocation7 [shape = 'u8[8192]{0}', space=vmem, size = 0x2000, scoped, tag = 'input window, operand 1, single buffered']
    #allocation8 [shape = 's32[1]{0}', space=sflag, size = 0x4, scoped, tag = 'scoped memory for forward.1']
    #allocation9 [shape = 'u8[1024]{0}', space=vmem, size = 0x400, scoped, tag = 'input window, operand 2, single buffered']
    #allocation10 [shape = 'u8[131072]{0}', space=vmem, size = 0x20000, scoped, tag = 'input window, operand 3, single buffered']
    #allocation11 [shape = 's32[1]{0}', space=sflag, size = 0x4, scoped, tag = 'scoped memory for forward.1']
    #allocation12 [shape = 'u8[131072]{0}', space=vmem, size = 0x20000, scoped, tag = 'input window, operand 4, single buffered']
    #allocation13 [shape = 'u8[131072]{0}', space=vmem, size = 0x20000, scoped, tag = 'input window, operand 5, single buffered']
    #allocation14 [shape = 's32[1]{0}', space=sflag, size = 0x4, scoped, tag = 'scoped memory for forward.1']
    #allocation15 [shape = 'u8[1024]{0}', space=vmem, size = 0x400, scoped, tag = 'input window, operand 6, single buffered']
    #allocation16 [shape = 'u8[16384]{0}', space=vmem, size = 0x4000, scoped, tag = 'input window, operand 7, single buffered']
    #allocation17 [shape = 's32[1]{0}', space=sflag, size = 0x4, scoped, tag = 'scoped memory for forward.1']
    #allocation18 [shape = 'u8[40960]{0}', space=vmem, size = 0xa000, scoped, tag = 'input window, operand 8, single buffered']
    #allocation19 [shape = 'u8[524288]{0}', space=vmem, size = 0x80000, scoped, tag = 'input window, operand 9, single buffered']
    #allocation20 [shape = 's32[1]{0}', space=sflag, size = 0x4, scoped, tag = 'scoped memory for forward.1']
    #allocation21 [shape = 'u8[65536]{0}', space=vmem, size = 0x10000, scoped, tag = 'input window, operand 10, single buffered']
    #allocation22 [shape = 'u8[8192]{0}', space=vmem, size = 0x2000, scoped, tag = 'input window, operand 11, single buffered']
    #allocation23 [shape = 's32[1]{0}', space=sflag, size = 0x4, scoped, tag = 'scoped memory for forward.1']
    #allocation24 [shape = 'u8[20480]{0}', space=vmem, size = 0x5000, scoped, tag = 'input window, operand 12, single buffered']
    #allocation25 [shape = 'u8[262144]{0}', space=vmem, size = 0x40000, scoped, tag = 'input window, operand 13, single buffered']
    #allocation26 [shape = 's32[1]{0}', space=sflag, size = 0x4, scoped, tag = 'scoped memory for forward.1']
    #allocation27 [shape = 'u8[32768]{0}', space=vmem, size = 0x8000, scoped, tag = 'input window, operand 14, single buffered']
    #allocation28 [shape = 'u8[8192]{0}', space=vmem, size = 0x2000, scoped, tag = 'input window, operand 15, single buffered']
    #allocation29 [shape = 's32[1]{0}', space=sflag, size = 0x4, scoped, tag = 'scoped memory for forward.1']
    #allocation30 [shape = 'u8[20480]{0}', space=vmem, size = 0x5000, scoped, tag = 'input window, operand 16, single buffered']
    #allocation31 [shape = 'u8[4096]{0}', space=vmem, size = 0x1000, scoped, tag = 'input window, operand 17, single buffered']
    #allocation32 [shape = 's32[1]{0}', space=sflag, size = 0x4, scoped, tag = 'scoped memory for forward.1']
    #allocation33 [shape = 'u8[512]{0}', space=vmem, size = 0x400, scoped, tag = 'input window, operand 18, single buffered']
    #allocation34 [shape = 'u8[4096]{0}', space=vmem, size = 0x1000, scoped, tag = 'output window, operand 0, single buffered']
    %24 = vsyncpa [#allocation5], 0
    %s25 = scalar_lea.sflag [#allocation5], 1
    %26 = vsyncpa %s25, 0
    %27 = vsyncpa [#allocation8], 0
    %28 = vsyncpa [#allocation11], 0
    %29 = vsyncpa [#allocation14], 0
    %30 = vsyncpa [#allocation17], 0
    %31 = vsyncpa [#allocation20], 0
    %32 = vsyncpa [#allocation23], 0
    %33 = vsyncpa [#allocation26], 0
    %34 = vsyncpa [#allocation29], 0
    %35 = vsyncpa [#allocation32], 0
    %36 = vsyncpa [#allocation6], 0
    loop: start=0, step=1, limit=4
    $region2: #{forward.1} parent=1 // loop_pre_header
      _
    $region3: #{forward.1} parent=1 // loop_header
      %s38 = sphi 0, %s42
      %p39 = scmp.ge.s32.totalorder %s38, 4
      %s45 = sphi 0, %s57
      %s46 = sphi 0, %s53
      %s47 = sphi 0, %s45
      %s48 = sphi 0, %s46
      %s49 = sphi 0, %s47
      %s50 = sphi 0, %s48
      %s62 = sphi 0, %s64
      %s65 = sphi 0, %s62
      %s66 = sphi 0, %s65
      %s82 = sphi 0, %s66
      %s86 = sphi 0, %s86
      %s88 = sphi 0, %s86
      %s89 = sphi 0, %s88
      %s103 = sphi 0, %s89
      %s107 = sphi 0, %s107
      %s109 = sphi 0, %s107
      %s110 = sphi 0, %s109
      %s124 = sphi 0, %s110
      %s128 = sphi 0, %s128
      %s130 = sphi 0, %s128
      %s131 = sphi 0, %s130
      %s145 = sphi 0, %s131
      %s149 = sphi 0, %s149
      %s151 = sphi 0, %s149
      %s152 = sphi 0, %s151
      %s166 = sphi 0, %s152
      %s170 = sphi 0, %s170
      %s172 = sphi 0, %s170
      %s173 = sphi 0, %s172
      %s187 = sphi 0, %s173
      %s191 = sphi 0, %s191
      %s193 = sphi 0, %s191
      %s194 = sphi 0, %s193
      %s208 = sphi 0, %s194
      %s212 = sphi 0, %s212
      %s214 = sphi 0, %s212
      %s215 = sphi 0, %s214
      %s229 = sphi 0, %s215
      %s233 = sphi 0, %s233
      %s235 = sphi 0, %s233
      %s236 = sphi 0, %s235
      %s250 = sphi 0, %s236
      %s254 = sphi 0, %s254
      %s256 = sphi 0, %s254
      %s257 = sphi 0, %s256
      %s271 = sphi 0, %s257
      %s275 = sphi 0, %s275
      %s277 = sphi 0, %s275
      %s278 = sphi 0, %s277
      %s292 = sphi 0, %s278
      %s296 = sphi 0, %s296
      %s298 = sphi 0, %s296
      %s299 = sphi 0, %s298
      %s313 = sphi 0, %s299
      %s317 = sphi 0, %s317
      %s319 = sphi 0, %s317
      %s320 = sphi 0, %s319
      %s334 = sphi 0, %s320
      %s338 = sphi 0, %s338
      %s340 = sphi 0, %s338
      %s341 = sphi 0, %s340
      %s355 = sphi 0, %s341
      %s359 = sphi 0, %s359
      %s361 = sphi 0, %s359
      %s362 = sphi 0, %s361
      %s376 = sphi 0, %s362
      %s380 = sphi 0, %s380
      %s382 = sphi 0, %s380
      %s383 = sphi 0, %s382
      %s397 = sphi 0, %s383
      %s401 = sphi 0, %s401
      %s403 = sphi 0, %s401
      %s404 = sphi 0, %s403
      %s418 = sphi 0, %s404
      %s422 = sphi 0, %s422
      %s424 = sphi 0, %s422
      %s425 = sphi 0, %s424
      %s439 = sphi 0, %s425
      %s443 = sphi 0, %s443
      %s445 = sphi 0, %s443
      %s446 = sphi 0, %s445
      %s460 = sphi 0, %s446
      %s466 = sphi 0, %s468
      %s469 = sphi 0, %s466
      %s470 = sphi 0, %s469
      %s486 = sphi 0, %s470
    $region4: #{forward.1} parent=1 // loop_header_branch
      %41 = sbr.rel (%p39) target = $region8
    $region5: #{forward.1} parent=1 // loop_body
      %s43 = ssub.s32 %s38, 1
      %s44 = ssub.s32 %s38, 2
      %s51 = sadd.s32 1, %s46
      %p52 = scmp.ge.s32.totalorder %s51, 2
      %s53 = scalar_select %p52, 0, %s51
      %s54 = sadd.s32 1, %s45
      %s55 = scalar_select %p52, %s54, %s45
      %p56 = scmp.ge.s32.totalorder %s55, 1
      %s57 = scalar_select %p56, 0, %s55
      %s58 = ssub.s32 %s46, %s53
      %s59 = ssub.s32 %s45, %s57
      %s60 = sor.u32 %s58, %s59
      %p61 = scmp.eq.s32.totalorder %s60, 0
      %s63 = sadd.s32 %s62, 1
      %s64 = scalar_select %p61, %s62, %s63
      %p67 = pneg %p61
      %p68 = scmp.eq.s32.totalorder %s38, 1
      %p69 = por %p67, %p68
      %p70 = scmp.ne.s32.totalorder %s62, %s65
      %p71 = scmp.eq.s32.totalorder %s38, 0
      %p72 = por %p70, %p71
      %p73 = scmp.ne.s32.totalorder %s62, %s65
      %p74 = scmp.eq.s32.totalorder %s43, 1
      %p75 = por %p73, %p74
      %p76 = scmp.ne.s32.totalorder %s65, %s66
      %p77 = scmp.eq.s32.totalorder %s43, 0
      %p78 = por %p76, %p77
      %p79 = scmp.ne.s32.totalorder %s65, %s66
      %p80 = scmp.eq.s32.totalorder %s44, 1
      %p81 = por %p79, %p80
      %p83 = scmp.ne.s32.totalorder %s66, %s82
      %p84 = scmp.eq.s32.totalorder %s44, 0
      %p85 = por %p83, %p84
      %s87 = sadd.s32 %s86, 1
      %p90 = scmp.eq.s32.totalorder %s38, 1
      %p91 = scmp.ne.s32.totalorder %s86, %s88
      %p92 = scmp.eq.s32.totalorder %s38, 0
      %p93 = por %p91, %p92
      %p94 = scmp.ne.s32.totalorder %s86, %s88
      %p95 = scmp.eq.s32.totalorder %s43, 1
      %p96 = por %p94, %p95
      %p97 = scmp.ne.s32.totalorder %s88, %s89
      %p98 = scmp.eq.s32.totalorder %s43, 0
      %p99 = por %p97, %p98
      %p100 = scmp.ne.s32.totalorder %s88, %s89
      %p101 = scmp.eq.s32.totalorder %s44, 1
      %p102 = por %p100, %p101
      %p104 = scmp.ne.s32.totalorder %s89, %s103
      %p105 = scmp.eq.s32.totalorder %s44, 0
      %p106 = por %p104, %p105
      %s108 = sadd.s32 %s107, 1
      %p111 = scmp.eq.s32.totalorder %s38, 1
      %p112 = scmp.ne.s32.totalorder %s107, %s109
      %p113 = scmp.eq.s32.totalorder %s38, 0
      %p114 = por %p112, %p113
      %p115 = scmp.ne.s32.totalorder %s107, %s109
      %p116 = scmp.eq.s32.totalorder %s43, 1
      %p117 = por %p115, %p116
      %p118 = scmp.ne.s32.totalorder %s109, %s110
      %p119 = scmp.eq.s32.totalorder %s43, 0
      %p120 = por %p118, %p119
      %p121 = scmp.ne.s32.totalorder %s109, %s110
      %p122 = scmp.eq.s32.totalorder %s44, 1
      %p123 = por %p121, %p122
      %p125 = scmp.ne.s32.totalorder %s110, %s124
      %p126 = scmp.eq.s32.totalorder %s44, 0
      %p127 = por %p125, %p126
      %s129 = sadd.s32 %s128, 1
      %p132 = scmp.eq.s32.totalorder %s38, 1
      %p133 = scmp.ne.s32.totalorder %s128, %s130
      %p134 = scmp.eq.s32.totalorder %s38, 0
      %p135 = por %p133, %p134
      %p136 = scmp.ne.s32.totalorder %s128, %s130
      %p137 = scmp.eq.s32.totalorder %s43, 1
      %p138 = por %p136, %p137
      %p139 = scmp.ne.s32.totalorder %s130, %s131
      %p140 = scmp.eq.s32.totalorder %s43, 0
      %p141 = por %p139, %p140
      %p142 = scmp.ne.s32.totalorder %s130, %s131
      %p143 = scmp.eq.s32.totalorder %s44, 1
      %p144 = por %p142, %p143
      %p146 = scmp.ne.s32.totalorder %s131, %s145
      %p147 = scmp.eq.s32.totalorder %s44, 0
      %p148 = por %p146, %p147
      %s150 = sadd.s32 %s149, 1
      %p153 = scmp.eq.s32.totalorder %s38, 1
      %p154 = scmp.ne.s32.totalorder %s149, %s151
      %p155 = scmp.eq.s32.totalorder %s38, 0
      %p156 = por %p154, %p155
      %p157 = scmp.ne.s32.totalorder %s149, %s151
      %p158 = scmp.eq.s32.totalorder %s43, 1
      %p159 = por %p157, %p158
      %p160 = scmp.ne.s32.totalorder %s151, %s152
      %p161 = scmp.eq.s32.totalorder %s43, 0
      %p162 = por %p160, %p161
      %p163 = scmp.ne.s32.totalorder %s151, %s152
      %p164 = scmp.eq.s32.totalorder %s44, 1
      %p165 = por %p163, %p164
      %p167 = scmp.ne.s32.totalorder %s152, %s166
      %p168 = scmp.eq.s32.totalorder %s44, 0
      %p169 = por %p167, %p168
      %s171 = sadd.s32 %s170, 1
      %p174 = scmp.eq.s32.totalorder %s38, 1
      %p175 = scmp.ne.s32.totalorder %s170, %s172
      %p176 = scmp.eq.s32.totalorder %s38, 0
      %p177 = por %p175, %p176
      %p178 = scmp.ne.s32.totalorder %s170, %s172
      %p179 = scmp.eq.s32.totalorder %s43, 1
      %p180 = por %p178, %p179
      %p181 = scmp.ne.s32.totalorder %s172, %s173
      %p182 = scmp.eq.s32.totalorder %s43, 0
      %p183 = por %p181, %p182
      %p184 = scmp.ne.s32.totalorder %s172, %s173
      %p185 = scmp.eq.s32.totalorder %s44, 1
      %p186 = por %p184, %p185
      %p188 = scmp.ne.s32.totalorder %s173, %s187
      %p189 = scmp.eq.s32.totalorder %s44, 0
      %p190 = por %p188, %p189
      %s192 = sadd.s32 %s191, 1
      %p195 = scmp.eq.s32.totalorder %s38, 1
      %p196 = scmp.ne.s32.totalorder %s191, %s193
      %p197 = scmp.eq.s32.totalorder %s38, 0
      %p198 = por %p196, %p197
      %p199 = scmp.ne.s32.totalorder %s191, %s193
      %p200 = scmp.eq.s32.totalorder %s43, 1
      %p201 = por %p199, %p200
      %p202 = scmp.ne.s32.totalorder %s193, %s194
      %p203 = scmp.eq.s32.totalorder %s43, 0
      %p204 = por %p202, %p203
      %p205 = scmp.ne.s32.totalorder %s193, %s194
      %p206 = scmp.eq.s32.totalorder %s44, 1
      %p207 = por %p205, %p206
      %p209 = scmp.ne.s32.totalorder %s194, %s208
      %p210 = scmp.eq.s32.totalorder %s44, 0
      %p211 = por %p209, %p210
      %s213 = sadd.s32 %s212, 1
      %p216 = scmp.eq.s32.totalorder %s38, 1
      %p217 = scmp.ne.s32.totalorder %s212, %s214
      %p218 = scmp.eq.s32.totalorder %s38, 0
      %p219 = por %p217, %p218
      %p220 = scmp.ne.s32.totalorder %s212, %s214
      %p221 = scmp.eq.s32.totalorder %s43, 1
      %p222 = por %p220, %p221
      %p223 = scmp.ne.s32.totalorder %s214, %s215
      %p224 = scmp.eq.s32.totalorder %s43, 0
      %p225 = por %p223, %p224
      %p226 = scmp.ne.s32.totalorder %s214, %s215
      %p227 = scmp.eq.s32.totalorder %s44, 1
      %p228 = por %p226, %p227
      %p230 = scmp.ne.s32.totalorder %s215, %s229
      %p231 = scmp.eq.s32.totalorder %s44, 0
      %p232 = por %p230, %p231
      %s234 = sadd.s32 %s233, 1
      %p237 = scmp.eq.s32.totalorder %s38, 1
      %p238 = scmp.ne.s32.totalorder %s233, %s235
      %p239 = scmp.eq.s32.totalorder %s38, 0
      %p240 = por %p238, %p239
      %p241 = scmp.ne.s32.totalorder %s233, %s235
      %p242 = scmp.eq.s32.totalorder %s43, 1
      %p243 = por %p241, %p242
      %p244 = scmp.ne.s32.totalorder %s235, %s236
      %p245 = scmp.eq.s32.totalorder %s43, 0
      %p246 = por %p244, %p245
      %p247 = scmp.ne.s32.totalorder %s235, %s236
      %p248 = scmp.eq.s32.totalorder %s44, 1
      %p249 = por %p247, %p248
      %p251 = scmp.ne.s32.totalorder %s236, %s250
      %p252 = scmp.eq.s32.totalorder %s44, 0
      %p253 = por %p251, %p252
      %s255 = sadd.s32 %s254, 1
      %p258 = scmp.eq.s32.totalorder %s38, 1
      %p259 = scmp.ne.s32.totalorder %s254, %s256
      %p260 = scmp.eq.s32.totalorder %s38, 0
      %p261 = por %p259, %p260
      %p262 = scmp.ne.s32.totalorder %s254, %s256
      %p263 = scmp.eq.s32.totalorder %s43, 1
      %p264 = por %p262, %p263
      %p265 = scmp.ne.s32.totalorder %s256, %s257
      %p266 = scmp.eq.s32.totalorder %s43, 0
      %p267 = por %p265, %p266
      %p268 = scmp.ne.s32.totalorder %s256, %s257
      %p269 = scmp.eq.s32.totalorder %s44, 1
      %p270 = por %p268, %p269
      %p272 = scmp.ne.s32.totalorder %s257, %s271
      %p273 = scmp.eq.s32.totalorder %s44, 0
      %p274 = por %p272, %p273
      %s276 = sadd.s32 %s275, 1
      %p279 = scmp.eq.s32.totalorder %s38, 1
      %p280 = scmp.ne.s32.totalorder %s275, %s277
      %p281 = scmp.eq.s32.totalorder %s38, 0
      %p282 = por %p280, %p281
      %p283 = scmp.ne.s32.totalorder %s275, %s277
      %p284 = scmp.eq.s32.totalorder %s43, 1
      %p285 = por %p283, %p284
      %p286 = scmp.ne.s32.totalorder %s277, %s278
      %p287 = scmp.eq.s32.totalorder %s43, 0
      %p288 = por %p286, %p287
      %p289 = scmp.ne.s32.totalorder %s277, %s278
      %p290 = scmp.eq.s32.totalorder %s44, 1
      %p291 = por %p289, %p290
      %p293 = scmp.ne.s32.totalorder %s278, %s292
      %p294 = scmp.eq.s32.totalorder %s44, 0
      %p295 = por %p293, %p294
      %s297 = sadd.s32 %s296, 1
      %p300 = scmp.eq.s32.totalorder %s38, 1
      %p301 = scmp.ne.s32.totalorder %s296, %s298
      %p302 = scmp.eq.s32.totalorder %s38, 0
      %p303 = por %p301, %p302
      %p304 = scmp.ne.s32.totalorder %s296, %s298
      %p305 = scmp.eq.s32.totalorder %s43, 1
      %p306 = por %p304, %p305
      %p307 = scmp.ne.s32.totalorder %s298, %s299
      %p308 = scmp.eq.s32.totalorder %s43, 0
      %p309 = por %p307, %p308
      %p310 = scmp.ne.s32.totalorder %s298, %s299
      %p311 = scmp.eq.s32.totalorder %s44, 1
      %p312 = por %p310, %p311
      %p314 = scmp.ne.s32.totalorder %s299, %s313
      %p315 = scmp.eq.s32.totalorder %s44, 0
      %p316 = por %p314, %p315
      %s318 = sadd.s32 %s317, 1
      %p321 = scmp.eq.s32.totalorder %s38, 1
      %p322 = scmp.ne.s32.totalorder %s317, %s319
      %p323 = scmp.eq.s32.totalorder %s38, 0
      %p324 = por %p322, %p323
      %p325 = scmp.ne.s32.totalorder %s317, %s319
      %p326 = scmp.eq.s32.totalorder %s43, 1
      %p327 = por %p325, %p326
      %p328 = scmp.ne.s32.totalorder %s319, %s320
      %p329 = scmp.eq.s32.totalorder %s43, 0
      %p330 = por %p328, %p329
      %p331 = scmp.ne.s32.totalorder %s319, %s320
      %p332 = scmp.eq.s32.totalorder %s44, 1
      %p333 = por %p331, %p332
      %p335 = scmp.ne.s32.totalorder %s320, %s334
      %p336 = scmp.eq.s32.totalorder %s44, 0
      %p337 = por %p335, %p336
      %s339 = sadd.s32 %s338, 1
      %p342 = scmp.eq.s32.totalorder %s38, 1
      %p343 = scmp.ne.s32.totalorder %s338, %s340
      %p344 = scmp.eq.s32.totalorder %s38, 0
      %p345 = por %p343, %p344
      %p346 = scmp.ne.s32.totalorder %s338, %s340
      %p347 = scmp.eq.s32.totalorder %s43, 1
      %p348 = por %p346, %p347
      %p349 = scmp.ne.s32.totalorder %s340, %s341
      %p350 = scmp.eq.s32.totalorder %s43, 0
      %p351 = por %p349, %p350
      %p352 = scmp.ne.s32.totalorder %s340, %s341
      %p353 = scmp.eq.s32.totalorder %s44, 1
      %p354 = por %p352, %p353
      %p356 = scmp.ne.s32.totalorder %s341, %s355
      %p357 = scmp.eq.s32.totalorder %s44, 0
      %p358 = por %p356, %p357
      %s360 = sadd.s32 %s359, 1
      %p363 = scmp.eq.s32.totalorder %s38, 1
      %p364 = scmp.ne.s32.totalorder %s359, %s361
      %p365 = scmp.eq.s32.totalorder %s38, 0
      %p366 = por %p364, %p365
      %p367 = scmp.ne.s32.totalorder %s359, %s361
      %p368 = scmp.eq.s32.totalorder %s43, 1
      %p369 = por %p367, %p368
      %p370 = scmp.ne.s32.totalorder %s361, %s362
      %p371 = scmp.eq.s32.totalorder %s43, 0
      %p372 = por %p370, %p371
      %p373 = scmp.ne.s32.totalorder %s361, %s362
      %p374 = scmp.eq.s32.totalorder %s44, 1
      %p375 = por %p373, %p374
      %p377 = scmp.ne.s32.totalorder %s362, %s376
      %p378 = scmp.eq.s32.totalorder %s44, 0
      %p379 = por %p377, %p378
      %s381 = sadd.s32 %s380, 1
      %p384 = scmp.eq.s32.totalorder %s38, 1
      %p385 = scmp.ne.s32.totalorder %s380, %s382
      %p386 = scmp.eq.s32.totalorder %s38, 0
      %p387 = por %p385, %p386
      %p388 = scmp.ne.s32.totalorder %s380, %s382
      %p389 = scmp.eq.s32.totalorder %s43, 1
      %p390 = por %p388, %p389
      %p391 = scmp.ne.s32.totalorder %s382, %s383
      %p392 = scmp.eq.s32.totalorder %s43, 0
      %p393 = por %p391, %p392
      %p394 = scmp.ne.s32.totalorder %s382, %s383
      %p395 = scmp.eq.s32.totalorder %s44, 1
      %p396 = por %p394, %p395
      %p398 = scmp.ne.s32.totalorder %s383, %s397
      %p399 = scmp.eq.s32.totalorder %s44, 0
      %p400 = por %p398, %p399
      %s402 = sadd.s32 %s401, 1
      %p405 = scmp.eq.s32.totalorder %s38, 1
      %p406 = scmp.ne.s32.totalorder %s401, %s403
      %p407 = scmp.eq.s32.totalorder %s38, 0
      %p408 = por %p406, %p407
      %p409 = scmp.ne.s32.totalorder %s401, %s403
      %p410 = scmp.eq.s32.totalorder %s43, 1
      %p411 = por %p409, %p410
      %p412 = scmp.ne.s32.totalorder %s403, %s404
      %p413 = scmp.eq.s32.totalorder %s43, 0
      %p414 = por %p412, %p413
      %p415 = scmp.ne.s32.totalorder %s403, %s404
      %p416 = scmp.eq.s32.totalorder %s44, 1
      %p417 = por %p415, %p416
      %p419 = scmp.ne.s32.totalorder %s404, %s418
      %p420 = scmp.eq.s32.totalorder %s44, 0
      %p421 = por %p419, %p420
      %s423 = sadd.s32 %s422, 1
      %p426 = scmp.eq.s32.totalorder %s38, 1
      %p427 = scmp.ne.s32.totalorder %s422, %s424
      %p428 = scmp.eq.s32.totalorder %s38, 0
      %p429 = por %p427, %p428
      %p430 = scmp.ne.s32.totalorder %s422, %s424
      %p431 = scmp.eq.s32.totalorder %s43, 1
      %p432 = por %p430, %p431
      %p433 = scmp.ne.s32.totalorder %s424, %s425
      %p434 = scmp.eq.s32.totalorder %s43, 0
      %p435 = por %p433, %p434
      %p436 = scmp.ne.s32.totalorder %s424, %s425
      %p437 = scmp.eq.s32.totalorder %s44, 1
      %p438 = por %p436, %p437
      %p440 = scmp.ne.s32.totalorder %s425, %s439
      %p441 = scmp.eq.s32.totalorder %s44, 0
      %p442 = por %p440, %p441
      %s444 = sadd.s32 %s443, 1
      %p447 = scmp.eq.s32.totalorder %s38, 1
      %p448 = scmp.ne.s32.totalorder %s443, %s445
      %p449 = scmp.eq.s32.totalorder %s38, 0
      %p450 = por %p448, %p449
      %p451 = scmp.ne.s32.totalorder %s443, %s445
      %p452 = scmp.eq.s32.totalorder %s43, 1
      %p453 = por %p451, %p452
      %p454 = scmp.ne.s32.totalorder %s445, %s446
      %p455 = scmp.eq.s32.totalorder %s43, 0
      %p456 = por %p454, %p455
      %p457 = scmp.ne.s32.totalorder %s445, %s446
      %p458 = scmp.eq.s32.totalorder %s44, 1
      %p459 = por %p457, %p458
      %p461 = scmp.ne.s32.totalorder %s446, %s460
      %p462 = scmp.eq.s32.totalorder %s44, 0
      %p463 = por %p461, %p462
      %s464 = ssub.s32 %s45, %s57
      %p465 = scmp.eq.s32.totalorder %s464, 0
      %s467 = sadd.s32 %s466, 1
      %s468 = scalar_select %p465, %s466, %s467
      %p471 = pneg %p465
      %p472 = scmp.eq.s32.totalorder %s38, 1
      %p473 = por %p471, %p472
      %p474 = scmp.ne.s32.totalorder %s466, %s469
      %p475 = scmp.eq.s32.totalorder %s38, 0
      %p476 = por %p474, %p475
      %p477 = scmp.ne.s32.totalorder %s466, %s469
      %p478 = scmp.eq.s32.totalorder %s43, 1
      %p479 = por %p477, %p478
      %p480 = scmp.ne.s32.totalorder %s469, %s470
      %p481 = scmp.eq.s32.totalorder %s43, 0
      %p482 = por %p480, %p481
      %p483 = scmp.ne.s32.totalorder %s469, %s470
      %p484 = scmp.eq.s32.totalorder %s44, 1
      %p485 = por %p483, %p484
      %p487 = scmp.ne.s32.totalorder %s470, %s486
      %p488 = scmp.eq.s32.totalorder %s44, 0
      %p489 = por %p487, %p488
      %p490 = scmp.le.s32.totalorder 1, %s38
      %p491 = scmp.lt.s32.totalorder %s38, 3
      %p492 = pnand %p490, %p491
      %p493 = pneg %p492
      // Predicated region
      $region9: #{forward.1} parent=5 // pred_check
        _
      $region10: #{forward.1} parent=5 // pred_check_branch
        %495 = sbr.rel (%p492) target = $region12
      $region11: #{forward.1} parent=5 // pred_region
        %s496 = ssub.s32 %s38, 1
        // Predicated region
        $region13: #{forward.1} parent=11 // pred_check
          %p497 = pneg %p99
        $region14: #{forward.1} parent=11 // pred_check_branch
          %499 = sbr.rel (%p497) target = $region16
        $region15: #{forward.1} parent=11 // pred_region
          %s501 = ssub.s32 256, 256
          %502 = vsyncadd [#allocation8], %s501
          %s503 = sshll.u32 [#allocation7], 4
          %s504 = int_to_ptr.vmem [resolvable:$true] %s503
          %509 = dma.hbm_to_vmem [thread:$0]  %s1, 256, %s504, [#allocation8], 128, 128, 8
        $region16: #{forward.1} parent=11 // pred_fallthru
          _
        // Predicated region
        $region17: #{forward.1} parent=11 // pred_check
          %p510 = pneg %p120
        $region18: #{forward.1} parent=11 // pred_check_branch
          %512 = sbr.rel (%p510) target = $region20
        $region19: #{forward.1} parent=11 // pred_region
          %s514 = ssub.s32 32, 32
          %515 = vsyncadd [#allocation8], %s514
          %s517 = sshll.u32 [#allocation9], 4
          %s518 = int_to_ptr.vmem [resolvable:$true] %s517
          %520 = dma.hbm_to_vmem [thread:$0]  %s2, 32, %s518, [#allocation8]
        $region20: #{forward.1} parent=11 // pred_fallthru
          _
        // Predicated region
        $region21: #{forward.1} parent=11 // pred_check
          %p521 = pneg %p141
        $region22: #{forward.1} parent=11 // pred_check_branch
          %523 = sbr.rel (%p521) target = $region24
        $region23: #{forward.1} parent=11 // pred_region
          %s525 = ssub.s32 4096, 4096
          %526 = vsyncadd [#allocation11], %s525
          %s527 = sshll.u32 [#allocation10], 4
          %s528 = int_to_ptr.vmem [resolvable:$true] %s527
          %533 = dma.hbm_to_vmem [thread:$0]  %s3, 4096, %s528, [#allocation11], 128, 128, 8
        $region24: #{forward.1} parent=11 // pred_fallthru
          _
        // Predicated region
        $region25: #{forward.1} parent=11 // pred_check
          %p534 = pneg %p162
        $region26: #{forward.1} parent=11 // pred_check_branch
          %536 = sbr.rel (%p534) target = $region28
        $region27: #{forward.1} parent=11 // pred_region
          %s538 = ssub.s32 4096, 4096
          %539 = vsyncadd [#allocation11], %s538
          %s540 = sshll.u32 [#allocation12], 4
          %s541 = int_to_ptr.vmem [resolvable:$true] %s540
          %546 = dma.hbm_to_vmem [thread:$0]  %s4, 4096, %s541, [#allocation11], 128, 128, 8
        $region28: #{forward.1} parent=11 // pred_fallthru
          _
        // Predicated region
        $region29: #{forward.1} parent=11 // pred_check
          %p547 = pneg %p183
        $region30: #{forward.1} parent=11 // pred_check_branch
          %549 = sbr.rel (%p547) target = $region32
        $region31: #{forward.1} parent=11 // pred_region
          %s551 = ssub.s32 4096, 4096
          %552 = vsyncadd [#allocation14], %s551
          %s553 = sshll.u32 [#allocation13], 4
          %s554 = int_to_ptr.vmem [resolvable:$true] %s553
          %559 = dma.hbm_to_vmem [thread:$0]  %s5, 4096, %s554, [#allocation14], 128, 128, 8
        $region32: #{forward.1} parent=11 // pred_fallthru
          _
        // Predicated region
        $region33: #{forward.1} parent=11 // pred_check
          %p560 = pneg %p204
        $region34: #{forward.1} parent=11 // pred_check_branch
          %562 = sbr.rel (%p560) target = $region36
        $region35: #{forward.1} parent=11 // pred_region
          %s564 = ssub.s32 32, 32
          %565 = vsyncadd [#allocation14], %s564
          %s567 = sshll.u32 [#allocation15], 4
          %s568 = int_to_ptr.vmem [resolvable:$true] %s567
          %570 = dma.hbm_to_vmem [thread:$0]  %s6, 32, %s568, [#allocation14]
        $region36: #{forward.1} parent=11 // pred_fallthru
          _
        // Predicated region
        $region37: #{forward.1} parent=11 // pred_check
          %p571 = pneg %p225
        $region38: #{forward.1} parent=11 // pred_check_branch
          %573 = sbr.rel (%p571) target = $region40
        $region39: #{forward.1} parent=11 // pred_region
          %s575 = ssub.s32 512, 512
          %576 = vsyncadd [#allocation17], %s575
          %s577 = sshll.u32 [#allocation16], 4
          %s578 = int_to_ptr.vmem [resolvable:$true] %s577
          %583 = dma.hbm_to_vmem [thread:$0]  %s7, 512, %s578, [#allocation17], 256, 256, 16
        $region40: #{forward.1} parent=11 // pred_fallthru
          _
        // Predicated region
        $region41: #{forward.1} parent=11 // pred_check
          %p584 = pneg %p246
        $region42: #{forward.1} parent=11 // pred_check_branch
          %586 = sbr.rel (%p584) target = $region44
        $region43: #{forward.1} parent=11 // pred_region
          %s588 = ssub.s32 1280, 1280
          %589 = vsyncadd [#allocation17], %s588
          %s590 = sshll.u32 [#allocation18], 4
          %s591 = int_to_ptr.vmem [resolvable:$true] %s590
          %596 = dma.hbm_to_vmem [thread:$0]  %s8, 1280, %s591, [#allocation17], 256, 256, 16
        $region44: #{forward.1} parent=11 // pred_fallthru
          _
        // Predicated region
        $region45: #{forward.1} parent=11 // pred_check
          %p597 = pneg %p267
        $region46: #{forward.1} parent=11 // pred_check_branch
          %599 = sbr.rel (%p597) target = $region48
        $region47: #{forward.1} parent=11 // pred_region
          %s601 = ssub.s32 16384, 16384
          %602 = vsyncadd [#allocation20], %s601
          %s603 = sshll.u32 [#allocation19], 4
          %s604 = int_to_ptr.vmem [resolvable:$true] %s603
          %609 = dma.hbm_to_vmem [thread:$0]  %s9, 16384, %s604, [#allocation20], 64, 64, 4
        $region48: #{forward.1} parent=11 // pred_fallthru
          _
        // Predicated region
        $region49: #{forward.1} parent=11 // pred_check
          %p610 = pneg %p288
        $region50: #{forward.1} parent=11 // pred_check_branch
          %612 = sbr.rel (%p610) target = $region52
        $region51: #{forward.1} parent=11 // pred_region
          %s614 = ssub.s32 2048, 2048
          %615 = vsyncadd [#allocation20], %s614
          %s616 = sshll.u32 [#allocation21], 4
          %s617 = int_to_ptr.vmem [resolvable:$true] %s616
          %622 = dma.hbm_to_vmem [thread:$0]  %s10, 2048, %s617, [#allocation20], 64, 64, 4
        $region52: #{forward.1} parent=11 // pred_fallthru
          _
        // Predicated region
        $region53: #{forward.1} parent=11 // pred_check
          %p623 = pneg %p309
        $region54: #{forward.1} parent=11 // pred_check_branch
          %625 = sbr.rel (%p623) target = $region56
        $region55: #{forward.1} parent=11 // pred_region
          %s627 = ssub.s32 256, 256
          %628 = vsyncadd [#allocation23], %s627
          %s629 = sshll.u32 [#allocation22], 4
          %s630 = int_to_ptr.vmem [resolvable:$true] %s629
          %635 = dma.hbm_to_vmem [thread:$0]  %s11, 256, %s630, [#allocation23], 128, 128, 8
        $region56: #{forward.1} parent=11 // pred_fallthru
          _
        // Predicated region
        $region57: #{forward.1} parent=11 // pred_check
          %p636 = pneg %p330
        $region58: #{forward.1} parent=11 // pred_check_branch
          %638 = sbr.rel (%p636) target = $region60
        $region59: #{forward.1} parent=11 // pred_region
          %s640 = ssub.s32 640, 640
          %641 = vsyncadd [#allocation23], %s640
          %s642 = sshll.u32 [#allocation24], 4
          %s643 = int_to_ptr.vmem [resolvable:$true] %s642
          %648 = dma.hbm_to_vmem [thread:$0]  %s12, 640, %s643, [#allocation23], 128, 128, 8
        $region60: #{forward.1} parent=11 // pred_fallthru
          _
        // Predicated region
        $region61: #{forward.1} parent=11 // pred_check
          %p649 = pneg %p351
        $region62: #{forward.1} parent=11 // pred_check_branch
          %651 = sbr.rel (%p649) target = $region64
        $region63: #{forward.1} parent=11 // pred_region
          %s653 = ssub.s32 8192, 8192
          %654 = vsyncadd [#allocation26], %s653
          %s655 = sshll.u32 [#allocation25], 4
          %s656 = int_to_ptr.vmem [resolvable:$true] %s655
          %661 = dma.hbm_to_vmem [thread:$0]  %s13, 8192, %s656, [#allocation26], 64, 64, 4
        $region64: #{forward.1} parent=11 // pred_fallthru
          _
        // Predicated region
        $region65: #{forward.1} parent=11 // pred_check
          %p662 = pneg %p372
        $region66: #{forward.1} parent=11 // pred_check_branch
          %664 = sbr.rel (%p662) target = $region68
        $region67: #{forward.1} parent=11 // pred_region
          %s666 = ssub.s32 1024, 1024
          %667 = vsyncadd [#allocation26], %s666
          %s668 = sshll.u32 [#allocation27], 4
          %s669 = int_to_ptr.vmem [resolvable:$true] %s668
          %674 = dma.hbm_to_vmem [thread:$0]  %s14, 1024, %s669, [#allocation26], 64, 64, 4
        $region68: #{forward.1} parent=11 // pred_fallthru
          _
        // Predicated region
        $region69: #{forward.1} parent=11 // pred_check
          %p675 = pneg %p393
        $region70: #{forward.1} parent=11 // pred_check_branch
          %677 = sbr.rel (%p675) target = $region72
        $region71: #{forward.1} parent=11 // pred_region
          %s679 = ssub.s32 256, 256
          %680 = vsyncadd [#allocation29], %s679
          %s681 = sshll.u32 [#allocation28], 4
          %s682 = int_to_ptr.vmem [resolvable:$true] %s681
          %687 = dma.hbm_to_vmem [thread:$0]  %s15, 256, %s682, [#allocation29], 128, 128, 8
        $region72: #{forward.1} parent=11 // pred_fallthru
          _
        // Predicated region
        $region73: #{forward.1} parent=11 // pred_check
          %p688 = pneg %p414
        $region74: #{forward.1} parent=11 // pred_check_branch
          %690 = sbr.rel (%p688) target = $region76
        $region75: #{forward.1} parent=11 // pred_region
          %s692 = ssub.s32 640, 640
          %693 = vsyncadd [#allocation29], %s692
          %s694 = sshll.u32 [#allocation30], 4
          %s695 = int_to_ptr.vmem [resolvable:$true] %s694
          %700 = dma.hbm_to_vmem [thread:$0]  %s16, 640, %s695, [#allocation29], 128, 128, 8
        $region76: #{forward.1} parent=11 // pred_fallthru
          _
        // Predicated region
        $region77: #{forward.1} parent=11 // pred_check
          %p701 = pneg %p435
        $region78: #{forward.1} parent=11 // pred_check_branch
          %703 = sbr.rel (%p701) target = $region80
        $region79: #{forward.1} parent=11 // pred_region
          %s705 = ssub.s32 128, 128
          %706 = vsyncadd [#allocation32], %s705
          %s708 = sshll.u32 [#allocation31], 4
          %s709 = int_to_ptr.vmem [resolvable:$true] %s708
          %711 = dma.hbm_to_vmem [thread:$0]  %s17, 128, %s709, [#allocation32]
        $region80: #{forward.1} parent=11 // pred_fallthru
          _
        // Predicated region
        $region81: #{forward.1} parent=11 // pred_check
          %p712 = pneg %p456
        $region82: #{forward.1} parent=11 // pred_check_branch
          %714 = sbr.rel (%p712) target = $region84
        $region83: #{forward.1} parent=11 // pred_region
          %s716 = ssub.s32 16, 16
          %717 = vsyncadd [#allocation32], %s716
          %s719 = sshll.u32 [#allocation33], 4
          %s720 = int_to_ptr.vmem [resolvable:$true] %s719
          %722 = dma.hbm_to_vmem [thread:$0]  %s18, 16, %s720, [#allocation32]
        $region84: #{forward.1} parent=11 // pred_fallthru
          _
      $region12: #{forward.1} parent=5 // pred_fallthru
        _
      %p723 = scmp.lt.s32.totalorder %s38, 2
      // Predicated region
      $region85: #{forward.1} parent=5 // pred_check
        %p724 = pneg %p723
      $region86: #{forward.1} parent=5 // pred_check_branch
        %726 = sbr.rel (%p724) target = $region88
      $region87: #{forward.1} parent=5 // pred_region
        // Predicated region
        $region89: #{forward.1} parent=87 // pred_check
          %p727 = pneg %p72
        $region90: #{forward.1} parent=87 // pred_check_branch
          %729 = sbr.rel (%p727) target = $region92
        $region91: #{forward.1} parent=87 // pred_region
          %s730 = sand.u32 %s62, 1
          %s731 = scalar_lea.sflag [#allocation5], %s730
          %s732 = sand.u32 %s62, 1
          %s733 = smul.addr %s732, 32
          %s734 = scalar_lea.vmem [#allocation4], %s733
          %s735 = smul.u32 4, %s46
          %s737 = ssub.s32 512, 512
          %738 = vsyncadd %s731, %s737
          %s739 = sadd.s32 %s45, %s735
          %s740 = smul.addr %s739, 128
          %s741 = scalar_lea.hbm %s0, %s740
          %s742 = sshll.u32 %s734, 4
          %s743 = int_to_ptr.vmem [resolvable:$true] %s742
          %748 = dma.hbm_to_vmem [thread:$0]  %s741, 512, %s743, %s731, 128, 128, 8
        $region92: #{forward.1} parent=87 // pred_fallthru
          _
      $region88: #{forward.1} parent=5 // pred_fallthru
        _
      %p749 = scmp.le.s32.totalorder 1, %s38
      %p750 = scmp.lt.s32.totalorder %s38, 3
      %p751 = pnand %p749, %p750
      %p752 = pneg %p751
      // Predicated region
      $region93: #{forward.1} parent=5 // pred_check
        _
      $region94: #{forward.1} parent=5 // pred_check_branch
        %754 = sbr.rel (%p751) target = $region96
      $region95: #{forward.1} parent=5 // pred_region
        %s755 = ssub.s32 %s38, 1
        %s756 = sand.u32 %s65, 1
        %s757 = scalar_lea.sflag [#allocation5], %s756
        %s758 = sand.u32 %s65, 1
        %s759 = smul.addr %s758, 32
        %s760 = scalar_lea.vmem [#allocation4], %s759
        // Predicated region
        $region97: #{forward.1} parent=95 // pred_check
          %p761 = pneg %p78
        $region98: #{forward.1} parent=95 // pred_check_branch
          %763 = sbr.rel (%p761) target = $region100
        $region99: #{forward.1} parent=95 // pred_region
          %764 = dma.done %s757, 512
        $region100: #{forward.1} parent=95 // pred_fallthru
          _
        // Predicated region
        $region101: #{forward.1} parent=95 // pred_check
          %p765 = pneg %p99
        $region102: #{forward.1} parent=95 // pred_check_branch
          %767 = sbr.rel (%p765) target = $region104
        $region103: #{forward.1} parent=95 // pred_region
          %768 = dma.done [#allocation8], 256
        $region104: #{forward.1} parent=95 // pred_fallthru
          _
        // Predicated region
        $region105: #{forward.1} parent=95 // pred_check
          %p769 = pneg %p120
        $region106: #{forward.1} parent=95 // pred_check_branch
          %771 = sbr.rel (%p769) target = $region108
        $region107: #{forward.1} parent=95 // pred_region
          %772 = dma.done [#allocation8], 32
        $region108: #{forward.1} parent=95 // pred_fallthru
          _
        // Predicated region
        $region109: #{forward.1} parent=95 // pred_check
          %p773 = pneg %p141
        $region110: #{forward.1} parent=95 // pred_check_branch
          %775 = sbr.rel (%p773) target = $region112
        $region111: #{forward.1} parent=95 // pred_region
          %776 = dma.done [#allocation11], 4096
        $region112: #{forward.1} parent=95 // pred_fallthru
          _
        // Predicated region
        $region113: #{forward.1} parent=95 // pred_check
          %p777 = pneg %p162
        $region114: #{forward.1} parent=95 // pred_check_branch
          %779 = sbr.rel (%p777) target = $region116
        $region115: #{forward.1} parent=95 // pred_region
          %780 = dma.done [#allocation11], 4096
        $region116: #{forward.1} parent=95 // pred_fallthru
          _
        // Predicated region
        $region117: #{forward.1} parent=95 // pred_check
          %p781 = pneg %p183
        $region118: #{forward.1} parent=95 // pred_check_branch
          %783 = sbr.rel (%p781) target = $region120
        $region119: #{forward.1} parent=95 // pred_region
          %784 = dma.done [#allocation14], 4096
        $region120: #{forward.1} parent=95 // pred_fallthru
          _
        // Predicated region
        $region121: #{forward.1} parent=95 // pred_check
          %p785 = pneg %p204
        $region122: #{forward.1} parent=95 // pred_check_branch
          %787 = sbr.rel (%p785) target = $region124
        $region123: #{forward.1} parent=95 // pred_region
          %788 = dma.done [#allocation14], 32
        $region124: #{forward.1} parent=95 // pred_fallthru
          _
        // Predicated region
        $region125: #{forward.1} parent=95 // pred_check
          %p789 = pneg %p225
        $region126: #{forward.1} parent=95 // pred_check_branch
          %791 = sbr.rel (%p789) target = $region128
        $region127: #{forward.1} parent=95 // pred_region
          %792 = dma.done [#allocation17], 512
        $region128: #{forward.1} parent=95 // pred_fallthru
          _
        // Predicated region
        $region129: #{forward.1} parent=95 // pred_check
          %p793 = pneg %p246
        $region130: #{forward.1} parent=95 // pred_check_branch
          %795 = sbr.rel (%p793) target = $region132
        $region131: #{forward.1} parent=95 // pred_region
          %796 = dma.done [#allocation17], 1280
        $region132: #{forward.1} parent=95 // pred_fallthru
          _
        // Predicated region
        $region133: #{forward.1} parent=95 // pred_check
          %p797 = pneg %p267
        $region134: #{forward.1} parent=95 // pred_check_branch
          %799 = sbr.rel (%p797) target = $region136
        $region135: #{forward.1} parent=95 // pred_region
          %800 = dma.done [#allocation20], 16384
        $region136: #{forward.1} parent=95 // pred_fallthru
          _
        // Predicated region
        $region137: #{forward.1} parent=95 // pred_check
          %p801 = pneg %p288
        $region138: #{forward.1} parent=95 // pred_check_branch
          %803 = sbr.rel (%p801) target = $region140
        $region139: #{forward.1} parent=95 // pred_region
          %804 = dma.done [#allocation20], 2048
        $region140: #{forward.1} parent=95 // pred_fallthru
          _
        // Predicated region
        $region141: #{forward.1} parent=95 // pred_check
          %p805 = pneg %p309
        $region142: #{forward.1} parent=95 // pred_check_branch
          %807 = sbr.rel (%p805) target = $region144
        $region143: #{forward.1} parent=95 // pred_region
          %808 = dma.done [#allocation23], 256
        $region144: #{forward.1} parent=95 // pred_fallthru
          _
        // Predicated region
        $region145: #{forward.1} parent=95 // pred_check
          %p809 = pneg %p330
        $region146: #{forward.1} parent=95 // pred_check_branch
          %811 = sbr.rel (%p809) target = $region148
        $region147: #{forward.1} parent=95 // pred_region
          %812 = dma.done [#allocation23], 640
        $region148: #{forward.1} parent=95 // pred_fallthru
          _
        // Predicated region
        $region149: #{forward.1} parent=95 // pred_check
          %p813 = pneg %p351
        $region150: #{forward.1} parent=95 // pred_check_branch
          %815 = sbr.rel (%p813) target = $region152
        $region151: #{forward.1} parent=95 // pred_region
          %816 = dma.done [#allocation26], 8192
        $region152: #{forward.1} parent=95 // pred_fallthru
          _
        // Predicated region
        $region153: #{forward.1} parent=95 // pred_check
          %p817 = pneg %p372
        $region154: #{forward.1} parent=95 // pred_check_branch
          %819 = sbr.rel (%p817) target = $region156
        $region155: #{forward.1} parent=95 // pred_region
          %820 = dma.done [#allocation26], 1024
        $region156: #{forward.1} parent=95 // pred_fallthru
          _
        // Predicated region
        $region157: #{forward.1} parent=95 // pred_check
          %p821 = pneg %p393
        $region158: #{forward.1} parent=95 // pred_check_branch
          %823 = sbr.rel (%p821) target = $region160
        $region159: #{forward.1} parent=95 // pred_region
          %824 = dma.done [#allocation29], 256
        $region160: #{forward.1} parent=95 // pred_fallthru
          _
        // Predicated region
        $region161: #{forward.1} parent=95 // pred_check
          %p825 = pneg %p414
        $region162: #{forward.1} parent=95 // pred_check_branch
          %827 = sbr.rel (%p825) target = $region164
        $region163: #{forward.1} parent=95 // pred_region
          %828 = dma.done [#allocation29], 640
        $region164: #{forward.1} parent=95 // pred_fallthru
          _
        // Predicated region
        $region165: #{forward.1} parent=95 // pred_check
          %p829 = pneg %p435
        $region166: #{forward.1} parent=95 // pred_check_branch
          %831 = sbr.rel (%p829) target = $region168
        $region167: #{forward.1} parent=95 // pred_region
          %832 = dma.done [#allocation32], 128
        $region168: #{forward.1} parent=95 // pred_fallthru
          _
        // Predicated region
        $region169: #{forward.1} parent=95 // pred_check
          %p833 = pneg %p456
        $region170: #{forward.1} parent=95 // pred_check_branch
          %835 = sbr.rel (%p833) target = $region172
        $region171: #{forward.1} parent=95 // pred_region
          %836 = dma.done [#allocation32], 16
        $region172: #{forward.1} parent=95 // pred_fallthru
          _
        %s837 = sand.u32 %s65, 1
        %s838 = scalar_lea.sflag [#allocation5], %s837
        %s839 = sand.u32 %s65, 1
        %s840 = smul.addr %s839, 32
        %s841 = scalar_lea.vmem [#allocation4], %s840
        %p842 = pneg %p78
        %p843 = pneg %p75
        %p844 = pneg %p99
        %p845 = pneg %p96
        %p846 = pneg %p120
        %p847 = pneg %p117
        %p848 = pneg %p141
        %p849 = pneg %p138
        %p850 = pneg %p162
        %p851 = pneg %p159
        %p852 = pneg %p183
        %p853 = pneg %p180
        %p854 = pneg %p204
        %p855 = pneg %p201
        %p856 = pneg %p225
        %p857 = pneg %p222
        %p858 = pneg %p246
        %p859 = pneg %p243
        %p860 = pneg %p267
        %p861 = pneg %p264
        %p862 = pneg %p288
        %p863 = pneg %p285
        %p864 = pneg %p309
        %p865 = pneg %p306
        %p866 = pneg %p330
        %p867 = pneg %p327
        %p868 = pneg %p351
        %p869 = pneg %p348
        %p870 = pneg %p372
        %p871 = pneg %p369
        %p872 = pneg %p393
        %p873 = pneg %p390
        %p874 = pneg %p414
        %p875 = pneg %p411
        %p876 = pneg %p435
        %p877 = pneg %p432
        %p878 = pneg %p456
        %p879 = pneg %p453
        %p880 = pneg %p482
        %p881 = pneg %p479
        %s882 = smul.u32 4, %s48
        %p884 = scmp.eq.s32.totalorder %s48, 0
        // Predicated region
        $region173: #{forward.1} parent=95 // pred_check
          %p885 = pneg %p884
        $region174: #{forward.1} parent=95 // pred_check_branch
          %887 = sbr.rel (%p885) target = $region176
        $region175: #{forward.1} parent=95 // pred_region
          %888 = vst [vmem:[#allocation2] sm:$0xff] 0.0
          %889 = vst [vmem:[#allocation2 + $0x8] sm:$0xff] 0.0
          %890 = vst [vmem:[#allocation3] sm:$0xff] 0.0
          %891 = vst [vmem:[#allocation3 + $0x8] sm:$0xff] 0.0
        $region176: #{forward.1} parent=95 // pred_fallthru
          _
        %v892 = vld [vmem:[%s760] sm:$0xff]
        %v893 = vld [vmem:[%s760 + $0x8] sm:$0xff]
        %v894 = vld [vmem:[%s760 + $0x10] sm:$0xff]
        %v895 = vld [vmem:[%s760 + $0x18] sm:$0xff]
        %v896 = vpack.c.bf16 %v893, %v892
        %v897 = vpack.c.bf16 %v895, %v894
        %v898 = vld [vmem:[#allocation7] sm:$0xff]
        %v899 = vld [vmem:[#allocation7 + $0x8] sm:$0xff]
        %v900 = vld [vmem:[#allocation9] sm:$0x3]
        %v902 = vlaneseq
        %v903 = vshrl.u32 %v902, 7
        %v904 = vsub.s32 0, %v903
        %v905 = vrot.slane %v900, %v904
        %v906 = vlaneseq
        %v907 = vshrl.u32 %v906, 7
        %v908 = vsub.s32 1, %v907
        %v909 = vrot.slane %v900, %v908
        %v914 = vunpack.c.l.b16 %v898
        %v915 = vunpack.c.h.b16 %v898
        %v916 = vunpack.c.l.b16 %v899
        %v917 = vunpack.c.h.b16 %v899
        %v918 = vpack.c.b16 %v916, %v914
        %v919 = vpack.c.b16 %v917, %v915
        %vm922 = vcmask 130048
        %v924 = vsel %vm922, %v896, 0
        %v927 = vsel %vm922, %v897, 0
        %929 = vmatprep.subr.bf16.mxu0 %v919
        %930 = vmatpush1.bf16.msra.mxu0 %v918
        %931 = vmatprep.subr.bf16.mxu0 0
        %932 = vmatpush1.bf16.msra.mxu0 0
        %933 = vmatprep.subr.bf16.mxu0 0
        %934 = vmatpush1.bf16.msra.mxu0 0
        %935 = vmatprep.subr.bf16.mxu0 0
        %936 = vmatpush1.bf16.msra.mxu0 0
        %937 = vmatprep.subr.bf16.mxu0 0
        %938 = vmatpush1.bf16.msra.mxu0 0
        %939 = vmatprep.subr.bf16.mxu0 0
        %940 = vmatpush1.bf16.msra.mxu0 0
        %941 = vmatprep.subr.bf16.mxu0 0
        %942 = vmatpush1.bf16.msra.mxu0 0
        %943 = vmatprep.subr.bf16.mxu0 0
        %944 = vmatpush1.bf16.msra.mxu0 0
        %945 = vmatprep.subr.bf16.mxu0 0
        %946 = vmatpush1.bf16.msra.mxu0 0
        %947 = vmatprep.subr.bf16.mxu0 0
        %948 = vmatpush1.bf16.msra.mxu0 0
        %949 = vmatprep.subr.bf16.mxu0 0
        %950 = vmatpush1.bf16.msra.mxu0 0
        %951 = vmatprep.subr.bf16.mxu0 0
        %952 = vmatpush1.bf16.msra.mxu0 0
        %953 = vmatprep.subr.bf16.mxu0 0
        %954 = vmatpush1.bf16.msra.mxu0 0
        %955 = vmatprep.subr.bf16.mxu0 0
        %956 = vmatpush1.bf16.msra.mxu0 0
        %957 = vmatprep.subr.bf16.mxu0 0
        %958 = vmatpush1.bf16.msra.mxu0 0
        %959 = vmatprep.subr.bf16.mxu0 0
        %960 = vmatpush1.bf16.msra.mxu0 0
        %961 = vmatprep.mubr.bf16.mxu0 0
        %962 = vmatmul.mubr.bf16.gmra.mrb[0].mxu0 %v924
        %v963 = vpop.f32.mrb[0].mxu0
        %v964 = vadd.f32 %v905, %v963
        %v965 = vpop.f32.mrb[0].mxu0
        %v966 = vadd.f32 %v909, %v965
        %v967 = vpop.f32.mrb[0].mxu0
        %v968 = vadd.f32 %v905, %v967
        %v969 = vpop.f32.mrb[0].mxu0
        %v970 = vadd.f32 %v909, %v969
        %971 = vmatprep.mubr.bf16.mxu0 0
        %972 = vmatmul.mubr.bf16.gmra.mrb[0].mxu0 %v927
        %v973 = vpop.f32.mrb[0].mxu0
        %v974 = vadd.f32 %v905, %v973
        %v975 = vpop.f32.mrb[0].mxu0
        %v976 = vadd.f32 %v909, %v975
        %v977 = vpop.f32.mrb[0].mxu0
        %v978 = vadd.f32 %v905, %v977
        %v979 = vpop.f32.mrb[0].mxu0
        %v980 = vadd.f32 %v909, %v979
        %981 = vdwg.mxu0
        %v982 = vld [vmem:[#allocation10] sm:$0xff]
        %v983 = vld [vmem:[#allocation10 + $0x8] sm:$0xff]
        %v984 = vld [vmem:[#allocation10 + $0x10] sm:$0xff]
        %v985 = vld [vmem:[#allocation10 + $0x18] sm:$0xff]
        %v986 = vld [vmem:[#allocation10 + $0x20] sm:$0xff]
        %v987 = vld [vmem:[#allocation10 + $0x28] sm:$0xff]
        %v988 = vld [vmem:[#allocation10 + $0x30] sm:$0xff]
        %v989 = vld [vmem:[#allocation10 + $0x38] sm:$0xff]
        %v990 = vld [vmem:[#allocation10 + $0x40] sm:$0xff]
        %v991 = vld [vmem:[#allocation10 + $0x48] sm:$0xff]
        %v992 = vld [vmem:[#allocation10 + $0x50] sm:$0xff]
        %v993 = vld [vmem:[#allocation10 + $0x58] sm:$0xff]
        %v994 = vld [vmem:[#allocation10 + $0x60] sm:$0xff]
        %v995 = vld [vmem:[#allocation10 + $0x68] sm:$0xff]
        %v996 = vld [vmem:[#allocation10 + $0x70] sm:$0xff]
        %v997 = vld [vmem:[#allocation10 + $0x78] sm:$0xff]
        %v998 = vld [vmem:[#allocation10 + $0x80] sm:$0xff]
        %v999 = vld [vmem:[#allocation10 + $0x88] sm:$0xff]
        %v1000 = vld [vmem:[#allocation10 + $0x90] sm:$0xff]
        %v1001 = vld [vmem:[#allocation10 + $0x98] sm:$0xff]
        %v1002 = vld [vmem:[#allocation10 + $0xa0] sm:$0xff]
        %v1003 = vld [vmem:[#allocation10 + $0xa8] sm:$0xff]
        %v1004 = vld [vmem:[#allocation10 + $0xb0] sm:$0xff]
        %v1005 = vld [vmem:[#allocation10 + $0xb8] sm:$0xff]
        %v1006 = vld [vmem:[#allocation10 + $0xc0] sm:$0xff]
        %v1007 = vld [vmem:[#allocation10 + $0xc8] sm:$0xff]
        %v1008 = vld [vmem:[#allocation10 + $0xd0] sm:$0xff]
        %v1009 = vld [vmem:[#allocation10 + $0xd8] sm:$0xff]
        %v1010 = vld [vmem:[#allocation10 + $0xe0] sm:$0xff]
        %v1011 = vld [vmem:[#allocation10 + $0xe8] sm:$0xff]
        %v1012 = vld [vmem:[#allocation10 + $0xf0] sm:$0xff]
        %v1013 = vld [vmem:[#allocation10 + $0xf8] sm:$0xff]
        %v1014 = vld [vmem:[#allocation12] sm:$0xff]
        %v1015 = vld [vmem:[#allocation12 + $0x8] sm:$0xff]
        %v1016 = vld [vmem:[#allocation12 + $0x10] sm:$0xff]
        %v1017 = vld [vmem:[#allocation12 + $0x18] sm:$0xff]
        %v1018 = vld [vmem:[#allocation12 + $0x20] sm:$0xff]
        %v1019 = vld [vmem:[#allocation12 + $0x28] sm:$0xff]
        %v1020 = vld [vmem:[#allocation12 + $0x30] sm:$0xff]
        %v1021 = vld [vmem:[#allocation12 + $0x38] sm:$0xff]
        %v1022 = vld [vmem:[#allocation12 + $0x40] sm:$0xff]
        %v1023 = vld [vmem:[#allocation12 + $0x48] sm:$0xff]
        %v1024 = vld [vmem:[#allocation12 + $0x50] sm:$0xff]
        %v1025 = vld [vmem:[#allocation12 + $0x58] sm:$0xff]
        %v1026 = vld [vmem:[#allocation12 + $0x60] sm:$0xff]
        %v1027 = vld [vmem:[#allocation12 + $0x68] sm:$0xff]
        %v1028 = vld [vmem:[#allocation12 + $0x70] sm:$0xff]
        %v1029 = vld [vmem:[#allocation12 + $0x78] sm:$0xff]
        %v1030 = vld [vmem:[#allocation12 + $0x80] sm:$0xff]
        %v1031 = vld [vmem:[#allocation12 + $0x88] sm:$0xff]
        %v1032 = vld [vmem:[#allocation12 + $0x90] sm:$0xff]
        %v1033 = vld [vmem:[#allocation12 + $0x98] sm:$0xff]
        %v1034 = vld [vmem:[#allocation12 + $0xa0] sm:$0xff]
        %v1035 = vld [vmem:[#allocation12 + $0xa8] sm:$0xff]
        %v1036 = vld [vmem:[#allocation12 + $0xb0] sm:$0xff]
        %v1037 = vld [vmem:[#allocation12 + $0xb8] sm:$0xff]
        %v1038 = vld [vmem:[#allocation12 + $0xc0] sm:$0xff]
        %v1039 = vld [vmem:[#allocation12 + $0xc8] sm:$0xff]
        %v1040 = vld [vmem:[#allocation12 + $0xd0] sm:$0xff]
        %v1041 = vld [vmem:[#allocation12 + $0xd8] sm:$0xff]
        %v1042 = vld [vmem:[#allocation12 + $0xe0] sm:$0xff]
        %v1043 = vld [vmem:[#allocation12 + $0xe8] sm:$0xff]
        %v1044 = vld [vmem:[#allocation12 + $0xf0] sm:$0xff]
        %v1045 = vld [vmem:[#allocation12 + $0xf8] sm:$0xff]
        %v1046 = vld [vmem:[#allocation13] sm:$0xff]
        %v1047 = vld [vmem:[#allocation13 + $0x8] sm:$0xff]
        %v1048 = vld [vmem:[#allocation13 + $0x10] sm:$0xff]
        %v1049 = vld [vmem:[#allocation13 + $0x18] sm:$0xff]
        %v1050 = vld [vmem:[#allocation13 + $0x20] sm:$0xff]
        %v1051 = vld [vmem:[#allocation13 + $0x28] sm:$0xff]
        %v1052 = vld [vmem:[#allocation13 + $0x30] sm:$0xff]
        %v1053 = vld [vmem:[#allocation13 + $0x38] sm:$0xff]
        %v1054 = vld [vmem:[#allocation13 + $0x40] sm:$0xff]
        %v1055 = vld [vmem:[#allocation13 + $0x48] sm:$0xff]
        %v1056 = vld [vmem:[#allocation13 + $0x50] sm:$0xff]
        %v1057 = vld [vmem:[#allocation13 + $0x58] sm:$0xff]
        %v1058 = vld [vmem:[#allocation13 + $0x60] sm:$0xff]
        %v1059 = vld [vmem:[#allocation13 + $0x68] sm:$0xff]
        %v1060 = vld [vmem:[#allocation13 + $0x70] sm:$0xff]
        %v1061 = vld [vmem:[#allocation13 + $0x78] sm:$0xff]
        %v1062 = vld [vmem:[#allocation13 + $0x80] sm:$0xff]
        %v1063 = vld [vmem:[#allocation13 + $0x88] sm:$0xff]
        %v1064 = vld [vmem:[#allocation13 + $0x90] sm:$0xff]
        %v1065 = vld [vmem:[#allocation13 + $0x98] sm:$0xff]
        %v1066 = vld [vmem:[#allocation13 + $0xa0] sm:$0xff]
        %v1067 = vld [vmem:[#allocation13 + $0xa8] sm:$0xff]
        %v1068 = vld [vmem:[#allocation13 + $0xb0] sm:$0xff]
        %v1069 = vld [vmem:[#allocation13 + $0xb8] sm:$0xff]
        %v1070 = vld [vmem:[#allocation13 + $0xc0] sm:$0xff]
        %v1071 = vld [vmem:[#allocation13 + $0xc8] sm:$0xff]
        %v1072 = vld [vmem:[#allocation13 + $0xd0] sm:$0xff]
        %v1073 = vld [vmem:[#allocation13 + $0xd8] sm:$0xff]
        %v1074 = vld [vmem:[#allocation13 + $0xe0] sm:$0xff]
        %v1075 = vld [vmem:[#allocation13 + $0xe8] sm:$0xff]
        %v1076 = vld [vmem:[#allocation13 + $0xf0] sm:$0xff]
        %v1077 = vld [vmem:[#allocation13 + $0xf8] sm:$0xff]
        %v1078 = vld [vmem:[#allocation15] sm:$0x3]
        %v1080 = vlaneseq
        %v1081 = vshrl.u32 %v1080, 7
        %v1082 = vsub.s32 0, %v1081
        %v1083 = vrot.slane %v1078, %v1082
        %v1084 = vlaneseq
        %v1085 = vshrl.u32 %v1084, 7
        %v1086 = vsub.s32 1, %v1085
        %v1087 = vrot.slane %v1078, %v1086
        %v1090 = vld [vmem:[#allocation2] sm:$0xff]
        %v1091 = vld [vmem:[#allocation2 + $0x8] sm:$0xff]
        %v1092 = vld [vmem:[#allocation3] sm:$0xff]
        %v1093 = vld [vmem:[#allocation3 + $0x8] sm:$0xff]
        %v1094 = vpack.c.bf16 %v1092, %v1092
        %v1095 = vpack.c.bf16 %v1093, %v1093
        %v1128 = vunpack.c.l.b16 %v1046
        %v1129 = vunpack.c.h.b16 %v1046
        %v1130 = vunpack.c.l.b16 %v1047
        %v1131 = vunpack.c.h.b16 %v1047
        %v1132 = vunpack.c.l.b16 %v1048
        %v1133 = vunpack.c.h.b16 %v1048
        %v1134 = vunpack.c.l.b16 %v1049
        %v1135 = vunpack.c.h.b16 %v1049
        %v1136 = vunpack.c.l.b16 %v1050
        %v1137 = vunpack.c.h.b16 %v1050
        %v1138 = vunpack.c.l.b16 %v1051
        %v1139 = vunpack.c.h.b16 %v1051
        %v1140 = vunpack.c.l.b16 %v1052
        %v1141 = vunpack.c.h.b16 %v1052
        %v1142 = vunpack.c.l.b16 %v1053
        %v1143 = vunpack.c.h.b16 %v1053
        %v1144 = vunpack.c.l.b16 %v1054
        %v1145 = vunpack.c.h.b16 %v1054
        %v1146 = vunpack.c.l.b16 %v1055
        %v1147 = vunpack.c.h.b16 %v1055
        %v1148 = vunpack.c.l.b16 %v1056
        %v1149 = vunpack.c.h.b16 %v1056
        %v1150 = vunpack.c.l.b16 %v1057
        %v1151 = vunpack.c.h.b16 %v1057
        %v1152 = vunpack.c.l.b16 %v1058
        %v1153 = vunpack.c.h.b16 %v1058
        %v1154 = vunpack.c.l.b16 %v1059
        %v1155 = vunpack.c.h.b16 %v1059
        %v1156 = vunpack.c.l.b16 %v1060
        %v1157 = vunpack.c.h.b16 %v1060
        %v1158 = vunpack.c.l.b16 %v1061
        %v1159 = vunpack.c.h.b16 %v1061
        %v1160 = vunpack.c.l.b16 %v1062
        %v1161 = vunpack.c.h.b16 %v1062
        %v1162 = vunpack.c.l.b16 %v1063
        %v1163 = vunpack.c.h.b16 %v1063
        %v1164 = vunpack.c.l.b16 %v1064
        %v1165 = vunpack.c.h.b16 %v1064
        %v1166 = vunpack.c.l.b16 %v1065
        %v1167 = vunpack.c.h.b16 %v1065
        %v1168 = vunpack.c.l.b16 %v1066
        %v1169 = vunpack.c.h.b16 %v1066
        %v1170 = vunpack.c.l.b16 %v1067
        %v1171 = vunpack.c.h.b16 %v1067
        %v1172 = vunpack.c.l.b16 %v1068
        %v1173 = vunpack.c.h.b16 %v1068
        %v1174 = vunpack.c.l.b16 %v1069
        %v1175 = vunpack.c.h.b16 %v1069
        %v1176 = vunpack.c.l.b16 %v1070
        %v1177 = vunpack.c.h.b16 %v1070
        %v1178 = vunpack.c.l.b16 %v1071
        %v1179 = vunpack.c.h.b16 %v1071
        %v1180 = vunpack.c.l.b16 %v1072
        %v1181 = vunpack.c.h.b16 %v1072
        %v1182 = vunpack.c.l.b16 %v1073
        %v1183 = vunpack.c.h.b16 %v1073
        %v1184 = vunpack.c.l.b16 %v1074
        %v1185 = vunpack.c.h.b16 %v1074
        %v1186 = vunpack.c.l.b16 %v1075
        %v1187 = vunpack.c.h.b16 %v1075
        %v1188 = vunpack.c.l.b16 %v1076
        %v1189 = vunpack.c.h.b16 %v1076
        %v1190 = vunpack.c.l.b16 %v1077
        %v1191 = vunpack.c.h.b16 %v1077
        %v1192 = vpack.c.b16 %v1130, %v1128
        %v1193 = vpack.c.b16 %v1131, %v1129
        %v1194 = vpack.c.b16 %v1134, %v1132
        %v1195 = vpack.c.b16 %v1135, %v1133
        %v1196 = vpack.c.b16 %v1138, %v1136
        %v1197 = vpack.c.b16 %v1139, %v1137
        %v1198 = vpack.c.b16 %v1142, %v1140
        %v1199 = vpack.c.b16 %v1143, %v1141
        %v1200 = vpack.c.b16 %v1146, %v1144
        %v1201 = vpack.c.b16 %v1147, %v1145
        %v1202 = vpack.c.b16 %v1150, %v1148
        %v1203 = vpack.c.b16 %v1151, %v1149
        %v1204 = vpack.c.b16 %v1154, %v1152
        %v1205 = vpack.c.b16 %v1155, %v1153
        %v1206 = vpack.c.b16 %v1158, %v1156
        %v1207 = vpack.c.b16 %v1159, %v1157
        %v1208 = vpack.c.b16 %v1162, %v1160
        %v1209 = vpack.c.b16 %v1163, %v1161
        %v1210 = vpack.c.b16 %v1166, %v1164
        %v1211 = vpack.c.b16 %v1167, %v1165
        %v1212 = vpack.c.b16 %v1170, %v1168
        %v1213 = vpack.c.b16 %v1171, %v1169
        %v1214 = vpack.c.b16 %v1174, %v1172
        %v1215 = vpack.c.b16 %v1175, %v1173
        %v1216 = vpack.c.b16 %v1178, %v1176
        %v1217 = vpack.c.b16 %v1179, %v1177
        %v1218 = vpack.c.b16 %v1182, %v1180
        %v1219 = vpack.c.b16 %v1183, %v1181
        %v1220 = vpack.c.b16 %v1186, %v1184
        %v1221 = vpack.c.b16 %v1187, %v1185
        %v1222 = vpack.c.b16 %v1190, %v1188
        %v1223 = vpack.c.b16 %v1191, %v1189
        %1256 = vmatprep.subr.bf16.mxu0 %v1193
        %1257 = vmatpush1.bf16.msra.mxu0 %v1192
        %1258 = vmatprep.subr.bf16.mxu0 %v1195
        %1259 = vmatpush1.bf16.msra.mxu0 %v1194
        %1260 = vmatprep.subr.bf16.mxu0 %v1197
        %1261 = vmatpush1.bf16.msra.mxu0 %v1196
        %1262 = vmatprep.subr.bf16.mxu0 %v1199
        %1263 = vmatpush1.bf16.msra.mxu0 %v1198
        %1264 = vmatprep.subr.bf16.mxu0 %v1201
        %1265 = vmatpush1.bf16.msra.mxu0 %v1200
        %1266 = vmatprep.subr.bf16.mxu0 %v1203
        %1267 = vmatpush1.bf16.msra.mxu0 %v1202
        %1268 = vmatprep.subr.bf16.mxu0 %v1205
        %1269 = vmatpush1.bf16.msra.mxu0 %v1204
        %1270 = vmatprep.subr.bf16.mxu0 %v1207
        %1271 = vmatpush1.bf16.msra.mxu0 %v1206
        %1272 = vmatprep.subr.bf16.mxu0 %v1209
        %1273 = vmatpush1.bf16.msra.mxu0 %v1208
        %1274 = vmatprep.subr.bf16.mxu0 %v1211
        %1275 = vmatpush1.bf16.msra.mxu0 %v1210
        %1276 = vmatprep.subr.bf16.mxu0 %v1213
        %1277 = vmatpush1.bf16.msra.mxu0 %v1212
        %1278 = vmatprep.subr.bf16.mxu0 %v1215
        %1279 = vmatpush1.bf16.msra.mxu0 %v1214
        %1280 = vmatprep.subr.bf16.mxu0 %v1217
        %1281 = vmatpush1.bf16.msra.mxu0 %v1216
        %1282 = vmatprep.subr.bf16.mxu0 %v1219
        %1283 = vmatpush1.bf16.msra.mxu0 %v1218
        %1284 = vmatprep.subr.bf16.mxu0 %v1221
        %1285 = vmatpush1.bf16.msra.mxu0 %v1220
        %1286 = vmatprep.subr.bf16.mxu0 %v1223
        %1287 = vmatpush1.bf16.msra.mxu0 %v1222
        %1288 = vmatprep.mubr.bf16.mxu0 %v1095
        %1289 = vmatmul.mubr.bf16.gmra.mrb[0].mxu0 %v1094
        %v1290 = vpop.f32.mrb[0].mxu0
        %v1291 = vadd.f32 0.0, %v1290
        %v1292 = vpop.f32.mrb[0].mxu0
        %v1293 = vadd.f32 0.0, %v1292
        %v1294 = vpop.f32.mrb[0].mxu0
        %v1295 = vpop.f32.mrb[0].mxu0
        %1296 = vdwg.mxu0
        %v1297 = vpack.c.bf16 %v1090, %v1090
        %v1298 = vpack.c.bf16 %v1091, %v1091
        %v1331 = vunpack.c.l.b16 %v982
        %v1332 = vunpack.c.h.b16 %v982
        %v1333 = vunpack.c.l.b16 %v983
        %v1334 = vunpack.c.h.b16 %v983
        %v1335 = vunpack.c.l.b16 %v984
        %v1336 = vunpack.c.h.b16 %v984
        %v1337 = vunpack.c.l.b16 %v985
        %v1338 = vunpack.c.h.b16 %v985
        %v1339 = vunpack.c.l.b16 %v986
        %v1340 = vunpack.c.h.b16 %v986
        %v1341 = vunpack.c.l.b16 %v987
        %v1342 = vunpack.c.h.b16 %v987
        %v1343 = vunpack.c.l.b16 %v988
        %v1344 = vunpack.c.h.b16 %v988
        %v1345 = vunpack.c.l.b16 %v989
        %v1346 = vunpack.c.h.b16 %v989
        %v1347 = vunpack.c.l.b16 %v990
        %v1348 = vunpack.c.h.b16 %v990
        %v1349 = vunpack.c.l.b16 %v991
        %v1350 = vunpack.c.h.b16 %v991
        %v1351 = vunpack.c.l.b16 %v992
        %v1352 = vunpack.c.h.b16 %v992
        %v1353 = vunpack.c.l.b16 %v993
        %v1354 = vunpack.c.h.b16 %v993
        %v1355 = vunpack.c.l.b16 %v994
        %v1356 = vunpack.c.h.b16 %v994
        %v1357 = vunpack.c.l.b16 %v995
        %v1358 = vunpack.c.h.b16 %v995
        %v1359 = vunpack.c.l.b16 %v996
        %v1360 = vunpack.c.h.b16 %v996
        %v1361 = vunpack.c.l.b16 %v997
        %v1362 = vunpack.c.h.b16 %v997
        %v1363 = vunpack.c.l.b16 %v998
        %v1364 = vunpack.c.h.b16 %v998
        %v1365 = vunpack.c.l.b16 %v999
        %v1366 = vunpack.c.h.b16 %v999
        %v1367 = vunpack.c.l.b16 %v1000
        %v1368 = vunpack.c.h.b16 %v1000
        %v1369 = vunpack.c.l.b16 %v1001
        %v1370 = vunpack.c.h.b16 %v1001
        %v1371 = vunpack.c.l.b16 %v1002
        %v1372 = vunpack.c.h.b16 %v1002
        %v1373 = vunpack.c.l.b16 %v1003
        %v1374 = vunpack.c.h.b16 %v1003
        %v1375 = vunpack.c.l.b16 %v1004
        %v1376 = vunpack.c.h.b16 %v1004
        %v1377 = vunpack.c.l.b16 %v1005
        %v1378 = vunpack.c.h.b16 %v1005
        %v1379 = vunpack.c.l.b16 %v1006
        %v1380 = vunpack.c.h.b16 %v1006
        %v1381 = vunpack.c.l.b16 %v1007
        %v1382 = vunpack.c.h.b16 %v1007
        %v1383 = vunpack.c.l.b16 %v1008
        %v1384 = vunpack.c.h.b16 %v1008
        %v1385 = vunpack.c.l.b16 %v1009
        %v1386 = vunpack.c.h.b16 %v1009
        %v1387 = vunpack.c.l.b16 %v1010
        %v1388 = vunpack.c.h.b16 %v1010
        %v1389 = vunpack.c.l.b16 %v1011
        %v1390 = vunpack.c.h.b16 %v1011
        %v1391 = vunpack.c.l.b16 %v1012
        %v1392 = vunpack.c.h.b16 %v1012
        %v1393 = vunpack.c.l.b16 %v1013
        %v1394 = vunpack.c.h.b16 %v1013
        %v1395 = vpack.c.b16 %v1333, %v1331
        %v1396 = vpack.c.b16 %v1334, %v1332
        %v1397 = vpack.c.b16 %v1337, %v1335
        %v1398 = vpack.c.b16 %v1338, %v1336
        %v1399 = vpack.c.b16 %v1341, %v1339
        %v1400 = vpack.c.b16 %v1342, %v1340
        %v1401 = vpack.c.b16 %v1345, %v1343
        %v1402 = vpack.c.b16 %v1346, %v1344
        %v1403 = vpack.c.b16 %v1349, %v1347
        %v1404 = vpack.c.b16 %v1350, %v1348
        %v1405 = vpack.c.b16 %v1353, %v1351
        %v1406 = vpack.c.b16 %v1354, %v1352
        %v1407 = vpack.c.b16 %v1357, %v1355
        %v1408 = vpack.c.b16 %v1358, %v1356
        %v1409 = vpack.c.b16 %v1361, %v1359
        %v1410 = vpack.c.b16 %v1362, %v1360
        %v1411 = vpack.c.b16 %v1365, %v1363
        %v1412 = vpack.c.b16 %v1366, %v1364
        %v1413 = vpack.c.b16 %v1369, %v1367
        %v1414 = vpack.c.b16 %v1370, %v1368
        %v1415 = vpack.c.b16 %v1373, %v1371
        %v1416 = vpack.c.b16 %v1374, %v1372
        %v1417 = vpack.c.b16 %v1377, %v1375
        %v1418 = vpack.c.b16 %v1378, %v1376
        %v1419 = vpack.c.b16 %v1381, %v1379
        %v1420 = vpack.c.b16 %v1382, %v1380
        %v1421 = vpack.c.b16 %v1385, %v1383
        %v1422 = vpack.c.b16 %v1386, %v1384
        %v1423 = vpack.c.b16 %v1389, %v1387
        %v1424 = vpack.c.b16 %v1390, %v1388
        %v1425 = vpack.c.b16 %v1393, %v1391
        %v1426 = vpack.c.b16 %v1394, %v1392
        %1459 = vmatprep.subr.bf16.mxu0 %v1396
        %1460 = vmatpush1.bf16.msra.mxu0 %v1395
        %1461 = vmatprep.subr.bf16.mxu0 %v1398
        %1462 = vmatpush1.bf16.msra.mxu0 %v1397
        %1463 = vmatprep.subr.bf16.mxu0 %v1400
        %1464 = vmatpush1.bf16.msra.mxu0 %v1399
        %1465 = vmatprep.subr.bf16.mxu0 %v1402
        %1466 = vmatpush1.bf16.msra.mxu0 %v1401
        %1467 = vmatprep.subr.bf16.mxu0 %v1404
        %1468 = vmatpush1.bf16.msra.mxu0 %v1403
        %1469 = vmatprep.subr.bf16.mxu0 %v1406
        %1470 = vmatpush1.bf16.msra.mxu0 %v1405
        %1471 = vmatprep.subr.bf16.mxu0 %v1408
        %1472 = vmatpush1.bf16.msra.mxu0 %v1407
        %1473 = vmatprep.subr.bf16.mxu0 %v1410
        %1474 = vmatpush1.bf16.msra.mxu0 %v1409
        %1475 = vmatprep.subr.bf16.mxu0 %v1412
        %1476 = vmatpush1.bf16.msra.mxu0 %v1411
        %1477 = vmatprep.subr.bf16.mxu0 %v1414
        %1478 = vmatpush1.bf16.msra.mxu0 %v1413
        %1479 = vmatprep.subr.bf16.mxu0 %v1416
        %1480 = vmatpush1.bf16.msra.mxu0 %v1415
        %1481 = vmatprep.subr.bf16.mxu0 %v1418
        %1482 = vmatpush1.bf16.msra.mxu0 %v1417
        %1483 = vmatprep.subr.bf16.mxu0 %v1420
        %1484 = vmatpush1.bf16.msra.mxu0 %v1419
        %1485 = vmatprep.subr.bf16.mxu0 %v1422
        %1486 = vmatpush1.bf16.msra.mxu0 %v1421
        %1487 = vmatprep.subr.bf16.mxu0 %v1424
        %1488 = vmatpush1.bf16.msra.mxu0 %v1423
        %1489 = vmatprep.subr.bf16.mxu0 %v1426
        %1490 = vmatpush1.bf16.msra.mxu0 %v1425
        %1491 = vmatprep.mubr.bf16.mxu0 %v1298
        %1492 = vmatmul.mubr.bf16.gmra.mrb[0].mxu0 %v1297
        %v1493 = vpop.f32.mrb[0].mxu0
        %v1494 = vadd.f32 0.0, %v1493
        %v1495 = vpop.f32.mrb[0].mxu0
        %v1496 = vadd.f32 0.0, %v1495
        %v1497 = vpop.f32.mrb[0].mxu0
        %v1498 = vpop.f32.mrb[0].mxu0
        %1499 = vdwg.mxu0
        %v1500 = vadd.f32 %v964, %v1494
        %v1501 = vadd.f32 %v966, %v1496
        %v1502 = vtanh.pop %v1500
        %v1503 = vtanh.pop %v1501
        %v1504 = vpack.c.bf16 %v1502, %v1502
        %v1505 = vpack.c.bf16 %v1503, %v1503
        %v1538 = vunpack.c.l.b16 %v1014
        %v1539 = vunpack.c.h.b16 %v1014
        %v1540 = vunpack.c.l.b16 %v1015
        %v1541 = vunpack.c.h.b16 %v1015
        %v1542 = vunpack.c.l.b16 %v1016
        %v1543 = vunpack.c.h.b16 %v1016
        %v1544 = vunpack.c.l.b16 %v1017
        %v1545 = vunpack.c.h.b16 %v1017
        %v1546 = vunpack.c.l.b16 %v1018
        %v1547 = vunpack.c.h.b16 %v1018
        %v1548 = vunpack.c.l.b16 %v1019
        %v1549 = vunpack.c.h.b16 %v1019
        %v1550 = vunpack.c.l.b16 %v1020
        %v1551 = vunpack.c.h.b16 %v1020
        %v1552 = vunpack.c.l.b16 %v1021
        %v1553 = vunpack.c.h.b16 %v1021
        %v1554 = vunpack.c.l.b16 %v1022
        %v1555 = vunpack.c.h.b16 %v1022
        %v1556 = vunpack.c.l.b16 %v1023
        %v1557 = vunpack.c.h.b16 %v1023
        %v1558 = vunpack.c.l.b16 %v1024
        %v1559 = vunpack.c.h.b16 %v1024
        %v1560 = vunpack.c.l.b16 %v1025
        %v1561 = vunpack.c.h.b16 %v1025
        %v1562 = vunpack.c.l.b16 %v1026
        %v1563 = vunpack.c.h.b16 %v1026
        %v1564 = vunpack.c.l.b16 %v1027
        %v1565 = vunpack.c.h.b16 %v1027
        %v1566 = vunpack.c.l.b16 %v1028
        %v1567 = vunpack.c.h.b16 %v1028
        %v1568 = vunpack.c.l.b16 %v1029
        %v1569 = vunpack.c.h.b16 %v1029
        %v1570 = vunpack.c.l.b16 %v1030
        %v1571 = vunpack.c.h.b16 %v1030
        %v1572 = vunpack.c.l.b16 %v1031
        %v1573 = vunpack.c.h.b16 %v1031
        %v1574 = vunpack.c.l.b16 %v1032
        %v1575 = vunpack.c.h.b16 %v1032
        %v1576 = vunpack.c.l.b16 %v1033
        %v1577 = vunpack.c.h.b16 %v1033
        %v1578 = vunpack.c.l.b16 %v1034
        %v1579 = vunpack.c.h.b16 %v1034
        %v1580 = vunpack.c.l.b16 %v1035
        %v1581 = vunpack.c.h.b16 %v1035
        %v1582 = vunpack.c.l.b16 %v1036
        %v1583 = vunpack.c.h.b16 %v1036
        %v1584 = vunpack.c.l.b16 %v1037
        %v1585 = vunpack.c.h.b16 %v1037
        %v1586 = vunpack.c.l.b16 %v1038
        %v1587 = vunpack.c.h.b16 %v1038
        %v1588 = vunpack.c.l.b16 %v1039
        %v1589 = vunpack.c.h.b16 %v1039
        %v1590 = vunpack.c.l.b16 %v1040
        %v1591 = vunpack.c.h.b16 %v1040
        %v1592 = vunpack.c.l.b16 %v1041
        %v1593 = vunpack.c.h.b16 %v1041
        %v1594 = vunpack.c.l.b16 %v1042
        %v1595 = vunpack.c.h.b16 %v1042
        %v1596 = vunpack.c.l.b16 %v1043
        %v1597 = vunpack.c.h.b16 %v1043
        %v1598 = vunpack.c.l.b16 %v1044
        %v1599 = vunpack.c.h.b16 %v1044
        %v1600 = vunpack.c.l.b16 %v1045
        %v1601 = vunpack.c.h.b16 %v1045
        %v1602 = vpack.c.b16 %v1540, %v1538
        %v1603 = vpack.c.b16 %v1541, %v1539
        %v1604 = vpack.c.b16 %v1544, %v1542
        %v1605 = vpack.c.b16 %v1545, %v1543
        %v1606 = vpack.c.b16 %v1548, %v1546
        %v1607 = vpack.c.b16 %v1549, %v1547
        %v1608 = vpack.c.b16 %v1552, %v1550
        %v1609 = vpack.c.b16 %v1553, %v1551
        %v1610 = vpack.c.b16 %v1556, %v1554
        %v1611 = vpack.c.b16 %v1557, %v1555
        %v1612 = vpack.c.b16 %v1560, %v1558
        %v1613 = vpack.c.b16 %v1561, %v1559
        %v1614 = vpack.c.b16 %v1564, %v1562
        %v1615 = vpack.c.b16 %v1565, %v1563
        %v1616 = vpack.c.b16 %v1568, %v1566
        %v1617 = vpack.c.b16 %v1569, %v1567
        %v1618 = vpack.c.b16 %v1572, %v1570
        %v1619 = vpack.c.b16 %v1573, %v1571
        %v1620 = vpack.c.b16 %v1576, %v1574
        %v1621 = vpack.c.b16 %v1577, %v1575
        %v1622 = vpack.c.b16 %v1580, %v1578
        %v1623 = vpack.c.b16 %v1581, %v1579
        %v1624 = vpack.c.b16 %v1584, %v1582
        %v1625 = vpack.c.b16 %v1585, %v1583
        %v1626 = vpack.c.b16 %v1588, %v1586
        %v1627 = vpack.c.b16 %v1589, %v1587
        %v1628 = vpack.c.b16 %v1592, %v1590
        %v1629 = vpack.c.b16 %v1593, %v1591
        %v1630 = vpack.c.b16 %v1596, %v1594
        %v1631 = vpack.c.b16 %v1597, %v1595
        %v1632 = vpack.c.b16 %v1600, %v1598
        %v1633 = vpack.c.b16 %v1601, %v1599
        %1666 = vmatprep.subr.bf16.mxu0 %v1603
        %1667 = vmatpush1.bf16.msra.mxu0 %v1602
        %1668 = vmatprep.subr.bf16.mxu0 %v1605
        %1669 = vmatpush1.bf16.msra.mxu0 %v1604
        %1670 = vmatprep.subr.bf16.mxu0 %v1607
        %1671 = vmatpush1.bf16.msra.mxu0 %v1606
        %1672 = vmatprep.subr.bf16.mxu0 %v1609
        %1673 = vmatpush1.bf16.msra.mxu0 %v1608
        %1674 = vmatprep.subr.bf16.mxu0 %v1611
        %1675 = vmatpush1.bf16.msra.mxu0 %v1610
        %1676 = vmatprep.subr.bf16.mxu0 %v1613
        %1677 = vmatpush1.bf16.msra.mxu0 %v1612
        %1678 = vmatprep.subr.bf16.mxu0 %v1615
        %1679 = vmatpush1.bf16.msra.mxu0 %v1614
        %1680 = vmatprep.subr.bf16.mxu0 %v1617
        %1681 = vmatpush1.bf16.msra.mxu0 %v1616
        %1682 = vmatprep.subr.bf16.mxu0 %v1619
        %1683 = vmatpush1.bf16.msra.mxu0 %v1618
        %1684 = vmatprep.subr.bf16.mxu0 %v1621
        %1685 = vmatpush1.bf16.msra.mxu0 %v1620
        %1686 = vmatprep.subr.bf16.mxu0 %v1623
        %1687 = vmatpush1.bf16.msra.mxu0 %v1622
        %1688 = vmatprep.subr.bf16.mxu0 %v1625
        %1689 = vmatpush1.bf16.msra.mxu0 %v1624
        %1690 = vmatprep.subr.bf16.mxu0 %v1627
        %1691 = vmatpush1.bf16.msra.mxu0 %v1626
        %1692 = vmatprep.subr.bf16.mxu0 %v1629
        %1693 = vmatpush1.bf16.msra.mxu0 %v1628
        %1694 = vmatprep.subr.bf16.mxu0 %v1631
        %1695 = vmatpush1.bf16.msra.mxu0 %v1630
        %1696 = vmatprep.subr.bf16.mxu0 %v1633
        %1697 = vmatpush1.bf16.msra.mxu0 %v1632
        %1698 = vmatprep.mubr.bf16.mxu0 %v1505
        %1699 = vmatmul.mubr.bf16.gmra.mrb[0].mxu0 %v1504
        %v1700 = vpop.f32.mrb[0].mxu0
        %v1701 = vadd.f32 %v1291, %v1700
        %v1702 = vpop.f32.mrb[0].mxu0
        %v1703 = vadd.f32 %v1293, %v1702
        %v1704 = vpop.f32.mrb[0].mxu0
        %v1705 = vpop.f32.mrb[0].mxu0
        %1706 = vdwg.mxu0
        %v1707 = vadd.f32 %v1701, %v1083
        %v1708 = vadd.f32 %v1703, %v1087
        %v1709 = vtanh.pop %v1707
        %v1710 = vtanh.pop %v1708
        %v1711 = vpack.c.bf16 %v1709, %v1709
        %v1712 = vpack.c.bf16 %v1710, %v1710
        %1713 = vmatprep.subr.bf16.mxu0 %v1193
        %1714 = vmatpush1.bf16.msra.mxu0 %v1192
        %1715 = vmatprep.subr.bf16.mxu0 %v1195
        %1716 = vmatpush1.bf16.msra.mxu0 %v1194
        %1717 = vmatprep.subr.bf16.mxu0 %v1197
        %1718 = vmatpush1.bf16.msra.mxu0 %v1196
        %1719 = vmatprep.subr.bf16.mxu0 %v1199
        %1720 = vmatpush1.bf16.msra.mxu0 %v1198
        %1721 = vmatprep.subr.bf16.mxu0 %v1201
        %1722 = vmatpush1.bf16.msra.mxu0 %v1200
        %1723 = vmatprep.subr.bf16.mxu0 %v1203
        %1724 = vmatpush1.bf16.msra.mxu0 %v1202
        %1725 = vmatprep.subr.bf16.mxu0 %v1205
        %1726 = vmatpush1.bf16.msra.mxu0 %v1204
        %1727 = vmatprep.subr.bf16.mxu0 %v1207
        %1728 = vmatpush1.bf16.msra.mxu0 %v1206
        %1729 = vmatprep.subr.bf16.mxu0 %v1209
        %1730 = vmatpush1.bf16.msra.mxu0 %v1208
        %1731 = vmatprep.subr.bf16.mxu0 %v1211
        %1732 = vmatpush1.bf16.msra.mxu0 %v1210
        %1733 = vmatprep.subr.bf16.mxu0 %v1213
        %1734 = vmatpush1.bf16.msra.mxu0 %v1212
        %1735 = vmatprep.subr.bf16.mxu0 %v1215
        %1736 = vmatpush1.bf16.msra.mxu0 %v1214
        %1737 = vmatprep.subr.bf16.mxu0 %v1217
        %1738 = vmatpush1.bf16.msra.mxu0 %v1216
        %1739 = vmatprep.subr.bf16.mxu0 %v1219
        %1740 = vmatpush1.bf16.msra.mxu0 %v1218
        %1741 = vmatprep.subr.bf16.mxu0 %v1221
        %1742 = vmatpush1.bf16.msra.mxu0 %v1220
        %1743 = vmatprep.subr.bf16.mxu0 %v1223
        %1744 = vmatpush1.bf16.msra.mxu0 %v1222
        %1745 = vmatprep.mubr.bf16.mxu0 %v1712
        %1746 = vmatmul.mubr.bf16.gmra.mrb[0].mxu0 %v1711
        %v1747 = vpop.f32.mrb[0].mxu0
        %v1748 = vadd.f32 0.0, %v1747
        %v1749 = vpop.f32.mrb[0].mxu0
        %v1750 = vadd.f32 0.0, %v1749
        %v1751 = vpop.f32.mrb[0].mxu0
        %v1752 = vpop.f32.mrb[0].mxu0
        %1753 = vdwg.mxu0
        %1754 = vmatprep.subr.bf16.mxu0 %v1396
        %1755 = vmatpush1.bf16.msra.mxu0 %v1395
        %1756 = vmatprep.subr.bf16.mxu0 %v1398
        %1757 = vmatpush1.bf16.msra.mxu0 %v1397
        %1758 = vmatprep.subr.bf16.mxu0 %v1400
        %1759 = vmatpush1.bf16.msra.mxu0 %v1399
        %1760 = vmatprep.subr.bf16.mxu0 %v1402
        %1761 = vmatpush1.bf16.msra.mxu0 %v1401
        %1762 = vmatprep.subr.bf16.mxu0 %v1404
        %1763 = vmatpush1.bf16.msra.mxu0 %v1403
        %1764 = vmatprep.subr.bf16.mxu0 %v1406
        %1765 = vmatpush1.bf16.msra.mxu0 %v1405
        %1766 = vmatprep.subr.bf16.mxu0 %v1408
        %1767 = vmatpush1.bf16.msra.mxu0 %v1407
        %1768 = vmatprep.subr.bf16.mxu0 %v1410
        %1769 = vmatpush1.bf16.msra.mxu0 %v1409
        %1770 = vmatprep.subr.bf16.mxu0 %v1412
        %1771 = vmatpush1.bf16.msra.mxu0 %v1411
        %1772 = vmatprep.subr.bf16.mxu0 %v1414
        %1773 = vmatpush1.bf16.msra.mxu0 %v1413
        %1774 = vmatprep.subr.bf16.mxu0 %v1416
        %1775 = vmatpush1.bf16.msra.mxu0 %v1415
        %1776 = vmatprep.subr.bf16.mxu0 %v1418
        %1777 = vmatpush1.bf16.msra.mxu0 %v1417
        %1778 = vmatprep.subr.bf16.mxu0 %v1420
        %1779 = vmatpush1.bf16.msra.mxu0 %v1419
        %1780 = vmatprep.subr.bf16.mxu0 %v1422
        %1781 = vmatpush1.bf16.msra.mxu0 %v1421
        %1782 = vmatprep.subr.bf16.mxu0 %v1424
        %1783 = vmatpush1.bf16.msra.mxu0 %v1423
        %1784 = vmatprep.subr.bf16.mxu0 %v1426
        %1785 = vmatpush1.bf16.msra.mxu0 %v1425
        %1786 = vmatprep.mubr.bf16.mxu0 %v1505
        %1787 = vmatmul.mubr.bf16.gmra.mrb[0].mxu0 %v1504
        %v1788 = vpop.f32.mrb[0].mxu0
        %v1789 = vadd.f32 0.0, %v1788
        %v1790 = vpop.f32.mrb[0].mxu0
        %v1791 = vadd.f32 0.0, %v1790
        %v1792 = vpop.f32.mrb[0].mxu0
        %v1793 = vpop.f32.mrb[0].mxu0
        %1794 = vdwg.mxu0
        %v1795 = vadd.f32 %v968, %v1789
        %v1796 = vadd.f32 %v970, %v1791
        %v1797 = vtanh.pop %v1795
        %v1798 = vtanh.pop %v1796
        %v1799 = vpack.c.bf16 %v1797, %v1797
        %v1800 = vpack.c.bf16 %v1798, %v1798
        %1801 = vmatprep.subr.bf16.mxu0 %v1603
        %1802 = vmatpush1.bf16.msra.mxu0 %v1602
        %1803 = vmatprep.subr.bf16.mxu0 %v1605
        %1804 = vmatpush1.bf16.msra.mxu0 %v1604
        %1805 = vmatprep.subr.bf16.mxu0 %v1607
        %1806 = vmatpush1.bf16.msra.mxu0 %v1606
        %1807 = vmatprep.subr.bf16.mxu0 %v1609
        %1808 = vmatpush1.bf16.msra.mxu0 %v1608
        %1809 = vmatprep.subr.bf16.mxu0 %v1611
        %1810 = vmatpush1.bf16.msra.mxu0 %v1610
        %1811 = vmatprep.subr.bf16.mxu0 %v1613
        %1812 = vmatpush1.bf16.msra.mxu0 %v1612
        %1813 = vmatprep.subr.bf16.mxu0 %v1615
        %1814 = vmatpush1.bf16.msra.mxu0 %v1614
        %1815 = vmatprep.subr.bf16.mxu0 %v1617
        %1816 = vmatpush1.bf16.msra.mxu0 %v1616
        %1817 = vmatprep.subr.bf16.mxu0 %v1619
        %1818 = vmatpush1.bf16.msra.mxu0 %v1618
        %1819 = vmatprep.subr.bf16.mxu0 %v1621
        %1820 = vmatpush1.bf16.msra.mxu0 %v1620
        %1821 = vmatprep.subr.bf16.mxu0 %v1623
        %1822 = vmatpush1.bf16.msra.mxu0 %v1622
        %1823 = vmatprep.subr.bf16.mxu0 %v1625
        %1824 = vmatpush1.bf16.msra.mxu0 %v1624
        %1825 = vmatprep.subr.bf16.mxu0 %v1627
        %1826 = vmatpush1.bf16.msra.mxu0 %v1626
        %1827 = vmatprep.subr.bf16.mxu0 %v1629
        %1828 = vmatpush1.bf16.msra.mxu0 %v1628
        %1829 = vmatprep.subr.bf16.mxu0 %v1631
        %1830 = vmatpush1.bf16.msra.mxu0 %v1630
        %1831 = vmatprep.subr.bf16.mxu0 %v1633
        %1832 = vmatpush1.bf16.msra.mxu0 %v1632
        %1833 = vmatprep.mubr.bf16.mxu0 %v1800
        %1834 = vmatmul.mubr.bf16.gmra.mrb[0].mxu0 %v1799
        %v1835 = vpop.f32.mrb[0].mxu0
        %v1836 = vadd.f32 %v1748, %v1835
        %v1837 = vpop.f32.mrb[0].mxu0
        %v1838 = vadd.f32 %v1750, %v1837
        %v1839 = vpop.f32.mrb[0].mxu0
        %v1840 = vpop.f32.mrb[0].mxu0
        %1841 = vdwg.mxu0
        %v1842 = vadd.f32 %v1836, %v1083
        %v1843 = vadd.f32 %v1838, %v1087
        %v1844 = vtanh.pop %v1842
        %v1845 = vtanh.pop %v1843
        %v1846 = vpack.c.bf16 %v1844, %v1844
        %v1847 = vpack.c.bf16 %v1845, %v1845
        %1848 = vmatprep.subr.bf16.mxu0 %v1193
        %1849 = vmatpush1.bf16.msra.mxu0 %v1192
        %1850 = vmatprep.subr.bf16.mxu0 %v1195
        %1851 = vmatpush1.bf16.msra.mxu0 %v1194
        %1852 = vmatprep.subr.bf16.mxu0 %v1197
        %1853 = vmatpush1.bf16.msra.mxu0 %v1196
        %1854 = vmatprep.subr.bf16.mxu0 %v1199
        %1855 = vmatpush1.bf16.msra.mxu0 %v1198
        %1856 = vmatprep.subr.bf16.mxu0 %v1201
        %1857 = vmatpush1.bf16.msra.mxu0 %v1200
        %1858 = vmatprep.subr.bf16.mxu0 %v1203
        %1859 = vmatpush1.bf16.msra.mxu0 %v1202
        %1860 = vmatprep.subr.bf16.mxu0 %v1205
        %1861 = vmatpush1.bf16.msra.mxu0 %v1204
        %1862 = vmatprep.subr.bf16.mxu0 %v1207
        %1863 = vmatpush1.bf16.msra.mxu0 %v1206
        %1864 = vmatprep.subr.bf16.mxu0 %v1209
        %1865 = vmatpush1.bf16.msra.mxu0 %v1208
        %1866 = vmatprep.subr.bf16.mxu0 %v1211
        %1867 = vmatpush1.bf16.msra.mxu0 %v1210
        %1868 = vmatprep.subr.bf16.mxu0 %v1213
        %1869 = vmatpush1.bf16.msra.mxu0 %v1212
        %1870 = vmatprep.subr.bf16.mxu0 %v1215
        %1871 = vmatpush1.bf16.msra.mxu0 %v1214
        %1872 = vmatprep.subr.bf16.mxu0 %v1217
        %1873 = vmatpush1.bf16.msra.mxu0 %v1216
        %1874 = vmatprep.subr.bf16.mxu0 %v1219
        %1875 = vmatpush1.bf16.msra.mxu0 %v1218
        %1876 = vmatprep.subr.bf16.mxu0 %v1221
        %1877 = vmatpush1.bf16.msra.mxu0 %v1220
        %1878 = vmatprep.subr.bf16.mxu0 %v1223
        %1879 = vmatpush1.bf16.msra.mxu0 %v1222
        %1880 = vmatprep.mubr.bf16.mxu0 %v1847
        %1881 = vmatmul.mubr.bf16.gmra.mrb[0].mxu0 %v1846
        %v1882 = vpop.f32.mrb[0].mxu0
        %v1883 = vadd.f32 0.0, %v1882
        %v1884 = vpop.f32.mrb[0].mxu0
        %v1885 = vadd.f32 0.0, %v1884
        %v1886 = vpop.f32.mrb[0].mxu0
        %v1887 = vpop.f32.mrb[0].mxu0
        %1888 = vdwg.mxu0
        %1889 = vmatprep.subr.bf16.mxu0 %v1396
        %1890 = vmatpush1.bf16.msra.mxu0 %v1395
        %1891 = vmatprep.subr.bf16.mxu0 %v1398
        %1892 = vmatpush1.bf16.msra.mxu0 %v1397
        %1893 = vmatprep.subr.bf16.mxu0 %v1400
        %1894 = vmatpush1.bf16.msra.mxu0 %v1399
        %1895 = vmatprep.subr.bf16.mxu0 %v1402
        %1896 = vmatpush1.bf16.msra.mxu0 %v1401
        %1897 = vmatprep.subr.bf16.mxu0 %v1404
        %1898 = vmatpush1.bf16.msra.mxu0 %v1403
        %1899 = vmatprep.subr.bf16.mxu0 %v1406
        %1900 = vmatpush1.bf16.msra.mxu0 %v1405
        %1901 = vmatprep.subr.bf16.mxu0 %v1408
        %1902 = vmatpush1.bf16.msra.mxu0 %v1407
        %1903 = vmatprep.subr.bf16.mxu0 %v1410
        %1904 = vmatpush1.bf16.msra.mxu0 %v1409
        %1905 = vmatprep.subr.bf16.mxu0 %v1412
        %1906 = vmatpush1.bf16.msra.mxu0 %v1411
        %1907 = vmatprep.subr.bf16.mxu0 %v1414
        %1908 = vmatpush1.bf16.msra.mxu0 %v1413
        %1909 = vmatprep.subr.bf16.mxu0 %v1416
        %1910 = vmatpush1.bf16.msra.mxu0 %v1415
        %1911 = vmatprep.subr.bf16.mxu0 %v1418
        %1912 = vmatpush1.bf16.msra.mxu0 %v1417
        %1913 = vmatprep.subr.bf16.mxu0 %v1420
        %1914 = vmatpush1.bf16.msra.mxu0 %v1419
        %1915 = vmatprep.subr.bf16.mxu0 %v1422
        %1916 = vmatpush1.bf16.msra.mxu0 %v1421
        %1917 = vmatprep.subr.bf16.mxu0 %v1424
        %1918 = vmatpush1.bf16.msra.mxu0 %v1423
        %1919 = vmatprep.subr.bf16.mxu0 %v1426
        %1920 = vmatpush1.bf16.msra.mxu0 %v1425
        %1921 = vmatprep.mubr.bf16.mxu0 %v1800
        %1922 = vmatmul.mubr.bf16.gmra.mrb[0].mxu0 %v1799
        %v1923 = vpop.f32.mrb[0].mxu0
        %v1924 = vadd.f32 0.0, %v1923
        %v1925 = vpop.f32.mrb[0].mxu0
        %v1926 = vadd.f32 0.0, %v1925
        %v1927 = vpop.f32.mrb[0].mxu0
        %v1928 = vpop.f32.mrb[0].mxu0
        %1929 = vdwg.mxu0
        %v1930 = vadd.f32 %v974, %v1924
        %v1931 = vadd.f32 %v976, %v1926
        %v1932 = vtanh.pop %v1930
        %v1933 = vtanh.pop %v1931
        %v1934 = vpack.c.bf16 %v1932, %v1932
        %v1935 = vpack.c.bf16 %v1933, %v1933
        %1936 = vmatprep.subr.bf16.mxu0 %v1603
        %1937 = vmatpush1.bf16.msra.mxu0 %v1602
        %1938 = vmatprep.subr.bf16.mxu0 %v1605
        %1939 = vmatpush1.bf16.msra.mxu0 %v1604
        %1940 = vmatprep.subr.bf16.mxu0 %v1607
        %1941 = vmatpush1.bf16.msra.mxu0 %v1606
        %1942 = vmatprep.subr.bf16.mxu0 %v1609
        %1943 = vmatpush1.bf16.msra.mxu0 %v1608
        %1944 = vmatprep.subr.bf16.mxu0 %v1611
        %1945 = vmatpush1.bf16.msra.mxu0 %v1610
        %1946 = vmatprep.subr.bf16.mxu0 %v1613
        %1947 = vmatpush1.bf16.msra.mxu0 %v1612
        %1948 = vmatprep.subr.bf16.mxu0 %v1615
        %1949 = vmatpush1.bf16.msra.mxu0 %v1614
        %1950 = vmatprep.subr.bf16.mxu0 %v1617
        %1951 = vmatpush1.bf16.msra.mxu0 %v1616
        %1952 = vmatprep.subr.bf16.mxu0 %v1619
        %1953 = vmatpush1.bf16.msra.mxu0 %v1618
        %1954 = vmatprep.subr.bf16.mxu0 %v1621
        %1955 = vmatpush1.bf16.msra.mxu0 %v1620
        %1956 = vmatprep.subr.bf16.mxu0 %v1623
        %1957 = vmatpush1.bf16.msra.mxu0 %v1622
        %1958 = vmatprep.subr.bf16.mxu0 %v1625
        %1959 = vmatpush1.bf16.msra.mxu0 %v1624
        %1960 = vmatprep.subr.bf16.mxu0 %v1627
        %1961 = vmatpush1.bf16.msra.mxu0 %v1626
        %1962 = vmatprep.subr.bf16.mxu0 %v1629
        %1963 = vmatpush1.bf16.msra.mxu0 %v1628
        %1964 = vmatprep.subr.bf16.mxu0 %v1631
        %1965 = vmatpush1.bf16.msra.mxu0 %v1630
        %1966 = vmatprep.subr.bf16.mxu0 %v1633
        %1967 = vmatpush1.bf16.msra.mxu0 %v1632
        %1968 = vmatprep.mubr.bf16.mxu0 %v1935
        %1969 = vmatmul.mubr.bf16.gmra.mrb[0].mxu0 %v1934
        %v1970 = vpop.f32.mrb[0].mxu0
        %v1971 = vadd.f32 %v1883, %v1970
        %v1972 = vpop.f32.mrb[0].mxu0
        %v1973 = vadd.f32 %v1885, %v1972
        %v1974 = vpop.f32.mrb[0].mxu0
        %v1975 = vpop.f32.mrb[0].mxu0
        %1976 = vdwg.mxu0
        %v1977 = vadd.f32 %v1971, %v1083
        %v1978 = vadd.f32 %v1973, %v1087
        %v1979 = vtanh.pop %v1977
        %v1980 = vtanh.pop %v1978
        %v1981 = vpack.c.bf16 %v1979, %v1979
        %v1982 = vpack.c.bf16 %v1980, %v1980
        %1983 = vmatprep.subr.bf16.mxu0 %v1193
        %1984 = vmatpush1.bf16.msra.mxu0 %v1192
        %1985 = vmatprep.subr.bf16.mxu0 %v1195
        %1986 = vmatpush1.bf16.msra.mxu0 %v1194
        %1987 = vmatprep.subr.bf16.mxu0 %v1197
        %1988 = vmatpush1.bf16.msra.mxu0 %v1196
        %1989 = vmatprep.subr.bf16.mxu0 %v1199
        %1990 = vmatpush1.bf16.msra.mxu0 %v1198
        %1991 = vmatprep.subr.bf16.mxu0 %v1201
        %1992 = vmatpush1.bf16.msra.mxu0 %v1200
        %1993 = vmatprep.subr.bf16.mxu0 %v1203
        %1994 = vmatpush1.bf16.msra.mxu0 %v1202
        %1995 = vmatprep.subr.bf16.mxu0 %v1205
        %1996 = vmatpush1.bf16.msra.mxu0 %v1204
        %1997 = vmatprep.subr.bf16.mxu0 %v1207
        %1998 = vmatpush1.bf16.msra.mxu0 %v1206
        %1999 = vmatprep.subr.bf16.mxu0 %v1209
        %2000 = vmatpush1.bf16.msra.mxu0 %v1208
        %2001 = vmatprep.subr.bf16.mxu0 %v1211
        %2002 = vmatpush1.bf16.msra.mxu0 %v1210
        %2003 = vmatprep.subr.bf16.mxu0 %v1213
        %2004 = vmatpush1.bf16.msra.mxu0 %v1212
        %2005 = vmatprep.subr.bf16.mxu0 %v1215
        %2006 = vmatpush1.bf16.msra.mxu0 %v1214
        %2007 = vmatprep.subr.bf16.mxu0 %v1217
        %2008 = vmatpush1.bf16.msra.mxu0 %v1216
        %2009 = vmatprep.subr.bf16.mxu0 %v1219
        %2010 = vmatpush1.bf16.msra.mxu0 %v1218
        %2011 = vmatprep.subr.bf16.mxu0 %v1221
        %2012 = vmatpush1.bf16.msra.mxu0 %v1220
        %2013 = vmatprep.subr.bf16.mxu0 %v1223
        %2014 = vmatpush1.bf16.msra.mxu0 %v1222
        %2015 = vmatprep.mubr.bf16.mxu0 %v1982
        %2016 = vmatmul.mubr.bf16.gmra.mrb[0].mxu0 %v1981
        %v2017 = vpop.f32.mrb[0].mxu0
        %v2018 = vadd.f32 0.0, %v2017
        %v2019 = vpop.f32.mrb[0].mxu0
        %v2020 = vadd.f32 0.0, %v2019
        %v2021 = vpop.f32.mrb[0].mxu0
        %v2022 = vpop.f32.mrb[0].mxu0
        %2023 = vdwg.mxu0
        %2024 = vmatprep.subr.bf16.mxu0 %v1396
        %2025 = vmatpush1.bf16.msra.mxu0 %v1395
        %2026 = vmatprep.subr.bf16.mxu0 %v1398
        %2027 = vmatpush1.bf16.msra.mxu0 %v1397
        %2028 = vmatprep.subr.bf16.mxu0 %v1400
        %2029 = vmatpush1.bf16.msra.mxu0 %v1399
        %2030 = vmatprep.subr.bf16.mxu0 %v1402
        %2031 = vmatpush1.bf16.msra.mxu0 %v1401
        %2032 = vmatprep.subr.bf16.mxu0 %v1404
        %2033 = vmatpush1.bf16.msra.mxu0 %v1403
        %2034 = vmatprep.subr.bf16.mxu0 %v1406
        %2035 = vmatpush1.bf16.msra.mxu0 %v1405
        %2036 = vmatprep.subr.bf16.mxu0 %v1408
        %2037 = vmatpush1.bf16.msra.mxu0 %v1407
        %2038 = vmatprep.subr.bf16.mxu0 %v1410
        %2039 = vmatpush1.bf16.msra.mxu0 %v1409
        %2040 = vmatprep.subr.bf16.mxu0 %v1412
        %2041 = vmatpush1.bf16.msra.mxu0 %v1411
        %2042 = vmatprep.subr.bf16.mxu0 %v1414
        %2043 = vmatpush1.bf16.msra.mxu0 %v1413
        %2044 = vmatprep.subr.bf16.mxu0 %v1416
        %2045 = vmatpush1.bf16.msra.mxu0 %v1415
        %2046 = vmatprep.subr.bf16.mxu0 %v1418
        %2047 = vmatpush1.bf16.msra.mxu0 %v1417
        %2048 = vmatprep.subr.bf16.mxu0 %v1420
        %2049 = vmatpush1.bf16.msra.mxu0 %v1419
        %2050 = vmatprep.subr.bf16.mxu0 %v1422
        %2051 = vmatpush1.bf16.msra.mxu0 %v1421
        %2052 = vmatprep.subr.bf16.mxu0 %v1424
        %2053 = vmatpush1.bf16.msra.mxu0 %v1423
        %2054 = vmatprep.subr.bf16.mxu0 %v1426
        %2055 = vmatpush1.bf16.msra.mxu0 %v1425
        %2056 = vmatprep.mubr.bf16.mxu0 %v1935
        %2057 = vmatmul.mubr.bf16.gmra.mrb[0].mxu0 %v1934
        %v2058 = vpop.f32.mrb[0].mxu0
        %v2059 = vadd.f32 0.0, %v2058
        %v2060 = vpop.f32.mrb[0].mxu0
        %v2061 = vadd.f32 0.0, %v2060
        %v2062 = vpop.f32.mrb[0].mxu0
        %v2063 = vpop.f32.mrb[0].mxu0
        %2064 = vdwg.mxu0
        %v2065 = vadd.f32 %v978, %v2059
        %v2066 = vadd.f32 %v980, %v2061
        %v2067 = vtanh.pop %v2065
        %v2068 = vtanh.pop %v2066
        %v2069 = vpack.c.bf16 %v2067, %v2067
        %v2070 = vpack.c.bf16 %v2068, %v2068
        %2071 = vmatprep.subr.bf16.mxu0 %v1603
        %2072 = vmatpush1.bf16.msra.mxu0 %v1602
        %2073 = vmatprep.subr.bf16.mxu0 %v1605
        %2074 = vmatpush1.bf16.msra.mxu0 %v1604
        %2075 = vmatprep.subr.bf16.mxu0 %v1607
        %2076 = vmatpush1.bf16.msra.mxu0 %v1606
        %2077 = vmatprep.subr.bf16.mxu0 %v1609
        %2078 = vmatpush1.bf16.msra.mxu0 %v1608
        %2079 = vmatprep.subr.bf16.mxu0 %v1611
        %2080 = vmatpush1.bf16.msra.mxu0 %v1610
        %2081 = vmatprep.subr.bf16.mxu0 %v1613
        %2082 = vmatpush1.bf16.msra.mxu0 %v1612
        %2083 = vmatprep.subr.bf16.mxu0 %v1615
        %2084 = vmatpush1.bf16.msra.mxu0 %v1614
        %2085 = vmatprep.subr.bf16.mxu0 %v1617
        %2086 = vmatpush1.bf16.msra.mxu0 %v1616
        %2087 = vmatprep.subr.bf16.mxu0 %v1619
        %2088 = vmatpush1.bf16.msra.mxu0 %v1618
        %2089 = vmatprep.subr.bf16.mxu0 %v1621
        %2090 = vmatpush1.bf16.msra.mxu0 %v1620
        %2091 = vmatprep.subr.bf16.mxu0 %v1623
        %2092 = vmatpush1.bf16.msra.mxu0 %v1622
        %2093 = vmatprep.subr.bf16.mxu0 %v1625
        %2094 = vmatpush1.bf16.msra.mxu0 %v1624
        %2095 = vmatprep.subr.bf16.mxu0 %v1627
        %2096 = vmatpush1.bf16.msra.mxu0 %v1626
        %2097 = vmatprep.subr.bf16.mxu0 %v1629
        %2098 = vmatpush1.bf16.msra.mxu0 %v1628
        %2099 = vmatprep.subr.bf16.mxu0 %v1631
        %2100 = vmatpush1.bf16.msra.mxu0 %v1630
        %2101 = vmatprep.subr.bf16.mxu0 %v1633
        %2102 = vmatpush1.bf16.msra.mxu0 %v1632
        %2103 = vmatprep.mubr.bf16.mxu0 %v2070
        %2104 = vmatmul.mubr.bf16.gmra.mrb[0].mxu0 %v2069
        %v2105 = vpop.f32.mrb[0].mxu0
        %v2106 = vadd.f32 %v2018, %v2105
        %v2107 = vpop.f32.mrb[0].mxu0
        %v2108 = vadd.f32 %v2020, %v2107
        %v2109 = vpop.f32.mrb[0].mxu0
        %v2110 = vpop.f32.mrb[0].mxu0
        %2111 = vdwg.mxu0
        %v2112 = vadd.f32 %v2106, %v1083
        %v2113 = vadd.f32 %v2108, %v1087
        %v2114 = vtanh.pop %v2112
        %v2115 = vtanh.pop %v2113
        %2116 = vst [vmem:[#allocation2] sm:$0xff] %v2067
        %2117 = vst [vmem:[#allocation2 + $0x8] sm:$0xff] %v2068
        %2118 = vst [vmem:[#allocation3] sm:$0xff] %v2114
        %2119 = vst [vmem:[#allocation3 + $0x8] sm:$0xff] %v2115
        %p2120 = scmp.eq.s32.totalorder %s48, 1
        // Predicated region
        $region177: #{forward.1} parent=95 // pred_check
          %p2121 = pneg %p2120
        $region178: #{forward.1} parent=95 // pred_check_branch
          %2123 = sbr.rel (%p2121) target = $region180
        $region179: #{forward.1} parent=95 // pred_region
          %v2124 = vld [vmem:[#allocation16] sm:$0xff]
          %v2125 = vld [vmem:[#allocation16 + $0x8] sm:$0xff]
          %v2126 = vld [vmem:[#allocation16 + $0x10] sm:$0xf]
          %v2127 = vld [vmem:[#allocation16 + $0x18] sm:$0xf]
          %v2128 = vld [vmem:[#allocation18] sm:$0xff]
          %v2129 = vld [vmem:[#allocation18 + $0x8] sm:$0xff]
          %v2130 = vld [vmem:[#allocation18 + $0x10] sm:$0xff]
          %v2131 = vld [vmem:[#allocation18 + $0x18] sm:$0xff]
          %v2132 = vld [vmem:[#allocation18 + $0x20] sm:$0xff]
          %v2133 = vld [vmem:[#allocation18 + $0x28] sm:$0xff]
          %v2134 = vld [vmem:[#allocation18 + $0x30] sm:$0xff]
          %v2135 = vld [vmem:[#allocation18 + $0x38] sm:$0xff]
          %v2136 = vlaneseq
          %v2137 = vshrl.u32 %v2136, 7
          %v2138 = vsub.s32 0, %v2137
          %v2139 = vrot.slane %v2124, %v2138
          %v2140 = vlaneseq
          %v2141 = vshrl.u32 %v2140, 7
          %v2142 = vsub.s32 0, %v2141
          %v2143 = vrot.slane %v2125, %v2142
          %vm2144 = vcmp.ge.f32.partialorder %v2114, %v2139
          %vm2145 = vcmp.ge.f32.partialorder %v2115, %v2143
          %v2146 = vlaneseq
          %v2147 = vshrl.u32 %v2146, 7
          %v2148 = vsub.s32 1, %v2147
          %v2149 = vrot.slane %v2124, %v2148
          %v2150 = vlaneseq
          %v2151 = vshrl.u32 %v2150, 7
          %v2152 = vsub.s32 1, %v2151
          %v2153 = vrot.slane %v2125, %v2152
          %vm2154 = vcmp.lt.f32.partialorder %v2114, %v2149
          %vm2155 = vcmp.lt.f32.partialorder %v2115, %v2153
          %vm2156 = vmand %vm2144, %vm2154
          %vm2157 = vmand %vm2145, %vm2155
          %v2158 = vsel %vm2156, 1, 0
          %v2159 = vsel %vm2157, 1, 0
          %v2160 = vcvt.s32.f32 %v2158
          %v2161 = vcvt.s32.f32 %v2159
          %vm2162 = vcmp.ge.f32.partialorder %v2114, %v2149
          %vm2163 = vcmp.ge.f32.partialorder %v2115, %v2153
          %v2164 = vlaneseq
          %v2165 = vshrl.u32 %v2164, 7
          %v2166 = vsub.s32 2, %v2165
          %v2167 = vrot.slane %v2124, %v2166
          %v2168 = vlaneseq
          %v2169 = vshrl.u32 %v2168, 7
          %v2170 = vsub.s32 2, %v2169
          %v2171 = vrot.slane %v2125, %v2170
          %vm2172 = vcmp.lt.f32.partialorder %v2114, %v2167
          %vm2173 = vcmp.lt.f32.partialorder %v2115, %v2171
          %vm2174 = vmand %vm2162, %vm2172
          %vm2175 = vmand %vm2163, %vm2173
          %v2176 = vsel %vm2174, 1, 0
          %v2177 = vsel %vm2175, 1, 0
          %v2178 = vcvt.s32.f32 %v2176
          %v2179 = vcvt.s32.f32 %v2177
          %vm2180 = vcmp.ge.f32.partialorder %v2114, %v2167
          %vm2181 = vcmp.ge.f32.partialorder %v2115, %v2171
          %v2182 = vlaneseq
          %v2183 = vshrl.u32 %v2182, 7
          %v2184 = vsub.s32 3, %v2183
          %v2185 = vrot.slane %v2124, %v2184
          %v2186 = vlaneseq
          %v2187 = vshrl.u32 %v2186, 7
          %v2188 = vsub.s32 3, %v2187
          %v2189 = vrot.slane %v2125, %v2188
          %vm2190 = vcmp.lt.f32.partialorder %v2114, %v2185
          %vm2191 = vcmp.lt.f32.partialorder %v2115, %v2189
          %vm2192 = vmand %vm2180, %vm2190
          %vm2193 = vmand %vm2181, %vm2191
          %v2194 = vsel %vm2192, 1, 0
          %v2195 = vsel %vm2193, 1, 0
          %v2196 = vcvt.s32.f32 %v2194
          %v2197 = vcvt.s32.f32 %v2195
          %vm2198 = vcmp.ge.f32.partialorder %v2114, %v2185
          %vm2199 = vcmp.ge.f32.partialorder %v2115, %v2189
          %v2200 = vlaneseq
          %v2201 = vshrl.u32 %v2200, 7
          %v2202 = vsub.s32 4, %v2201
          %v2203 = vrot.slane %v2124, %v2202
          %v2204 = vlaneseq
          %v2205 = vshrl.u32 %v2204, 7
          %v2206 = vsub.s32 4, %v2205
          %v2207 = vrot.slane %v2125, %v2206
          %vm2208 = vcmp.lt.f32.partialorder %v2114, %v2203
          %vm2209 = vcmp.lt.f32.partialorder %v2115, %v2207
          %vm2210 = vmand %vm2198, %vm2208
          %vm2211 = vmand %vm2199, %vm2209
          %v2212 = vsel %vm2210, 1, 0
          %v2213 = vsel %vm2211, 1, 0
          %v2214 = vcvt.s32.f32 %v2212
          %v2215 = vcvt.s32.f32 %v2213
          %vm2216 = vcmp.ge.f32.partialorder %v2114, %v2203
          %vm2217 = vcmp.ge.f32.partialorder %v2115, %v2207
          %v2218 = vlaneseq
          %v2219 = vshrl.u32 %v2218, 7
          %v2220 = vsub.s32 5, %v2219
          %v2221 = vrot.slane %v2124, %v2220
          %v2222 = vlaneseq
          %v2223 = vshrl.u32 %v2222, 7
          %v2224 = vsub.s32 5, %v2223
          %v2225 = vrot.slane %v2125, %v2224
          %vm2226 = vcmp.lt.f32.partialorder %v2114, %v2221
          %vm2227 = vcmp.lt.f32.partialorder %v2115, %v2225
          %vm2228 = vmand %vm2216, %vm2226
          %vm2229 = vmand %vm2217, %vm2227
          %v2230 = vsel %vm2228, 1, 0
          %v2231 = vsel %vm2229, 1, 0
          %v2232 = vcvt.s32.f32 %v2230
          %v2233 = vcvt.s32.f32 %v2231
          %vm2234 = vcmp.ge.f32.partialorder %v2114, %v2221
          %vm2235 = vcmp.ge.f32.partialorder %v2115, %v2225
          %v2236 = vlaneseq
          %v2237 = vshrl.u32 %v2236, 7
          %v2238 = vsub.s32 6, %v2237
          %v2239 = vrot.slane %v2124, %v2238
          %v2240 = vlaneseq
          %v2241 = vshrl.u32 %v2240, 7
          %v2242 = vsub.s32 6, %v2241
          %v2243 = vrot.slane %v2125, %v2242
          %vm2244 = vcmp.lt.f32.partialorder %v2114, %v2239
          %vm2245 = vcmp.lt.f32.partialorder %v2115, %v2243
          %vm2246 = vmand %vm2234, %vm2244
          %vm2247 = vmand %vm2235, %vm2245
          %v2248 = vsel %vm2246, 1, 0
          %v2249 = vsel %vm2247, 1, 0
          %v2250 = vcvt.s32.f32 %v2248
          %v2251 = vcvt.s32.f32 %v2249
          %vm2252 = vcmp.ge.f32.partialorder %v2114, %v2239
          %vm2253 = vcmp.ge.f32.partialorder %v2115, %v2243
          %v2254 = vlaneseq
          %v2255 = vshrl.u32 %v2254, 7
          %v2256 = vsub.s32 7, %v2255
          %v2257 = vrot.slane %v2124, %v2256
          %v2258 = vlaneseq
          %v2259 = vshrl.u32 %v2258, 7
          %v2260 = vsub.s32 7, %v2259
          %v2261 = vrot.slane %v2125, %v2260
          %vm2262 = vcmp.lt.f32.partialorder %v2114, %v2257
          %vm2263 = vcmp.lt.f32.partialorder %v2115, %v2261
          %vm2264 = vmand %vm2252, %vm2262
          %vm2265 = vmand %vm2253, %vm2263
          %v2266 = vsel %vm2264, 1, 0
          %v2267 = vsel %vm2265, 1, 0
          %v2268 = vcvt.s32.f32 %v2266
          %v2269 = vcvt.s32.f32 %v2267
          %vm2270 = vcmp.ge.f32.partialorder %v2114, %v2257
          %vm2271 = vcmp.ge.f32.partialorder %v2115, %v2261
          %v2272 = vlaneseq
          %v2273 = vshrl.u32 %v2272, 7
          %v2274 = vsub.s32 0, %v2273
          %v2275 = vrot.slane %v2126, %v2274
          %v2276 = vlaneseq
          %v2277 = vshrl.u32 %v2276, 7
          %v2278 = vsub.s32 0, %v2277
          %v2279 = vrot.slane %v2127, %v2278
          %vm2280 = vcmp.lt.f32.partialorder %v2114, %v2275
          %vm2281 = vcmp.lt.f32.partialorder %v2115, %v2279
          %vm2282 = vmand %vm2270, %vm2280
          %vm2283 = vmand %vm2271, %vm2281
          %v2284 = vsel %vm2282, 1, 0
          %v2285 = vsel %vm2283, 1, 0
          %v2286 = vcvt.s32.f32 %v2284
          %v2287 = vcvt.s32.f32 %v2285
          %vm2288 = vcmp.ge.f32.partialorder %v2114, %v2275
          %vm2289 = vcmp.ge.f32.partialorder %v2115, %v2279
          %v2290 = vlaneseq
          %v2291 = vshrl.u32 %v2290, 7
          %v2292 = vsub.s32 1, %v2291
          %v2293 = vrot.slane %v2126, %v2292
          %v2294 = vlaneseq
          %v2295 = vshrl.u32 %v2294, 7
          %v2296 = vsub.s32 1, %v2295
          %v2297 = vrot.slane %v2127, %v2296
          %vm2298 = vcmp.lt.f32.partialorder %v2114, %v2293
          %vm2299 = vcmp.lt.f32.partialorder %v2115, %v2297
          %vm2300 = vmand %vm2288, %vm2298
          %vm2301 = vmand %vm2289, %vm2299
          %v2302 = vsel %vm2300, 1, 0
          %v2303 = vsel %vm2301, 1, 0
          %v2304 = vcvt.s32.f32 %v2302
          %v2305 = vcvt.s32.f32 %v2303
          %vm2306 = vcmp.ge.f32.partialorder %v2114, %v2293
          %vm2307 = vcmp.ge.f32.partialorder %v2115, %v2297
          %v2308 = vlaneseq
          %v2309 = vshrl.u32 %v2308, 7
          %v2310 = vsub.s32 2, %v2309
          %v2311 = vrot.slane %v2126, %v2310
          %v2312 = vlaneseq
          %v2313 = vshrl.u32 %v2312, 7
          %v2314 = vsub.s32 2, %v2313
          %v2315 = vrot.slane %v2127, %v2314
          %vm2316 = vcmp.lt.f32.partialorder %v2114, %v2311
          %vm2317 = vcmp.lt.f32.partialorder %v2115, %v2315
          %vm2318 = vmand %vm2306, %vm2316
          %vm2319 = vmand %vm2307, %vm2317
          %v2320 = vsel %vm2318, 1, 0
          %v2321 = vsel %vm2319, 1, 0
          %v2322 = vcvt.s32.f32 %v2320
          %v2323 = vcvt.s32.f32 %v2321
          %vm2324 = vcmp.ge.f32.partialorder %v2114, %v2311
          %vm2325 = vcmp.ge.f32.partialorder %v2115, %v2315
          %v2326 = vlaneseq
          %v2327 = vshrl.u32 %v2326, 7
          %v2328 = vsub.s32 3, %v2327
          %v2329 = vrot.slane %v2126, %v2328
          %v2330 = vlaneseq
          %v2331 = vshrl.u32 %v2330, 7
          %v2332 = vsub.s32 3, %v2331
          %v2333 = vrot.slane %v2127, %v2332
          %vm2334 = vcmp.lt.f32.partialorder %v2114, %v2329
          %vm2335 = vcmp.lt.f32.partialorder %v2115, %v2333
          %vm2336 = vmand %vm2324, %vm2334
          %vm2337 = vmand %vm2325, %vm2335
          %v2338 = vsel %vm2336, 1, 0
          %v2339 = vsel %vm2337, 1, 0
          %v2340 = vcvt.s32.f32 %v2338
          %v2341 = vcvt.s32.f32 %v2339
          %v2342 = vsub.f32 %v2114, %v2139
          %v2343 = vsub.f32 %v2115, %v2143
          %v2344 = vsub.f32 %v2114, %v2149
          %v2345 = vsub.f32 %v2115, %v2153
          %v2346 = vsub.f32 %v2114, %v2167
          %v2347 = vsub.f32 %v2115, %v2171
          %v2348 = vsub.f32 %v2114, %v2185
          %v2349 = vsub.f32 %v2115, %v2189
          %v2350 = vsub.f32 %v2114, %v2203
          %v2351 = vsub.f32 %v2115, %v2207
          %v2352 = vsub.f32 %v2114, %v2221
          %v2353 = vsub.f32 %v2115, %v2225
          %v2354 = vsub.f32 %v2114, %v2239
          %v2355 = vsub.f32 %v2115, %v2243
          %v2356 = vsub.f32 %v2114, %v2257
          %v2357 = vsub.f32 %v2115, %v2261
          %v2358 = vsub.f32 %v2114, %v2275
          %v2359 = vsub.f32 %v2115, %v2279
          %v2360 = vsub.f32 %v2114, %v2293
          %v2361 = vsub.f32 %v2115, %v2297
          %v2362 = vsub.f32 %v2114, %v2311
          %v2363 = vsub.f32 %v2115, %v2315
          %v2364 = vsub.f32 %v2114, %v2329
          %v2365 = vsub.f32 %v2115, %v2333
          %v2366 = vlaneseq
          %v2367 = vshrl.u32 %v2366, 7
          %v2368 = vsub.s32 0, %v2367
          %v2369 = vrot.slane %v2128, %v2368
          %v2370 = vlaneseq
          %v2371 = vshrl.u32 %v2370, 7
          %v2372 = vsub.s32 0, %v2371
          %v2373 = vrot.slane %v2129, %v2372
          %v2374 = vmul.f32 %v2342, %v2369
          %v2375 = vmul.f32 %v2343, %v2373
          %v2376 = vmul.f32 %v2374, %v2160
          %v2377 = vmul.f32 %v2375, %v2161
          %v2378 = vlaneseq
          %v2379 = vshrl.u32 %v2378, 7
          %v2380 = vsub.s32 1, %v2379
          %v2381 = vrot.slane %v2128, %v2380
          %v2382 = vlaneseq
          %v2383 = vshrl.u32 %v2382, 7
          %v2384 = vsub.s32 1, %v2383
          %v2385 = vrot.slane %v2129, %v2384
          %v2386 = vmul.f32 %v2346, %v2381
          %v2387 = vmul.f32 %v2347, %v2385
          %v2388 = vmul.f32 %v2386, %v2178
          %v2389 = vmul.f32 %v2387, %v2179
          %v2390 = vsub.f32 %v2376, %v2388
          %v2391 = vsub.f32 %v2377, %v2389
          %v2392 = vmul.f32 %v2344, %v2381
          %v2393 = vmul.f32 %v2345, %v2385
          %v2394 = vmul.f32 %v2392, %v2178
          %v2395 = vmul.f32 %v2393, %v2179
          %v2396 = vlaneseq
          %v2397 = vshrl.u32 %v2396, 7
          %v2398 = vsub.s32 2, %v2397
          %v2399 = vrot.slane %v2128, %v2398
          %v2400 = vlaneseq
          %v2401 = vshrl.u32 %v2400, 7
          %v2402 = vsub.s32 2, %v2401
          %v2403 = vrot.slane %v2129, %v2402
          %v2404 = vmul.f32 %v2348, %v2399
          %v2405 = vmul.f32 %v2349, %v2403
          %v2406 = vmul.f32 %v2404, %v2196
          %v2407 = vmul.f32 %v2405, %v2197
          %v2408 = vsub.f32 %v2394, %v2406
          %v2409 = vsub.f32 %v2395, %v2407
          %v2410 = vmul.f32 %v2346, %v2399
          %v2411 = vmul.f32 %v2347, %v2403
          %v2412 = vmul.f32 %v2410, %v2196
          %v2413 = vmul.f32 %v2411, %v2197
          %v2414 = vlaneseq
          %v2415 = vshrl.u32 %v2414, 7
          %v2416 = vsub.s32 3, %v2415
          %v2417 = vrot.slane %v2128, %v2416
          %v2418 = vlaneseq
          %v2419 = vshrl.u32 %v2418, 7
          %v2420 = vsub.s32 3, %v2419
          %v2421 = vrot.slane %v2129, %v2420
          %v2422 = vmul.f32 %v2350, %v2417
          %v2423 = vmul.f32 %v2351, %v2421
          %v2424 = vmul.f32 %v2422, %v2214
          %v2425 = vmul.f32 %v2423, %v2215
          %v2426 = vsub.f32 %v2412, %v2424
          %v2427 = vsub.f32 %v2413, %v2425
          %v2428 = vmul.f32 %v2348, %v2417
          %v2429 = vmul.f32 %v2349, %v2421
          %v2430 = vmul.f32 %v2428, %v2214
          %v2431 = vmul.f32 %v2429, %v2215
          %v2432 = vlaneseq
          %v2433 = vshrl.u32 %v2432, 7
          %v2434 = vsub.s32 4, %v2433
          %v2435 = vrot.slane %v2128, %v2434
          %v2436 = vlaneseq
          %v2437 = vshrl.u32 %v2436, 7
          %v2438 = vsub.s32 4, %v2437
          %v2439 = vrot.slane %v2129, %v2438
          %v2440 = vmul.f32 %v2352, %v2435
          %v2441 = vmul.f32 %v2353, %v2439
          %v2442 = vmul.f32 %v2440, %v2232
          %v2443 = vmul.f32 %v2441, %v2233
          %v2444 = vsub.f32 %v2430, %v2442
          %v2445 = vsub.f32 %v2431, %v2443
          %v2446 = vmul.f32 %v2350, %v2435
          %v2447 = vmul.f32 %v2351, %v2439
          %v2448 = vmul.f32 %v2446, %v2232
          %v2449 = vmul.f32 %v2447, %v2233
          %v2450 = vlaneseq
          %v2451 = vshrl.u32 %v2450, 7
          %v2452 = vsub.s32 5, %v2451
          %v2453 = vrot.slane %v2128, %v2452
          %v2454 = vlaneseq
          %v2455 = vshrl.u32 %v2454, 7
          %v2456 = vsub.s32 5, %v2455
          %v2457 = vrot.slane %v2129, %v2456
          %v2458 = vmul.f32 %v2354, %v2453
          %v2459 = vmul.f32 %v2355, %v2457
          %v2460 = vmul.f32 %v2458, %v2250
          %v2461 = vmul.f32 %v2459, %v2251
          %v2462 = vsub.f32 %v2448, %v2460
          %v2463 = vsub.f32 %v2449, %v2461
          %v2464 = vmul.f32 %v2352, %v2453
          %v2465 = vmul.f32 %v2353, %v2457
          %v2466 = vmul.f32 %v2464, %v2250
          %v2467 = vmul.f32 %v2465, %v2251
          %v2468 = vlaneseq
          %v2469 = vshrl.u32 %v2468, 7
          %v2470 = vsub.s32 6, %v2469
          %v2471 = vrot.slane %v2128, %v2470
          %v2472 = vlaneseq
          %v2473 = vshrl.u32 %v2472, 7
          %v2474 = vsub.s32 6, %v2473
          %v2475 = vrot.slane %v2129, %v2474
          %v2476 = vmul.f32 %v2356, %v2471
          %v2477 = vmul.f32 %v2357, %v2475
          %v2478 = vmul.f32 %v2476, %v2268
          %v2479 = vmul.f32 %v2477, %v2269
          %v2480 = vsub.f32 %v2466, %v2478
          %v2481 = vsub.f32 %v2467, %v2479
          %v2482 = vmul.f32 %v2354, %v2471
          %v2483 = vmul.f32 %v2355, %v2475
          %v2484 = vmul.f32 %v2482, %v2268
          %v2485 = vmul.f32 %v2483, %v2269
          %v2486 = vlaneseq
          %v2487 = vshrl.u32 %v2486, 7
          %v2488 = vsub.s32 7, %v2487
          %v2489 = vrot.slane %v2128, %v2488
          %v2490 = vlaneseq
          %v2491 = vshrl.u32 %v2490, 7
          %v2492 = vsub.s32 7, %v2491
          %v2493 = vrot.slane %v2129, %v2492
          %v2494 = vmul.f32 %v2358, %v2489
          %v2495 = vmul.f32 %v2359, %v2493
          %v2496 = vmul.f32 %v2494, %v2286
          %v2497 = vmul.f32 %v2495, %v2287
          %v2498 = vsub.f32 %v2484, %v2496
          %v2499 = vsub.f32 %v2485, %v2497
          %v2500 = vmul.f32 %v2356, %v2489
          %v2501 = vmul.f32 %v2357, %v2493
          %v2502 = vmul.f32 %v2500, %v2286
          %v2503 = vmul.f32 %v2501, %v2287
          %v2504 = vlaneseq
          %v2505 = vshrl.u32 %v2504, 7
          %v2506 = vsub.s32 0, %v2505
          %v2507 = vrot.slane %v2130, %v2506
          %v2508 = vlaneseq
          %v2509 = vshrl.u32 %v2508, 7
          %v2510 = vsub.s32 0, %v2509
          %v2511 = vrot.slane %v2131, %v2510
          %v2512 = vmul.f32 %v2360, %v2507
          %v2513 = vmul.f32 %v2361, %v2511
          %v2514 = vmul.f32 %v2512, %v2304
          %v2515 = vmul.f32 %v2513, %v2305
          %v2516 = vsub.f32 %v2502, %v2514
          %v2517 = vsub.f32 %v2503, %v2515
          %v2518 = vmul.f32 %v2358, %v2507
          %v2519 = vmul.f32 %v2359, %v2511
          %v2520 = vmul.f32 %v2518, %v2304
          %v2521 = vmul.f32 %v2519, %v2305
          %v2522 = vlaneseq
          %v2523 = vshrl.u32 %v2522, 7
          %v2524 = vsub.s32 1, %v2523
          %v2525 = vrot.slane %v2130, %v2524
          %v2526 = vlaneseq
          %v2527 = vshrl.u32 %v2526, 7
          %v2528 = vsub.s32 1, %v2527
          %v2529 = vrot.slane %v2131, %v2528
          %v2530 = vmul.f32 %v2362, %v2525
          %v2531 = vmul.f32 %v2363, %v2529
          %v2532 = vmul.f32 %v2530, %v2322
          %v2533 = vmul.f32 %v2531, %v2323
          %v2534 = vsub.f32 %v2520, %v2532
          %v2535 = vsub.f32 %v2521, %v2533
          %v2536 = vmul.f32 %v2360, %v2525
          %v2537 = vmul.f32 %v2361, %v2529
          %v2538 = vmul.f32 %v2536, %v2322
          %v2539 = vmul.f32 %v2537, %v2323
          %v2540 = vlaneseq
          %v2541 = vshrl.u32 %v2540, 7
          %v2542 = vsub.s32 2, %v2541
          %v2543 = vrot.slane %v2130, %v2542
          %v2544 = vlaneseq
          %v2545 = vshrl.u32 %v2544, 7
          %v2546 = vsub.s32 2, %v2545
          %v2547 = vrot.slane %v2131, %v2546
          %v2548 = vmul.f32 %v2364, %v2543
          %v2549 = vmul.f32 %v2365, %v2547
          %v2550 = vmul.f32 %v2548, %v2340
          %v2551 = vmul.f32 %v2549, %v2341
          %v2552 = vsub.f32 %v2538, %v2550
          %v2553 = vsub.f32 %v2539, %v2551
          %v2554 = vlaneseq
          %v2555 = vshrl.u32 %v2554, 7
          %v2556 = vsub.s32 3, %v2555
          %v2557 = vrot.slane %v2130, %v2556
          %v2558 = vlaneseq
          %v2559 = vshrl.u32 %v2558, 7
          %v2560 = vsub.s32 3, %v2559
          %v2561 = vrot.slane %v2131, %v2560
          %v2562 = vmul.f32 %v2342, %v2557
          %v2563 = vmul.f32 %v2343, %v2561
          %v2564 = vmul.f32 %v2562, %v2390
          %v2565 = vmul.f32 %v2563, %v2391
          %v2566 = vlaneseq
          %v2567 = vshrl.u32 %v2566, 7
          %v2568 = vsub.s32 4, %v2567
          %v2569 = vrot.slane %v2130, %v2568
          %v2570 = vlaneseq
          %v2571 = vshrl.u32 %v2570, 7
          %v2572 = vsub.s32 4, %v2571
          %v2573 = vrot.slane %v2131, %v2572
          %v2574 = vmul.f32 %v2348, %v2569
          %v2575 = vmul.f32 %v2349, %v2573
          %v2576 = vmul.f32 %v2574, %v2408
          %v2577 = vmul.f32 %v2575, %v2409
          %v2578 = vsub.f32 %v2564, %v2576
          %v2579 = vsub.f32 %v2565, %v2577
          %v2580 = vmul.f32 %v2344, %v2569
          %v2581 = vmul.f32 %v2345, %v2573
          %v2582 = vmul.f32 %v2580, %v2408
          %v2583 = vmul.f32 %v2581, %v2409
          %v2584 = vlaneseq
          %v2585 = vshrl.u32 %v2584, 7
          %v2586 = vsub.s32 5, %v2585
          %v2587 = vrot.slane %v2130, %v2586
          %v2588 = vlaneseq
          %v2589 = vshrl.u32 %v2588, 7
          %v2590 = vsub.s32 5, %v2589
          %v2591 = vrot.slane %v2131, %v2590
          %v2592 = vmul.f32 %v2350, %v2587
          %v2593 = vmul.f32 %v2351, %v2591
          %v2594 = vmul.f32 %v2592, %v2426
          %v2595 = vmul.f32 %v2593, %v2427
          %v2596 = vsub.f32 %v2582, %v2594
          %v2597 = vsub.f32 %v2583, %v2595
          %v2598 = vmul.f32 %v2346, %v2587
          %v2599 = vmul.f32 %v2347, %v2591
          %v2600 = vmul.f32 %v2598, %v2426
          %v2601 = vmul.f32 %v2599, %v2427
          %v2602 = vlaneseq
          %v2603 = vshrl.u32 %v2602, 7
          %v2604 = vsub.s32 6, %v2603
          %v2605 = vrot.slane %v2130, %v2604
          %v2606 = vlaneseq
          %v2607 = vshrl.u32 %v2606, 7
          %v2608 = vsub.s32 6, %v2607
          %v2609 = vrot.slane %v2131, %v2608
          %v2610 = vmul.f32 %v2352, %v2605
          %v2611 = vmul.f32 %v2353, %v2609
          %v2612 = vmul.f32 %v2610, %v2444
          %v2613 = vmul.f32 %v2611, %v2445
          %v2614 = vsub.f32 %v2600, %v2612
          %v2615 = vsub.f32 %v2601, %v2613
          %v2616 = vmul.f32 %v2348, %v2605
          %v2617 = vmul.f32 %v2349, %v2609
          %v2618 = vmul.f32 %v2616, %v2444
          %v2619 = vmul.f32 %v2617, %v2445
          %v2620 = vlaneseq
          %v2621 = vshrl.u32 %v2620, 7
          %v2622 = vsub.s32 7, %v2621
          %v2623 = vrot.slane %v2130, %v2622
          %v2624 = vlaneseq
          %v2625 = vshrl.u32 %v2624, 7
          %v2626 = vsub.s32 7, %v2625
          %v2627 = vrot.slane %v2131, %v2626
          %v2628 = vmul.f32 %v2354, %v2623
          %v2629 = vmul.f32 %v2355, %v2627
          %v2630 = vmul.f32 %v2628, %v2462
          %v2631 = vmul.f32 %v2629, %v2463
          %v2632 = vsub.f32 %v2618, %v2630
          %v2633 = vsub.f32 %v2619, %v2631
          %v2634 = vmul.f32 %v2350, %v2623
          %v2635 = vmul.f32 %v2351, %v2627
          %v2636 = vmul.f32 %v2634, %v2462
          %v2637 = vmul.f32 %v2635, %v2463
          %v2638 = vlaneseq
          %v2639 = vshrl.u32 %v2638, 7
          %v2640 = vsub.s32 0, %v2639
          %v2641 = vrot.slane %v2132, %v2640
          %v2642 = vlaneseq
          %v2643 = vshrl.u32 %v2642, 7
          %v2644 = vsub.s32 0, %v2643
          %v2645 = vrot.slane %v2133, %v2644
          %v2646 = vmul.f32 %v2356, %v2641
          %v2647 = vmul.f32 %v2357, %v2645
          %v2648 = vmul.f32 %v2646, %v2480
          %v2649 = vmul.f32 %v2647, %v2481
          %v2650 = vsub.f32 %v2636, %v2648
          %v2651 = vsub.f32 %v2637, %v2649
          %v2652 = vmul.f32 %v2352, %v2641
          %v2653 = vmul.f32 %v2353, %v2645
          %v2654 = vmul.f32 %v2652, %v2480
          %v2655 = vmul.f32 %v2653, %v2481
          %v2656 = vlaneseq
          %v2657 = vshrl.u32 %v2656, 7
          %v2658 = vsub.s32 1, %v2657
          %v2659 = vrot.slane %v2132, %v2658
          %v2660 = vlaneseq
          %v2661 = vshrl.u32 %v2660, 7
          %v2662 = vsub.s32 1, %v2661
          %v2663 = vrot.slane %v2133, %v2662
          %v2664 = vmul.f32 %v2358, %v2659
          %v2665 = vmul.f32 %v2359, %v2663
          %v2666 = vmul.f32 %v2664, %v2498
          %v2667 = vmul.f32 %v2665, %v2499
          %v2668 = vsub.f32 %v2654, %v2666
          %v2669 = vsub.f32 %v2655, %v2667
          %v2670 = vmul.f32 %v2354, %v2659
          %v2671 = vmul.f32 %v2355, %v2663
          %v2672 = vmul.f32 %v2670, %v2498
          %v2673 = vmul.f32 %v2671, %v2499
          %v2674 = vlaneseq
          %v2675 = vshrl.u32 %v2674, 7
          %v2676 = vsub.s32 2, %v2675
          %v2677 = vrot.slane %v2132, %v2676
          %v2678 = vlaneseq
          %v2679 = vshrl.u32 %v2678, 7
          %v2680 = vsub.s32 2, %v2679
          %v2681 = vrot.slane %v2133, %v2680
          %v2682 = vmul.f32 %v2360, %v2677
          %v2683 = vmul.f32 %v2361, %v2681
          %v2684 = vmul.f32 %v2682, %v2516
          %v2685 = vmul.f32 %v2683, %v2517
          %v2686 = vsub.f32 %v2672, %v2684
          %v2687 = vsub.f32 %v2673, %v2685
          %v2688 = vmul.f32 %v2356, %v2677
          %v2689 = vmul.f32 %v2357, %v2681
          %v2690 = vmul.f32 %v2688, %v2516
          %v2691 = vmul.f32 %v2689, %v2517
          %v2692 = vlaneseq
          %v2693 = vshrl.u32 %v2692, 7
          %v2694 = vsub.s32 3, %v2693
          %v2695 = vrot.slane %v2132, %v2694
          %v2696 = vlaneseq
          %v2697 = vshrl.u32 %v2696, 7
          %v2698 = vsub.s32 3, %v2697
          %v2699 = vrot.slane %v2133, %v2698
          %v2700 = vmul.f32 %v2362, %v2695
          %v2701 = vmul.f32 %v2363, %v2699
          %v2702 = vmul.f32 %v2700, %v2534
          %v2703 = vmul.f32 %v2701, %v2535
          %v2704 = vsub.f32 %v2690, %v2702
          %v2705 = vsub.f32 %v2691, %v2703
          %v2706 = vmul.f32 %v2358, %v2695
          %v2707 = vmul.f32 %v2359, %v2699
          %v2708 = vmul.f32 %v2706, %v2534
          %v2709 = vmul.f32 %v2707, %v2535
          %v2710 = vlaneseq
          %v2711 = vshrl.u32 %v2710, 7
          %v2712 = vsub.s32 4, %v2711
          %v2713 = vrot.slane %v2132, %v2712
          %v2714 = vlaneseq
          %v2715 = vshrl.u32 %v2714, 7
          %v2716 = vsub.s32 4, %v2715
          %v2717 = vrot.slane %v2133, %v2716
          %v2718 = vmul.f32 %v2364, %v2713
          %v2719 = vmul.f32 %v2365, %v2717
          %v2720 = vmul.f32 %v2718, %v2552
          %v2721 = vmul.f32 %v2719, %v2553
          %v2722 = vsub.f32 %v2708, %v2720
          %v2723 = vsub.f32 %v2709, %v2721
          %v2724 = vlaneseq
          %v2725 = vshrl.u32 %v2724, 7
          %v2726 = vsub.s32 6, %v2725
          %v2727 = vrot.slane %v2132, %v2726
          %v2728 = vlaneseq
          %v2729 = vshrl.u32 %v2728, 7
          %v2730 = vsub.s32 6, %v2729
          %v2731 = vrot.slane %v2133, %v2730
          %v2732 = vmul.f32 %v2342, %v2727
          %v2733 = vmul.f32 %v2343, %v2731
          %v2734 = vmul.f32 %v2732, %v2578
          %v2735 = vmul.f32 %v2733, %v2579
          %v2736 = vlaneseq
          %v2737 = vshrl.u32 %v2736, 7
          %v2738 = vsub.s32 7, %v2737
          %v2739 = vrot.slane %v2132, %v2738
          %v2740 = vlaneseq
          %v2741 = vshrl.u32 %v2740, 7
          %v2742 = vsub.s32 7, %v2741
          %v2743 = vrot.slane %v2133, %v2742
          %v2744 = vmul.f32 %v2350, %v2739
          %v2745 = vmul.f32 %v2351, %v2743
          %v2746 = vmul.f32 %v2744, %v2596
          %v2747 = vmul.f32 %v2745, %v2597
          %v2748 = vsub.f32 %v2734, %v2746
          %v2749 = vsub.f32 %v2735, %v2747
          %v2750 = vmul.f32 %v2344, %v2739
          %v2751 = vmul.f32 %v2345, %v2743
          %v2752 = vmul.f32 %v2750, %v2596
          %v2753 = vmul.f32 %v2751, %v2597
          %v2754 = vlaneseq
          %v2755 = vshrl.u32 %v2754, 7
          %v2756 = vsub.s32 0, %v2755
          %v2757 = vrot.slane %v2134, %v2756
          %v2758 = vlaneseq
          %v2759 = vshrl.u32 %v2758, 7
          %v2760 = vsub.s32 0, %v2759
          %v2761 = vrot.slane %v2135, %v2760
          %v2762 = vmul.f32 %v2352, %v2757
          %v2763 = vmul.f32 %v2353, %v2761
          %v2764 = vmul.f32 %v2762, %v2614
          %v2765 = vmul.f32 %v2763, %v2615
          %v2766 = vsub.f32 %v2752, %v2764
          %v2767 = vsub.f32 %v2753, %v2765
          %v2768 = vmul.f32 %v2346, %v2757
          %v2769 = vmul.f32 %v2347, %v2761
          %v2770 = vmul.f32 %v2768, %v2614
          %v2771 = vmul.f32 %v2769, %v2615
          %v2772 = vlaneseq
          %v2773 = vshrl.u32 %v2772, 7
          %v2774 = vsub.s32 1, %v2773
          %v2775 = vrot.slane %v2134, %v2774
          %v2776 = vlaneseq
          %v2777 = vshrl.u32 %v2776, 7
          %v2778 = vsub.s32 1, %v2777
          %v2779 = vrot.slane %v2135, %v2778
          %v2780 = vmul.f32 %v2354, %v2775
          %v2781 = vmul.f32 %v2355, %v2779
          %v2782 = vmul.f32 %v2780, %v2632
          %v2783 = vmul.f32 %v2781, %v2633
          %v2784 = vsub.f32 %v2770, %v2782
          %v2785 = vsub.f32 %v2771, %v2783
          %v2786 = vmul.f32 %v2348, %v2775
          %v2787 = vmul.f32 %v2349, %v2779
          %v2788 = vmul.f32 %v2786, %v2632
          %v2789 = vmul.f32 %v2787, %v2633
          %v2790 = vlaneseq
          %v2791 = vshrl.u32 %v2790, 7
          %v2792 = vsub.s32 2, %v2791
          %v2793 = vrot.slane %v2134, %v2792
          %v2794 = vlaneseq
          %v2795 = vshrl.u32 %v2794, 7
          %v2796 = vsub.s32 2, %v2795
          %v2797 = vrot.slane %v2135, %v2796
          %v2798 = vmul.f32 %v2356, %v2793
          %v2799 = vmul.f32 %v2357, %v2797
          %v2800 = vmul.f32 %v2798, %v2650
          %v2801 = vmul.f32 %v2799, %v2651
          %v2802 = vsub.f32 %v2788, %v2800
          %v2803 = vsub.f32 %v2789, %v2801
          %v2804 = vmul.f32 %v2350, %v2793
          %v2805 = vmul.f32 %v2351, %v2797
          %v2806 = vmul.f32 %v2804, %v2650
          %v2807 = vmul.f32 %v2805, %v2651
          %v2808 = vlaneseq
          %v2809 = vshrl.u32 %v2808, 7
          %v2810 = vsub.s32 3, %v2809
          %v2811 = vrot.slane %v2134, %v2810
          %v2812 = vlaneseq
          %v2813 = vshrl.u32 %v2812, 7
          %v2814 = vsub.s32 3, %v2813
          %v2815 = vrot.slane %v2135, %v2814
          %v2816 = vmul.f32 %v2358, %v2811
          %v2817 = vmul.f32 %v2359, %v2815
          %v2818 = vmul.f32 %v2816, %v2668
          %v2819 = vmul.f32 %v2817, %v2669
          %v2820 = vsub.f32 %v2806, %v2818
          %v2821 = vsub.f32 %v2807, %v2819
          %v2822 = vmul.f32 %v2352, %v2811
          %v2823 = vmul.f32 %v2353, %v2815
          %v2824 = vmul.f32 %v2822, %v2668
          %v2825 = vmul.f32 %v2823, %v2669
          %v2826 = vlaneseq
          %v2827 = vshrl.u32 %v2826, 7
          %v2828 = vsub.s32 4, %v2827
          %v2829 = vrot.slane %v2134, %v2828
          %v2830 = vlaneseq
          %v2831 = vshrl.u32 %v2830, 7
          %v2832 = vsub.s32 4, %v2831
          %v2833 = vrot.slane %v2135, %v2832
          %v2834 = vmul.f32 %v2360, %v2829
          %v2835 = vmul.f32 %v2361, %v2833
          %v2836 = vmul.f32 %v2834, %v2686
          %v2837 = vmul.f32 %v2835, %v2687
          %v2838 = vsub.f32 %v2824, %v2836
          %v2839 = vsub.f32 %v2825, %v2837
          %v2840 = vmul.f32 %v2354, %v2829
          %v2841 = vmul.f32 %v2355, %v2833
          %v2842 = vmul.f32 %v2840, %v2686
          %v2843 = vmul.f32 %v2841, %v2687
          %v2844 = vlaneseq
          %v2845 = vshrl.u32 %v2844, 7
          %v2846 = vsub.s32 5, %v2845
          %v2847 = vrot.slane %v2134, %v2846
          %v2848 = vlaneseq
          %v2849 = vshrl.u32 %v2848, 7
          %v2850 = vsub.s32 5, %v2849
          %v2851 = vrot.slane %v2135, %v2850
          %v2852 = vmul.f32 %v2362, %v2847
          %v2853 = vmul.f32 %v2363, %v2851
          %v2854 = vmul.f32 %v2852, %v2704
          %v2855 = vmul.f32 %v2853, %v2705
          %v2856 = vsub.f32 %v2842, %v2854
          %v2857 = vsub.f32 %v2843, %v2855
          %v2858 = vmul.f32 %v2356, %v2847
          %v2859 = vmul.f32 %v2357, %v2851
          %v2860 = vmul.f32 %v2858, %v2704
          %v2861 = vmul.f32 %v2859, %v2705
          %v2862 = vlaneseq
          %v2863 = vshrl.u32 %v2862, 7
          %v2864 = vsub.s32 6, %v2863
          %v2865 = vrot.slane %v2134, %v2864
          %v2866 = vlaneseq
          %v2867 = vshrl.u32 %v2866, 7
          %v2868 = vsub.s32 6, %v2867
          %v2869 = vrot.slane %v2135, %v2868
          %v2870 = vmul.f32 %v2364, %v2865
          %v2871 = vmul.f32 %v2365, %v2869
          %v2872 = vmul.f32 %v2870, %v2722
          %v2873 = vmul.f32 %v2871, %v2723
          %v2874 = vsub.f32 %v2860, %v2872
          %v2875 = vsub.f32 %v2861, %v2873
          %v2876 = vxor.u32 %v2114, 2147483648
          %v2877 = vxor.u32 %v2115, 2147483648
          %v2878 = vmul.f32 %v2876, 1.442695
          %v2879 = vpow.pop %v2878
          %v2880 = vmul.f32 %v2877, 1.442695
          %v2881 = vpow.pop %v2880
          %v2882 = vadd.f32 %v2879, 1.0
          %v2883 = vadd.f32 %v2881, 1.0
          %v2884 = vrcp.pop %v2882
          %v2885 = vmul.f32 1.0, %v2884
          %v2886 = vrcp.pop %v2883
          %v2887 = vmul.f32 1.0, %v2886
          %v2888 = vmul.f32 %v2114, %v2885
          %v2889 = vmul.f32 %v2115, %v2887
          %v2890 = vpack.c.bf16 %v2748, %v2748
          %v2891 = vpack.c.bf16 %v2749, %v2749
          %v2892 = vpack.c.bf16 %v2766, %v2766
          %v2893 = vpack.c.bf16 %v2767, %v2767
          %v2894 = vpack.c.bf16 %v2784, %v2784
          %v2895 = vpack.c.bf16 %v2785, %v2785
          %v2896 = vpack.c.bf16 %v2802, %v2802
          %v2897 = vpack.c.bf16 %v2803, %v2803
          %v2898 = vpack.c.bf16 %v2820, %v2820
          %v2899 = vpack.c.bf16 %v2821, %v2821
          %v2900 = vpack.c.bf16 %v2838, %v2838
          %v2901 = vpack.c.bf16 %v2839, %v2839
          %v2902 = vpack.c.bf16 %v2856, %v2856
          %v2903 = vpack.c.bf16 %v2857, %v2857
          %v2904 = vpack.c.bf16 %v2874, %v2874
          %v2905 = vpack.c.bf16 %v2875, %v2875
          %v2906 = vpack.c.bf16 %v2888, %v2888
          %v2907 = vpack.c.bf16 %v2889, %v2889
          %v2908 = vld [vmem:[#allocation21] sm:$0xf]
          %v2909 = vld [vmem:[#allocation21 + $0x4] sm:$0xf]
          %v2910 = vld [vmem:[#allocation21 + $0x8] sm:$0xf]
          %v2911 = vld [vmem:[#allocation21 + $0xc] sm:$0xf]
          %v2912 = vld [vmem:[#allocation21 + $0x10] sm:$0xf]
          %v2913 = vld [vmem:[#allocation21 + $0x14] sm:$0xf]
          %v2914 = vld [vmem:[#allocation21 + $0x18] sm:$0xf]
          %v2915 = vld [vmem:[#allocation21 + $0x1c] sm:$0xf]
          %v2916 = vld [vmem:[#allocation21 + $0x20] sm:$0xf]
          %v2917 = vld [vmem:[#allocation21 + $0x24] sm:$0xf]
          %v2918 = vld [vmem:[#allocation21 + $0x28] sm:$0xf]
          %v2919 = vld [vmem:[#allocation21 + $0x2c] sm:$0xf]
          %v2920 = vld [vmem:[#allocation21 + $0x30] sm:$0xf]
          %v2921 = vld [vmem:[#allocation21 + $0x34] sm:$0xf]
          %v2922 = vld [vmem:[#allocation21 + $0x38] sm:$0xf]
          %v2923 = vld [vmem:[#allocation21 + $0x3c] sm:$0xf]
          %v2924 = vld [vmem:[#allocation21 + $0x40] sm:$0xf]
          %v2925 = vld [vmem:[#allocation21 + $0x44] sm:$0xf]
          %v2926 = vld [vmem:[#allocation21 + $0x48] sm:$0xf]
          %v2927 = vld [vmem:[#allocation21 + $0x4c] sm:$0xf]
          %v2928 = vld [vmem:[#allocation21 + $0x50] sm:$0xf]
          %v2929 = vld [vmem:[#allocation21 + $0x54] sm:$0xf]
          %v2930 = vld [vmem:[#allocation21 + $0x58] sm:$0xf]
          %v2931 = vld [vmem:[#allocation21 + $0x5c] sm:$0xf]
          %v2932 = vld [vmem:[#allocation21 + $0x60] sm:$0xf]
          %v2933 = vld [vmem:[#allocation21 + $0x64] sm:$0xf]
          %v2934 = vld [vmem:[#allocation21 + $0x68] sm:$0xf]
          %v2935 = vld [vmem:[#allocation21 + $0x6c] sm:$0xf]
          %v2936 = vld [vmem:[#allocation21 + $0x70] sm:$0xf]
          %v2937 = vld [vmem:[#allocation21 + $0x74] sm:$0xf]
          %v2938 = vld [vmem:[#allocation21 + $0x78] sm:$0xf]
          %v2939 = vld [vmem:[#allocation21 + $0x7c] sm:$0xf]
          %v2940 = vld [vmem:[#allocation19] sm:$0xf]
          %v2941 = vld [vmem:[#allocation19 + $0x4] sm:$0xf]
          %v2942 = vld [vmem:[#allocation19 + $0x8] sm:$0xf]
          %v2943 = vld [vmem:[#allocation19 + $0xc] sm:$0xf]
          %v2944 = vld [vmem:[#allocation19 + $0x10] sm:$0xf]
          %v2945 = vld [vmem:[#allocation19 + $0x14] sm:$0xf]
          %v2946 = vld [vmem:[#allocation19 + $0x18] sm:$0xf]
          %v2947 = vld [vmem:[#allocation19 + $0x1c] sm:$0xf]
          %v2948 = vld [vmem:[#allocation19 + $0x20] sm:$0xf]
          %v2949 = vld [vmem:[#allocation19 + $0x24] sm:$0xf]
          %v2950 = vld [vmem:[#allocation19 + $0x28] sm:$0xf]
          %v2951 = vld [vmem:[#allocation19 + $0x2c] sm:$0xf]
          %v2952 = vld [vmem:[#allocation19 + $0x30] sm:$0xf]
          %v2953 = vld [vmem:[#allocation19 + $0x34] sm:$0xf]
          %v2954 = vld [vmem:[#allocation19 + $0x38] sm:$0xf]
          %v2955 = vld [vmem:[#allocation19 + $0x3c] sm:$0xf]
          %v2956 = vld [vmem:[#allocation19 + $0x40] sm:$0xf]
          %v2957 = vld [vmem:[#allocation19 + $0x44] sm:$0xf]
          %v2958 = vld [vmem:[#allocation19 + $0x48] sm:$0xf]
          %v2959 = vld [vmem:[#allocation19 + $0x4c] sm:$0xf]
          %v2960 = vld [vmem:[#allocation19 + $0x50] sm:$0xf]
          %v2961 = vld [vmem:[#allocation19 + $0x54] sm:$0xf]
          %v2962 = vld [vmem:[#allocation19 + $0x58] sm:$0xf]
          %v2963 = vld [vmem:[#allocation19 + $0x5c] sm:$0xf]
          %v2964 = vld [vmem:[#allocation19 + $0x60] sm:$0xf]
          %v2965 = vld [vmem:[#allocation19 + $0x64] sm:$0xf]
          %v2966 = vld [vmem:[#allocation19 + $0x68] sm:$0xf]
          %v2967 = vld [vmem:[#allocation19 + $0x6c] sm:$0xf]
          %v2968 = vld [vmem:[#allocation19 + $0x70] sm:$0xf]
          %v2969 = vld [vmem:[#allocation19 + $0x74] sm:$0xf]
          %v2970 = vld [vmem:[#allocation19 + $0x78] sm:$0xf]
          %v2971 = vld [vmem:[#allocation19 + $0x7c] sm:$0xf]
          %v2972 = vld [vmem:[#allocation19 + $0x80] sm:$0xf]
          %v2973 = vld [vmem:[#allocation19 + $0x84] sm:$0xf]
          %v2974 = vld [vmem:[#allocation19 + $0x88] sm:$0xf]
          %v2975 = vld [vmem:[#allocation19 + $0x8c] sm:$0xf]
          %v2976 = vld [vmem:[#allocation19 + $0x90] sm:$0xf]
          %v2977 = vld [vmem:[#allocation19 + $0x94] sm:$0xf]
          %v2978 = vld [vmem:[#allocation19 + $0x98] sm:$0xf]
          %v2979 = vld [vmem:[#allocation19 + $0x9c] sm:$0xf]
          %v2980 = vld [vmem:[#allocation19 + $0xa0] sm:$0xf]
          %v2981 = vld [vmem:[#allocation19 + $0xa4] sm:$0xf]
          %v2982 = vld [vmem:[#allocation19 + $0xa8] sm:$0xf]
          %v2983 = vld [vmem:[#allocation19 + $0xac] sm:$0xf]
          %v2984 = vld [vmem:[#allocation19 + $0xb0] sm:$0xf]
          %v2985 = vld [vmem:[#allocation19 + $0xb4] sm:$0xf]
          %v2986 = vld [vmem:[#allocation19 + $0xb8] sm:$0xf]
          %v2987 = vld [vmem:[#allocation19 + $0xbc] sm:$0xf]
          %v2988 = vld [vmem:[#allocation19 + $0xc0] sm:$0xf]
          %v2989 = vld [vmem:[#allocation19 + $0xc4] sm:$0xf]
          %v2990 = vld [vmem:[#allocation19 + $0xc8] sm:$0xf]
          %v2991 = vld [vmem:[#allocation19 + $0xcc] sm:$0xf]
          %v2992 = vld [vmem:[#allocation19 + $0xd0] sm:$0xf]
          %v2993 = vld [vmem:[#allocation19 + $0xd4] sm:$0xf]
          %v2994 = vld [vmem:[#allocation19 + $0xd8] sm:$0xf]
          %v2995 = vld [vmem:[#allocation19 + $0xdc] sm:$0xf]
          %v2996 = vld [vmem:[#allocation19 + $0xe0] sm:$0xf]
          %v2997 = vld [vmem:[#allocation19 + $0xe4] sm:$0xf]
          %v2998 = vld [vmem:[#allocation19 + $0xe8] sm:$0xf]
          %v2999 = vld [vmem:[#allocation19 + $0xec] sm:$0xf]
          %v3000 = vld [vmem:[#allocation19 + $0xf0] sm:$0xf]
          %v3001 = vld [vmem:[#allocation19 + $0xf4] sm:$0xf]
          %v3002 = vld [vmem:[#allocation19 + $0xf8] sm:$0xf]
          %v3003 = vld [vmem:[#allocation19 + $0xfc] sm:$0xf]
          %v3004 = vld [vmem:[#allocation19 + $0x100] sm:$0xf]
          %v3005 = vld [vmem:[#allocation19 + $0x104] sm:$0xf]
          %v3006 = vld [vmem:[#allocation19 + $0x108] sm:$0xf]
          %v3007 = vld [vmem:[#allocation19 + $0x10c] sm:$0xf]
          %v3008 = vld [vmem:[#allocation19 + $0x110] sm:$0xf]
          %v3009 = vld [vmem:[#allocation19 + $0x114] sm:$0xf]
          %v3010 = vld [vmem:[#allocation19 + $0x118] sm:$0xf]
          %v3011 = vld [vmem:[#allocation19 + $0x11c] sm:$0xf]
          %v3012 = vld [vmem:[#allocation19 + $0x120] sm:$0xf]
          %v3013 = vld [vmem:[#allocation19 + $0x124] sm:$0xf]
          %v3014 = vld [vmem:[#allocation19 + $0x128] sm:$0xf]
          %v3015 = vld [vmem:[#allocation19 + $0x12c] sm:$0xf]
          %v3016 = vld [vmem:[#allocation19 + $0x130] sm:$0xf]
          %v3017 = vld [vmem:[#allocation19 + $0x134] sm:$0xf]
          %v3018 = vld [vmem:[#allocation19 + $0x138] sm:$0xf]
          %v3019 = vld [vmem:[#allocation19 + $0x13c] sm:$0xf]
          %v3020 = vld [vmem:[#allocation19 + $0x140] sm:$0xf]
          %v3021 = vld [vmem:[#allocation19 + $0x144] sm:$0xf]
          %v3022 = vld [vmem:[#allocation19 + $0x148] sm:$0xf]
          %v3023 = vld [vmem:[#allocation19 + $0x14c] sm:$0xf]
          %v3024 = vld [vmem:[#allocation19 + $0x150] sm:$0xf]
          %v3025 = vld [vmem:[#allocation19 + $0x154] sm:$0xf]
          %v3026 = vld [vmem:[#allocation19 + $0x158] sm:$0xf]
          %v3027 = vld [vmem:[#allocation19 + $0x15c] sm:$0xf]
          %v3028 = vld [vmem:[#allocation19 + $0x160] sm:$0xf]
          %v3029 = vld [vmem:[#allocation19 + $0x164] sm:$0xf]
          %v3030 = vld [vmem:[#allocation19 + $0x168] sm:$0xf]
          %v3031 = vld [vmem:[#allocation19 + $0x16c] sm:$0xf]
          %v3032 = vld [vmem:[#allocation19 + $0x170] sm:$0xf]
          %v3033 = vld [vmem:[#allocation19 + $0x174] sm:$0xf]
          %v3034 = vld [vmem:[#allocation19 + $0x178] sm:$0xf]
          %v3035 = vld [vmem:[#allocation19 + $0x17c] sm:$0xf]
          %v3036 = vld [vmem:[#allocation19 + $0x180] sm:$0xf]
          %v3037 = vld [vmem:[#allocation19 + $0x184] sm:$0xf]
          %v3038 = vld [vmem:[#allocation19 + $0x188] sm:$0xf]
          %v3039 = vld [vmem:[#allocation19 + $0x18c] sm:$0xf]
          %v3040 = vld [vmem:[#allocation19 + $0x190] sm:$0xf]
          %v3041 = vld [vmem:[#allocation19 + $0x194] sm:$0xf]
          %v3042 = vld [vmem:[#allocation19 + $0x198] sm:$0xf]
          %v3043 = vld [vmem:[#allocation19 + $0x19c] sm:$0xf]
          %v3044 = vld [vmem:[#allocation19 + $0x1a0] sm:$0xf]
          %v3045 = vld [vmem:[#allocation19 + $0x1a4] sm:$0xf]
          %v3046 = vld [vmem:[#allocation19 + $0x1a8] sm:$0xf]
          %v3047 = vld [vmem:[#allocation19 + $0x1ac] sm:$0xf]
          %v3048 = vld [vmem:[#allocation19 + $0x1b0] sm:$0xf]
          %v3049 = vld [vmem:[#allocation19 + $0x1b4] sm:$0xf]
          %v3050 = vld [vmem:[#allocation19 + $0x1b8] sm:$0xf]
          %v3051 = vld [vmem:[#allocation19 + $0x1bc] sm:$0xf]
          %v3052 = vld [vmem:[#allocation19 + $0x1c0] sm:$0xf]
          %v3053 = vld [vmem:[#allocation19 + $0x1c4] sm:$0xf]
          %v3054 = vld [vmem:[#allocation19 + $0x1c8] sm:$0xf]
          %v3055 = vld [vmem:[#allocation19 + $0x1cc] sm:$0xf]
          %v3056 = vld [vmem:[#allocation19 + $0x1d0] sm:$0xf]
          %v3057 = vld [vmem:[#allocation19 + $0x1d4] sm:$0xf]
          %v3058 = vld [vmem:[#allocation19 + $0x1d8] sm:$0xf]
          %v3059 = vld [vmem:[#allocation19 + $0x1dc] sm:$0xf]
          %v3060 = vld [vmem:[#allocation19 + $0x1e0] sm:$0xf]
          %v3061 = vld [vmem:[#allocation19 + $0x1e4] sm:$0xf]
          %v3062 = vld [vmem:[#allocation19 + $0x1e8] sm:$0xf]
          %v3063 = vld [vmem:[#allocation19 + $0x1ec] sm:$0xf]
          %v3064 = vld [vmem:[#allocation19 + $0x1f0] sm:$0xf]
          %v3065 = vld [vmem:[#allocation19 + $0x1f4] sm:$0xf]
          %v3066 = vld [vmem:[#allocation19 + $0x1f8] sm:$0xf]
          %v3067 = vld [vmem:[#allocation19 + $0x1fc] sm:$0xf]
          %v3068 = vld [vmem:[#allocation19 + $0x200] sm:$0xf]
          %v3069 = vld [vmem:[#allocation19 + $0x204] sm:$0xf]
          %v3070 = vld [vmem:[#allocation19 + $0x208] sm:$0xf]
          %v3071 = vld [vmem:[#allocation19 + $0x20c] sm:$0xf]
          %v3072 = vld [vmem:[#allocation19 + $0x210] sm:$0xf]
          %v3073 = vld [vmem:[#allocation19 + $0x214] sm:$0xf]
          %v3074 = vld [vmem:[#allocation19 + $0x218] sm:$0xf]
          %v3075 = vld [vmem:[#allocation19 + $0x21c] sm:$0xf]
          %v3076 = vld [vmem:[#allocation19 + $0x220] sm:$0xf]
          %v3077 = vld [vmem:[#allocation19 + $0x224] sm:$0xf]
          %v3078 = vld [vmem:[#allocation19 + $0x228] sm:$0xf]
          %v3079 = vld [vmem:[#allocation19 + $0x22c] sm:$0xf]
          %v3080 = vld [vmem:[#allocation19 + $0x230] sm:$0xf]
          %v3081 = vld [vmem:[#allocation19 + $0x234] sm:$0xf]
          %v3082 = vld [vmem:[#allocation19 + $0x238] sm:$0xf]
          %v3083 = vld [vmem:[#allocation19 + $0x23c] sm:$0xf]
          %v3084 = vld [vmem:[#allocation19 + $0x240] sm:$0xf]
          %v3085 = vld [vmem:[#allocation19 + $0x244] sm:$0xf]
          %v3086 = vld [vmem:[#allocation19 + $0x248] sm:$0xf]
          %v3087 = vld [vmem:[#allocation19 + $0x24c] sm:$0xf]
          %v3088 = vld [vmem:[#allocation19 + $0x250] sm:$0xf]
          %v3089 = vld [vmem:[#allocation19 + $0x254] sm:$0xf]
          %v3090 = vld [vmem:[#allocation19 + $0x258] sm:$0xf]
          %v3091 = vld [vmem:[#allocation19 + $0x25c] sm:$0xf]
          %v3092 = vld [vmem:[#allocation19 + $0x260] sm:$0xf]
          %v3093 = vld [vmem:[#allocation19 + $0x264] sm:$0xf]
          %v3094 = vld [vmem:[#allocation19 + $0x268] sm:$0xf]
          %v3095 = vld [vmem:[#allocation19 + $0x26c] sm:$0xf]
          %v3096 = vld [vmem:[#allocation19 + $0x270] sm:$0xf]
          %v3097 = vld [vmem:[#allocation19 + $0x274] sm:$0xf]
          %v3098 = vld [vmem:[#allocation19 + $0x278] sm:$0xf]
          %v3099 = vld [vmem:[#allocation19 + $0x27c] sm:$0xf]
          %v3100 = vld [vmem:[#allocation19 + $0x280] sm:$0xf]
          %v3101 = vld [vmem:[#allocation19 + $0x284] sm:$0xf]
          %v3102 = vld [vmem:[#allocation19 + $0x288] sm:$0xf]
          %v3103 = vld [vmem:[#allocation19 + $0x28c] sm:$0xf]
          %v3104 = vld [vmem:[#allocation19 + $0x290] sm:$0xf]
          %v3105 = vld [vmem:[#allocation19 + $0x294] sm:$0xf]
          %v3106 = vld [vmem:[#allocation19 + $0x298] sm:$0xf]
          %v3107 = vld [vmem:[#allocation19 + $0x29c] sm:$0xf]
          %v3108 = vld [vmem:[#allocation19 + $0x2a0] sm:$0xf]
          %v3109 = vld [vmem:[#allocation19 + $0x2a4] sm:$0xf]
          %v3110 = vld [vmem:[#allocation19 + $0x2a8] sm:$0xf]
          %v3111 = vld [vmem:[#allocation19 + $0x2ac] sm:$0xf]
          %v3112 = vld [vmem:[#allocation19 + $0x2b0] sm:$0xf]
          %v3113 = vld [vmem:[#allocation19 + $0x2b4] sm:$0xf]
          %v3114 = vld [vmem:[#allocation19 + $0x2b8] sm:$0xf]
          %v3115 = vld [vmem:[#allocation19 + $0x2bc] sm:$0xf]
          %v3116 = vld [vmem:[#allocation19 + $0x2c0] sm:$0xf]
          %v3117 = vld [vmem:[#allocation19 + $0x2c4] sm:$0xf]
          %v3118 = vld [vmem:[#allocation19 + $0x2c8] sm:$0xf]
          %v3119 = vld [vmem:[#allocation19 + $0x2cc] sm:$0xf]
          %v3120 = vld [vmem:[#allocation19 + $0x2d0] sm:$0xf]
          %v3121 = vld [vmem:[#allocation19 + $0x2d4] sm:$0xf]
          %v3122 = vld [vmem:[#allocation19 + $0x2d8] sm:$0xf]
          %v3123 = vld [vmem:[#allocation19 + $0x2dc] sm:$0xf]
          %v3124 = vld [vmem:[#allocation19 + $0x2e0] sm:$0xf]
          %v3125 = vld [vmem:[#allocation19 + $0x2e4] sm:$0xf]
          %v3126 = vld [vmem:[#allocation19 + $0x2e8] sm:$0xf]
          %v3127 = vld [vmem:[#allocation19 + $0x2ec] sm:$0xf]
          %v3128 = vld [vmem:[#allocation19 + $0x2f0] sm:$0xf]
          %v3129 = vld [vmem:[#allocation19 + $0x2f4] sm:$0xf]
          %v3130 = vld [vmem:[#allocation19 + $0x2f8] sm:$0xf]
          %v3131 = vld [vmem:[#allocation19 + $0x2fc] sm:$0xf]
          %v3132 = vld [vmem:[#allocation19 + $0x300] sm:$0xf]
          %v3133 = vld [vmem:[#allocation19 + $0x304] sm:$0xf]
          %v3134 = vld [vmem:[#allocation19 + $0x308] sm:$0xf]
          %v3135 = vld [vmem:[#allocation19 + $0x30c] sm:$0xf]
          %v3136 = vld [vmem:[#allocation19 + $0x310] sm:$0xf]
          %v3137 = vld [vmem:[#allocation19 + $0x314] sm:$0xf]
          %v3138 = vld [vmem:[#allocation19 + $0x318] sm:$0xf]
          %v3139 = vld [vmem:[#allocation19 + $0x31c] sm:$0xf]
          %v3140 = vld [vmem:[#allocation19 + $0x320] sm:$0xf]
          %v3141 = vld [vmem:[#allocation19 + $0x324] sm:$0xf]
          %v3142 = vld [vmem:[#allocation19 + $0x328] sm:$0xf]
          %v3143 = vld [vmem:[#allocation19 + $0x32c] sm:$0xf]
          %v3144 = vld [vmem:[#allocation19 + $0x330] sm:$0xf]
          %v3145 = vld [vmem:[#allocation19 + $0x334] sm:$0xf]
          %v3146 = vld [vmem:[#allocation19 + $0x338] sm:$0xf]
          %v3147 = vld [vmem:[#allocation19 + $0x33c] sm:$0xf]
          %v3148 = vld [vmem:[#allocation19 + $0x340] sm:$0xf]
          %v3149 = vld [vmem:[#allocation19 + $0x344] sm:$0xf]
          %v3150 = vld [vmem:[#allocation19 + $0x348] sm:$0xf]
          %v3151 = vld [vmem:[#allocation19 + $0x34c] sm:$0xf]
          %v3152 = vld [vmem:[#allocation19 + $0x350] sm:$0xf]
          %v3153 = vld [vmem:[#allocation19 + $0x354] sm:$0xf]
          %v3154 = vld [vmem:[#allocation19 + $0x358] sm:$0xf]
          %v3155 = vld [vmem:[#allocation19 + $0x35c] sm:$0xf]
          %v3156 = vld [vmem:[#allocation19 + $0x360] sm:$0xf]
          %v3157 = vld [vmem:[#allocation19 + $0x364] sm:$0xf]
          %v3158 = vld [vmem:[#allocation19 + $0x368] sm:$0xf]
          %v3159 = vld [vmem:[#allocation19 + $0x36c] sm:$0xf]
          %v3160 = vld [vmem:[#allocation19 + $0x370] sm:$0xf]
          %v3161 = vld [vmem:[#allocation19 + $0x374] sm:$0xf]
          %v3162 = vld [vmem:[#allocation19 + $0x378] sm:$0xf]
          %v3163 = vld [vmem:[#allocation19 + $0x37c] sm:$0xf]
          %v3164 = vld [vmem:[#allocation19 + $0x380] sm:$0xf]
          %v3165 = vld [vmem:[#allocation19 + $0x384] sm:$0xf]
          %v3166 = vld [vmem:[#allocation19 + $0x388] sm:$0xf]
          %v3167 = vld [vmem:[#allocation19 + $0x38c] sm:$0xf]
          %v3168 = vld [vmem:[#allocation19 + $0x390] sm:$0xf]
          %v3169 = vld [vmem:[#allocation19 + $0x394] sm:$0xf]
          %v3170 = vld [vmem:[#allocation19 + $0x398] sm:$0xf]
          %v3171 = vld [vmem:[#allocation19 + $0x39c] sm:$0xf]
          %v3172 = vld [vmem:[#allocation19 + $0x3a0] sm:$0xf]
          %v3173 = vld [vmem:[#allocation19 + $0x3a4] sm:$0xf]
          %v3174 = vld [vmem:[#allocation19 + $0x3a8] sm:$0xf]
          %v3175 = vld [vmem:[#allocation19 + $0x3ac] sm:$0xf]
          %v3176 = vld [vmem:[#allocation19 + $0x3b0] sm:$0xf]
          %v3177 = vld [vmem:[#allocation19 + $0x3b4] sm:$0xf]
          %v3178 = vld [vmem:[#allocation19 + $0x3b8] sm:$0xf]
          %v3179 = vld [vmem:[#allocation19 + $0x3bc] sm:$0xf]
          %v3180 = vld [vmem:[#allocation19 + $0x3c0] sm:$0xf]
          %v3181 = vld [vmem:[#allocation19 + $0x3c4] sm:$0xf]
          %v3182 = vld [vmem:[#allocation19 + $0x3c8] sm:$0xf]
          %v3183 = vld [vmem:[#allocation19 + $0x3cc] sm:$0xf]
          %v3184 = vld [vmem:[#allocation19 + $0x3d0] sm:$0xf]
          %v3185 = vld [vmem:[#allocation19 + $0x3d4] sm:$0xf]
          %v3186 = vld [vmem:[#allocation19 + $0x3d8] sm:$0xf]
          %v3187 = vld [vmem:[#allocation19 + $0x3dc] sm:$0xf]
          %v3188 = vld [vmem:[#allocation19 + $0x3e0] sm:$0xf]
          %v3189 = vld [vmem:[#allocation19 + $0x3e4] sm:$0xf]
          %v3190 = vld [vmem:[#allocation19 + $0x3e8] sm:$0xf]
          %v3191 = vld [vmem:[#allocation19 + $0x3ec] sm:$0xf]
          %v3192 = vld [vmem:[#allocation19 + $0x3f0] sm:$0xf]
          %v3193 = vld [vmem:[#allocation19 + $0x3f4] sm:$0xf]
          %v3194 = vld [vmem:[#allocation19 + $0x3f8] sm:$0xf]
          %v3195 = vld [vmem:[#allocation19 + $0x3fc] sm:$0xf]
          %v3452 = vunpack.c.l.b16 %v2940
          %v3453 = vunpack.c.l.b16 %v2941
          %v3454 = vunpack.c.l.b16 %v2942
          %v3455 = vunpack.c.l.b16 %v2943
          %v3456 = vunpack.c.l.b16 %v2944
          %v3457 = vunpack.c.l.b16 %v2945
          %v3458 = vunpack.c.l.b16 %v2946
          %v3459 = vunpack.c.l.b16 %v2947
          %v3460 = vunpack.c.l.b16 %v2948
          %v3461 = vunpack.c.l.b16 %v2949
          %v3462 = vunpack.c.l.b16 %v2950
          %v3463 = vunpack.c.l.b16 %v2951
          %v3464 = vunpack.c.l.b16 %v2952
          %v3465 = vunpack.c.l.b16 %v2953
          %v3466 = vunpack.c.l.b16 %v2954
          %v3467 = vunpack.c.l.b16 %v2955
          %v3468 = vunpack.c.l.b16 %v2956
          %v3469 = vunpack.c.l.b16 %v2957
          %v3470 = vunpack.c.l.b16 %v2958
          %v3471 = vunpack.c.l.b16 %v2959
          %v3472 = vunpack.c.l.b16 %v2960
          %v3473 = vunpack.c.l.b16 %v2961
          %v3474 = vunpack.c.l.b16 %v2962
          %v3475 = vunpack.c.l.b16 %v2963
          %v3476 = vunpack.c.l.b16 %v2964
          %v3477 = vunpack.c.l.b16 %v2965
          %v3478 = vunpack.c.l.b16 %v2966
          %v3479 = vunpack.c.l.b16 %v2967
          %v3480 = vunpack.c.l.b16 %v2968
          %v3481 = vunpack.c.l.b16 %v2969
          %v3482 = vunpack.c.l.b16 %v2970
          %v3483 = vunpack.c.l.b16 %v2971
          %v3484 = vunpack.c.l.b16 %v2972
          %v3485 = vunpack.c.l.b16 %v2973
          %v3486 = vunpack.c.l.b16 %v2974
          %v3487 = vunpack.c.l.b16 %v2975
          %v3488 = vunpack.c.l.b16 %v2976
          %v3489 = vunpack.c.l.b16 %v2977
          %v3490 = vunpack.c.l.b16 %v2978
          %v3491 = vunpack.c.l.b16 %v2979
          %v3492 = vunpack.c.l.b16 %v2980
          %v3493 = vunpack.c.l.b16 %v2981
          %v3494 = vunpack.c.l.b16 %v2982
          %v3495 = vunpack.c.l.b16 %v2983
          %v3496 = vunpack.c.l.b16 %v2984
          %v3497 = vunpack.c.l.b16 %v2985
          %v3498 = vunpack.c.l.b16 %v2986
          %v3499 = vunpack.c.l.b16 %v2987
          %v3500 = vunpack.c.l.b16 %v2988
          %v3501 = vunpack.c.l.b16 %v2989
          %v3502 = vunpack.c.l.b16 %v2990
          %v3503 = vunpack.c.l.b16 %v2991
          %v3504 = vunpack.c.l.b16 %v2992
          %v3505 = vunpack.c.l.b16 %v2993
          %v3506 = vunpack.c.l.b16 %v2994
          %v3507 = vunpack.c.l.b16 %v2995
          %v3508 = vunpack.c.l.b16 %v2996
          %v3509 = vunpack.c.l.b16 %v2997
          %v3510 = vunpack.c.l.b16 %v2998
          %v3511 = vunpack.c.l.b16 %v2999
          %v3512 = vunpack.c.l.b16 %v3000
          %v3513 = vunpack.c.l.b16 %v3001
          %v3514 = vunpack.c.l.b16 %v3002
          %v3515 = vunpack.c.l.b16 %v3003
          %v3516 = vunpack.c.l.b16 %v3004
          %v3517 = vunpack.c.l.b16 %v3005
          %v3518 = vunpack.c.l.b16 %v3006
          %v3519 = vunpack.c.l.b16 %v3007
          %v3520 = vunpack.c.l.b16 %v3008
          %v3521 = vunpack.c.l.b16 %v3009
          %v3522 = vunpack.c.l.b16 %v3010
          %v3523 = vunpack.c.l.b16 %v3011
          %v3524 = vunpack.c.l.b16 %v3012
          %v3525 = vunpack.c.l.b16 %v3013
          %v3526 = vunpack.c.l.b16 %v3014
          %v3527 = vunpack.c.l.b16 %v3015
          %v3528 = vunpack.c.l.b16 %v3016
          %v3529 = vunpack.c.l.b16 %v3017
          %v3530 = vunpack.c.l.b16 %v3018
          %v3531 = vunpack.c.l.b16 %v3019
          %v3532 = vunpack.c.l.b16 %v3020
          %v3533 = vunpack.c.l.b16 %v3021
          %v3534 = vunpack.c.l.b16 %v3022
          %v3535 = vunpack.c.l.b16 %v3023
          %v3536 = vunpack.c.l.b16 %v3024
          %v3537 = vunpack.c.l.b16 %v3025
          %v3538 = vunpack.c.l.b16 %v3026
          %v3539 = vunpack.c.l.b16 %v3027
          %v3540 = vunpack.c.l.b16 %v3028
          %v3541 = vunpack.c.l.b16 %v3029
          %v3542 = vunpack.c.l.b16 %v3030
          %v3543 = vunpack.c.l.b16 %v3031
          %v3544 = vunpack.c.l.b16 %v3032
          %v3545 = vunpack.c.l.b16 %v3033
          %v3546 = vunpack.c.l.b16 %v3034
          %v3547 = vunpack.c.l.b16 %v3035
          %v3548 = vunpack.c.l.b16 %v3036
          %v3549 = vunpack.c.l.b16 %v3037
          %v3550 = vunpack.c.l.b16 %v3038
          %v3551 = vunpack.c.l.b16 %v3039
          %v3552 = vunpack.c.l.b16 %v3040
          %v3553 = vunpack.c.l.b16 %v3041
          %v3554 = vunpack.c.l.b16 %v3042
          %v3555 = vunpack.c.l.b16 %v3043
          %v3556 = vunpack.c.l.b16 %v3044
          %v3557 = vunpack.c.l.b16 %v3045
          %v3558 = vunpack.c.l.b16 %v3046
          %v3559 = vunpack.c.l.b16 %v3047
          %v3560 = vunpack.c.l.b16 %v3048
          %v3561 = vunpack.c.l.b16 %v3049
          %v3562 = vunpack.c.l.b16 %v3050
          %v3563 = vunpack.c.l.b16 %v3051
          %v3564 = vunpack.c.l.b16 %v3052
          %v3565 = vunpack.c.l.b16 %v3053
          %v3566 = vunpack.c.l.b16 %v3054
          %v3567 = vunpack.c.l.b16 %v3055
          %v3568 = vunpack.c.l.b16 %v3056
          %v3569 = vunpack.c.l.b16 %v3057
          %v3570 = vunpack.c.l.b16 %v3058
          %v3571 = vunpack.c.l.b16 %v3059
          %v3572 = vunpack.c.l.b16 %v3060
          %v3573 = vunpack.c.l.b16 %v3061
          %v3574 = vunpack.c.l.b16 %v3062
          %v3575 = vunpack.c.l.b16 %v3063
          %v3576 = vunpack.c.l.b16 %v3064
          %v3577 = vunpack.c.l.b16 %v3065
          %v3578 = vunpack.c.l.b16 %v3066
          %v3579 = vunpack.c.l.b16 %v3067
          %v3580 = vunpack.c.l.b16 %v3068
          %v3581 = vunpack.c.l.b16 %v3069
          %v3582 = vunpack.c.l.b16 %v3070
          %v3583 = vunpack.c.l.b16 %v3071
          %v3584 = vunpack.c.l.b16 %v3072
          %v3585 = vunpack.c.l.b16 %v3073
          %v3586 = vunpack.c.l.b16 %v3074
          %v3587 = vunpack.c.l.b16 %v3075
          %v3588 = vunpack.c.l.b16 %v3076
          %v3589 = vunpack.c.l.b16 %v3077
          %v3590 = vunpack.c.l.b16 %v3078
          %v3591 = vunpack.c.l.b16 %v3079
          %v3592 = vunpack.c.l.b16 %v3080
          %v3593 = vunpack.c.l.b16 %v3081
          %v3594 = vunpack.c.l.b16 %v3082
          %v3595 = vunpack.c.l.b16 %v3083
          %v3596 = vunpack.c.l.b16 %v3084
          %v3597 = vunpack.c.l.b16 %v3085
          %v3598 = vunpack.c.l.b16 %v3086
          %v3599 = vunpack.c.l.b16 %v3087
          %v3600 = vunpack.c.l.b16 %v3088
          %v3601 = vunpack.c.l.b16 %v3089
          %v3602 = vunpack.c.l.b16 %v3090
          %v3603 = vunpack.c.l.b16 %v3091
          %v3604 = vunpack.c.l.b16 %v3092
          %v3605 = vunpack.c.l.b16 %v3093
          %v3606 = vunpack.c.l.b16 %v3094
          %v3607 = vunpack.c.l.b16 %v3095
          %v3608 = vunpack.c.l.b16 %v3096
          %v3609 = vunpack.c.l.b16 %v3097
          %v3610 = vunpack.c.l.b16 %v3098
          %v3611 = vunpack.c.l.b16 %v3099
          %v3612 = vunpack.c.l.b16 %v3100
          %v3613 = vunpack.c.l.b16 %v3101
          %v3614 = vunpack.c.l.b16 %v3102
          %v3615 = vunpack.c.l.b16 %v3103
          %v3616 = vunpack.c.l.b16 %v3104
          %v3617 = vunpack.c.l.b16 %v3105
          %v3618 = vunpack.c.l.b16 %v3106
          %v3619 = vunpack.c.l.b16 %v3107
          %v3620 = vunpack.c.l.b16 %v3108
          %v3621 = vunpack.c.l.b16 %v3109
          %v3622 = vunpack.c.l.b16 %v3110
          %v3623 = vunpack.c.l.b16 %v3111
          %v3624 = vunpack.c.l.b16 %v3112
          %v3625 = vunpack.c.l.b16 %v3113
          %v3626 = vunpack.c.l.b16 %v3114
          %v3627 = vunpack.c.l.b16 %v3115
          %v3628 = vunpack.c.l.b16 %v3116
          %v3629 = vunpack.c.l.b16 %v3117
          %v3630 = vunpack.c.l.b16 %v3118
          %v3631 = vunpack.c.l.b16 %v3119
          %v3632 = vunpack.c.l.b16 %v3120
          %v3633 = vunpack.c.l.b16 %v3121
          %v3634 = vunpack.c.l.b16 %v3122
          %v3635 = vunpack.c.l.b16 %v3123
          %v3636 = vunpack.c.l.b16 %v3124
          %v3637 = vunpack.c.l.b16 %v3125
          %v3638 = vunpack.c.l.b16 %v3126
          %v3639 = vunpack.c.l.b16 %v3127
          %v3640 = vunpack.c.l.b16 %v3128
          %v3641 = vunpack.c.l.b16 %v3129
          %v3642 = vunpack.c.l.b16 %v3130
          %v3643 = vunpack.c.l.b16 %v3131
          %v3644 = vunpack.c.l.b16 %v3132
          %v3645 = vunpack.c.l.b16 %v3133
          %v3646 = vunpack.c.l.b16 %v3134
          %v3647 = vunpack.c.l.b16 %v3135
          %v3648 = vunpack.c.l.b16 %v3136
          %v3649 = vunpack.c.l.b16 %v3137
          %v3650 = vunpack.c.l.b16 %v3138
          %v3651 = vunpack.c.l.b16 %v3139
          %v3652 = vunpack.c.l.b16 %v3140
          %v3653 = vunpack.c.l.b16 %v3141
          %v3654 = vunpack.c.l.b16 %v3142
          %v3655 = vunpack.c.l.b16 %v3143
          %v3656 = vunpack.c.l.b16 %v3144
          %v3657 = vunpack.c.l.b16 %v3145
          %v3658 = vunpack.c.l.b16 %v3146
          %v3659 = vunpack.c.l.b16 %v3147
          %v3660 = vunpack.c.l.b16 %v3148
          %v3661 = vunpack.c.l.b16 %v3149
          %v3662 = vunpack.c.l.b16 %v3150
          %v3663 = vunpack.c.l.b16 %v3151
          %v3664 = vunpack.c.l.b16 %v3152
          %v3665 = vunpack.c.l.b16 %v3153
          %v3666 = vunpack.c.l.b16 %v3154
          %v3667 = vunpack.c.l.b16 %v3155
          %v3668 = vunpack.c.l.b16 %v3156
          %v3669 = vunpack.c.l.b16 %v3157
          %v3670 = vunpack.c.l.b16 %v3158
          %v3671 = vunpack.c.l.b16 %v3159
          %v3672 = vunpack.c.l.b16 %v3160
          %v3673 = vunpack.c.l.b16 %v3161
          %v3674 = vunpack.c.l.b16 %v3162
          %v3675 = vunpack.c.l.b16 %v3163
          %v3676 = vunpack.c.l.b16 %v3164
          %v3677 = vunpack.c.l.b16 %v3165
          %v3678 = vunpack.c.l.b16 %v3166
          %v3679 = vunpack.c.l.b16 %v3167
          %v3680 = vunpack.c.l.b16 %v3168
          %v3681 = vunpack.c.l.b16 %v3169
          %v3682 = vunpack.c.l.b16 %v3170
          %v3683 = vunpack.c.l.b16 %v3171
          %v3684 = vunpack.c.l.b16 %v3172
          %v3685 = vunpack.c.l.b16 %v3173
          %v3686 = vunpack.c.l.b16 %v3174
          %v3687 = vunpack.c.l.b16 %v3175
          %v3688 = vunpack.c.l.b16 %v3176
          %v3689 = vunpack.c.l.b16 %v3177
          %v3690 = vunpack.c.l.b16 %v3178
          %v3691 = vunpack.c.l.b16 %v3179
          %v3692 = vunpack.c.l.b16 %v3180
          %v3693 = vunpack.c.l.b16 %v3181
          %v3694 = vunpack.c.l.b16 %v3182
          %v3695 = vunpack.c.l.b16 %v3183
          %v3696 = vunpack.c.l.b16 %v3184
          %v3697 = vunpack.c.l.b16 %v3185
          %v3698 = vunpack.c.l.b16 %v3186
          %v3699 = vunpack.c.l.b16 %v3187
          %v3700 = vunpack.c.l.b16 %v3188
          %v3701 = vunpack.c.l.b16 %v3189
          %v3702 = vunpack.c.l.b16 %v3190
          %v3703 = vunpack.c.l.b16 %v3191
          %v3704 = vunpack.c.l.b16 %v3192
          %v3705 = vunpack.c.l.b16 %v3193
          %v3706 = vunpack.c.l.b16 %v3194
          %v3707 = vunpack.c.l.b16 %v3195
          %v3708 = vpack.c.b16 %v3453, %v3452
          %v3709 = vpack.c.b16 %v3455, %v3454
          %v3710 = vpack.c.b16 %v3457, %v3456
          %v3711 = vpack.c.b16 %v3459, %v3458
          %v3712 = vpack.c.b16 %v3461, %v3460
          %v3713 = vpack.c.b16 %v3463, %v3462
          %v3714 = vpack.c.b16 %v3465, %v3464
          %v3715 = vpack.c.b16 %v3467, %v3466
          %v3716 = vpack.c.b16 %v3469, %v3468
          %v3717 = vpack.c.b16 %v3471, %v3470
          %v3718 = vpack.c.b16 %v3473, %v3472
          %v3719 = vpack.c.b16 %v3475, %v3474
          %v3720 = vpack.c.b16 %v3477, %v3476
          %v3721 = vpack.c.b16 %v3479, %v3478
          %v3722 = vpack.c.b16 %v3481, %v3480
          %v3723 = vpack.c.b16 %v3483, %v3482
          %v3724 = vpack.c.b16 %v3485, %v3484
          %v3725 = vpack.c.b16 %v3487, %v3486
          %v3726 = vpack.c.b16 %v3489, %v3488
          %v3727 = vpack.c.b16 %v3491, %v3490
          %v3728 = vpack.c.b16 %v3493, %v3492
          %v3729 = vpack.c.b16 %v3495, %v3494
          %v3730 = vpack.c.b16 %v3497, %v3496
          %v3731 = vpack.c.b16 %v3499, %v3498
          %v3732 = vpack.c.b16 %v3501, %v3500
          %v3733 = vpack.c.b16 %v3503, %v3502
          %v3734 = vpack.c.b16 %v3505, %v3504
          %v3735 = vpack.c.b16 %v3507, %v3506
          %v3736 = vpack.c.b16 %v3509, %v3508
          %v3737 = vpack.c.b16 %v3511, %v3510
          %v3738 = vpack.c.b16 %v3513, %v3512
          %v3739 = vpack.c.b16 %v3515, %v3514
          %v3740 = vpack.c.b16 %v3517, %v3516
          %v3741 = vpack.c.b16 %v3519, %v3518
          %v3742 = vpack.c.b16 %v3521, %v3520
          %v3743 = vpack.c.b16 %v3523, %v3522
          %v3744 = vpack.c.b16 %v3525, %v3524
          %v3745 = vpack.c.b16 %v3527, %v3526
          %v3746 = vpack.c.b16 %v3529, %v3528
          %v3747 = vpack.c.b16 %v3531, %v3530
          %v3748 = vpack.c.b16 %v3533, %v3532
          %v3749 = vpack.c.b16 %v3535, %v3534
          %v3750 = vpack.c.b16 %v3537, %v3536
          %v3751 = vpack.c.b16 %v3539, %v3538
          %v3752 = vpack.c.b16 %v3541, %v3540
          %v3753 = vpack.c.b16 %v3543, %v3542
          %v3754 = vpack.c.b16 %v3545, %v3544
          %v3755 = vpack.c.b16 %v3547, %v3546
          %v3756 = vpack.c.b16 %v3549, %v3548
          %v3757 = vpack.c.b16 %v3551, %v3550
          %v3758 = vpack.c.b16 %v3553, %v3552
          %v3759 = vpack.c.b16 %v3555, %v3554
          %v3760 = vpack.c.b16 %v3557, %v3556
          %v3761 = vpack.c.b16 %v3559, %v3558
          %v3762 = vpack.c.b16 %v3561, %v3560
          %v3763 = vpack.c.b16 %v3563, %v3562
          %v3764 = vpack.c.b16 %v3565, %v3564
          %v3765 = vpack.c.b16 %v3567, %v3566
          %v3766 = vpack.c.b16 %v3569, %v3568
          %v3767 = vpack.c.b16 %v3571, %v3570
          %v3768 = vpack.c.b16 %v3573, %v3572
          %v3769 = vpack.c.b16 %v3575, %v3574
          %v3770 = vpack.c.b16 %v3577, %v3576
          %v3771 = vpack.c.b16 %v3579, %v3578
          %v3772 = vpack.c.b16 %v3581, %v3580
          %v3773 = vpack.c.b16 %v3583, %v3582
          %v3774 = vpack.c.b16 %v3585, %v3584
          %v3775 = vpack.c.b16 %v3587, %v3586
          %v3776 = vpack.c.b16 %v3589, %v3588
          %v3777 = vpack.c.b16 %v3591, %v3590
          %v3778 = vpack.c.b16 %v3593, %v3592
          %v3779 = vpack.c.b16 %v3595, %v3594
          %v3780 = vpack.c.b16 %v3597, %v3596
          %v3781 = vpack.c.b16 %v3599, %v3598
          %v3782 = vpack.c.b16 %v3601, %v3600
          %v3783 = vpack.c.b16 %v3603, %v3602
          %v3784 = vpack.c.b16 %v3605, %v3604
          %v3785 = vpack.c.b16 %v3607, %v3606
          %v3786 = vpack.c.b16 %v3609, %v3608
          %v3787 = vpack.c.b16 %v3611, %v3610
          %v3788 = vpack.c.b16 %v3613, %v3612
          %v3789 = vpack.c.b16 %v3615, %v3614
          %v3790 = vpack.c.b16 %v3617, %v3616
          %v3791 = vpack.c.b16 %v3619, %v3618
          %v3792 = vpack.c.b16 %v3621, %v3620
          %v3793 = vpack.c.b16 %v3623, %v3622
          %v3794 = vpack.c.b16 %v3625, %v3624
          %v3795 = vpack.c.b16 %v3627, %v3626
          %v3796 = vpack.c.b16 %v3629, %v3628
          %v3797 = vpack.c.b16 %v3631, %v3630
          %v3798 = vpack.c.b16 %v3633, %v3632
          %v3799 = vpack.c.b16 %v3635, %v3634
          %v3800 = vpack.c.b16 %v3637, %v3636
          %v3801 = vpack.c.b16 %v3639, %v3638
          %v3802 = vpack.c.b16 %v3641, %v3640
          %v3803 = vpack.c.b16 %v3643, %v3642
          %v3804 = vpack.c.b16 %v3645, %v3644
          %v3805 = vpack.c.b16 %v3647, %v3646
          %v3806 = vpack.c.b16 %v3649, %v3648
          %v3807 = vpack.c.b16 %v3651, %v3650
          %v3808 = vpack.c.b16 %v3653, %v3652
          %v3809 = vpack.c.b16 %v3655, %v3654
          %v3810 = vpack.c.b16 %v3657, %v3656
          %v3811 = vpack.c.b16 %v3659, %v3658
          %v3812 = vpack.c.b16 %v3661, %v3660
          %v3813 = vpack.c.b16 %v3663, %v3662
          %v3814 = vpack.c.b16 %v3665, %v3664
          %v3815 = vpack.c.b16 %v3667, %v3666
          %v3816 = vpack.c.b16 %v3669, %v3668
          %v3817 = vpack.c.b16 %v3671, %v3670
          %v3818 = vpack.c.b16 %v3673, %v3672
          %v3819 = vpack.c.b16 %v3675, %v3674
          %v3820 = vpack.c.b16 %v3677, %v3676
          %v3821 = vpack.c.b16 %v3679, %v3678
          %v3822 = vpack.c.b16 %v3681, %v3680
          %v3823 = vpack.c.b16 %v3683, %v3682
          %v3824 = vpack.c.b16 %v3685, %v3684
          %v3825 = vpack.c.b16 %v3687, %v3686
          %v3826 = vpack.c.b16 %v3689, %v3688
          %v3827 = vpack.c.b16 %v3691, %v3690
          %v3828 = vpack.c.b16 %v3693, %v3692
          %v3829 = vpack.c.b16 %v3695, %v3694
          %v3830 = vpack.c.b16 %v3697, %v3696
          %v3831 = vpack.c.b16 %v3699, %v3698
          %v3832 = vpack.c.b16 %v3701, %v3700
          %v3833 = vpack.c.b16 %v3703, %v3702
          %v3834 = vpack.c.b16 %v3705, %v3704
          %v3835 = vpack.c.b16 %v3707, %v3706
          %3964 = vmatprep.subr.bf16.mxu0 0
          %3965 = vmatpush1.bf16.msra.mxu0 %v3708
          %3966 = vmatprep.subr.bf16.mxu0 0
          %3967 = vmatpush1.bf16.msra.mxu0 %v3709
          %3968 = vmatprep.subr.bf16.mxu0 0
          %3969 = vmatpush1.bf16.msra.mxu0 %v3710
          %3970 = vmatprep.subr.bf16.mxu0 0
          %3971 = vmatpush1.bf16.msra.mxu0 %v3711
          %3972 = vmatprep.subr.bf16.mxu0 0
          %3973 = vmatpush1.bf16.msra.mxu0 %v3712
          %3974 = vmatprep.subr.bf16.mxu0 0
          %3975 = vmatpush1.bf16.msra.mxu0 %v3713
          %3976 = vmatprep.subr.bf16.mxu0 0
          %3977 = vmatpush1.bf16.msra.mxu0 %v3714
          %3978 = vmatprep.subr.bf16.mxu0 0
          %3979 = vmatpush1.bf16.msra.mxu0 %v3715
          %3980 = vmatprep.subr.bf16.mxu0 0
          %3981 = vmatpush1.bf16.msra.mxu0 %v3716
          %3982 = vmatprep.subr.bf16.mxu0 0
          %3983 = vmatpush1.bf16.msra.mxu0 %v3717
          %3984 = vmatprep.subr.bf16.mxu0 0
          %3985 = vmatpush1.bf16.msra.mxu0 %v3718
          %3986 = vmatprep.subr.bf16.mxu0 0
          %3987 = vmatpush1.bf16.msra.mxu0 %v3719
          %3988 = vmatprep.subr.bf16.mxu0 0
          %3989 = vmatpush1.bf16.msra.mxu0 %v3720
          %3990 = vmatprep.subr.bf16.mxu0 0
          %3991 = vmatpush1.bf16.msra.mxu0 %v3721
          %3992 = vmatprep.subr.bf16.mxu0 0
          %3993 = vmatpush1.bf16.msra.mxu0 %v3722
          %3994 = vmatprep.subr.bf16.mxu0 0
          %3995 = vmatpush1.bf16.msra.mxu0 %v3723
          %3996 = vmatprep.mubr.bf16.mxu0 %v2891
          %3997 = vmatmul.mubr.bf16.gmra.mrb[0].mxu0 %v2890
          %v3998 = vpop.f32.mrb[0].mxu0
          %v3999 = vadd.f32 0.0, %v3998
          %v4000 = vpop.f32.mrb[0].mxu0
          %v4001 = vpop.f32.mrb[0].mxu0
          %v4002 = vpop.f32.mrb[0].mxu0
          %4003 = vdwg.mxu0
          %4004 = vmatprep.subr.bf16.mxu0 0
          %4005 = vmatpush1.bf16.msra.mxu0 %v3724
          %4006 = vmatprep.subr.bf16.mxu0 0
          %4007 = vmatpush1.bf16.msra.mxu0 %v3725
          %4008 = vmatprep.subr.bf16.mxu0 0
          %4009 = vmatpush1.bf16.msra.mxu0 %v3726
          %4010 = vmatprep.subr.bf16.mxu0 0
          %4011 = vmatpush1.bf16.msra.mxu0 %v3727
          %4012 = vmatprep.subr.bf16.mxu0 0
          %4013 = vmatpush1.bf16.msra.mxu0 %v3728
          %4014 = vmatprep.subr.bf16.mxu0 0
          %4015 = vmatpush1.bf16.msra.mxu0 %v3729
          %4016 = vmatprep.subr.bf16.mxu0 0
          %4017 = vmatpush1.bf16.msra.mxu0 %v3730
          %4018 = vmatprep.subr.bf16.mxu0 0
          %4019 = vmatpush1.bf16.msra.mxu0 %v3731
          %4020 = vmatprep.subr.bf16.mxu0 0
          %4021 = vmatpush1.bf16.msra.mxu0 %v3732
          %4022 = vmatprep.subr.bf16.mxu0 0
          %4023 = vmatpush1.bf16.msra.mxu0 %v3733
          %4024 = vmatprep.subr.bf16.mxu0 0
          %4025 = vmatpush1.bf16.msra.mxu0 %v3734
          %4026 = vmatprep.subr.bf16.mxu0 0
          %4027 = vmatpush1.bf16.msra.mxu0 %v3735
          %4028 = vmatprep.subr.bf16.mxu0 0
          %4029 = vmatpush1.bf16.msra.mxu0 %v3736
          %4030 = vmatprep.subr.bf16.mxu0 0
          %4031 = vmatpush1.bf16.msra.mxu0 %v3737
          %4032 = vmatprep.subr.bf16.mxu0 0
          %4033 = vmatpush1.bf16.msra.mxu0 %v3738
          %4034 = vmatprep.subr.bf16.mxu0 0
          %4035 = vmatpush1.bf16.msra.mxu0 %v3739
          %4036 = vmatprep.mubr.bf16.mxu0 %v2893
          %4037 = vmatmul.mubr.bf16.gmra.mrb[0].mxu0 %v2892
          %v4038 = vpop.f32.mrb[0].mxu0
          %v4039 = vadd.f32 %v3999, %v4038
          %v4040 = vpop.f32.mrb[0].mxu0
          %v4041 = vpop.f32.mrb[0].mxu0
          %v4042 = vpop.f32.mrb[0].mxu0
          %4043 = vdwg.mxu0
          %4044 = vmatprep.subr.bf16.mxu0 0
          %4045 = vmatpush1.bf16.msra.mxu0 %v3740
          %4046 = vmatprep.subr.bf16.mxu0 0
          %4047 = vmatpush1.bf16.msra.mxu0 %v3741
          %4048 = vmatprep.subr.bf16.mxu0 0
          %4049 = vmatpush1.bf16.msra.mxu0 %v3742
          %4050 = vmatprep.subr.bf16.mxu0 0
          %4051 = vmatpush1.bf16.msra.mxu0 %v3743
          %4052 = vmatprep.subr.bf16.mxu0 0
          %4053 = vmatpush1.bf16.msra.mxu0 %v3744
          %4054 = vmatprep.subr.bf16.mxu0 0
          %4055 = vmatpush1.bf16.msra.mxu0 %v3745
          %4056 = vmatprep.subr.bf16.mxu0 0
          %4057 = vmatpush1.bf16.msra.mxu0 %v3746
          %4058 = vmatprep.subr.bf16.mxu0 0
          %4059 = vmatpush1.bf16.msra.mxu0 %v3747
          %4060 = vmatprep.subr.bf16.mxu0 0
          %4061 = vmatpush1.bf16.msra.mxu0 %v3748
          %4062 = vmatprep.subr.bf16.mxu0 0
          %4063 = vmatpush1.bf16.msra.mxu0 %v3749
          %4064 = vmatprep.subr.bf16.mxu0 0
          %4065 = vmatpush1.bf16.msra.mxu0 %v3750
          %4066 = vmatprep.subr.bf16.mxu0 0
          %4067 = vmatpush1.bf16.msra.mxu0 %v3751
          %4068 = vmatprep.subr.bf16.mxu0 0
          %4069 = vmatpush1.bf16.msra.mxu0 %v3752
          %4070 = vmatprep.subr.bf16.mxu0 0
          %4071 = vmatpush1.bf16.msra.mxu0 %v3753
          %4072 = vmatprep.subr.bf16.mxu0 0
          %4073 = vmatpush1.bf16.msra.mxu0 %v3754
          %4074 = vmatprep.subr.bf16.mxu0 0
          %4075 = vmatpush1.bf16.msra.mxu0 %v3755
          %4076 = vmatprep.mubr.bf16.mxu0 %v2895
          %4077 = vmatmul.mubr.bf16.gmra.mrb[0].mxu0 %v2894
          %v4078 = vpop.f32.mrb[0].mxu0
          %v4079 = vadd.f32 %v4039, %v4078
          %v4080 = vpop.f32.mrb[0].mxu0
          %v4081 = vpop.f32.mrb[0].mxu0
          %v4082 = vpop.f32.mrb[0].mxu0
          %4083 = vdwg.mxu0
          %4084 = vmatprep.subr.bf16.mxu0 0
          %4085 = vmatpush1.bf16.msra.mxu0 %v3756
          %4086 = vmatprep.subr.bf16.mxu0 0
          %4087 = vmatpush1.bf16.msra.mxu0 %v3757
          %4088 = vmatprep.subr.bf16.mxu0 0
          %4089 = vmatpush1.bf16.msra.mxu0 %v3758
          %4090 = vmatprep.subr.bf16.mxu0 0
          %4091 = vmatpush1.bf16.msra.mxu0 %v3759
          %4092 = vmatprep.subr.bf16.mxu0 0
          %4093 = vmatpush1.bf16.msra.mxu0 %v3760
          %4094 = vmatprep.subr.bf16.mxu0 0
          %4095 = vmatpush1.bf16.msra.mxu0 %v3761
          %4096 = vmatprep.subr.bf16.mxu0 0
          %4097 = vmatpush1.bf16.msra.mxu0 %v3762
          %4098 = vmatprep.subr.bf16.mxu0 0
          %4099 = vmatpush1.bf16.msra.mxu0 %v3763
          %4100 = vmatprep.subr.bf16.mxu0 0
          %4101 = vmatpush1.bf16.msra.mxu0 %v3764
          %4102 = vmatprep.subr.bf16.mxu0 0
          %4103 = vmatpush1.bf16.msra.mxu0 %v3765
          %4104 = vmatprep.subr.bf16.mxu0 0
          %4105 = vmatpush1.bf16.msra.mxu0 %v3766
          %4106 = vmatprep.subr.bf16.mxu0 0
          %4107 = vmatpush1.bf16.msra.mxu0 %v3767
          %4108 = vmatprep.subr.bf16.mxu0 0
          %4109 = vmatpush1.bf16.msra.mxu0 %v3768
          %4110 = vmatprep.subr.bf16.mxu0 0
          %4111 = vmatpush1.bf16.msra.mxu0 %v3769
          %4112 = vmatprep.subr.bf16.mxu0 0
          %4113 = vmatpush1.bf16.msra.mxu0 %v3770
          %4114 = vmatprep.subr.bf16.mxu0 0
          %4115 = vmatpush1.bf16.msra.mxu0 %v3771
          %4116 = vmatprep.mubr.bf16.mxu0 %v2897
          %4117 = vmatmul.mubr.bf16.gmra.mrb[0].mxu0 %v2896
          %v4118 = vpop.f32.mrb[0].mxu0
          %v4119 = vadd.f32 %v4079, %v4118
          %v4120 = vpop.f32.mrb[0].mxu0
          %v4121 = vpop.f32.mrb[0].mxu0
          %v4122 = vpop.f32.mrb[0].mxu0
          %4123 = vdwg.mxu0
          %4124 = vmatprep.subr.bf16.mxu0 0
          %4125 = vmatpush1.bf16.msra.mxu0 %v3772
          %4126 = vmatprep.subr.bf16.mxu0 0
          %4127 = vmatpush1.bf16.msra.mxu0 %v3773
          %4128 = vmatprep.subr.bf16.mxu0 0
          %4129 = vmatpush1.bf16.msra.mxu0 %v3774
          %4130 = vmatprep.subr.bf16.mxu0 0
          %4131 = vmatpush1.bf16.msra.mxu0 %v3775
          %4132 = vmatprep.subr.bf16.mxu0 0
          %4133 = vmatpush1.bf16.msra.mxu0 %v3776
          %4134 = vmatprep.subr.bf16.mxu0 0
          %4135 = vmatpush1.bf16.msra.mxu0 %v3777
          %4136 = vmatprep.subr.bf16.mxu0 0
          %4137 = vmatpush1.bf16.msra.mxu0 %v3778
          %4138 = vmatprep.subr.bf16.mxu0 0
          %4139 = vmatpush1.bf16.msra.mxu0 %v3779
          %4140 = vmatprep.subr.bf16.mxu0 0
          %4141 = vmatpush1.bf16.msra.mxu0 %v3780
          %4142 = vmatprep.subr.bf16.mxu0 0
          %4143 = vmatpush1.bf16.msra.mxu0 %v3781
          %4144 = vmatprep.subr.bf16.mxu0 0
          %4145 = vmatpush1.bf16.msra.mxu0 %v3782
          %4146 = vmatprep.subr.bf16.mxu0 0
          %4147 = vmatpush1.bf16.msra.mxu0 %v3783
          %4148 = vmatprep.subr.bf16.mxu0 0
          %4149 = vmatpush1.bf16.msra.mxu0 %v3784
          %4150 = vmatprep.subr.bf16.mxu0 0
          %4151 = vmatpush1.bf16.msra.mxu0 %v3785
          %4152 = vmatprep.subr.bf16.mxu0 0
          %4153 = vmatpush1.bf16.msra.mxu0 %v3786
          %4154 = vmatprep.subr.bf16.mxu0 0
          %4155 = vmatpush1.bf16.msra.mxu0 %v3787
          %4156 = vmatprep.mubr.bf16.mxu0 %v2899
          %4157 = vmatmul.mubr.bf16.gmra.mrb[0].mxu0 %v2898
          %v4158 = vpop.f32.mrb[0].mxu0
          %v4159 = vadd.f32 %v4119, %v4158
          %v4160 = vpop.f32.mrb[0].mxu0
          %v4161 = vpop.f32.mrb[0].mxu0
          %v4162 = vpop.f32.mrb[0].mxu0
          %4163 = vdwg.mxu0
          %4164 = vmatprep.subr.bf16.mxu0 0
          %4165 = vmatpush1.bf16.msra.mxu0 %v3788
          %4166 = vmatprep.subr.bf16.mxu0 0
          %4167 = vmatpush1.bf16.msra.mxu0 %v3789
          %4168 = vmatprep.subr.bf16.mxu0 0
          %4169 = vmatpush1.bf16.msra.mxu0 %v3790
          %4170 = vmatprep.subr.bf16.mxu0 0
          %4171 = vmatpush1.bf16.msra.mxu0 %v3791
          %4172 = vmatprep.subr.bf16.mxu0 0
          %4173 = vmatpush1.bf16.msra.mxu0 %v3792
          %4174 = vmatprep.subr.bf16.mxu0 0
          %4175 = vmatpush1.bf16.msra.mxu0 %v3793
          %4176 = vmatprep.subr.bf16.mxu0 0
          %4177 = vmatpush1.bf16.msra.mxu0 %v3794
          %4178 = vmatprep.subr.bf16.mxu0 0
          %4179 = vmatpush1.bf16.msra.mxu0 %v3795
          %4180 = vmatprep.subr.bf16.mxu0 0
          %4181 = vmatpush1.bf16.msra.mxu0 %v3796
          %4182 = vmatprep.subr.bf16.mxu0 0
          %4183 = vmatpush1.bf16.msra.mxu0 %v3797
          %4184 = vmatprep.subr.bf16.mxu0 0
          %4185 = vmatpush1.bf16.msra.mxu0 %v3798
          %4186 = vmatprep.subr.bf16.mxu0 0
          %4187 = vmatpush1.bf16.msra.mxu0 %v3799
          %4188 = vmatprep.subr.bf16.mxu0 0
          %4189 = vmatpush1.bf16.msra.mxu0 %v3800
          %4190 = vmatprep.subr.bf16.mxu0 0
          %4191 = vmatpush1.bf16.msra.mxu0 %v3801
          %4192 = vmatprep.subr.bf16.mxu0 0
          %4193 = vmatpush1.bf16.msra.mxu0 %v3802
          %4194 = vmatprep.subr.bf16.mxu0 0
          %4195 = vmatpush1.bf16.msra.mxu0 %v3803
          %4196 = vmatprep.mubr.bf16.mxu0 %v2901
          %4197 = vmatmul.mubr.bf16.gmra.mrb[0].mxu0 %v2900
          %v4198 = vpop.f32.mrb[0].mxu0
          %v4199 = vadd.f32 %v4159, %v4198
          %v4200 = vpop.f32.mrb[0].mxu0
          %v4201 = vpop.f32.mrb[0].mxu0
          %v4202 = vpop.f32.mrb[0].mxu0
          %4203 = vdwg.mxu0
          %4204 = vmatprep.subr.bf16.mxu0 0
          %4205 = vmatpush1.bf16.msra.mxu0 %v3804
          %4206 = vmatprep.subr.bf16.mxu0 0
          %4207 = vmatpush1.bf16.msra.mxu0 %v3805
          %4208 = vmatprep.subr.bf16.mxu0 0
          %4209 = vmatpush1.bf16.msra.mxu0 %v3806
          %4210 = vmatprep.subr.bf16.mxu0 0
          %4211 = vmatpush1.bf16.msra.mxu0 %v3807
          %4212 = vmatprep.subr.bf16.mxu0 0
          %4213 = vmatpush1.bf16.msra.mxu0 %v3808
          %4214 = vmatprep.subr.bf16.mxu0 0
          %4215 = vmatpush1.bf16.msra.mxu0 %v3809
          %4216 = vmatprep.subr.bf16.mxu0 0
          %4217 = vmatpush1.bf16.msra.mxu0 %v3810
          %4218 = vmatprep.subr.bf16.mxu0 0
          %4219 = vmatpush1.bf16.msra.mxu0 %v3811
          %4220 = vmatprep.subr.bf16.mxu0 0
          %4221 = vmatpush1.bf16.msra.mxu0 %v3812
          %4222 = vmatprep.subr.bf16.mxu0 0
          %4223 = vmatpush1.bf16.msra.mxu0 %v3813
          %4224 = vmatprep.subr.bf16.mxu0 0
          %4225 = vmatpush1.bf16.msra.mxu0 %v3814
          %4226 = vmatprep.subr.bf16.mxu0 0
          %4227 = vmatpush1.bf16.msra.mxu0 %v3815
          %4228 = vmatprep.subr.bf16.mxu0 0
          %4229 = vmatpush1.bf16.msra.mxu0 %v3816
          %4230 = vmatprep.subr.bf16.mxu0 0
          %4231 = vmatpush1.bf16.msra.mxu0 %v3817
          %4232 = vmatprep.subr.bf16.mxu0 0
          %4233 = vmatpush1.bf16.msra.mxu0 %v3818
          %4234 = vmatprep.subr.bf16.mxu0 0
          %4235 = vmatpush1.bf16.msra.mxu0 %v3819
          %4236 = vmatprep.mubr.bf16.mxu0 %v2903
          %4237 = vmatmul.mubr.bf16.gmra.mrb[0].mxu0 %v2902
          %v4238 = vpop.f32.mrb[0].mxu0
          %v4239 = vadd.f32 %v4199, %v4238
          %v4240 = vpop.f32.mrb[0].mxu0
          %v4241 = vpop.f32.mrb[0].mxu0
          %v4242 = vpop.f32.mrb[0].mxu0
          %4243 = vdwg.mxu0
          %4244 = vmatprep.subr.bf16.mxu0 0
          %4245 = vmatpush1.bf16.msra.mxu0 %v3820
          %4246 = vmatprep.subr.bf16.mxu0 0
          %4247 = vmatpush1.bf16.msra.mxu0 %v3821
          %4248 = vmatprep.subr.bf16.mxu0 0
          %4249 = vmatpush1.bf16.msra.mxu0 %v3822
          %4250 = vmatprep.subr.bf16.mxu0 0
          %4251 = vmatpush1.bf16.msra.mxu0 %v3823
          %4252 = vmatprep.subr.bf16.mxu0 0
          %4253 = vmatpush1.bf16.msra.mxu0 %v3824
          %4254 = vmatprep.subr.bf16.mxu0 0
          %4255 = vmatpush1.bf16.msra.mxu0 %v3825
          %4256 = vmatprep.subr.bf16.mxu0 0
          %4257 = vmatpush1.bf16.msra.mxu0 %v3826
          %4258 = vmatprep.subr.bf16.mxu0 0
          %4259 = vmatpush1.bf16.msra.mxu0 %v3827
          %4260 = vmatprep.subr.bf16.mxu0 0
          %4261 = vmatpush1.bf16.msra.mxu0 %v3828
          %4262 = vmatprep.subr.bf16.mxu0 0
          %4263 = vmatpush1.bf16.msra.mxu0 %v3829
          %4264 = vmatprep.subr.bf16.mxu0 0
          %4265 = vmatpush1.bf16.msra.mxu0 %v3830
          %4266 = vmatprep.subr.bf16.mxu0 0
          %4267 = vmatpush1.bf16.msra.mxu0 %v3831
          %4268 = vmatprep.subr.bf16.mxu0 0
          %4269 = vmatpush1.bf16.msra.mxu0 %v3832
          %4270 = vmatprep.subr.bf16.mxu0 0
          %4271 = vmatpush1.bf16.msra.mxu0 %v3833
          %4272 = vmatprep.subr.bf16.mxu0 0
          %4273 = vmatpush1.bf16.msra.mxu0 %v3834
          %4274 = vmatprep.subr.bf16.mxu0 0
          %4275 = vmatpush1.bf16.msra.mxu0 %v3835
          %4276 = vmatprep.mubr.bf16.mxu0 %v2905
          %4277 = vmatmul.mubr.bf16.gmra.mrb[0].mxu0 %v2904
          %v4278 = vpop.f32.mrb[0].mxu0
          %v4279 = vadd.f32 %v4239, %v4278
          %v4280 = vpop.f32.mrb[0].mxu0
          %v4281 = vpop.f32.mrb[0].mxu0
          %v4282 = vpop.f32.mrb[0].mxu0
          %4283 = vdwg.mxu0
          %v4316 = vunpack.c.l.b16 %v2908
          %v4317 = vunpack.c.l.b16 %v2909
          %v4318 = vunpack.c.l.b16 %v2910
          %v4319 = vunpack.c.l.b16 %v2911
          %v4320 = vunpack.c.l.b16 %v2912
          %v4321 = vunpack.c.l.b16 %v2913
          %v4322 = vunpack.c.l.b16 %v2914
          %v4323 = vunpack.c.l.b16 %v2915
          %v4324 = vunpack.c.l.b16 %v2916
          %v4325 = vunpack.c.l.b16 %v2917
          %v4326 = vunpack.c.l.b16 %v2918
          %v4327 = vunpack.c.l.b16 %v2919
          %v4328 = vunpack.c.l.b16 %v2920
          %v4329 = vunpack.c.l.b16 %v2921
          %v4330 = vunpack.c.l.b16 %v2922
          %v4331 = vunpack.c.l.b16 %v2923
          %v4332 = vunpack.c.l.b16 %v2924
          %v4333 = vunpack.c.l.b16 %v2925
          %v4334 = vunpack.c.l.b16 %v2926
          %v4335 = vunpack.c.l.b16 %v2927
          %v4336 = vunpack.c.l.b16 %v2928
          %v4337 = vunpack.c.l.b16 %v2929
          %v4338 = vunpack.c.l.b16 %v2930
          %v4339 = vunpack.c.l.b16 %v2931
          %v4340 = vunpack.c.l.b16 %v2932
          %v4341 = vunpack.c.l.b16 %v2933
          %v4342 = vunpack.c.l.b16 %v2934
          %v4343 = vunpack.c.l.b16 %v2935
          %v4344 = vunpack.c.l.b16 %v2936
          %v4345 = vunpack.c.l.b16 %v2937
          %v4346 = vunpack.c.l.b16 %v2938
          %v4347 = vunpack.c.l.b16 %v2939
          %v4348 = vpack.c.b16 %v4317, %v4316
          %v4349 = vpack.c.b16 %v4319, %v4318
          %v4350 = vpack.c.b16 %v4321, %v4320
          %v4351 = vpack.c.b16 %v4323, %v4322
          %v4352 = vpack.c.b16 %v4325, %v4324
          %v4353 = vpack.c.b16 %v4327, %v4326
          %v4354 = vpack.c.b16 %v4329, %v4328
          %v4355 = vpack.c.b16 %v4331, %v4330
          %v4356 = vpack.c.b16 %v4333, %v4332
          %v4357 = vpack.c.b16 %v4335, %v4334
          %v4358 = vpack.c.b16 %v4337, %v4336
          %v4359 = vpack.c.b16 %v4339, %v4338
          %v4360 = vpack.c.b16 %v4341, %v4340
          %v4361 = vpack.c.b16 %v4343, %v4342
          %v4362 = vpack.c.b16 %v4345, %v4344
          %v4363 = vpack.c.b16 %v4347, %v4346
          %4380 = vmatprep.subr.bf16.mxu0 0
          %4381 = vmatpush1.bf16.msra.mxu0 %v4348
          %4382 = vmatprep.subr.bf16.mxu0 0
          %4383 = vmatpush1.bf16.msra.mxu0 %v4349
          %4384 = vmatprep.subr.bf16.mxu0 0
          %4385 = vmatpush1.bf16.msra.mxu0 %v4350
          %4386 = vmatprep.subr.bf16.mxu0 0
          %4387 = vmatpush1.bf16.msra.mxu0 %v4351
          %4388 = vmatprep.subr.bf16.mxu0 0
          %4389 = vmatpush1.bf16.msra.mxu0 %v4352
          %4390 = vmatprep.subr.bf16.mxu0 0
          %4391 = vmatpush1.bf16.msra.mxu0 %v4353
          %4392 = vmatprep.subr.bf16.mxu0 0
          %4393 = vmatpush1.bf16.msra.mxu0 %v4354
          %4394 = vmatprep.subr.bf16.mxu0 0
          %4395 = vmatpush1.bf16.msra.mxu0 %v4355
          %4396 = vmatprep.subr.bf16.mxu0 0
          %4397 = vmatpush1.bf16.msra.mxu0 %v4356
          %4398 = vmatprep.subr.bf16.mxu0 0
          %4399 = vmatpush1.bf16.msra.mxu0 %v4357
          %4400 = vmatprep.subr.bf16.mxu0 0
          %4401 = vmatpush1.bf16.msra.mxu0 %v4358
          %4402 = vmatprep.subr.bf16.mxu0 0
          %4403 = vmatpush1.bf16.msra.mxu0 %v4359
          %4404 = vmatprep.subr.bf16.mxu0 0
          %4405 = vmatpush1.bf16.msra.mxu0 %v4360
          %4406 = vmatprep.subr.bf16.mxu0 0
          %4407 = vmatpush1.bf16.msra.mxu0 %v4361
          %4408 = vmatprep.subr.bf16.mxu0 0
          %4409 = vmatpush1.bf16.msra.mxu0 %v4362
          %4410 = vmatprep.subr.bf16.mxu0 0
          %4411 = vmatpush1.bf16.msra.mxu0 %v4363
          %4412 = vmatprep.mubr.bf16.mxu0 %v2907
          %4413 = vmatmul.mubr.bf16.gmra.mrb[0].mxu0 %v2906
          %v4414 = vpop.f32.mrb[0].mxu0
          %v4415 = vadd.f32 %v4279, %v4414
          %v4416 = vpop.f32.mrb[0].mxu0
          %v4417 = vpop.f32.mrb[0].mxu0
          %v4418 = vpop.f32.mrb[0].mxu0
          %4419 = vdwg.mxu0
          %v4420 = vld [vmem:[#allocation22] sm:$0xff]
          %v4421 = vld [vmem:[#allocation22 + $0x8] sm:$0xf]
          %v4422 = vld [vmem:[#allocation24] sm:$0xff]
          %v4423 = vld [vmem:[#allocation24 + $0x8] sm:$0xff]
          %v4424 = vld [vmem:[#allocation24 + $0x10] sm:$0xff]
          %v4425 = vld [vmem:[#allocation24 + $0x18] sm:$0xff]
          %v4426 = vlaneseq
          %v4427 = vshrl.u32 %v4426, 7
          %v4428 = vsub.s32 0, %v4427
          %v4429 = vrot.slane %v4420, %v4428
          %vm4430 = vcmp.ge.f32.partialorder %v4415, %v4429
          %v4431 = vlaneseq
          %v4432 = vshrl.u32 %v4431, 7
          %v4433 = vsub.s32 1, %v4432
          %v4434 = vrot.slane %v4420, %v4433
          %vm4435 = vcmp.lt.f32.partialorder %v4415, %v4434
          %vm4436 = vmand %vm4430, %vm4435
          %v4437 = vsel %vm4436, 1, 0
          %v4438 = vcvt.s32.f32 %v4437
          %vm4439 = vcmp.ge.f32.partialorder %v4415, %v4434
          %v4440 = vlaneseq
          %v4441 = vshrl.u32 %v4440, 7
          %v4442 = vsub.s32 2, %v4441
          %v4443 = vrot.slane %v4420, %v4442
          %vm4444 = vcmp.lt.f32.partialorder %v4415, %v4443
          %vm4445 = vmand %vm4439, %vm4444
          %v4446 = vsel %vm4445, 1, 0
          %v4447 = vcvt.s32.f32 %v4446
          %vm4448 = vcmp.ge.f32.partialorder %v4415, %v4443
          %v4449 = vlaneseq
          %v4450 = vshrl.u32 %v4449, 7
          %v4451 = vsub.s32 3, %v4450
          %v4452 = vrot.slane %v4420, %v4451
          %vm4453 = vcmp.lt.f32.partialorder %v4415, %v4452
          %vm4454 = vmand %vm4448, %vm4453
          %v4455 = vsel %vm4454, 1, 0
          %v4456 = vcvt.s32.f32 %v4455
          %vm4457 = vcmp.ge.f32.partialorder %v4415, %v4452
          %v4458 = vlaneseq
          %v4459 = vshrl.u32 %v4458, 7
          %v4460 = vsub.s32 4, %v4459
          %v4461 = vrot.slane %v4420, %v4460
          %vm4462 = vcmp.lt.f32.partialorder %v4415, %v4461
          %vm4463 = vmand %vm4457, %vm4462
          %v4464 = vsel %vm4463, 1, 0
          %v4465 = vcvt.s32.f32 %v4464
          %vm4466 = vcmp.ge.f32.partialorder %v4415, %v4461
          %v4467 = vlaneseq
          %v4468 = vshrl.u32 %v4467, 7
          %v4469 = vsub.s32 5, %v4468
          %v4470 = vrot.slane %v4420, %v4469
          %vm4471 = vcmp.lt.f32.partialorder %v4415, %v4470
          %vm4472 = vmand %vm4466, %vm4471
          %v4473 = vsel %vm4472, 1, 0
          %v4474 = vcvt.s32.f32 %v4473
          %vm4475 = vcmp.ge.f32.partialorder %v4415, %v4470
          %v4476 = vlaneseq
          %v4477 = vshrl.u32 %v4476, 7
          %v4478 = vsub.s32 6, %v4477
          %v4479 = vrot.slane %v4420, %v4478
          %vm4480 = vcmp.lt.f32.partialorder %v4415, %v4479
          %vm4481 = vmand %vm4475, %vm4480
          %v4482 = vsel %vm4481, 1, 0
          %v4483 = vcvt.s32.f32 %v4482
          %vm4484 = vcmp.ge.f32.partialorder %v4415, %v4479
          %v4485 = vlaneseq
          %v4486 = vshrl.u32 %v4485, 7
          %v4487 = vsub.s32 7, %v4486
          %v4488 = vrot.slane %v4420, %v4487
          %vm4489 = vcmp.lt.f32.partialorder %v4415, %v4488
          %vm4490 = vmand %vm4484, %vm4489
          %v4491 = vsel %vm4490, 1, 0
          %v4492 = vcvt.s32.f32 %v4491
          %vm4493 = vcmp.ge.f32.partialorder %v4415, %v4488
          %v4494 = vlaneseq
          %v4495 = vshrl.u32 %v4494, 7
          %v4496 = vsub.s32 0, %v4495
          %v4497 = vrot.slane %v4421, %v4496
          %vm4498 = vcmp.lt.f32.partialorder %v4415, %v4497
          %vm4499 = vmand %vm4493, %vm4498
          %v4500 = vsel %vm4499, 1, 0
          %v4501 = vcvt.s32.f32 %v4500
          %vm4502 = vcmp.ge.f32.partialorder %v4415, %v4497
          %v4503 = vlaneseq
          %v4504 = vshrl.u32 %v4503, 7
          %v4505 = vsub.s32 1, %v4504
          %v4506 = vrot.slane %v4421, %v4505
          %vm4507 = vcmp.lt.f32.partialorder %v4415, %v4506
          %vm4508 = vmand %vm4502, %vm4507
          %v4509 = vsel %vm4508, 1, 0
          %v4510 = vcvt.s32.f32 %v4509
          %vm4511 = vcmp.ge.f32.partialorder %v4415, %v4506
          %v4512 = vlaneseq
          %v4513 = vshrl.u32 %v4512, 7
          %v4514 = vsub.s32 2, %v4513
          %v4515 = vrot.slane %v4421, %v4514
          %vm4516 = vcmp.lt.f32.partialorder %v4415, %v4515
          %vm4517 = vmand %vm4511, %vm4516
          %v4518 = vsel %vm4517, 1, 0
          %v4519 = vcvt.s32.f32 %v4518
          %vm4520 = vcmp.ge.f32.partialorder %v4415, %v4515
          %v4521 = vlaneseq
          %v4522 = vshrl.u32 %v4521, 7
          %v4523 = vsub.s32 3, %v4522
          %v4524 = vrot.slane %v4421, %v4523
          %vm4525 = vcmp.lt.f32.partialorder %v4415, %v4524
          %vm4526 = vmand %vm4520, %vm4525
          %v4527 = vsel %vm4526, 1, 0
          %v4528 = vcvt.s32.f32 %v4527
          %v4529 = vsub.f32 %v4415, %v4429
          %v4530 = vsub.f32 %v4415, %v4434
          %v4531 = vsub.f32 %v4415, %v4443
          %v4532 = vsub.f32 %v4415, %v4452
          %v4533 = vsub.f32 %v4415, %v4461
          %v4534 = vsub.f32 %v4415, %v4470
          %v4535 = vsub.f32 %v4415, %v4479
          %v4536 = vsub.f32 %v4415, %v4488
          %v4537 = vsub.f32 %v4415, %v4497
          %v4538 = vsub.f32 %v4415, %v4506
          %v4539 = vsub.f32 %v4415, %v4515
          %v4540 = vsub.f32 %v4415, %v4524
          %v4541 = vlaneseq
          %v4542 = vshrl.u32 %v4541, 7
          %v4543 = vsub.s32 0, %v4542
          %v4544 = vrot.slane %v4422, %v4543
          %v4545 = vmul.f32 %v4529, %v4544
          %v4546 = vmul.f32 %v4545, %v4438
          %v4547 = vlaneseq
          %v4548 = vshrl.u32 %v4547, 7
          %v4549 = vsub.s32 1, %v4548
          %v4550 = vrot.slane %v4422, %v4549
          %v4551 = vmul.f32 %v4531, %v4550
          %v4552 = vmul.f32 %v4551, %v4447
          %v4553 = vsub.f32 %v4546, %v4552
          %v4554 = vmul.f32 %v4530, %v4550
          %v4555 = vmul.f32 %v4554, %v4447
          %v4556 = vlaneseq
          %v4557 = vshrl.u32 %v4556, 7
          %v4558 = vsub.s32 2, %v4557
          %v4559 = vrot.slane %v4422, %v4558
          %v4560 = vmul.f32 %v4532, %v4559
          %v4561 = vmul.f32 %v4560, %v4456
          %v4562 = vsub.f32 %v4555, %v4561
          %v4563 = vmul.f32 %v4531, %v4559
          %v4564 = vmul.f32 %v4563, %v4456
          %v4565 = vlaneseq
          %v4566 = vshrl.u32 %v4565, 7
          %v4567 = vsub.s32 3, %v4566
          %v4568 = vrot.slane %v4422, %v4567
          %v4569 = vmul.f32 %v4533, %v4568
          %v4570 = vmul.f32 %v4569, %v4465
          %v4571 = vsub.f32 %v4564, %v4570
          %v4572 = vmul.f32 %v4532, %v4568
          %v4573 = vmul.f32 %v4572, %v4465
          %v4574 = vlaneseq
          %v4575 = vshrl.u32 %v4574, 7
          %v4576 = vsub.s32 4, %v4575
          %v4577 = vrot.slane %v4422, %v4576
          %v4578 = vmul.f32 %v4534, %v4577
          %v4579 = vmul.f32 %v4578, %v4474
          %v4580 = vsub.f32 %v4573, %v4579
          %v4581 = vmul.f32 %v4533, %v4577
          %v4582 = vmul.f32 %v4581, %v4474
          %v4583 = vlaneseq
          %v4584 = vshrl.u32 %v4583, 7
          %v4585 = vsub.s32 5, %v4584
          %v4586 = vrot.slane %v4422, %v4585
          %v4587 = vmul.f32 %v4535, %v4586
          %v4588 = vmul.f32 %v4587, %v4483
          %v4589 = vsub.f32 %v4582, %v4588
          %v4590 = vmul.f32 %v4534, %v4586
          %v4591 = vmul.f32 %v4590, %v4483
          %v4592 = vlaneseq
          %v4593 = vshrl.u32 %v4592, 7
          %v4594 = vsub.s32 6, %v4593
          %v4595 = vrot.slane %v4422, %v4594
          %v4596 = vmul.f32 %v4536, %v4595
          %v4597 = vmul.f32 %v4596, %v4492
          %v4598 = vsub.f32 %v4591, %v4597
          %v4599 = vmul.f32 %v4535, %v4595
          %v4600 = vmul.f32 %v4599, %v4492
          %v4601 = vlaneseq
          %v4602 = vshrl.u32 %v4601, 7
          %v4603 = vsub.s32 7, %v4602
          %v4604 = vrot.slane %v4422, %v4603
          %v4605 = vmul.f32 %v4537, %v4604
          %v4606 = vmul.f32 %v4605, %v4501
          %v4607 = vsub.f32 %v4600, %v4606
          %v4608 = vmul.f32 %v4536, %v4604
          %v4609 = vmul.f32 %v4608, %v4501
          %v4610 = vlaneseq
          %v4611 = vshrl.u32 %v4610, 7
          %v4612 = vsub.s32 0, %v4611
          %v4613 = vrot.slane %v4423, %v4612
          %v4614 = vmul.f32 %v4538, %v4613
          %v4615 = vmul.f32 %v4614, %v4510
          %v4616 = vsub.f32 %v4609, %v4615
          %v4617 = vmul.f32 %v4537, %v4613
          %v4618 = vmul.f32 %v4617, %v4510
          %v4619 = vlaneseq
          %v4620 = vshrl.u32 %v4619, 7
          %v4621 = vsub.s32 1, %v4620
          %v4622 = vrot.slane %v4423, %v4621
          %v4623 = vmul.f32 %v4539, %v4622
          %v4624 = vmul.f32 %v4623, %v4519
          %v4625 = vsub.f32 %v4618, %v4624
          %v4626 = vmul.f32 %v4538, %v4622
          %v4627 = vmul.f32 %v4626, %v4519
          %v4628 = vlaneseq
          %v4629 = vshrl.u32 %v4628, 7
          %v4630 = vsub.s32 2, %v4629
          %v4631 = vrot.slane %v4423, %v4630
          %v4632 = vmul.f32 %v4540, %v4631
          %v4633 = vmul.f32 %v4632, %v4528
          %v4634 = vsub.f32 %v4627, %v4633
          %v4635 = vlaneseq
          %v4636 = vshrl.u32 %v4635, 7
          %v4637 = vsub.s32 3, %v4636
          %v4638 = vrot.slane %v4423, %v4637
          %v4639 = vmul.f32 %v4529, %v4638
          %v4640 = vmul.f32 %v4639, %v4553
          %v4641 = vlaneseq
          %v4642 = vshrl.u32 %v4641, 7
          %v4643 = vsub.s32 4, %v4642
          %v4644 = vrot.slane %v4423, %v4643
          %v4645 = vmul.f32 %v4532, %v4644
          %v4646 = vmul.f32 %v4645, %v4562
          %v4647 = vsub.f32 %v4640, %v4646
          %v4648 = vmul.f32 %v4530, %v4644
          %v4649 = vmul.f32 %v4648, %v4562
          %v4650 = vlaneseq
          %v4651 = vshrl.u32 %v4650, 7
          %v4652 = vsub.s32 5, %v4651
          %v4653 = vrot.slane %v4423, %v4652
          %v4654 = vmul.f32 %v4533, %v4653
          %v4655 = vmul.f32 %v4654, %v4571
          %v4656 = vsub.f32 %v4649, %v4655
          %v4657 = vmul.f32 %v4531, %v4653
          %v4658 = vmul.f32 %v4657, %v4571
          %v4659 = vlaneseq
          %v4660 = vshrl.u32 %v4659, 7
          %v4661 = vsub.s32 6, %v4660
          %v4662 = vrot.slane %v4423, %v4661
          %v4663 = vmul.f32 %v4534, %v4662
          %v4664 = vmul.f32 %v4663, %v4580
          %v4665 = vsub.f32 %v4658, %v4664
          %v4666 = vmul.f32 %v4532, %v4662
          %v4667 = vmul.f32 %v4666, %v4580
          %v4668 = vlaneseq
          %v4669 = vshrl.u32 %v4668, 7
          %v4670 = vsub.s32 7, %v4669
          %v4671 = vrot.slane %v4423, %v4670
          %v4672 = vmul.f32 %v4535, %v4671
          %v4673 = vmul.f32 %v4672, %v4589
          %v4674 = vsub.f32 %v4667, %v4673
          %v4675 = vmul.f32 %v4533, %v4671
          %v4676 = vmul.f32 %v4675, %v4589
          %v4677 = vlaneseq
          %v4678 = vshrl.u32 %v4677, 7
          %v4679 = vsub.s32 0, %v4678
          %v4680 = vrot.slane %v4424, %v4679
          %v4681 = vmul.f32 %v4536, %v4680
          %v4682 = vmul.f32 %v4681, %v4598
          %v4683 = vsub.f32 %v4676, %v4682
          %v4684 = vmul.f32 %v4534, %v4680
          %v4685 = vmul.f32 %v4684, %v4598
          %v4686 = vlaneseq
          %v4687 = vshrl.u32 %v4686, 7
          %v4688 = vsub.s32 1, %v4687
          %v4689 = vrot.slane %v4424, %v4688
          %v4690 = vmul.f32 %v4537, %v4689
          %v4691 = vmul.f32 %v4690, %v4607
          %v4692 = vsub.f32 %v4685, %v4691
          %v4693 = vmul.f32 %v4535, %v4689
          %v4694 = vmul.f32 %v4693, %v4607
          %v4695 = vlaneseq
          %v4696 = vshrl.u32 %v4695, 7
          %v4697 = vsub.s32 2, %v4696
          %v4698 = vrot.slane %v4424, %v4697
          %v4699 = vmul.f32 %v4538, %v4698
          %v4700 = vmul.f32 %v4699, %v4616
          %v4701 = vsub.f32 %v4694, %v4700
          %v4702 = vmul.f32 %v4536, %v4698
          %v4703 = vmul.f32 %v4702, %v4616
          %v4704 = vlaneseq
          %v4705 = vshrl.u32 %v4704, 7
          %v4706 = vsub.s32 3, %v4705
          %v4707 = vrot.slane %v4424, %v4706
          %v4708 = vmul.f32 %v4539, %v4707
          %v4709 = vmul.f32 %v4708, %v4625
          %v4710 = vsub.f32 %v4703, %v4709
          %v4711 = vmul.f32 %v4537, %v4707
          %v4712 = vmul.f32 %v4711, %v4625
          %v4713 = vlaneseq
          %v4714 = vshrl.u32 %v4713, 7
          %v4715 = vsub.s32 4, %v4714
          %v4716 = vrot.slane %v4424, %v4715
          %v4717 = vmul.f32 %v4540, %v4716
          %v4718 = vmul.f32 %v4717, %v4634
          %v4719 = vsub.f32 %v4712, %v4718
          %v4720 = vlaneseq
          %v4721 = vshrl.u32 %v4720, 7
          %v4722 = vsub.s32 6, %v4721
          %v4723 = vrot.slane %v4424, %v4722
          %v4724 = vmul.f32 %v4529, %v4723
          %v4725 = vmul.f32 %v4724, %v4647
          %v4726 = vlaneseq
          %v4727 = vshrl.u32 %v4726, 7
          %v4728 = vsub.s32 7, %v4727
          %v4729 = vrot.slane %v4424, %v4728
          %v4730 = vmul.f32 %v4533, %v4729
          %v4731 = vmul.f32 %v4730, %v4656
          %v4732 = vsub.f32 %v4725, %v4731
          %v4733 = vmul.f32 %v4530, %v4729
          %v4734 = vmul.f32 %v4733, %v4656
          %v4735 = vlaneseq
          %v4736 = vshrl.u32 %v4735, 7
          %v4737 = vsub.s32 0, %v4736
          %v4738 = vrot.slane %v4425, %v4737
          %v4739 = vmul.f32 %v4534, %v4738
          %v4740 = vmul.f32 %v4739, %v4665
          %v4741 = vsub.f32 %v4734, %v4740
          %v4742 = vmul.f32 %v4531, %v4738
          %v4743 = vmul.f32 %v4742, %v4665
          %v4744 = vlaneseq
          %v4745 = vshrl.u32 %v4744, 7
          %v4746 = vsub.s32 1, %v4745
          %v4747 = vrot.slane %v4425, %v4746
          %v4748 = vmul.f32 %v4535, %v4747
          %v4749 = vmul.f32 %v4748, %v4674
          %v4750 = vsub.f32 %v4743, %v4749
          %v4751 = vmul.f32 %v4532, %v4747
          %v4752 = vmul.f32 %v4751, %v4674
          %v4753 = vlaneseq
          %v4754 = vshrl.u32 %v4753, 7
          %v4755 = vsub.s32 2, %v4754
          %v4756 = vrot.slane %v4425, %v4755
          %v4757 = vmul.f32 %v4536, %v4756
          %v4758 = vmul.f32 %v4757, %v4683
          %v4759 = vsub.f32 %v4752, %v4758
          %v4760 = vmul.f32 %v4533, %v4756
          %v4761 = vmul.f32 %v4760, %v4683
          %v4762 = vlaneseq
          %v4763 = vshrl.u32 %v4762, 7
          %v4764 = vsub.s32 3, %v4763
          %v4765 = vrot.slane %v4425, %v4764
          %v4766 = vmul.f32 %v4537, %v4765
          %v4767 = vmul.f32 %v4766, %v4692
          %v4768 = vsub.f32 %v4761, %v4767
          %v4769 = vmul.f32 %v4534, %v4765
          %v4770 = vmul.f32 %v4769, %v4692
          %v4771 = vlaneseq
          %v4772 = vshrl.u32 %v4771, 7
          %v4773 = vsub.s32 4, %v4772
          %v4774 = vrot.slane %v4425, %v4773
          %v4775 = vmul.f32 %v4538, %v4774
          %v4776 = vmul.f32 %v4775, %v4701
          %v4777 = vsub.f32 %v4770, %v4776
          %v4778 = vmul.f32 %v4535, %v4774
          %v4779 = vmul.f32 %v4778, %v4701
          %v4780 = vlaneseq
          %v4781 = vshrl.u32 %v4780, 7
          %v4782 = vsub.s32 5, %v4781
          %v4783 = vrot.slane %v4425, %v4782
          %v4784 = vmul.f32 %v4539, %v4783
          %v4785 = vmul.f32 %v4784, %v4710
          %v4786 = vsub.f32 %v4779, %v4785
          %v4787 = vmul.f32 %v4536, %v4783
          %v4788 = vmul.f32 %v4787, %v4710
          %v4789 = vlaneseq
          %v4790 = vshrl.u32 %v4789, 7
          %v4791 = vsub.s32 6, %v4790
          %v4792 = vrot.slane %v4425, %v4791
          %v4793 = vmul.f32 %v4540, %v4792
          %v4794 = vmul.f32 %v4793, %v4719
          %v4795 = vsub.f32 %v4788, %v4794
          %v4796 = vxor.u32 %v4415, 2147483648
          %v4797 = vmul.f32 %v4796, 1.442695
          %v4798 = vpow.pop %v4797
          %v4799 = vadd.f32 %v4798, 1.0
          %v4800 = vrcp.pop %v4799
          %v4801 = vmul.f32 1.0, %v4800
          %v4802 = vmul.f32 %v4415, %v4801
          %v4803 = vpack.c.bf16 %v4732, %v4732
          %v4804 = vpack.c.bf16 %v4741, %v4741
          %v4805 = vpack.c.bf16 %v4750, %v4750
          %v4806 = vpack.c.bf16 %v4759, %v4759
          %v4807 = vpack.c.bf16 %v4768, %v4768
          %v4808 = vpack.c.bf16 %v4777, %v4777
          %v4809 = vpack.c.bf16 %v4786, %v4786
          %v4810 = vpack.c.bf16 %v4795, %v4795
          %v4811 = vpack.c.bf16 %v4802, %v4802
          %v4812 = vld [vmem:[#allocation27] sm:$0xf]
          %v4813 = vld [vmem:[#allocation27 + $0x4] sm:$0xf]
          %v4814 = vld [vmem:[#allocation27 + $0x8] sm:$0xf]
          %v4815 = vld [vmem:[#allocation27 + $0xc] sm:$0xf]
          %v4816 = vld [vmem:[#allocation27 + $0x10] sm:$0xf]
          %v4817 = vld [vmem:[#allocation27 + $0x14] sm:$0xf]
          %v4818 = vld [vmem:[#allocation27 + $0x18] sm:$0xf]
          %v4819 = vld [vmem:[#allocation27 + $0x1c] sm:$0xf]
          %v4820 = vld [vmem:[#allocation27 + $0x20] sm:$0xf]
          %v4821 = vld [vmem:[#allocation27 + $0x24] sm:$0xf]
          %v4822 = vld [vmem:[#allocation27 + $0x28] sm:$0xf]
          %v4823 = vld [vmem:[#allocation27 + $0x2c] sm:$0xf]
          %v4824 = vld [vmem:[#allocation27 + $0x30] sm:$0xf]
          %v4825 = vld [vmem:[#allocation27 + $0x34] sm:$0xf]
          %v4826 = vld [vmem:[#allocation27 + $0x38] sm:$0xf]
          %v4827 = vld [vmem:[#allocation27 + $0x3c] sm:$0xf]
          %v4828 = vld [vmem:[#allocation25] sm:$0xf]
          %v4829 = vld [vmem:[#allocation25 + $0x4] sm:$0xf]
          %v4830 = vld [vmem:[#allocation25 + $0x8] sm:$0xf]
          %v4831 = vld [vmem:[#allocation25 + $0xc] sm:$0xf]
          %v4832 = vld [vmem:[#allocation25 + $0x10] sm:$0xf]
          %v4833 = vld [vmem:[#allocation25 + $0x14] sm:$0xf]
          %v4834 = vld [vmem:[#allocation25 + $0x18] sm:$0xf]
          %v4835 = vld [vmem:[#allocation25 + $0x1c] sm:$0xf]
          %v4836 = vld [vmem:[#allocation25 + $0x20] sm:$0xf]
          %v4837 = vld [vmem:[#allocation25 + $0x24] sm:$0xf]
          %v4838 = vld [vmem:[#allocation25 + $0x28] sm:$0xf]
          %v4839 = vld [vmem:[#allocation25 + $0x2c] sm:$0xf]
          %v4840 = vld [vmem:[#allocation25 + $0x30] sm:$0xf]
          %v4841 = vld [vmem:[#allocation25 + $0x34] sm:$0xf]
          %v4842 = vld [vmem:[#allocation25 + $0x38] sm:$0xf]
          %v4843 = vld [vmem:[#allocation25 + $0x3c] sm:$0xf]
          %v4844 = vld [vmem:[#allocation25 + $0x40] sm:$0xf]
          %v4845 = vld [vmem:[#allocation25 + $0x44] sm:$0xf]
          %v4846 = vld [vmem:[#allocation25 + $0x48] sm:$0xf]
          %v4847 = vld [vmem:[#allocation25 + $0x4c] sm:$0xf]
          %v4848 = vld [vmem:[#allocation25 + $0x50] sm:$0xf]
          %v4849 = vld [vmem:[#allocation25 + $0x54] sm:$0xf]
          %v4850 = vld [vmem:[#allocation25 + $0x58] sm:$0xf]
          %v4851 = vld [vmem:[#allocation25 + $0x5c] sm:$0xf]
          %v4852 = vld [vmem:[#allocation25 + $0x60] sm:$0xf]
          %v4853 = vld [vmem:[#allocation25 + $0x64] sm:$0xf]
          %v4854 = vld [vmem:[#allocation25 + $0x68] sm:$0xf]
          %v4855 = vld [vmem:[#allocation25 + $0x6c] sm:$0xf]
          %v4856 = vld [vmem:[#allocation25 + $0x70] sm:$0xf]
          %v4857 = vld [vmem:[#allocation25 + $0x74] sm:$0xf]
          %v4858 = vld [vmem:[#allocation25 + $0x78] sm:$0xf]
          %v4859 = vld [vmem:[#allocation25 + $0x7c] sm:$0xf]
          %v4860 = vld [vmem:[#allocation25 + $0x80] sm:$0xf]
          %v4861 = vld [vmem:[#allocation25 + $0x84] sm:$0xf]
          %v4862 = vld [vmem:[#allocation25 + $0x88] sm:$0xf]
          %v4863 = vld [vmem:[#allocation25 + $0x8c] sm:$0xf]
          %v4864 = vld [vmem:[#allocation25 + $0x90] sm:$0xf]
          %v4865 = vld [vmem:[#allocation25 + $0x94] sm:$0xf]
          %v4866 = vld [vmem:[#allocation25 + $0x98] sm:$0xf]
          %v4867 = vld [vmem:[#allocation25 + $0x9c] sm:$0xf]
          %v4868 = vld [vmem:[#allocation25 + $0xa0] sm:$0xf]
          %v4869 = vld [vmem:[#allocation25 + $0xa4] sm:$0xf]
          %v4870 = vld [vmem:[#allocation25 + $0xa8] sm:$0xf]
          %v4871 = vld [vmem:[#allocation25 + $0xac] sm:$0xf]
          %v4872 = vld [vmem:[#allocation25 + $0xb0] sm:$0xf]
          %v4873 = vld [vmem:[#allocation25 + $0xb4] sm:$0xf]
          %v4874 = vld [vmem:[#allocation25 + $0xb8] sm:$0xf]
          %v4875 = vld [vmem:[#allocation25 + $0xbc] sm:$0xf]
          %v4876 = vld [vmem:[#allocation25 + $0xc0] sm:$0xf]
          %v4877 = vld [vmem:[#allocation25 + $0xc4] sm:$0xf]
          %v4878 = vld [vmem:[#allocation25 + $0xc8] sm:$0xf]
          %v4879 = vld [vmem:[#allocation25 + $0xcc] sm:$0xf]
          %v4880 = vld [vmem:[#allocation25 + $0xd0] sm:$0xf]
          %v4881 = vld [vmem:[#allocation25 + $0xd4] sm:$0xf]
          %v4882 = vld [vmem:[#allocation25 + $0xd8] sm:$0xf]
          %v4883 = vld [vmem:[#allocation25 + $0xdc] sm:$0xf]
          %v4884 = vld [vmem:[#allocation25 + $0xe0] sm:$0xf]
          %v4885 = vld [vmem:[#allocation25 + $0xe4] sm:$0xf]
          %v4886 = vld [vmem:[#allocation25 + $0xe8] sm:$0xf]
          %v4887 = vld [vmem:[#allocation25 + $0xec] sm:$0xf]
          %v4888 = vld [vmem:[#allocation25 + $0xf0] sm:$0xf]
          %v4889 = vld [vmem:[#allocation25 + $0xf4] sm:$0xf]
          %v4890 = vld [vmem:[#allocation25 + $0xf8] sm:$0xf]
          %v4891 = vld [vmem:[#allocation25 + $0xfc] sm:$0xf]
          %v4892 = vld [vmem:[#allocation25 + $0x100] sm:$0xf]
          %v4893 = vld [vmem:[#allocation25 + $0x104] sm:$0xf]
          %v4894 = vld [vmem:[#allocation25 + $0x108] sm:$0xf]
          %v4895 = vld [vmem:[#allocation25 + $0x10c] sm:$0xf]
          %v4896 = vld [vmem:[#allocation25 + $0x110] sm:$0xf]
          %v4897 = vld [vmem:[#allocation25 + $0x114] sm:$0xf]
          %v4898 = vld [vmem:[#allocation25 + $0x118] sm:$0xf]
          %v4899 = vld [vmem:[#allocation25 + $0x11c] sm:$0xf]
          %v4900 = vld [vmem:[#allocation25 + $0x120] sm:$0xf]
          %v4901 = vld [vmem:[#allocation25 + $0x124] sm:$0xf]
          %v4902 = vld [vmem:[#allocation25 + $0x128] sm:$0xf]
          %v4903 = vld [vmem:[#allocation25 + $0x12c] sm:$0xf]
          %v4904 = vld [vmem:[#allocation25 + $0x130] sm:$0xf]
          %v4905 = vld [vmem:[#allocation25 + $0x134] sm:$0xf]
          %v4906 = vld [vmem:[#allocation25 + $0x138] sm:$0xf]
          %v4907 = vld [vmem:[#allocation25 + $0x13c] sm:$0xf]
          %v4908 = vld [vmem:[#allocation25 + $0x140] sm:$0xf]
          %v4909 = vld [vmem:[#allocation25 + $0x144] sm:$0xf]
          %v4910 = vld [vmem:[#allocation25 + $0x148] sm:$0xf]
          %v4911 = vld [vmem:[#allocation25 + $0x14c] sm:$0xf]
          %v4912 = vld [vmem:[#allocation25 + $0x150] sm:$0xf]
          %v4913 = vld [vmem:[#allocation25 + $0x154] sm:$0xf]
          %v4914 = vld [vmem:[#allocation25 + $0x158] sm:$0xf]
          %v4915 = vld [vmem:[#allocation25 + $0x15c] sm:$0xf]
          %v4916 = vld [vmem:[#allocation25 + $0x160] sm:$0xf]
          %v4917 = vld [vmem:[#allocation25 + $0x164] sm:$0xf]
          %v4918 = vld [vmem:[#allocation25 + $0x168] sm:$0xf]
          %v4919 = vld [vmem:[#allocation25 + $0x16c] sm:$0xf]
          %v4920 = vld [vmem:[#allocation25 + $0x170] sm:$0xf]
          %v4921 = vld [vmem:[#allocation25 + $0x174] sm:$0xf]
          %v4922 = vld [vmem:[#allocation25 + $0x178] sm:$0xf]
          %v4923 = vld [vmem:[#allocation25 + $0x17c] sm:$0xf]
          %v4924 = vld [vmem:[#allocation25 + $0x180] sm:$0xf]
          %v4925 = vld [vmem:[#allocation25 + $0x184] sm:$0xf]
          %v4926 = vld [vmem:[#allocation25 + $0x188] sm:$0xf]
          %v4927 = vld [vmem:[#allocation25 + $0x18c] sm:$0xf]
          %v4928 = vld [vmem:[#allocation25 + $0x190] sm:$0xf]
          %v4929 = vld [vmem:[#allocation25 + $0x194] sm:$0xf]
          %v4930 = vld [vmem:[#allocation25 + $0x198] sm:$0xf]
          %v4931 = vld [vmem:[#allocation25 + $0x19c] sm:$0xf]
          %v4932 = vld [vmem:[#allocation25 + $0x1a0] sm:$0xf]
          %v4933 = vld [vmem:[#allocation25 + $0x1a4] sm:$0xf]
          %v4934 = vld [vmem:[#allocation25 + $0x1a8] sm:$0xf]
          %v4935 = vld [vmem:[#allocation25 + $0x1ac] sm:$0xf]
          %v4936 = vld [vmem:[#allocation25 + $0x1b0] sm:$0xf]
          %v4937 = vld [vmem:[#allocation25 + $0x1b4] sm:$0xf]
          %v4938 = vld [vmem:[#allocation25 + $0x1b8] sm:$0xf]
          %v4939 = vld [vmem:[#allocation25 + $0x1bc] sm:$0xf]
          %v4940 = vld [vmem:[#allocation25 + $0x1c0] sm:$0xf]
          %v4941 = vld [vmem:[#allocation25 + $0x1c4] sm:$0xf]
          %v4942 = vld [vmem:[#allocation25 + $0x1c8] sm:$0xf]
          %v4943 = vld [vmem:[#allocation25 + $0x1cc] sm:$0xf]
          %v4944 = vld [vmem:[#allocation25 + $0x1d0] sm:$0xf]
          %v4945 = vld [vmem:[#allocation25 + $0x1d4] sm:$0xf]
          %v4946 = vld [vmem:[#allocation25 + $0x1d8] sm:$0xf]
          %v4947 = vld [vmem:[#allocation25 + $0x1dc] sm:$0xf]
          %v4948 = vld [vmem:[#allocation25 + $0x1e0] sm:$0xf]
          %v4949 = vld [vmem:[#allocation25 + $0x1e4] sm:$0xf]
          %v4950 = vld [vmem:[#allocation25 + $0x1e8] sm:$0xf]
          %v4951 = vld [vmem:[#allocation25 + $0x1ec] sm:$0xf]
          %v4952 = vld [vmem:[#allocation25 + $0x1f0] sm:$0xf]
          %v4953 = vld [vmem:[#allocation25 + $0x1f4] sm:$0xf]
          %v4954 = vld [vmem:[#allocation25 + $0x1f8] sm:$0xf]
          %v4955 = vld [vmem:[#allocation25 + $0x1fc] sm:$0xf]
          %v5084 = vunpack.c.l.b16 %v4828
          %v5085 = vunpack.c.l.b16 %v4829
          %v5086 = vunpack.c.l.b16 %v4830
          %v5087 = vunpack.c.l.b16 %v4831
          %v5088 = vunpack.c.l.b16 %v4832
          %v5089 = vunpack.c.l.b16 %v4833
          %v5090 = vunpack.c.l.b16 %v4834
          %v5091 = vunpack.c.l.b16 %v4835
          %v5092 = vunpack.c.l.b16 %v4836
          %v5093 = vunpack.c.l.b16 %v4837
          %v5094 = vunpack.c.l.b16 %v4838
          %v5095 = vunpack.c.l.b16 %v4839
          %v5096 = vunpack.c.l.b16 %v4840
          %v5097 = vunpack.c.l.b16 %v4841
          %v5098 = vunpack.c.l.b16 %v4842
          %v5099 = vunpack.c.l.b16 %v4843
          %v5100 = vunpack.c.l.b16 %v4844
          %v5101 = vunpack.c.l.b16 %v4845
          %v5102 = vunpack.c.l.b16 %v4846
          %v5103 = vunpack.c.l.b16 %v4847
          %v5104 = vunpack.c.l.b16 %v4848
          %v5105 = vunpack.c.l.b16 %v4849
          %v5106 = vunpack.c.l.b16 %v4850
          %v5107 = vunpack.c.l.b16 %v4851
          %v5108 = vunpack.c.l.b16 %v4852
          %v5109 = vunpack.c.l.b16 %v4853
          %v5110 = vunpack.c.l.b16 %v4854
          %v5111 = vunpack.c.l.b16 %v4855
          %v5112 = vunpack.c.l.b16 %v4856
          %v5113 = vunpack.c.l.b16 %v4857
          %v5114 = vunpack.c.l.b16 %v4858
          %v5115 = vunpack.c.l.b16 %v4859
          %v5116 = vunpack.c.l.b16 %v4860
          %v5117 = vunpack.c.l.b16 %v4861
          %v5118 = vunpack.c.l.b16 %v4862
          %v5119 = vunpack.c.l.b16 %v4863
          %v5120 = vunpack.c.l.b16 %v4864
          %v5121 = vunpack.c.l.b16 %v4865
          %v5122 = vunpack.c.l.b16 %v4866
          %v5123 = vunpack.c.l.b16 %v4867
          %v5124 = vunpack.c.l.b16 %v4868
          %v5125 = vunpack.c.l.b16 %v4869
          %v5126 = vunpack.c.l.b16 %v4870
          %v5127 = vunpack.c.l.b16 %v4871
          %v5128 = vunpack.c.l.b16 %v4872
          %v5129 = vunpack.c.l.b16 %v4873
          %v5130 = vunpack.c.l.b16 %v4874
          %v5131 = vunpack.c.l.b16 %v4875
          %v5132 = vunpack.c.l.b16 %v4876
          %v5133 = vunpack.c.l.b16 %v4877
          %v5134 = vunpack.c.l.b16 %v4878
          %v5135 = vunpack.c.l.b16 %v4879
          %v5136 = vunpack.c.l.b16 %v4880
          %v5137 = vunpack.c.l.b16 %v4881
          %v5138 = vunpack.c.l.b16 %v4882
          %v5139 = vunpack.c.l.b16 %v4883
          %v5140 = vunpack.c.l.b16 %v4884
          %v5141 = vunpack.c.l.b16 %v4885
          %v5142 = vunpack.c.l.b16 %v4886
          %v5143 = vunpack.c.l.b16 %v4887
          %v5144 = vunpack.c.l.b16 %v4888
          %v5145 = vunpack.c.l.b16 %v4889
          %v5146 = vunpack.c.l.b16 %v4890
          %v5147 = vunpack.c.l.b16 %v4891
          %v5148 = vunpack.c.l.b16 %v4892
          %v5149 = vunpack.c.l.b16 %v4893
          %v5150 = vunpack.c.l.b16 %v4894
          %v5151 = vunpack.c.l.b16 %v4895
          %v5152 = vunpack.c.l.b16 %v4896
          %v5153 = vunpack.c.l.b16 %v4897
          %v5154 = vunpack.c.l.b16 %v4898
          %v5155 = vunpack.c.l.b16 %v4899
          %v5156 = vunpack.c.l.b16 %v4900
          %v5157 = vunpack.c.l.b16 %v4901
          %v5158 = vunpack.c.l.b16 %v4902
          %v5159 = vunpack.c.l.b16 %v4903
          %v5160 = vunpack.c.l.b16 %v4904
          %v5161 = vunpack.c.l.b16 %v4905
          %v5162 = vunpack.c.l.b16 %v4906
          %v5163 = vunpack.c.l.b16 %v4907
          %v5164 = vunpack.c.l.b16 %v4908
          %v5165 = vunpack.c.l.b16 %v4909
          %v5166 = vunpack.c.l.b16 %v4910
          %v5167 = vunpack.c.l.b16 %v4911
          %v5168 = vunpack.c.l.b16 %v4912
          %v5169 = vunpack.c.l.b16 %v4913
          %v5170 = vunpack.c.l.b16 %v4914
          %v5171 = vunpack.c.l.b16 %v4915
          %v5172 = vunpack.c.l.b16 %v4916
          %v5173 = vunpack.c.l.b16 %v4917
          %v5174 = vunpack.c.l.b16 %v4918
          %v5175 = vunpack.c.l.b16 %v4919
          %v5176 = vunpack.c.l.b16 %v4920
          %v5177 = vunpack.c.l.b16 %v4921
          %v5178 = vunpack.c.l.b16 %v4922
          %v5179 = vunpack.c.l.b16 %v4923
          %v5180 = vunpack.c.l.b16 %v4924
          %v5181 = vunpack.c.l.b16 %v4925
          %v5182 = vunpack.c.l.b16 %v4926
          %v5183 = vunpack.c.l.b16 %v4927
          %v5184 = vunpack.c.l.b16 %v4928
          %v5185 = vunpack.c.l.b16 %v4929
          %v5186 = vunpack.c.l.b16 %v4930
          %v5187 = vunpack.c.l.b16 %v4931
          %v5188 = vunpack.c.l.b16 %v4932
          %v5189 = vunpack.c.l.b16 %v4933
          %v5190 = vunpack.c.l.b16 %v4934
          %v5191 = vunpack.c.l.b16 %v4935
          %v5192 = vunpack.c.l.b16 %v4936
          %v5193 = vunpack.c.l.b16 %v4937
          %v5194 = vunpack.c.l.b16 %v4938
          %v5195 = vunpack.c.l.b16 %v4939
          %v5196 = vunpack.c.l.b16 %v4940
          %v5197 = vunpack.c.l.b16 %v4941
          %v5198 = vunpack.c.l.b16 %v4942
          %v5199 = vunpack.c.l.b16 %v4943
          %v5200 = vunpack.c.l.b16 %v4944
          %v5201 = vunpack.c.l.b16 %v4945
          %v5202 = vunpack.c.l.b16 %v4946
          %v5203 = vunpack.c.l.b16 %v4947
          %v5204 = vunpack.c.l.b16 %v4948
          %v5205 = vunpack.c.l.b16 %v4949
          %v5206 = vunpack.c.l.b16 %v4950
          %v5207 = vunpack.c.l.b16 %v4951
          %v5208 = vunpack.c.l.b16 %v4952
          %v5209 = vunpack.c.l.b16 %v4953
          %v5210 = vunpack.c.l.b16 %v4954
          %v5211 = vunpack.c.l.b16 %v4955
          %v5212 = vpack.c.b16 %v5085, %v5084
          %v5213 = vpack.c.b16 %v5087, %v5086
          %v5214 = vpack.c.b16 %v5089, %v5088
          %v5215 = vpack.c.b16 %v5091, %v5090
          %v5216 = vpack.c.b16 %v5093, %v5092
          %v5217 = vpack.c.b16 %v5095, %v5094
          %v5218 = vpack.c.b16 %v5097, %v5096
          %v5219 = vpack.c.b16 %v5099, %v5098
          %v5220 = vpack.c.b16 %v5101, %v5100
          %v5221 = vpack.c.b16 %v5103, %v5102
          %v5222 = vpack.c.b16 %v5105, %v5104
          %v5223 = vpack.c.b16 %v5107, %v5106
          %v5224 = vpack.c.b16 %v5109, %v5108
          %v5225 = vpack.c.b16 %v5111, %v5110
          %v5226 = vpack.c.b16 %v5113, %v5112
          %v5227 = vpack.c.b16 %v5115, %v5114
          %v5228 = vpack.c.b16 %v5117, %v5116
          %v5229 = vpack.c.b16 %v5119, %v5118
          %v5230 = vpack.c.b16 %v5121, %v5120
          %v5231 = vpack.c.b16 %v5123, %v5122
          %v5232 = vpack.c.b16 %v5125, %v5124
          %v5233 = vpack.c.b16 %v5127, %v5126
          %v5234 = vpack.c.b16 %v5129, %v5128
          %v5235 = vpack.c.b16 %v5131, %v5130
          %v5236 = vpack.c.b16 %v5133, %v5132
          %v5237 = vpack.c.b16 %v5135, %v5134
          %v5238 = vpack.c.b16 %v5137, %v5136
          %v5239 = vpack.c.b16 %v5139, %v5138
          %v5240 = vpack.c.b16 %v5141, %v5140
          %v5241 = vpack.c.b16 %v5143, %v5142
          %v5242 = vpack.c.b16 %v5145, %v5144
          %v5243 = vpack.c.b16 %v5147, %v5146
          %v5244 = vpack.c.b16 %v5149, %v5148
          %v5245 = vpack.c.b16 %v5151, %v5150
          %v5246 = vpack.c.b16 %v5153, %v5152
          %v5247 = vpack.c.b16 %v5155, %v5154
          %v5248 = vpack.c.b16 %v5157, %v5156
          %v5249 = vpack.c.b16 %v5159, %v5158
          %v5250 = vpack.c.b16 %v5161, %v5160
          %v5251 = vpack.c.b16 %v5163, %v5162
          %v5252 = vpack.c.b16 %v5165, %v5164
          %v5253 = vpack.c.b16 %v5167, %v5166
          %v5254 = vpack.c.b16 %v5169, %v5168
          %v5255 = vpack.c.b16 %v5171, %v5170
          %v5256 = vpack.c.b16 %v5173, %v5172
          %v5257 = vpack.c.b16 %v5175, %v5174
          %v5258 = vpack.c.b16 %v5177, %v5176
          %v5259 = vpack.c.b16 %v5179, %v5178
          %v5260 = vpack.c.b16 %v5181, %v5180
          %v5261 = vpack.c.b16 %v5183, %v5182
          %v5262 = vpack.c.b16 %v5185, %v5184
          %v5263 = vpack.c.b16 %v5187, %v5186
          %v5264 = vpack.c.b16 %v5189, %v5188
          %v5265 = vpack.c.b16 %v5191, %v5190
          %v5266 = vpack.c.b16 %v5193, %v5192
          %v5267 = vpack.c.b16 %v5195, %v5194
          %v5268 = vpack.c.b16 %v5197, %v5196
          %v5269 = vpack.c.b16 %v5199, %v5198
          %v5270 = vpack.c.b16 %v5201, %v5200
          %v5271 = vpack.c.b16 %v5203, %v5202
          %v5272 = vpack.c.b16 %v5205, %v5204
          %v5273 = vpack.c.b16 %v5207, %v5206
          %v5274 = vpack.c.b16 %v5209, %v5208
          %v5275 = vpack.c.b16 %v5211, %v5210
          %5340 = vmatprep.subr.bf16.mxu0 0
          %5341 = vmatpush1.bf16.msra.mxu0 %v5212
          %5342 = vmatprep.subr.bf16.mxu0 0
          %5343 = vmatpush1.bf16.msra.mxu0 %v5213
          %5344 = vmatprep.subr.bf16.mxu0 0
          %5345 = vmatpush1.bf16.msra.mxu0 %v5214
          %5346 = vmatprep.subr.bf16.mxu0 0
          %5347 = vmatpush1.bf16.msra.mxu0 %v5215
          %5348 = vmatprep.subr.bf16.mxu0 0
          %5349 = vmatpush1.bf16.msra.mxu0 %v5216
          %5350 = vmatprep.subr.bf16.mxu0 0
          %5351 = vmatpush1.bf16.msra.mxu0 %v5217
          %5352 = vmatprep.subr.bf16.mxu0 0
          %5353 = vmatpush1.bf16.msra.mxu0 %v5218
          %5354 = vmatprep.subr.bf16.mxu0 0
          %5355 = vmatpush1.bf16.msra.mxu0 %v5219
          %5356 = vmatprep.subr.bf16.mxu0 0
          %5357 = vmatpush1.bf16.msra.mxu0 %v5220
          %5358 = vmatprep.subr.bf16.mxu0 0
          %5359 = vmatpush1.bf16.msra.mxu0 %v5221
          %5360 = vmatprep.subr.bf16.mxu0 0
          %5361 = vmatpush1.bf16.msra.mxu0 %v5222
          %5362 = vmatprep.subr.bf16.mxu0 0
          %5363 = vmatpush1.bf16.msra.mxu0 %v5223
          %5364 = vmatprep.subr.bf16.mxu0 0
          %5365 = vmatpush1.bf16.msra.mxu0 %v5224
          %5366 = vmatprep.subr.bf16.mxu0 0
          %5367 = vmatpush1.bf16.msra.mxu0 %v5225
          %5368 = vmatprep.subr.bf16.mxu0 0
          %5369 = vmatpush1.bf16.msra.mxu0 %v5226
          %5370 = vmatprep.subr.bf16.mxu0 0
          %5371 = vmatpush1.bf16.msra.mxu0 %v5227
          %5372 = vmatprep.mubr.bf16.mxu0 %v4804
          %5373 = vmatmul.mubr.bf16.gmra.mrb[0].mxu0 %v4803
          %v5374 = vpop.f32.mrb[0].mxu0
          %v5375 = vadd.f32 0.0, %v5374
          %v5376 = vpop.f32.mrb[0].mxu0
          %v5377 = vpop.f32.mrb[0].mxu0
          %v5378 = vpop.f32.mrb[0].mxu0
          %5379 = vdwg.mxu0
          %5380 = vmatprep.subr.bf16.mxu0 0
          %5381 = vmatpush1.bf16.msra.mxu0 %v5228
          %5382 = vmatprep.subr.bf16.mxu0 0
          %5383 = vmatpush1.bf16.msra.mxu0 %v5229
          %5384 = vmatprep.subr.bf16.mxu0 0
          %5385 = vmatpush1.bf16.msra.mxu0 %v5230
          %5386 = vmatprep.subr.bf16.mxu0 0
          %5387 = vmatpush1.bf16.msra.mxu0 %v5231
          %5388 = vmatprep.subr.bf16.mxu0 0
          %5389 = vmatpush1.bf16.msra.mxu0 %v5232
          %5390 = vmatprep.subr.bf16.mxu0 0
          %5391 = vmatpush1.bf16.msra.mxu0 %v5233
          %5392 = vmatprep.subr.bf16.mxu0 0
          %5393 = vmatpush1.bf16.msra.mxu0 %v5234
          %5394 = vmatprep.subr.bf16.mxu0 0
          %5395 = vmatpush1.bf16.msra.mxu0 %v5235
          %5396 = vmatprep.subr.bf16.mxu0 0
          %5397 = vmatpush1.bf16.msra.mxu0 %v5236
          %5398 = vmatprep.subr.bf16.mxu0 0
          %5399 = vmatpush1.bf16.msra.mxu0 %v5237
          %5400 = vmatprep.subr.bf16.mxu0 0
          %5401 = vmatpush1.bf16.msra.mxu0 %v5238
          %5402 = vmatprep.subr.bf16.mxu0 0
          %5403 = vmatpush1.bf16.msra.mxu0 %v5239
          %5404 = vmatprep.subr.bf16.mxu0 0
          %5405 = vmatpush1.bf16.msra.mxu0 %v5240
          %5406 = vmatprep.subr.bf16.mxu0 0
          %5407 = vmatpush1.bf16.msra.mxu0 %v5241
          %5408 = vmatprep.subr.bf16.mxu0 0
          %5409 = vmatpush1.bf16.msra.mxu0 %v5242
          %5410 = vmatprep.subr.bf16.mxu0 0
          %5411 = vmatpush1.bf16.msra.mxu0 %v5243
          %5412 = vmatprep.mubr.bf16.mxu0 %v4806
          %5413 = vmatmul.mubr.bf16.gmra.mrb[0].mxu0 %v4805
          %v5414 = vpop.f32.mrb[0].mxu0
          %v5415 = vadd.f32 %v5375, %v5414
          %v5416 = vpop.f32.mrb[0].mxu0
          %v5417 = vpop.f32.mrb[0].mxu0
          %v5418 = vpop.f32.mrb[0].mxu0
          %5419 = vdwg.mxu0
          %5420 = vmatprep.subr.bf16.mxu0 0
          %5421 = vmatpush1.bf16.msra.mxu0 %v5244
          %5422 = vmatprep.subr.bf16.mxu0 0
          %5423 = vmatpush1.bf16.msra.mxu0 %v5245
          %5424 = vmatprep.subr.bf16.mxu0 0
          %5425 = vmatpush1.bf16.msra.mxu0 %v5246
          %5426 = vmatprep.subr.bf16.mxu0 0
          %5427 = vmatpush1.bf16.msra.mxu0 %v5247
          %5428 = vmatprep.subr.bf16.mxu0 0
          %5429 = vmatpush1.bf16.msra.mxu0 %v5248
          %5430 = vmatprep.subr.bf16.mxu0 0
          %5431 = vmatpush1.bf16.msra.mxu0 %v5249
          %5432 = vmatprep.subr.bf16.mxu0 0
          %5433 = vmatpush1.bf16.msra.mxu0 %v5250
          %5434 = vmatprep.subr.bf16.mxu0 0
          %5435 = vmatpush1.bf16.msra.mxu0 %v5251
          %5436 = vmatprep.subr.bf16.mxu0 0
          %5437 = vmatpush1.bf16.msra.mxu0 %v5252
          %5438 = vmatprep.subr.bf16.mxu0 0
          %5439 = vmatpush1.bf16.msra.mxu0 %v5253
          %5440 = vmatprep.subr.bf16.mxu0 0
          %5441 = vmatpush1.bf16.msra.mxu0 %v5254
          %5442 = vmatprep.subr.bf16.mxu0 0
          %5443 = vmatpush1.bf16.msra.mxu0 %v5255
          %5444 = vmatprep.subr.bf16.mxu0 0
          %5445 = vmatpush1.bf16.msra.mxu0 %v5256
          %5446 = vmatprep.subr.bf16.mxu0 0
          %5447 = vmatpush1.bf16.msra.mxu0 %v5257
          %5448 = vmatprep.subr.bf16.mxu0 0
          %5449 = vmatpush1.bf16.msra.mxu0 %v5258
          %5450 = vmatprep.subr.bf16.mxu0 0
          %5451 = vmatpush1.bf16.msra.mxu0 %v5259
          %5452 = vmatprep.mubr.bf16.mxu0 %v4808
          %5453 = vmatmul.mubr.bf16.gmra.mrb[0].mxu0 %v4807
          %v5454 = vpop.f32.mrb[0].mxu0
          %v5455 = vadd.f32 %v5415, %v5454
          %v5456 = vpop.f32.mrb[0].mxu0
          %v5457 = vpop.f32.mrb[0].mxu0
          %v5458 = vpop.f32.mrb[0].mxu0
          %5459 = vdwg.mxu0
          %5460 = vmatprep.subr.bf16.mxu0 0
          %5461 = vmatpush1.bf16.msra.mxu0 %v5260
          %5462 = vmatprep.subr.bf16.mxu0 0
          %5463 = vmatpush1.bf16.msra.mxu0 %v5261
          %5464 = vmatprep.subr.bf16.mxu0 0
          %5465 = vmatpush1.bf16.msra.mxu0 %v5262
          %5466 = vmatprep.subr.bf16.mxu0 0
          %5467 = vmatpush1.bf16.msra.mxu0 %v5263
          %5468 = vmatprep.subr.bf16.mxu0 0
          %5469 = vmatpush1.bf16.msra.mxu0 %v5264
          %5470 = vmatprep.subr.bf16.mxu0 0
          %5471 = vmatpush1.bf16.msra.mxu0 %v5265
          %5472 = vmatprep.subr.bf16.mxu0 0
          %5473 = vmatpush1.bf16.msra.mxu0 %v5266
          %5474 = vmatprep.subr.bf16.mxu0 0
          %5475 = vmatpush1.bf16.msra.mxu0 %v5267
          %5476 = vmatprep.subr.bf16.mxu0 0
          %5477 = vmatpush1.bf16.msra.mxu0 %v5268
          %5478 = vmatprep.subr.bf16.mxu0 0
          %5479 = vmatpush1.bf16.msra.mxu0 %v5269
          %5480 = vmatprep.subr.bf16.mxu0 0
          %5481 = vmatpush1.bf16.msra.mxu0 %v5270
          %5482 = vmatprep.subr.bf16.mxu0 0
          %5483 = vmatpush1.bf16.msra.mxu0 %v5271
          %5484 = vmatprep.subr.bf16.mxu0 0
          %5485 = vmatpush1.bf16.msra.mxu0 %v5272
          %5486 = vmatprep.subr.bf16.mxu0 0
          %5487 = vmatpush1.bf16.msra.mxu0 %v5273
          %5488 = vmatprep.subr.bf16.mxu0 0
          %5489 = vmatpush1.bf16.msra.mxu0 %v5274
          %5490 = vmatprep.subr.bf16.mxu0 0
          %5491 = vmatpush1.bf16.msra.mxu0 %v5275
          %5492 = vmatprep.mubr.bf16.mxu0 %v4810
          %5493 = vmatmul.mubr.bf16.gmra.mrb[0].mxu0 %v4809
          %v5494 = vpop.f32.mrb[0].mxu0
          %v5495 = vadd.f32 %v5455, %v5494
          %v5496 = vpop.f32.mrb[0].mxu0
          %v5497 = vpop.f32.mrb[0].mxu0
          %v5498 = vpop.f32.mrb[0].mxu0
          %5499 = vdwg.mxu0
          %v5516 = vunpack.c.l.b16 %v4812
          %v5517 = vunpack.c.l.b16 %v4813
          %v5518 = vunpack.c.l.b16 %v4814
          %v5519 = vunpack.c.l.b16 %v4815
          %v5520 = vunpack.c.l.b16 %v4816
          %v5521 = vunpack.c.l.b16 %v4817
          %v5522 = vunpack.c.l.b16 %v4818
          %v5523 = vunpack.c.l.b16 %v4819
          %v5524 = vunpack.c.l.b16 %v4820
          %v5525 = vunpack.c.l.b16 %v4821
          %v5526 = vunpack.c.l.b16 %v4822
          %v5527 = vunpack.c.l.b16 %v4823
          %v5528 = vunpack.c.l.b16 %v4824
          %v5529 = vunpack.c.l.b16 %v4825
          %v5530 = vunpack.c.l.b16 %v4826
          %v5531 = vunpack.c.l.b16 %v4827
          %v5532 = vpack.c.b16 %v5517, %v5516
          %v5533 = vpack.c.b16 %v5519, %v5518
          %v5534 = vpack.c.b16 %v5521, %v5520
          %v5535 = vpack.c.b16 %v5523, %v5522
          %v5536 = vpack.c.b16 %v5525, %v5524
          %v5537 = vpack.c.b16 %v5527, %v5526
          %v5538 = vpack.c.b16 %v5529, %v5528
          %v5539 = vpack.c.b16 %v5531, %v5530
          %5548 = vmatprep.subr.bf16.mxu0 0
          %5549 = vmatpush1.bf16.msra.mxu0 %v5532
          %5550 = vmatprep.subr.bf16.mxu0 0
          %5551 = vmatpush1.bf16.msra.mxu0 %v5533
          %5552 = vmatprep.subr.bf16.mxu0 0
          %5553 = vmatpush1.bf16.msra.mxu0 %v5534
          %5554 = vmatprep.subr.bf16.mxu0 0
          %5555 = vmatpush1.bf16.msra.mxu0 %v5535
          %5556 = vmatprep.subr.bf16.mxu0 0
          %5557 = vmatpush1.bf16.msra.mxu0 %v5536
          %5558 = vmatprep.subr.bf16.mxu0 0
          %5559 = vmatpush1.bf16.msra.mxu0 %v5537
          %5560 = vmatprep.subr.bf16.mxu0 0
          %5561 = vmatpush1.bf16.msra.mxu0 %v5538
          %5562 = vmatprep.subr.bf16.mxu0 0
          %5563 = vmatpush1.bf16.msra.mxu0 %v5539
          %5564 = vmatprep.subr.bf16.mxu0 0
          %5565 = vmatpush1.bf16.msra.mxu0 0
          %5566 = vmatprep.subr.bf16.mxu0 0
          %5567 = vmatpush1.bf16.msra.mxu0 0
          %5568 = vmatprep.subr.bf16.mxu0 0
          %5569 = vmatpush1.bf16.msra.mxu0 0
          %5570 = vmatprep.subr.bf16.mxu0 0
          %5571 = vmatpush1.bf16.msra.mxu0 0
          %5572 = vmatprep.subr.bf16.mxu0 0
          %5573 = vmatpush1.bf16.msra.mxu0 0
          %5574 = vmatprep.subr.bf16.mxu0 0
          %5575 = vmatpush1.bf16.msra.mxu0 0
          %5576 = vmatprep.subr.bf16.mxu0 0
          %5577 = vmatpush1.bf16.msra.mxu0 0
          %5578 = vmatprep.subr.bf16.mxu0 0
          %5579 = vmatpush1.bf16.msra.mxu0 0
          %5580 = vmatprep.mubr.bf16.mxu0 0
          %5581 = vmatmul.mubr.bf16.gmra.mrb[0].mxu0 %v4811
          %v5582 = vpop.f32.mrb[0].mxu0
          %v5583 = vadd.f32 %v5495, %v5582
          %v5584 = vpop.f32.mrb[0].mxu0
          %v5585 = vpop.f32.mrb[0].mxu0
          %v5586 = vpop.f32.mrb[0].mxu0
          %5587 = vdwg.mxu0
          %v5588 = vld [vmem:[#allocation28] sm:$0xff]
          %v5589 = vld [vmem:[#allocation28 + $0x8] sm:$0xf]
          %v5590 = vld [vmem:[#allocation30] sm:$0xff]
          %v5591 = vld [vmem:[#allocation30 + $0x8] sm:$0xff]
          %v5592 = vld [vmem:[#allocation30 + $0x10] sm:$0xff]
          %v5593 = vld [vmem:[#allocation30 + $0x18] sm:$0xff]
          %v5594 = vlaneseq
          %v5595 = vshrl.u32 %v5594, 7
          %v5596 = vsub.s32 0, %v5595
          %v5597 = vrot.slane %v5588, %v5596
          %vm5598 = vcmp.ge.f32.partialorder %v5583, %v5597
          %v5599 = vlaneseq
          %v5600 = vshrl.u32 %v5599, 7
          %v5601 = vsub.s32 1, %v5600
          %v5602 = vrot.slane %v5588, %v5601
          %vm5603 = vcmp.lt.f32.partialorder %v5583, %v5602
          %vm5604 = vmand %vm5598, %vm5603
          %v5605 = vsel %vm5604, 1, 0
          %v5606 = vcvt.s32.f32 %v5605
          %vm5607 = vcmp.ge.f32.partialorder %v5583, %v5602
          %v5608 = vlaneseq
          %v5609 = vshrl.u32 %v5608, 7
          %v5610 = vsub.s32 2, %v5609
          %v5611 = vrot.slane %v5588, %v5610
          %vm5612 = vcmp.lt.f32.partialorder %v5583, %v5611
          %vm5613 = vmand %vm5607, %vm5612
          %v5614 = vsel %vm5613, 1, 0
          %v5615 = vcvt.s32.f32 %v5614
          %vm5616 = vcmp.ge.f32.partialorder %v5583, %v5611
          %v5617 = vlaneseq
          %v5618 = vshrl.u32 %v5617, 7
          %v5619 = vsub.s32 3, %v5618
          %v5620 = vrot.slane %v5588, %v5619
          %vm5621 = vcmp.lt.f32.partialorder %v5583, %v5620
          %vm5622 = vmand %vm5616, %vm5621
          %v5623 = vsel %vm5622, 1, 0
          %v5624 = vcvt.s32.f32 %v5623
          %vm5625 = vcmp.ge.f32.partialorder %v5583, %v5620
          %v5626 = vlaneseq
          %v5627 = vshrl.u32 %v5626, 7
          %v5628 = vsub.s32 4, %v5627
          %v5629 = vrot.slane %v5588, %v5628
          %vm5630 = vcmp.lt.f32.partialorder %v5583, %v5629
          %vm5631 = vmand %vm5625, %vm5630
          %v5632 = vsel %vm5631, 1, 0
          %v5633 = vcvt.s32.f32 %v5632
          %vm5634 = vcmp.ge.f32.partialorder %v5583, %v5629
          %v5635 = vlaneseq
          %v5636 = vshrl.u32 %v5635, 7
          %v5637 = vsub.s32 5, %v5636
          %v5638 = vrot.slane %v5588, %v5637
          %vm5639 = vcmp.lt.f32.partialorder %v5583, %v5638
          %vm5640 = vmand %vm5634, %vm5639
          %v5641 = vsel %vm5640, 1, 0
          %v5642 = vcvt.s32.f32 %v5641
          %vm5643 = vcmp.ge.f32.partialorder %v5583, %v5638
          %v5644 = vlaneseq
          %v5645 = vshrl.u32 %v5644, 7
          %v5646 = vsub.s32 6, %v5645
          %v5647 = vrot.slane %v5588, %v5646
          %vm5648 = vcmp.lt.f32.partialorder %v5583, %v5647
          %vm5649 = vmand %vm5643, %vm5648
          %v5650 = vsel %vm5649, 1, 0
          %v5651 = vcvt.s32.f32 %v5650
          %vm5652 = vcmp.ge.f32.partialorder %v5583, %v5647
          %v5653 = vlaneseq
          %v5654 = vshrl.u32 %v5653, 7
          %v5655 = vsub.s32 7, %v5654
          %v5656 = vrot.slane %v5588, %v5655
          %vm5657 = vcmp.lt.f32.partialorder %v5583, %v5656
          %vm5658 = vmand %vm5652, %vm5657
          %v5659 = vsel %vm5658, 1, 0
          %v5660 = vcvt.s32.f32 %v5659
          %vm5661 = vcmp.ge.f32.partialorder %v5583, %v5656
          %v5662 = vlaneseq
          %v5663 = vshrl.u32 %v5662, 7
          %v5664 = vsub.s32 0, %v5663
          %v5665 = vrot.slane %v5589, %v5664
          %vm5666 = vcmp.lt.f32.partialorder %v5583, %v5665
          %vm5667 = vmand %vm5661, %vm5666
          %v5668 = vsel %vm5667, 1, 0
          %v5669 = vcvt.s32.f32 %v5668
          %vm5670 = vcmp.ge.f32.partialorder %v5583, %v5665
          %v5671 = vlaneseq
          %v5672 = vshrl.u32 %v5671, 7
          %v5673 = vsub.s32 1, %v5672
          %v5674 = vrot.slane %v5589, %v5673
          %vm5675 = vcmp.lt.f32.partialorder %v5583, %v5674
          %vm5676 = vmand %vm5670, %vm5675
          %v5677 = vsel %vm5676, 1, 0
          %v5678 = vcvt.s32.f32 %v5677
          %vm5679 = vcmp.ge.f32.partialorder %v5583, %v5674
          %v5680 = vlaneseq
          %v5681 = vshrl.u32 %v5680, 7
          %v5682 = vsub.s32 2, %v5681
          %v5683 = vrot.slane %v5589, %v5682
          %vm5684 = vcmp.lt.f32.partialorder %v5583, %v5683
          %vm5685 = vmand %vm5679, %vm5684
          %v5686 = vsel %vm5685, 1, 0
          %v5687 = vcvt.s32.f32 %v5686
          %vm5688 = vcmp.ge.f32.partialorder %v5583, %v5683
          %v5689 = vlaneseq
          %v5690 = vshrl.u32 %v5689, 7
          %v5691 = vsub.s32 3, %v5690
          %v5692 = vrot.slane %v5589, %v5691
          %vm5693 = vcmp.lt.f32.partialorder %v5583, %v5692
          %vm5694 = vmand %vm5688, %vm5693
          %v5695 = vsel %vm5694, 1, 0
          %v5696 = vcvt.s32.f32 %v5695
          %v5697 = vsub.f32 %v5583, %v5597
          %v5698 = vsub.f32 %v5583, %v5602
          %v5699 = vsub.f32 %v5583, %v5611
          %v5700 = vsub.f32 %v5583, %v5620
          %v5701 = vsub.f32 %v5583, %v5629
          %v5702 = vsub.f32 %v5583, %v5638
          %v5703 = vsub.f32 %v5583, %v5647
          %v5704 = vsub.f32 %v5583, %v5656
          %v5705 = vsub.f32 %v5583, %v5665
          %v5706 = vsub.f32 %v5583, %v5674
          %v5707 = vsub.f32 %v5583, %v5683
          %v5708 = vsub.f32 %v5583, %v5692
          %v5709 = vlaneseq
          %v5710 = vshrl.u32 %v5709, 7
          %v5711 = vsub.s32 0, %v5710
          %v5712 = vrot.slane %v5590, %v5711
          %v5713 = vmul.f32 %v5697, %v5712
          %v5714 = vmul.f32 %v5713, %v5606
          %v5715 = vlaneseq
          %v5716 = vshrl.u32 %v5715, 7
          %v5717 = vsub.s32 1, %v5716
          %v5718 = vrot.slane %v5590, %v5717
          %v5719 = vmul.f32 %v5699, %v5718
          %v5720 = vmul.f32 %v5719, %v5615
          %v5721 = vsub.f32 %v5714, %v5720
          %v5722 = vmul.f32 %v5698, %v5718
          %v5723 = vmul.f32 %v5722, %v5615
          %v5724 = vlaneseq
          %v5725 = vshrl.u32 %v5724, 7
          %v5726 = vsub.s32 2, %v5725
          %v5727 = vrot.slane %v5590, %v5726
          %v5728 = vmul.f32 %v5700, %v5727
          %v5729 = vmul.f32 %v5728, %v5624
          %v5730 = vsub.f32 %v5723, %v5729
          %v5731 = vmul.f32 %v5699, %v5727
          %v5732 = vmul.f32 %v5731, %v5624
          %v5733 = vlaneseq
          %v5734 = vshrl.u32 %v5733, 7
          %v5735 = vsub.s32 3, %v5734
          %v5736 = vrot.slane %v5590, %v5735
          %v5737 = vmul.f32 %v5701, %v5736
          %v5738 = vmul.f32 %v5737, %v5633
          %v5739 = vsub.f32 %v5732, %v5738
          %v5740 = vmul.f32 %v5700, %v5736
          %v5741 = vmul.f32 %v5740, %v5633
          %v5742 = vlaneseq
          %v5743 = vshrl.u32 %v5742, 7
          %v5744 = vsub.s32 4, %v5743
          %v5745 = vrot.slane %v5590, %v5744
          %v5746 = vmul.f32 %v5702, %v5745
          %v5747 = vmul.f32 %v5746, %v5642
          %v5748 = vsub.f32 %v5741, %v5747
          %v5749 = vmul.f32 %v5701, %v5745
          %v5750 = vmul.f32 %v5749, %v5642
          %v5751 = vlaneseq
          %v5752 = vshrl.u32 %v5751, 7
          %v5753 = vsub.s32 5, %v5752
          %v5754 = vrot.slane %v5590, %v5753
          %v5755 = vmul.f32 %v5703, %v5754
          %v5756 = vmul.f32 %v5755, %v5651
          %v5757 = vsub.f32 %v5750, %v5756
          %v5758 = vmul.f32 %v5702, %v5754
          %v5759 = vmul.f32 %v5758, %v5651
          %v5760 = vlaneseq
          %v5761 = vshrl.u32 %v5760, 7
          %v5762 = vsub.s32 6, %v5761
          %v5763 = vrot.slane %v5590, %v5762
          %v5764 = vmul.f32 %v5704, %v5763
          %v5765 = vmul.f32 %v5764, %v5660
          %v5766 = vsub.f32 %v5759, %v5765
          %v5767 = vmul.f32 %v5703, %v5763
          %v5768 = vmul.f32 %v5767, %v5660
          %v5769 = vlaneseq
          %v5770 = vshrl.u32 %v5769, 7
          %v5771 = vsub.s32 7, %v5770
          %v5772 = vrot.slane %v5590, %v5771
          %v5773 = vmul.f32 %v5705, %v5772
          %v5774 = vmul.f32 %v5773, %v5669
          %v5775 = vsub.f32 %v5768, %v5774
          %v5776 = vmul.f32 %v5704, %v5772
          %v5777 = vmul.f32 %v5776, %v5669
          %v5778 = vlaneseq
          %v5779 = vshrl.u32 %v5778, 7
          %v5780 = vsub.s32 0, %v5779
          %v5781 = vrot.slane %v5591, %v5780
          %v5782 = vmul.f32 %v5706, %v5781
          %v5783 = vmul.f32 %v5782, %v5678
          %v5784 = vsub.f32 %v5777, %v5783
          %v5785 = vmul.f32 %v5705, %v5781
          %v5786 = vmul.f32 %v5785, %v5678
          %v5787 = vlaneseq
          %v5788 = vshrl.u32 %v5787, 7
          %v5789 = vsub.s32 1, %v5788
          %v5790 = vrot.slane %v5591, %v5789
          %v5791 = vmul.f32 %v5707, %v5790
          %v5792 = vmul.f32 %v5791, %v5687
          %v5793 = vsub.f32 %v5786, %v5792
          %v5794 = vmul.f32 %v5706, %v5790
          %v5795 = vmul.f32 %v5794, %v5687
          %v5796 = vlaneseq
          %v5797 = vshrl.u32 %v5796, 7
          %v5798 = vsub.s32 2, %v5797
          %v5799 = vrot.slane %v5591, %v5798
          %v5800 = vmul.f32 %v5708, %v5799
          %v5801 = vmul.f32 %v5800, %v5696
          %v5802 = vsub.f32 %v5795, %v5801
          %v5803 = vlaneseq
          %v5804 = vshrl.u32 %v5803, 7
          %v5805 = vsub.s32 3, %v5804
          %v5806 = vrot.slane %v5591, %v5805
          %v5807 = vmul.f32 %v5697, %v5806
          %v5808 = vmul.f32 %v5807, %v5721
          %v5809 = vlaneseq
          %v5810 = vshrl.u32 %v5809, 7
          %v5811 = vsub.s32 4, %v5810
          %v5812 = vrot.slane %v5591, %v5811
          %v5813 = vmul.f32 %v5700, %v5812
          %v5814 = vmul.f32 %v5813, %v5730
          %v5815 = vsub.f32 %v5808, %v5814
          %v5816 = vmul.f32 %v5698, %v5812
          %v5817 = vmul.f32 %v5816, %v5730
          %v5818 = vlaneseq
          %v5819 = vshrl.u32 %v5818, 7
          %v5820 = vsub.s32 5, %v5819
          %v5821 = vrot.slane %v5591, %v5820
          %v5822 = vmul.f32 %v5701, %v5821
          %v5823 = vmul.f32 %v5822, %v5739
          %v5824 = vsub.f32 %v5817, %v5823
          %v5825 = vmul.f32 %v5699, %v5821
          %v5826 = vmul.f32 %v5825, %v5739
          %v5827 = vlaneseq
          %v5828 = vshrl.u32 %v5827, 7
          %v5829 = vsub.s32 6, %v5828
          %v5830 = vrot.slane %v5591, %v5829
          %v5831 = vmul.f32 %v5702, %v5830
          %v5832 = vmul.f32 %v5831, %v5748
          %v5833 = vsub.f32 %v5826, %v5832
          %v5834 = vmul.f32 %v5700, %v5830
          %v5835 = vmul.f32 %v5834, %v5748
          %v5836 = vlaneseq
          %v5837 = vshrl.u32 %v5836, 7
          %v5838 = vsub.s32 7, %v5837
          %v5839 = vrot.slane %v5591, %v5838
          %v5840 = vmul.f32 %v5703, %v5839
          %v5841 = vmul.f32 %v5840, %v5757
          %v5842 = vsub.f32 %v5835, %v5841
          %v5843 = vmul.f32 %v5701, %v5839
          %v5844 = vmul.f32 %v5843, %v5757
          %v5845 = vlaneseq
          %v5846 = vshrl.u32 %v5845, 7
          %v5847 = vsub.s32 0, %v5846
          %v5848 = vrot.slane %v5592, %v5847
          %v5849 = vmul.f32 %v5704, %v5848
          %v5850 = vmul.f32 %v5849, %v5766
          %v5851 = vsub.f32 %v5844, %v5850
          %v5852 = vmul.f32 %v5702, %v5848
          %v5853 = vmul.f32 %v5852, %v5766
          %v5854 = vlaneseq
          %v5855 = vshrl.u32 %v5854, 7
          %v5856 = vsub.s32 1, %v5855
          %v5857 = vrot.slane %v5592, %v5856
          %v5858 = vmul.f32 %v5705, %v5857
          %v5859 = vmul.f32 %v5858, %v5775
          %v5860 = vsub.f32 %v5853, %v5859
          %v5861 = vmul.f32 %v5703, %v5857
          %v5862 = vmul.f32 %v5861, %v5775
          %v5863 = vlaneseq
          %v5864 = vshrl.u32 %v5863, 7
          %v5865 = vsub.s32 2, %v5864
          %v5866 = vrot.slane %v5592, %v5865
          %v5867 = vmul.f32 %v5706, %v5866
          %v5868 = vmul.f32 %v5867, %v5784
          %v5869 = vsub.f32 %v5862, %v5868
          %v5870 = vmul.f32 %v5704, %v5866
          %v5871 = vmul.f32 %v5870, %v5784
          %v5872 = vlaneseq
          %v5873 = vshrl.u32 %v5872, 7
          %v5874 = vsub.s32 3, %v5873
          %v5875 = vrot.slane %v5592, %v5874
          %v5876 = vmul.f32 %v5707, %v5875
          %v5877 = vmul.f32 %v5876, %v5793
          %v5878 = vsub.f32 %v5871, %v5877
          %v5879 = vmul.f32 %v5705, %v5875
          %v5880 = vmul.f32 %v5879, %v5793
          %v5881 = vlaneseq
          %v5882 = vshrl.u32 %v5881, 7
          %v5883 = vsub.s32 4, %v5882
          %v5884 = vrot.slane %v5592, %v5883
          %v5885 = vmul.f32 %v5708, %v5884
          %v5886 = vmul.f32 %v5885, %v5802
          %v5887 = vsub.f32 %v5880, %v5886
          %v5888 = vlaneseq
          %v5889 = vshrl.u32 %v5888, 7
          %v5890 = vsub.s32 6, %v5889
          %v5891 = vrot.slane %v5592, %v5890
          %v5892 = vmul.f32 %v5697, %v5891
          %v5893 = vmul.f32 %v5892, %v5815
          %v5894 = vlaneseq
          %v5895 = vshrl.u32 %v5894, 7
          %v5896 = vsub.s32 7, %v5895
          %v5897 = vrot.slane %v5592, %v5896
          %v5898 = vmul.f32 %v5701, %v5897
          %v5899 = vmul.f32 %v5898, %v5824
          %v5900 = vsub.f32 %v5893, %v5899
          %v5901 = vmul.f32 %v5698, %v5897
          %v5902 = vmul.f32 %v5901, %v5824
          %v5903 = vlaneseq
          %v5904 = vshrl.u32 %v5903, 7
          %v5905 = vsub.s32 0, %v5904
          %v5906 = vrot.slane %v5593, %v5905
          %v5907 = vmul.f32 %v5702, %v5906
          %v5908 = vmul.f32 %v5907, %v5833
          %v5909 = vsub.f32 %v5902, %v5908
          %v5910 = vmul.f32 %v5699, %v5906
          %v5911 = vmul.f32 %v5910, %v5833
          %v5912 = vlaneseq
          %v5913 = vshrl.u32 %v5912, 7
          %v5914 = vsub.s32 1, %v5913
          %v5915 = vrot.slane %v5593, %v5914
          %v5916 = vmul.f32 %v5703, %v5915
          %v5917 = vmul.f32 %v5916, %v5842
          %v5918 = vsub.f32 %v5911, %v5917
          %v5919 = vmul.f32 %v5700, %v5915
          %v5920 = vmul.f32 %v5919, %v5842
          %v5921 = vlaneseq
          %v5922 = vshrl.u32 %v5921, 7
          %v5923 = vsub.s32 2, %v5922
          %v5924 = vrot.slane %v5593, %v5923
          %v5925 = vmul.f32 %v5704, %v5924
          %v5926 = vmul.f32 %v5925, %v5851
          %v5927 = vsub.f32 %v5920, %v5926
          %v5928 = vmul.f32 %v5701, %v5924
          %v5929 = vmul.f32 %v5928, %v5851
          %v5930 = vlaneseq
          %v5931 = vshrl.u32 %v5930, 7
          %v5932 = vsub.s32 3, %v5931
          %v5933 = vrot.slane %v5593, %v5932
          %v5934 = vmul.f32 %v5705, %v5933
          %v5935 = vmul.f32 %v5934, %v5860
          %v5936 = vsub.f32 %v5929, %v5935
          %v5937 = vmul.f32 %v5702, %v5933
          %v5938 = vmul.f32 %v5937, %v5860
          %v5939 = vlaneseq
          %v5940 = vshrl.u32 %v5939, 7
          %v5941 = vsub.s32 4, %v5940
          %v5942 = vrot.slane %v5593, %v5941
          %v5943 = vmul.f32 %v5706, %v5942
          %v5944 = vmul.f32 %v5943, %v5869
          %v5945 = vsub.f32 %v5938, %v5944
          %v5946 = vmul.f32 %v5703, %v5942
          %v5947 = vmul.f32 %v5946, %v5869
          %v5948 = vlaneseq
          %v5949 = vshrl.u32 %v5948, 7
          %v5950 = vsub.s32 5, %v5949
          %v5951 = vrot.slane %v5593, %v5950
          %v5952 = vmul.f32 %v5707, %v5951
          %v5953 = vmul.f32 %v5952, %v5878
          %v5954 = vsub.f32 %v5947, %v5953
          %v5955 = vmul.f32 %v5704, %v5951
          %v5956 = vmul.f32 %v5955, %v5878
          %v5957 = vlaneseq
          %v5958 = vshrl.u32 %v5957, 7
          %v5959 = vsub.s32 6, %v5958
          %v5960 = vrot.slane %v5593, %v5959
          %v5961 = vmul.f32 %v5708, %v5960
          %v5962 = vmul.f32 %v5961, %v5887
          %v5963 = vsub.f32 %v5956, %v5962
          %v5964 = vxor.u32 %v5583, 2147483648
          %v5965 = vmul.f32 %v5964, 1.442695
          %v5966 = vpow.pop %v5965
          %v5967 = vadd.f32 %v5966, 1.0
          %v5968 = vrcp.pop %v5967
          %v5969 = vmul.f32 1.0, %v5968
          %v5970 = vmul.f32 %v5583, %v5969
          %v5971 = vld [vmem:[#allocation31] sm:$0xff]
          %v5972 = vld [vmem:[#allocation33] sm:$0x1]
          %v5974 = vlaneseq
          %v5975 = vshrl.u32 %v5974, 7
          %v5976 = vsub.s32 0, %v5975
          %v5977 = vrot.slane %v5972, %v5976
          %v5979 = vmul.f32 %v5970, %v5977
          %v5980 = vlaneseq
          %v5981 = vshrl.u32 %v5980, 7
          %v5982 = vsub.s32 0, %v5981
          %v5983 = vrot.slane %v5971, %v5982
          %v5984 = vmul.f32 %v5900, %v5983
          %v5985 = vadd.f32 %v5979, %v5984
          %v5986 = vlaneseq
          %v5987 = vshrl.u32 %v5986, 7
          %v5988 = vsub.s32 1, %v5987
          %v5989 = vrot.slane %v5971, %v5988
          %v5990 = vmul.f32 %v5909, %v5989
          %v5991 = vadd.f32 %v5985, %v5990
          %v5992 = vlaneseq
          %v5993 = vshrl.u32 %v5992, 7
          %v5994 = vsub.s32 2, %v5993
          %v5995 = vrot.slane %v5971, %v5994
          %v5996 = vmul.f32 %v5918, %v5995
          %v5997 = vadd.f32 %v5991, %v5996
          %v5998 = vlaneseq
          %v5999 = vshrl.u32 %v5998, 7
          %v6000 = vsub.s32 3, %v5999
          %v6001 = vrot.slane %v5971, %v6000
          %v6002 = vmul.f32 %v5927, %v6001
          %v6003 = vadd.f32 %v5997, %v6002
          %v6004 = vlaneseq
          %v6005 = vshrl.u32 %v6004, 7
          %v6006 = vsub.s32 4, %v6005
          %v6007 = vrot.slane %v5971, %v6006
          %v6008 = vmul.f32 %v5936, %v6007
          %v6009 = vadd.f32 %v6003, %v6008
          %v6010 = vlaneseq
          %v6011 = vshrl.u32 %v6010, 7
          %v6012 = vsub.s32 5, %v6011
          %v6013 = vrot.slane %v5971, %v6012
          %v6014 = vmul.f32 %v5945, %v6013
          %v6015 = vadd.f32 %v6009, %v6014
          %v6016 = vlaneseq
          %v6017 = vshrl.u32 %v6016, 7
          %v6018 = vsub.s32 6, %v6017
          %v6019 = vrot.slane %v5971, %v6018
          %v6020 = vmul.f32 %v5954, %v6019
          %v6021 = vadd.f32 %v6015, %v6020
          %v6022 = vlaneseq
          %v6023 = vshrl.u32 %v6022, 7
          %v6024 = vsub.s32 7, %v6023
          %v6025 = vrot.slane %v5971, %v6024
          %v6026 = vmul.f32 %v5963, %v6025
          %v6027 = vadd.f32 %v6021, %v6026
          %vm6028 = vcmask 261120
          %v6029 = vsel %vm6028, %v6027, 0.0
          %6030 = vadd.xlane.f32.xlu0 %v6029
          %v6031 = vpop.xlane.xlu0 %6030
          %v6032 = vxor.u32 %v6031, 2147483648
          %v6033 = vmul.f32 %v6032, 1.442695
          %v6034 = vpow.pop %v6033
          %v6035 = vadd.f32 %v6034, 1.0
          %v6036 = vrcp.pop %v6035
          %v6037 = vmul.f32 1.0, %v6036
          %6038 = vst [vmem:[#allocation34] sm:$0xff] %v6037
        $region180: #{forward.1} parent=95 // pred_fallthru
          _
        // Predicated region
        $region181: #{forward.1} parent=95 // pred_check
          %p6039 = pneg %p479
        $region182: #{forward.1} parent=95 // pred_check_branch
          %6041 = sbr.rel (%p6039) target = $region184
        $region183: #{forward.1} parent=95 // pred_region
          %s6043 = ssub.s32 128, 128
          %6044 = vsyncadd [#allocation6], %s6043
          %s6045 = smul.addr %s47, 128
          %s6046 = scalar_lea.hbm %s19, %s6045
          %s6048 = sshll.u32 [#allocation34], 4
          %s6049 = int_to_ptr.vmem [resolvable:$true] %s6048
          %6051 = dma.vmem_to_hbm [thread:$0]  %s6049, 128, %s6046, [#allocation6]
        $region184: #{forward.1} parent=95 // pred_fallthru
          _
        // Predicated region
        $region185: #{forward.1} parent=95 // pred_check
          %p6052 = pneg %p479
        $region186: #{forward.1} parent=95 // pred_check_branch
          %6054 = sbr.rel (%p6052) target = $region188
        $region187: #{forward.1} parent=95 // pred_region
          %6055 = dma.done [#allocation6], 128
        $region188: #{forward.1} parent=95 // pred_fallthru
          _
      $region96: #{forward.1} parent=5 // pred_fallthru
        _
      %p6056 = scmp.le.s32.totalorder 2, %s38
      // Predicated region
      $region189: #{forward.1} parent=5 // pred_check
        %p6057 = pneg %p6056
      $region190: #{forward.1} parent=5 // pred_check_branch
        %6059 = sbr.rel (%p6057) target = $region192
      $region191: #{forward.1} parent=5 // pred_region
        %s6060 = ssub.s32 %s38, 2
      $region192: #{forward.1} parent=5 // pred_fallthru
        _
    $region6: #{forward.1} parent=1 // loop_footer
      %s42 = sadd.s32 1, %s38
    $region7: #{forward.1} parent=1 // loop_footer_branch
      %37 = sbr.rel target = $region3
    $region8: #{forward.1} parent=1 // loop_exit
      _
    %6061 = vsyncpa [#allocation5], 1
    %s6062 = scalar_lea.sflag [#allocation5], 1
    %6063 = vsyncpa %s6062, 1
    %6064 = vsyncpa [#allocation8], 1
    %6065 = vsyncpa [#allocation11], 1
    %6066 = vsyncpa [#allocation14], 1
    %6067 = vsyncpa [#allocation17], 1
    %6068 = vsyncpa [#allocation20], 1
    %6069 = vsyncpa [#allocation23], 1
    %6070 = vsyncpa [#allocation26], 1
    %6071 = vsyncpa [#allocation29], 1
    %6072 = vsyncpa [#allocation32], 1
    %6073 = vsyncpa [#allocation6], 1
    %s6074 = scalar_lea.sflag [#allocation6], 1
    %6075 = vsyncpa %s6074, 1

</llo_original>
